<compile_context>
chip_gen: v7x
topology: tpu7x:2x2x1
jax: 0.10.0
libtpu: 0.0.40
codegen_flags: <defaults>
</compile_context>

<pallas_src>
import numpy as np
import jax
import jax.numpy as jnp
from jax import lax
from jax.experimental import pallas as pl
from jax.experimental.pallas import tpu as pltpu

_MIB = 1024 * 1024


# ----------------------------------------------------------------------------
# hardware-aware sizing helpers
# ----------------------------------------------------------------------------
def _vmem_capacity_bytes():
    try:
        return int(pltpu.get_tpu_info().vmem_capacity_bytes)
    except Exception:
        pass
    try:
        kind = jax.devices()[0].device_kind.lower()
    except Exception:
        kind = ""
    if "v7" in kind:
        return 64 * _MIB
    if ("v5" in kind) or ("v6" in kind):
        return 128 * _MIB
    return 64 * _MIB  # conservative default


def _choose_block_rows(H_out, W_store, H_in, W_in, C, K, csize, xsize,
                       max_block_rows):
    """Pick TH (output rows per grid step).  TH must divide H_out and be a
    multiple of 8 (or equal H_out) so the output BlockSpec obeys the (8,128)
    tiling rule, and its per-step working set must fit the VMEM budget."""
    cap = _vmem_capacity_bytes()
    # 128 MiB parts (v5e/v6e) get a bigger budget; v7x (64 MiB) stays at 1/3.
    budget = cap // 2 if cap > 96 * _MIB else cap // 3
    wc = W_store + 2

    def est(th):
        x_img = 2 * H_in * W_in * C * xsize                     # double-buffered
        consts = 2 * ((2 * 9 * C * C + K * C + wc * W_in) * csize
                      + (2 * C + 2 * K) * 4)
        gs = (th + 4) * wc * C * csize                          # gather scratch
        h1 = (th + 2) * wc * C * csize                          # conv1 scratch
        inter = 8 * (th + 4) * W_store * C * 4                  # f32 temporaries
        outb = 2 * K * th * W_store * 4                         # output block
        return x_img + consts + gs + h1 + inter + outb

    cands = sorted({d for d in range(8, H_out + 1, 8) if H_out % d == 0}
                   | {H_out})
    if max_block_rows is not None:
        fits = [d for d in cands if d <= max_block_rows]
        cands = fits if fits else [cands[0]]
    th = cands[0]
    for d in cands:
        if est(d) <= budget:
            th = d
    return th, est(th)


# ----------------------------------------------------------------------------
# nearest grid_sample index math (align_corners=False, zero padding)
# ----------------------------------------------------------------------------
def _nearest_indices(input_scope_dim, output_scope_dim, in_size):
    """Nearest source indices + validity along one separable axis.  float32
    index arithmetic + round-half-to-even to track PyTorch grid_sample; exact
    half-integer positions remain a (documented) rounding caveat."""
    imin, imax, _ = input_scope_dim
    omin, omax, ostep = output_scope_dim
    v = np.arange(np.float32(omin + ostep / 2), np.float32(omax),
                  np.float32(ostep), dtype=np.float32)
    g = (v - np.float32(imin)) / np.float32(imax - imin) * np.float32(2) \
        - np.float32(1)
    idx = ((g + np.float32(1)) * np.float32(in_size) - np.float32(1)) \
        / np.float32(2)
    nearest = np.rint(idx).astype(np.int64)
    valid = (nearest >= 0) & (nearest < in_size)
    return nearest, valid, int(v.shape[0])


def _selection_matrix(idx, valid, out_size, in_size):
    sel = np.zeros((out_size, in_size), np.float32)
    for o in range(out_size):
        if valid[o]:
            sel[o, idx[o]] = 1.0
    return sel


# ----------------------------------------------------------------------------
# fused kernel: grid-sample rows (2-row halo) -> conv3x3+BN+ReLU x2 ->
#               conv1x1 -> sigmoid, stored with W on the lane dim.
# ----------------------------------------------------------------------------
def _make_head_kernel(C, K, H_out, W_out, W_store, TH):
    R_IN = TH + 4            # grid-sampled rows needed by two stacked 3x3 convs
    WC = W_store + 2         # 1-col zero border on each side

    def kernel(srow_ref, x_ref, cmp_ref, w1_ref, b1_ref, w2_ref, b2_ref,
               w3_ref, b3_ref, o_ref, gs_ref, h1_ref):
        # srow_ref : SMEM (H_out+4,) nearest input row per gs row (-1 = zeros)
        # x_ref    : (H_in, W_in, C) channels-last input feature map (one image)
        # cmp_ref  : (WC, W_in) one-hot column-selection (zero rows = padding)
        # w1/w2    : (3, 3, C_out, C_in) BN-folded conv weights
        # b1/b2    : (1, 1, C) f32;  w3: (K, C);  b3: (K, 1) f32
        # o_ref    : (K, TH, W_store) output block (W on lanes, not K)
        # gs_ref   : (TH+4, WC, C) scratch; h1_ref: (TH+2, WC, C) scratch
        t = pl.program_id(1)
        row0 = t * TH
        cdt = gs_ref.dtype

        # -- 1) grid-sample the TH+4 rows of this block (gather rows, one-hot
        #       MXU matmul for columns); OOB rows/cols -> zeros.
        cm = cmp_ref[...]

        def fill_row(j, carry):
            src = srow_ref[row0 + j]
            valid = (src >= 0).astype(jnp.float32)
            xrow = x_ref[jnp.maximum(src, 0)]               # (W_in, C)
            row = jnp.dot(cm, xrow, preferred_element_type=jnp.float32)
            gs_ref[j] = (row * valid).astype(cdt)           # (WC, C)
            return carry

        lax.fori_loop(0, R_IN, fill_row, 0)

        def conv3x3_relu(src_ref, rows, w_ref, b_ref):
            acc = jnp.zeros((rows, W_store, C), jnp.float32)
            for kx in range(3):
                sh = src_ref[:, kx:kx + W_store, :]          # 3 shifted copies
                for ky in range(3):
                    win = sh[ky:ky + rows]                   # cheap leading slice
                    acc = acc + lax.dot_general(
                        win, w_ref[ky, kx],
                        dimension_numbers=(((2,), (1,)), ((), ())),
                        preferred_element_type=jnp.float32)
            return jnp.maximum(acc + b_ref[...], 0.0)

        # -- 2) conv1 over TH+2 rows (1-row halo for conv2); rows/cols outside
        #       the H_out x W_out domain are zeroed = conv2's zero padding.
        h1 = conv3x3_relu(gs_ref, TH + 2, w1_ref, b1_ref)
        row_pos = row0 - 1 + lax.broadcasted_iota(jnp.int32, (TH + 2, 1, 1), 0)
        row_ok = ((row_pos >= 0) & (row_pos < H_out)).astype(jnp.float32)
        col_ok = (lax.broadcasted_iota(jnp.int32, (1, W_store, 1), 1)
                  < W_out).astype(jnp.float32)
        h1 = h1 * row_ok * col_ok
        zcol = jnp.zeros((TH + 2, 1, C), cdt)
        h1_ref[:, 0:1, :] = zcol
        h1_ref[:, W_store + 1:W_store + 2, :] = zcol
        h1_ref[:, 1:W_store + 1, :] = h1.astype(cdt)

        # -- 3) conv2 + the 1x1 classifier head + sigmoid; logits come out as
        #       (K, TH*W_store) so the stores keep W (not K) on the lane dim.
        h2 = conv3x3_relu(h1_ref, TH, w2_ref, b2_ref).astype(cdt)
        h2m = h2.reshape(TH * W_store, C)
        logits = lax.dot_general(
            w3_ref[...], h2m,
            dimension_numbers=(((1,), (1,)), ((), ())),
            preferred_element_type=jnp.float32) + b3_ref[...]
        probs = pl.reciprocal(1.0 + jnp.exp(-logits))        # exact recip
        for i in range(TH):
            o_ref[:, i, :] = probs[:, i * W_store:(i + 1) * W_store].astype(
                o_ref.dtype)

    return kernel


def _fold_bn(w, gamma, beta, mean, var, eps=1e-5):
    scale = gamma / jnp.sqrt(var + eps)
    return w * scale[:, None, None, None], beta - mean * scale


def map_segmentation_head_sr_forward(x, input_scope, output_scope, params,
                                     *, max_block_rows=None,
                                     compute_dtype=None):
    """MapSegmentationHeadSR eval forward (finetune=False):
    BEVGridTransform -> classifier -> sigmoid.  Returns (N, K, H_out, W_out)
    float32 probabilities."""
    N, C, H_in, W_in = x.shape
    K = params['w3'].shape[0]
    cdtype = compute_dtype or (jnp.bfloat16 if x.dtype == jnp.bfloat16
                               else jnp.float32)
    csize = jnp.dtype(cdtype).itemsize

    rIdx, rValid, H_out = _nearest_indices(input_scope[0], output_scope[0], H_in)
    cIdx, cValid, W_out = _nearest_indices(input_scope[1], output_scope[1], W_in)
    W_store = 8 * int(np.ceil(W_out / 8))        # lane-friendly stored width
    WC = W_store + 2

    # nearest input row per gs row, with 2 halo slots each side (-1 = zeros)
    srow = np.full((H_out + 4,), -1, np.int32)
    for g in range(H_out):
        if rValid[g]:
            srow[g + 2] = rIdx[g]
    # one-hot column selection; row 0 / rows >= 1+W_out are the conv zero pad
    cmp_np = np.zeros((WC, W_in), np.float32)
    for wo in range(W_out):
        if cValid[wo]:
            cmp_np[wo + 1, cIdx[wo]] = 1.0

    # fold BatchNorm (eval) into the conv weights
    w1f, b1f = _fold_bn(params['w1'], params['g1'], params['b1'],
                        params['m1'], params['v1'])
    w2f, b2f = _fold_bn(params['w2'], params['g2'], params['b2'],
                        params['m2'], params['v2'])
    w1k = jnp.transpose(w1f, (2, 3, 0, 1)).astype(cdtype)     # (3,3,Co,Ci)
    w2k = jnp.transpose(w2f, (2, 3, 0, 1)).astype(cdtype)
    b1k = b1f.reshape(1, 1, C).astype(jnp.float32)
    b2k = b2f.reshape(1, 1, C).astype(jnp.float32)
    w3k = params['w3'].reshape(K, C).astype(cdtype)
    b3k = params['b3'].reshape(K, 1).astype(jnp.float32)

    # channels-last input (this is the smallest tensor of the head; keeping it
    # NHWC makes every conv contraction a minor-dim MXU dot in-kernel).
    x_cl = jnp.transpose(x, (0, 2, 3, 1)).astype(cdtype)      # (N,H_in,W_in,C)
    cmp_d = jnp.asarray(cmp_np, dtype=cdtype)
    srow_d = jnp.asarray(srow)

    TH, est = _choose_block_rows(H_out, W_store, H_in, W_in, C, K,
                                 csize, csize, max_block_rows)
    assert H_out % TH == 0
    T = H_out // TH
    cap = _vmem_capacity_bytes()
    vmem_limit = int(min(cap * 9 // 10, max(4 * est, 32 * _MIB)))

    kernel = _make_head_kernel(C, K, H_out, W_out, W_store, TH)
    grid_spec = pltpu.PrefetchScalarGridSpec(
        num_scalar_prefetch=1,
        grid=(N, T),
        in_specs=[
            pl.BlockSpec((None, H_in, W_in, C), lambda n, t, *_: (n, 0, 0, 0)),
            pl.BlockSpec((WC, W_in), lambda n, t, *_: (0, 0)),
            pl.BlockSpec((3, 3, C, C), lambda n, t, *_: (0, 0, 0, 0)),
            pl.BlockSpec((1, 1, C), lambda n, t, *_: (0, 0, 0)),
            pl.BlockSpec((3, 3, C, C), lambda n, t, *_: (0, 0, 0, 0)),
            pl.BlockSpec((1, 1, C), lambda n, t, *_: (0, 0, 0)),
            pl.BlockSpec((K, C), lambda n, t, *_: (0, 0)),
            pl.BlockSpec((K, 1), lambda n, t, *_: (0, 0)),
        ],
        out_specs=pl.BlockSpec((None, K, TH, W_store),
                               lambda n, t, *_: (n, 0, t, 0)),
        scratch_shapes=[
            pltpu.VMEM((TH + 4, WC, C), cdtype),     # grid-sampled rows
            pltpu.VMEM((TH + 2, WC, C), cdtype),     # conv1 output (+ zero pad)
        ],
    )
    out = pl.pallas_call(
        kernel,
        out_shape=jax.ShapeDtypeStruct((N, K, H_out, W_store), jnp.float32),
        grid_spec=grid_spec,
        compiler_params=pltpu.CompilerParams(
            dimension_semantics=("parallel", "parallel"),
            vmem_limit_bytes=vmem_limit),
    )(srow_d, x_cl, cmp_d, w1k, b1k, w2k, b2k, w3k, b3k)

    return out[:, :, :, :W_out]


# ----------------------------------------------------------------------------
# numpy reference
# ----------------------------------------------------------------------------
def _reference_grid(x, input_scope, output_scope):
    xn = np.asarray(x, np.float32)
    rIdx, rVal, H_out = _nearest_indices(input_scope[0], output_scope[0],
                                         xn.shape[2])
    cIdx, cVal, W_out = _nearest_indices(input_scope[1], output_scope[1],
                                         xn.shape[3])
    R = _selection_matrix(rIdx, rVal, H_out, xn.shape[2])
    Cm = _selection_matrix(cIdx, cVal, W_out, xn.shape[3])
    return np.einsum('oh,nchw,pw->ncop', R, xn, Cm)


def _conv3x3_np(x, w):
    N, C, H, W = x.shape
    xp = np.pad(x, ((0, 0), (0, 0), (1, 1), (1, 1)))
    out = np.zeros((N, w.shape[0], H, W), np.float32)
    for ky in range(3):
        for kx in range(3):
            out += np.einsum('oc,nchw->nohw', w[:, :, ky, kx],
                             xp[:, :, ky:ky + H, kx:kx + W])
    return out


def _bn_np(x, g, b, m, v, eps=1e-5):
    g, b, m, v = (a[None, :, None, None] for a in (g, b, m, v))
    return (x - m) / np.sqrt(v + eps) * g + b


def _reference_head(x, input_scope, output_scope, p):
    pn = {k: np.asarray(v, np.float32) for k, v in p.items()}
    t = _reference_grid(x, input_scope, output_scope)
    h = np.maximum(_bn_np(_conv3x3_np(t, pn['w1']), pn['g1'], pn['b1'],
                          pn['m1'], pn['v1']), 0.0)
    h = np.maximum(_bn_np(_conv3x3_np(h, pn['w2']), pn['g2'], pn['b2'],
                          pn['m2'], pn['v2']), 0.0)
    K, C = pn['w3'].shape[:2]
    logits = (np.einsum('kc,nchw->nkhw', pn['w3'].reshape(K, C), h)
              + pn['b3'].reshape(1, K, 1, 1))
    return 1.0 / (1.0 + np.exp(-logits))


if __name__ == "__main__":
    # Small shapes consistent with the module's forward:
    #   x: (N=2, C=4, 16, 16); output grid 40x40 (wider output scope exercises
    #   the zero-padding rows/cols of nearest grid_sample); 6 map classes.
    input_scope = [(-8.0, 8.0, 1.0), (-8.0, 8.0, 1.0)]        # H_in = W_in = 16
    output_scope = [(-10.0, 10.0, 0.5), (-10.0, 10.0, 0.5)]   # H_out = W_out = 40
    N, C, K = 2, 4, 6

    key = jax.random.PRNGKey(0)
    ks = jax.random.split(key, 13)
    x = jax.random.normal(ks[0], (N, C, 16, 16), dtype=jnp.float32)
    params = {
        'w1': 0.25 * jax.random.normal(ks[1], (C, C, 3, 3), dtype=jnp.float32),
        'g1': 1.0 + 0.1 * jax.random.normal(ks[2], (C,), dtype=jnp.float32),
        'b1': 0.1 * jax.random.normal(ks[3], (C,), dtype=jnp.float32),
        'm1': 0.1 * jax.random.normal(ks[4], (C,), dtype=jnp.float32),
        'v1': 1.0 + 0.1 * jnp.abs(jax.random.normal(ks[5], (C,), dtype=jnp.float32)),
        'w2': 0.25 * jax.random.normal(ks[6], (C, C, 3, 3), dtype=jnp.float32),
        'g2': 1.0 + 0.1 * jax.random.normal(ks[7], (C,), dtype=jnp.float32),
        'b2': 0.1 * jax.random.normal(ks[8], (C,), dtype=jnp.float32),
        'm2': 0.1 * jax.random.normal(ks[9], (C,), dtype=jnp.float32),
        'v2': 1.0 + 0.1 * jnp.abs(jax.random.normal(ks[10], (C,), dtype=jnp.float32)),
        'w3': 0.25 * jax.random.normal(ks[11], (K, C, 1, 1), dtype=jnp.float32),
        'b3': 0.1 * jax.random.normal(ks[12], (K,), dtype=jnp.float32),
    }

    # f32 path (exact): max_block_rows=16 forces TH=8 -> 5 row blocks per image,
    # exercising the 2-row recomputed halos and the boundary zero padding.
    out = jax.block_until_ready(map_segmentation_head_sr_forward(
        x, input_scope, output_scope, params, max_block_rows=16))
    assert out.shape == (N, K, 40, 40), out.shape
    ref = _reference_head(x, input_scope, output_scope, params)
    np.testing.assert_allclose(np.asarray(out), ref, rtol=1e-4, atol=1e-5)

    # bf16 MXU-feed path (f32 accumulation): loose smoke tolerance.
    out_bf = jax.block_until_ready(map_segmentation_head_sr_forward(
        x.astype(jnp.bfloat16), input_scope, output_scope, params,
        max_block_rows=16))
    assert out_bf.shape == (N, K, 40, 40), out_bf.shape
    np.testing.assert_allclose(np.asarray(out_bf), ref, rtol=0.0, atol=0.1)

    print("KERNEL_OK")
</pallas_src>

<mosaic_0001>
module attributes {stable_mosaic.version = 11 : i64} {
  func.func @kernel(%arg0: i32, %arg1: i32, %arg2: memref<44xi32, #tpu.memory_space<smem>>, %arg3: memref<1x16x16x4xf32, #tpu.memory_space<vmem>>, %arg4: memref<42x16xf32, #tpu.memory_space<vmem>>, %arg5: memref<3x3x4x4xf32, #tpu.memory_space<vmem>>, %arg6: memref<1x1x4xf32, #tpu.memory_space<vmem>>, %arg7: memref<3x3x4x4xf32, #tpu.memory_space<vmem>>, %arg8: memref<1x1x4xf32, #tpu.memory_space<vmem>>, %arg9: memref<6x4xf32, #tpu.memory_space<vmem>>, %arg10: memref<6x1xf32, #tpu.memory_space<vmem>>, %arg11: memref<1x6x8x40xf32, #tpu.memory_space<vmem>>, %arg12: memref<12x42x4xf32, #tpu.memory_space<vmem>>, %arg13: memref<10x42x4xf32, #tpu.memory_space<vmem>>) attributes {dimension_semantics = [#tpu.dimension_semantics<parallel>, #tpu.dimension_semantics<parallel>], iteration_bounds = array<i64: 2, 5>, scalar_prefetch = 1 : i64, scratch_operands = 2 : i64, tpu.core_type = #tpu.core_type<tc>, window_params = [{transform_indices = @transform_0, window_bounds = array<i64: 1, 16, 16, 4>}, {pipeline_mode = #tpu.pipeline_mode<synchronous>, transform_indices = @transform_1, window_bounds = array<i64: 42, 16>}, {pipeline_mode = #tpu.pipeline_mode<synchronous>, transform_indices = @transform_2, window_bounds = array<i64: 3, 3, 4, 4>}, {pipeline_mode = #tpu.pipeline_mode<synchronous>, transform_indices = @transform_3, window_bounds = array<i64: 1, 1, 4>}, {pipeline_mode = #tpu.pipeline_mode<synchronous>, transform_indices = @transform_4, window_bounds = array<i64: 3, 3, 4, 4>}, {pipeline_mode = #tpu.pipeline_mode<synchronous>, transform_indices = @transform_5, window_bounds = array<i64: 1, 1, 4>}, {pipeline_mode = #tpu.pipeline_mode<synchronous>, transform_indices = @transform_6, window_bounds = array<i64: 6, 4>}, {pipeline_mode = #tpu.pipeline_mode<synchronous>, transform_indices = @transform_7, window_bounds = array<i64: 6, 1>}, {transform_indices = @transform_8, window_bounds = array<i64: 1, 6, 8, 40>}]} {
    %c8_i32 = arith.constant 8 : i32
    %0 = arith.muli %arg1, %c8_i32 : i32
    %c0 = arith.constant 0 : index
    %c0_0 = arith.constant 0 : index
    %1 = vector.load %arg4[%c0, %c0_0] : memref<42x16xf32, #tpu.memory_space<vmem>>, vector<42x16xf32>
    %c0_i32 = arith.constant 0 : i32
    %c12_i32 = arith.constant 12 : i32
    %2 = arith.addi %c0_i32, %c12_i32 : i32
    %c1_i32 = arith.constant 1 : i32
    scf.for %arg14 = %c0_i32 to %2 step %c1_i32  : i32 {
      %179 = arith.addi %0, %arg14 : i32
      %180 = arith.index_cast %179 : i32 to index
      %181 = memref.load %arg2[%180] : memref<44xi32, #tpu.memory_space<smem>>
      %c0_i32_163 = arith.constant 0 : i32
      %182 = arith.cmpi sge, %181, %c0_i32_163 : i32
      %183 = arith.extui %182 : i1 to i32
      %184 = arith.sitofp %183 : i32 to f32
      %c0_i32_164 = arith.constant 0 : i32
      %185 = arith.maxsi %181, %c0_i32_164 : i32
      %c0_165 = arith.constant 0 : index
      %186 = arith.index_cast %185 : i32 to index
      %c0_166 = arith.constant 0 : index
      %c0_167 = arith.constant 0 : index
      %187 = vector.load %arg3[%c0_165, %186, %c0_166, %c0_167] : memref<1x16x16x4xf32, #tpu.memory_space<vmem>>, vector<1x1x16x4xf32>
      %188 = vector.shape_cast %187 : vector<1x1x16x4xf32> to vector<16x4xf32>
      %cst_168 = arith.constant dense<0.000000e+00> : vector<42x4xf32>
      %189 = tpu.matmul %1, %188, %cst_168 {dimension_numbers = #tpu.dot_dimension_numbers<[1], [0], [0], [1], [0, 0, 1, 1], [], []>} : vector<42x16xf32>, vector<16x4xf32>, vector<42x4xf32> -> vector<42x4xf32>
      %190 = vector.broadcast %184 : f32 to vector<42x4xf32>
      %191 = arith.mulf %189, %190 : vector<42x4xf32>
      %192 = arith.index_cast %arg14 : i32 to index
      %c0_169 = arith.constant 0 : index
      %c0_170 = arith.constant 0 : index
      %193 = vector.load %arg12[%192, %c0_169, %c0_170] : memref<12x42x4xf32, #tpu.memory_space<vmem>>, vector<1x42x4xf32>
      %194 = vector.shape_cast %193 : vector<1x42x4xf32> to vector<42x4xf32>
      %195 = vector.shape_cast %191 : vector<42x4xf32> to vector<1x42x4xf32>
      tpu.vector_store %arg12[%192, %c0_169, %c0_170], %195 {strides = array<i32>} : memref<12x42x4xf32, #tpu.memory_space<vmem>>, vector<1x42x4xf32>,
    }
    %c12_i32_1 = arith.constant 12 : i32
    %cst = arith.constant 0.000000e+00 : f32
    %3 = vector.broadcast %cst : f32 to vector<10x40x4xf32>
    %c0_2 = arith.constant 0 : index
    %c0_3 = arith.constant 0 : index
    %c0_4 = arith.constant 0 : index
    %4 = vector.load %arg12[%c0_2, %c0_3, %c0_4] : memref<12x42x4xf32, #tpu.memory_space<vmem>>, vector<12x40x4xf32>
    %5 = vector.extract_strided_slice %4 {offsets = [0, 0, 0], sizes = [10, 40, 4], strides = [1, 1, 1]} : vector<12x40x4xf32> to vector<10x40x4xf32>
    %c0_5 = arith.constant 0 : index
    %c0_6 = arith.constant 0 : index
    %c0_7 = arith.constant 0 : index
    %c0_8 = arith.constant 0 : index
    %6 = vector.load %arg5[%c0_5, %c0_6, %c0_7, %c0_8] : memref<3x3x4x4xf32, #tpu.memory_space<vmem>>, vector<1x1x4x4xf32>
    %7 = vector.shape_cast %6 : vector<1x1x4x4xf32> to vector<4x4xf32>
    %cst_9 = arith.constant dense<0.000000e+00> : vector<10x40x4xf32>
    %8 = tpu.matmul %5, %7, %cst_9 {dimension_numbers = #tpu.dot_dimension_numbers<[2], [1], [0, 1], [0], [0, 0, 0, 1, 1, 0], [], []>} : vector<10x40x4xf32>, vector<4x4xf32>, vector<10x40x4xf32> -> vector<10x40x4xf32>
    %9 = arith.addf %3, %8 : vector<10x40x4xf32>
    %10 = vector.extract_strided_slice %4 {offsets = [1, 0, 0], sizes = [10, 40, 4], strides = [1, 1, 1]} : vector<12x40x4xf32> to vector<10x40x4xf32>
    %c1 = arith.constant 1 : index
    %c0_10 = arith.constant 0 : index
    %c0_11 = arith.constant 0 : index
    %c0_12 = arith.constant 0 : index
    %11 = vector.load %arg5[%c1, %c0_10, %c0_11, %c0_12] : memref<3x3x4x4xf32, #tpu.memory_space<vmem>>, vector<1x1x4x4xf32>
    %12 = vector.shape_cast %11 : vector<1x1x4x4xf32> to vector<4x4xf32>
    %cst_13 = arith.constant dense<0.000000e+00> : vector<10x40x4xf32>
    %13 = tpu.matmul %10, %12, %cst_13 {dimension_numbers = #tpu.dot_dimension_numbers<[2], [1], [0, 1], [0], [0, 0, 0, 1, 1, 0], [], []>} : vector<10x40x4xf32>, vector<4x4xf32>, vector<10x40x4xf32> -> vector<10x40x4xf32>
    %14 = arith.addf %9, %13 : vector<10x40x4xf32>
    %15 = vector.extract_strided_slice %4 {offsets = [2, 0, 0], sizes = [10, 40, 4], strides = [1, 1, 1]} : vector<12x40x4xf32> to vector<10x40x4xf32>
    %c2 = arith.constant 2 : index
    %c0_14 = arith.constant 0 : index
    %c0_15 = arith.constant 0 : index
    %c0_16 = arith.constant 0 : index
    %16 = vector.load %arg5[%c2, %c0_14, %c0_15, %c0_16] : memref<3x3x4x4xf32, #tpu.memory_space<vmem>>, vector<1x1x4x4xf32>
    %17 = vector.shape_cast %16 : vector<1x1x4x4xf32> to vector<4x4xf32>
    %cst_17 = arith.constant dense<0.000000e+00> : vector<10x40x4xf32>
    %18 = tpu.matmul %15, %17, %cst_17 {dimension_numbers = #tpu.dot_dimension_numbers<[2], [1], [0, 1], [0], [0, 0, 0, 1, 1, 0], [], []>} : vector<10x40x4xf32>, vector<4x4xf32>, vector<10x40x4xf32> -> vector<10x40x4xf32>
    %19 = arith.addf %14, %18 : vector<10x40x4xf32>
    %c0_18 = arith.constant 0 : index
    %c1_19 = arith.constant 1 : index
    %c0_20 = arith.constant 0 : index
    %20 = vector.load %arg12[%c0_18, %c1_19, %c0_20] : memref<12x42x4xf32, #tpu.memory_space<vmem>>, vector<12x40x4xf32>
    %21 = vector.extract_strided_slice %20 {offsets = [0, 0, 0], sizes = [10, 40, 4], strides = [1, 1, 1]} : vector<12x40x4xf32> to vector<10x40x4xf32>
    %c0_21 = arith.constant 0 : index
    %c1_22 = arith.constant 1 : index
    %c0_23 = arith.constant 0 : index
    %c0_24 = arith.constant 0 : index
    %22 = vector.load %arg5[%c0_21, %c1_22, %c0_23, %c0_24] : memref<3x3x4x4xf32, #tpu.memory_space<vmem>>, vector<1x1x4x4xf32>
    %23 = vector.shape_cast %22 : vector<1x1x4x4xf32> to vector<4x4xf32>
    %cst_25 = arith.constant dense<0.000000e+00> : vector<10x40x4xf32>
    %24 = tpu.matmul %21, %23, %cst_25 {dimension_numbers = #tpu.dot_dimension_numbers<[2], [1], [0, 1], [0], [0, 0, 0, 1, 1, 0], [], []>} : vector<10x40x4xf32>, vector<4x4xf32>, vector<10x40x4xf32> -> vector<10x40x4xf32>
    %25 = arith.addf %19, %24 : vector<10x40x4xf32>
    %26 = vector.extract_strided_slice %20 {offsets = [1, 0, 0], sizes = [10, 40, 4], strides = [1, 1, 1]} : vector<12x40x4xf32> to vector<10x40x4xf32>
    %c1_26 = arith.constant 1 : index
    %c1_27 = arith.constant 1 : index
    %c0_28 = arith.constant 0 : index
    %c0_29 = arith.constant 0 : index
    %27 = vector.load %arg5[%c1_26, %c1_27, %c0_28, %c0_29] : memref<3x3x4x4xf32, #tpu.memory_space<vmem>>, vector<1x1x4x4xf32>
    %28 = vector.shape_cast %27 : vector<1x1x4x4xf32> to vector<4x4xf32>
    %cst_30 = arith.constant dense<0.000000e+00> : vector<10x40x4xf32>
    %29 = tpu.matmul %26, %28, %cst_30 {dimension_numbers = #tpu.dot_dimension_numbers<[2], [1], [0, 1], [0], [0, 0, 0, 1, 1, 0], [], []>} : vector<10x40x4xf32>, vector<4x4xf32>, vector<10x40x4xf32> -> vector<10x40x4xf32>
    %30 = arith.addf %25, %29 : vector<10x40x4xf32>
    %31 = vector.extract_strided_slice %20 {offsets = [2, 0, 0], sizes = [10, 40, 4], strides = [1, 1, 1]} : vector<12x40x4xf32> to vector<10x40x4xf32>
    %c2_31 = arith.constant 2 : index
    %c1_32 = arith.constant 1 : index
    %c0_33 = arith.constant 0 : index
    %c0_34 = arith.constant 0 : index
    %32 = vector.load %arg5[%c2_31, %c1_32, %c0_33, %c0_34] : memref<3x3x4x4xf32, #tpu.memory_space<vmem>>, vector<1x1x4x4xf32>
    %33 = vector.shape_cast %32 : vector<1x1x4x4xf32> to vector<4x4xf32>
    %cst_35 = arith.constant dense<0.000000e+00> : vector<10x40x4xf32>
    %34 = tpu.matmul %31, %33, %cst_35 {dimension_numbers = #tpu.dot_dimension_numbers<[2], [1], [0, 1], [0], [0, 0, 0, 1, 1, 0], [], []>} : vector<10x40x4xf32>, vector<4x4xf32>, vector<10x40x4xf32> -> vector<10x40x4xf32>
    %35 = arith.addf %30, %34 : vector<10x40x4xf32>
    %c0_36 = arith.constant 0 : index
    %c2_37 = arith.constant 2 : index
    %c0_38 = arith.constant 0 : index
    %36 = vector.load %arg12[%c0_36, %c2_37, %c0_38] : memref<12x42x4xf32, #tpu.memory_space<vmem>>, vector<12x40x4xf32>
    %37 = vector.extract_strided_slice %36 {offsets = [0, 0, 0], sizes = [10, 40, 4], strides = [1, 1, 1]} : vector<12x40x4xf32> to vector<10x40x4xf32>
    %c0_39 = arith.constant 0 : index
    %c2_40 = arith.constant 2 : index
    %c0_41 = arith.constant 0 : index
    %c0_42 = arith.constant 0 : index
    %38 = vector.load %arg5[%c0_39, %c2_40, %c0_41, %c0_42] : memref<3x3x4x4xf32, #tpu.memory_space<vmem>>, vector<1x1x4x4xf32>
    %39 = vector.shape_cast %38 : vector<1x1x4x4xf32> to vector<4x4xf32>
    %cst_43 = arith.constant dense<0.000000e+00> : vector<10x40x4xf32>
    %40 = tpu.matmul %37, %39, %cst_43 {dimension_numbers = #tpu.dot_dimension_numbers<[2], [1], [0, 1], [0], [0, 0, 0, 1, 1, 0], [], []>} : vector<10x40x4xf32>, vector<4x4xf32>, vector<10x40x4xf32> -> vector<10x40x4xf32>
    %41 = arith.addf %35, %40 : vector<10x40x4xf32>
    %42 = vector.extract_strided_slice %36 {offsets = [1, 0, 0], sizes = [10, 40, 4], strides = [1, 1, 1]} : vector<12x40x4xf32> to vector<10x40x4xf32>
    %c1_44 = arith.constant 1 : index
    %c2_45 = arith.constant 2 : index
    %c0_46 = arith.constant 0 : index
    %c0_47 = arith.constant 0 : index
    %43 = vector.load %arg5[%c1_44, %c2_45, %c0_46, %c0_47] : memref<3x3x4x4xf32, #tpu.memory_space<vmem>>, vector<1x1x4x4xf32>
    %44 = vector.shape_cast %43 : vector<1x1x4x4xf32> to vector<4x4xf32>
    %cst_48 = arith.constant dense<0.000000e+00> : vector<10x40x4xf32>
    %45 = tpu.matmul %42, %44, %cst_48 {dimension_numbers = #tpu.dot_dimension_numbers<[2], [1], [0, 1], [0], [0, 0, 0, 1, 1, 0], [], []>} : vector<10x40x4xf32>, vector<4x4xf32>, vector<10x40x4xf32> -> vector<10x40x4xf32>
    %46 = arith.addf %41, %45 : vector<10x40x4xf32>
    %47 = vector.extract_strided_slice %36 {offsets = [2, 0, 0], sizes = [10, 40, 4], strides = [1, 1, 1]} : vector<12x40x4xf32> to vector<10x40x4xf32>
    %c2_49 = arith.constant 2 : index
    %c2_50 = arith.constant 2 : index
    %c0_51 = arith.constant 0 : index
    %c0_52 = arith.constant 0 : index
    %48 = vector.load %arg5[%c2_49, %c2_50, %c0_51, %c0_52] : memref<3x3x4x4xf32, #tpu.memory_space<vmem>>, vector<1x1x4x4xf32>
    %49 = vector.shape_cast %48 : vector<1x1x4x4xf32> to vector<4x4xf32>
    %cst_53 = arith.constant dense<0.000000e+00> : vector<10x40x4xf32>
    %50 = tpu.matmul %47, %49, %cst_53 {dimension_numbers = #tpu.dot_dimension_numbers<[2], [1], [0, 1], [0], [0, 0, 0, 1, 1, 0], [], []>} : vector<10x40x4xf32>, vector<4x4xf32>, vector<10x40x4xf32> -> vector<10x40x4xf32>
    %51 = arith.addf %46, %50 : vector<10x40x4xf32>
    %c0_54 = arith.constant 0 : index
    %c0_55 = arith.constant 0 : index
    %c0_56 = arith.constant 0 : index
    %52 = vector.load %arg6[%c0_54, %c0_55, %c0_56] : memref<1x1x4xf32, #tpu.memory_space<vmem>>, vector<1x1x4xf32>
    %53 = vector.broadcast %52 : vector<1x1x4xf32> to vector<10x40x4xf32>
    %54 = arith.addf %51, %53 : vector<10x40x4xf32>
    %cst_57 = arith.constant 0.000000e+00 : f32
    %55 = vector.broadcast %cst_57 : f32 to vector<10x40x4xf32>
    %56 = arith.maximumf %54, %55 : vector<10x40x4xf32>
    %c1_i32_58 = arith.constant 1 : i32
    %57 = arith.subi %0, %c1_i32_58 : i32
    %58 = tpu.iota {dimensions = array<i32: 0>} : vector<10x1x1xi32>
    %59 = vector.broadcast %57 : i32 to vector<10x1x1xi32>
    %60 = arith.addi %59, %58 : vector<10x1x1xi32>
    %c0_i32_59 = arith.constant 0 : i32
    %61 = vector.broadcast %c0_i32_59 : i32 to vector<10x1x1xi32>
    %62 = arith.cmpi sge, %60, %61 : vector<10x1x1xi32>
    %c40_i32 = arith.constant 40 : i32
    %63 = vector.broadcast %c40_i32 : i32 to vector<10x1x1xi32>
    %64 = arith.cmpi slt, %60, %63 : vector<10x1x1xi32>
    %65 = arith.andi %62, %64 : vector<10x1x1xi1>
    %66 = arith.extui %65 : vector<10x1x1xi1> to vector<10x1x1xi32>
    %67 = arith.sitofp %66 : vector<10x1x1xi32> to vector<10x1x1xf32>
    %68 = tpu.iota {dimensions = array<i32: 1>} : vector<1x40x1xi32>
    %c40_i32_60 = arith.constant 40 : i32
    %69 = vector.broadcast %c40_i32_60 : i32 to vector<1x40x1xi32>
    %70 = arith.cmpi slt, %68, %69 : vector<1x40x1xi32>
    %71 = arith.extui %70 : vector<1x40x1xi1> to vector<1x40x1xi32>
    %72 = arith.sitofp %71 : vector<1x40x1xi32> to vector<1x40x1xf32>
    %73 = vector.broadcast %67 : vector<10x1x1xf32> to vector<10x40x4xf32>
    %74 = arith.mulf %56, %73 : vector<10x40x4xf32>
    %75 = vector.broadcast %72 : vector<1x40x1xf32> to vector<10x40x4xf32>
    %76 = arith.mulf %74, %75 : vector<10x40x4xf32>
    %cst_61 = arith.constant 0.000000e+00 : f32
    %77 = vector.broadcast %cst_61 : f32 to vector<10x1x4xf32>
    %c0_62 = arith.constant 0 : index
    %c0_63 = arith.constant 0 : index
    %c0_64 = arith.constant 0 : index
    %78 = vector.load %arg13[%c0_62, %c0_63, %c0_64] : memref<10x42x4xf32, #tpu.memory_space<vmem>>, vector<10x1x4xf32>
    tpu.vector_store %arg13[%c0_62, %c0_63, %c0_64], %77 {strides = array<i32>} : memref<10x42x4xf32, #tpu.memory_space<vmem>>, vector<10x1x4xf32>,
    %c0_65 = arith.constant 0 : index
    %c41 = arith.constant 41 : index
    %c0_66 = arith.constant 0 : index
    %79 = vector.load %arg13[%c0_65, %c41, %c0_66] : memref<10x42x4xf32, #tpu.memory_space<vmem>>, vector<10x1x4xf32>
    tpu.vector_store %arg13[%c0_65, %c41, %c0_66], %77 {strides = array<i32>} : memref<10x42x4xf32, #tpu.memory_space<vmem>>, vector<10x1x4xf32>,
    %c0_67 = arith.constant 0 : index
    %c1_68 = arith.constant 1 : index
    %c0_69 = arith.constant 0 : index
    %80 = vector.load %arg13[%c0_67, %c1_68, %c0_69] : memref<10x42x4xf32, #tpu.memory_space<vmem>>, vector<10x40x4xf32>
    tpu.vector_store %arg13[%c0_67, %c1_68, %c0_69], %76 {strides = array<i32>} : memref<10x42x4xf32, #tpu.memory_space<vmem>>, vector<10x40x4xf32>,
    %cst_70 = arith.constant 0.000000e+00 : f32
    %81 = vector.broadcast %cst_70 : f32 to vector<8x40x4xf32>
    %c0_71 = arith.constant 0 : index
    %c0_72 = arith.constant 0 : index
    %c0_73 = arith.constant 0 : index
    %82 = vector.load %arg13[%c0_71, %c0_72, %c0_73] : memref<10x42x4xf32, #tpu.memory_space<vmem>>, vector<10x40x4xf32>
    %83 = vector.extract_strided_slice %82 {offsets = [0, 0, 0], sizes = [8, 40, 4], strides = [1, 1, 1]} : vector<10x40x4xf32> to vector<8x40x4xf32>
    %c0_74 = arith.constant 0 : index
    %c0_75 = arith.constant 0 : index
    %c0_76 = arith.constant 0 : index
    %c0_77 = arith.constant 0 : index
    %84 = vector.load %arg7[%c0_74, %c0_75, %c0_76, %c0_77] : memref<3x3x4x4xf32, #tpu.memory_space<vmem>>, vector<1x1x4x4xf32>
    %85 = vector.shape_cast %84 : vector<1x1x4x4xf32> to vector<4x4xf32>
    %cst_78 = arith.constant dense<0.000000e+00> : vector<8x40x4xf32>
    %86 = tpu.matmul %83, %85, %cst_78 {dimension_numbers = #tpu.dot_dimension_numbers<[2], [1], [0, 1], [0], [0, 0, 0, 1, 1, 0], [], []>} : vector<8x40x4xf32>, vector<4x4xf32>, vector<8x40x4xf32> -> vector<8x40x4xf32>
    %87 = arith.addf %81, %86 : vector<8x40x4xf32>
    %88 = vector.extract_strided_slice %82 {offsets = [1, 0, 0], sizes = [8, 40, 4], strides = [1, 1, 1]} : vector<10x40x4xf32> to vector<8x40x4xf32>
    %c1_79 = arith.constant 1 : index
    %c0_80 = arith.constant 0 : index
    %c0_81 = arith.constant 0 : index
    %c0_82 = arith.constant 0 : index
    %89 = vector.load %arg7[%c1_79, %c0_80, %c0_81, %c0_82] : memref<3x3x4x4xf32, #tpu.memory_space<vmem>>, vector<1x1x4x4xf32>
    %90 = vector.shape_cast %89 : vector<1x1x4x4xf32> to vector<4x4xf32>
    %cst_83 = arith.constant dense<0.000000e+00> : vector<8x40x4xf32>
    %91 = tpu.matmul %88, %90, %cst_83 {dimension_numbers = #tpu.dot_dimension_numbers<[2], [1], [0, 1], [0], [0, 0, 0, 1, 1, 0], [], []>} : vector<8x40x4xf32>, vector<4x4xf32>, vector<8x40x4xf32> -> vector<8x40x4xf32>
    %92 = arith.addf %87, %91 : vector<8x40x4xf32>
    %93 = vector.extract_strided_slice %82 {offsets = [2, 0, 0], sizes = [8, 40, 4], strides = [1, 1, 1]} : vector<10x40x4xf32> to vector<8x40x4xf32>
    %c2_84 = arith.constant 2 : index
    %c0_85 = arith.constant 0 : index
    %c0_86 = arith.constant 0 : index
    %c0_87 = arith.constant 0 : index
    %94 = vector.load %arg7[%c2_84, %c0_85, %c0_86, %c0_87] : memref<3x3x4x4xf32, #tpu.memory_space<vmem>>, vector<1x1x4x4xf32>
    %95 = vector.shape_cast %94 : vector<1x1x4x4xf32> to vector<4x4xf32>
    %cst_88 = arith.constant dense<0.000000e+00> : vector<8x40x4xf32>
    %96 = tpu.matmul %93, %95, %cst_88 {dimension_numbers = #tpu.dot_dimension_numbers<[2], [1], [0, 1], [0], [0, 0, 0, 1, 1, 0], [], []>} : vector<8x40x4xf32>, vector<4x4xf32>, vector<8x40x4xf32> -> vector<8x40x4xf32>
    %97 = arith.addf %92, %96 : vector<8x40x4xf32>
    %c0_89 = arith.constant 0 : index
    %c1_90 = arith.constant 1 : index
    %c0_91 = arith.constant 0 : index
    %98 = vector.load %arg13[%c0_89, %c1_90, %c0_91] : memref<10x42x4xf32, #tpu.memory_space<vmem>>, vector<10x40x4xf32>
    %99 = vector.extract_strided_slice %98 {offsets = [0, 0, 0], sizes = [8, 40, 4], strides = [1, 1, 1]} : vector<10x40x4xf32> to vector<8x40x4xf32>
    %c0_92 = arith.constant 0 : index
    %c1_93 = arith.constant 1 : index
    %c0_94 = arith.constant 0 : index
    %c0_95 = arith.constant 0 : index
    %100 = vector.load %arg7[%c0_92, %c1_93, %c0_94, %c0_95] : memref<3x3x4x4xf32, #tpu.memory_space<vmem>>, vector<1x1x4x4xf32>
    %101 = vector.shape_cast %100 : vector<1x1x4x4xf32> to vector<4x4xf32>
    %cst_96 = arith.constant dense<0.000000e+00> : vector<8x40x4xf32>
    %102 = tpu.matmul %99, %101, %cst_96 {dimension_numbers = #tpu.dot_dimension_numbers<[2], [1], [0, 1], [0], [0, 0, 0, 1, 1, 0], [], []>} : vector<8x40x4xf32>, vector<4x4xf32>, vector<8x40x4xf32> -> vector<8x40x4xf32>
    %103 = arith.addf %97, %102 : vector<8x40x4xf32>
    %104 = vector.extract_strided_slice %98 {offsets = [1, 0, 0], sizes = [8, 40, 4], strides = [1, 1, 1]} : vector<10x40x4xf32> to vector<8x40x4xf32>
    %c1_97 = arith.constant 1 : index
    %c1_98 = arith.constant 1 : index
    %c0_99 = arith.constant 0 : index
    %c0_100 = arith.constant 0 : index
    %105 = vector.load %arg7[%c1_97, %c1_98, %c0_99, %c0_100] : memref<3x3x4x4xf32, #tpu.memory_space<vmem>>, vector<1x1x4x4xf32>
    %106 = vector.shape_cast %105 : vector<1x1x4x4xf32> to vector<4x4xf32>
    %cst_101 = arith.constant dense<0.000000e+00> : vector<8x40x4xf32>
    %107 = tpu.matmul %104, %106, %cst_101 {dimension_numbers = #tpu.dot_dimension_numbers<[2], [1], [0, 1], [0], [0, 0, 0, 1, 1, 0], [], []>} : vector<8x40x4xf32>, vector<4x4xf32>, vector<8x40x4xf32> -> vector<8x40x4xf32>
    %108 = arith.addf %103, %107 : vector<8x40x4xf32>
    %109 = vector.extract_strided_slice %98 {offsets = [2, 0, 0], sizes = [8, 40, 4], strides = [1, 1, 1]} : vector<10x40x4xf32> to vector<8x40x4xf32>
    %c2_102 = arith.constant 2 : index
    %c1_103 = arith.constant 1 : index
    %c0_104 = arith.constant 0 : index
    %c0_105 = arith.constant 0 : index
    %110 = vector.load %arg7[%c2_102, %c1_103, %c0_104, %c0_105] : memref<3x3x4x4xf32, #tpu.memory_space<vmem>>, vector<1x1x4x4xf32>
    %111 = vector.shape_cast %110 : vector<1x1x4x4xf32> to vector<4x4xf32>
    %cst_106 = arith.constant dense<0.000000e+00> : vector<8x40x4xf32>
    %112 = tpu.matmul %109, %111, %cst_106 {dimension_numbers = #tpu.dot_dimension_numbers<[2], [1], [0, 1], [0], [0, 0, 0, 1, 1, 0], [], []>} : vector<8x40x4xf32>, vector<4x4xf32>, vector<8x40x4xf32> -> vector<8x40x4xf32>
    %113 = arith.addf %108, %112 : vector<8x40x4xf32>
    %c0_107 = arith.constant 0 : index
    %c2_108 = arith.constant 2 : index
    %c0_109 = arith.constant 0 : index
    %114 = vector.load %arg13[%c0_107, %c2_108, %c0_109] : memref<10x42x4xf32, #tpu.memory_space<vmem>>, vector<10x40x4xf32>
    %115 = vector.extract_strided_slice %114 {offsets = [0, 0, 0], sizes = [8, 40, 4], strides = [1, 1, 1]} : vector<10x40x4xf32> to vector<8x40x4xf32>
    %c0_110 = arith.constant 0 : index
    %c2_111 = arith.constant 2 : index
    %c0_112 = arith.constant 0 : index
    %c0_113 = arith.constant 0 : index
    %116 = vector.load %arg7[%c0_110, %c2_111, %c0_112, %c0_113] : memref<3x3x4x4xf32, #tpu.memory_space<vmem>>, vector<1x1x4x4xf32>
    %117 = vector.shape_cast %116 : vector<1x1x4x4xf32> to vector<4x4xf32>
    %cst_114 = arith.constant dense<0.000000e+00> : vector<8x40x4xf32>
    %118 = tpu.matmul %115, %117, %cst_114 {dimension_numbers = #tpu.dot_dimension_numbers<[2], [1], [0, 1], [0], [0, 0, 0, 1, 1, 0], [], []>} : vector<8x40x4xf32>, vector<4x4xf32>, vector<8x40x4xf32> -> vector<8x40x4xf32>
    %119 = arith.addf %113, %118 : vector<8x40x4xf32>
    %120 = vector.extract_strided_slice %114 {offsets = [1, 0, 0], sizes = [8, 40, 4], strides = [1, 1, 1]} : vector<10x40x4xf32> to vector<8x40x4xf32>
    %c1_115 = arith.constant 1 : index
    %c2_116 = arith.constant 2 : index
    %c0_117 = arith.constant 0 : index
    %c0_118 = arith.constant 0 : index
    %121 = vector.load %arg7[%c1_115, %c2_116, %c0_117, %c0_118] : memref<3x3x4x4xf32, #tpu.memory_space<vmem>>, vector<1x1x4x4xf32>
    %122 = vector.shape_cast %121 : vector<1x1x4x4xf32> to vector<4x4xf32>
    %cst_119 = arith.constant dense<0.000000e+00> : vector<8x40x4xf32>
    %123 = tpu.matmul %120, %122, %cst_119 {dimension_numbers = #tpu.dot_dimension_numbers<[2], [1], [0, 1], [0], [0, 0, 0, 1, 1, 0], [], []>} : vector<8x40x4xf32>, vector<4x4xf32>, vector<8x40x4xf32> -> vector<8x40x4xf32>
    %124 = arith.addf %119, %123 : vector<8x40x4xf32>
    %125 = vector.extract_strided_slice %114 {offsets = [2, 0, 0], sizes = [8, 40, 4], strides = [1, 1, 1]} : vector<10x40x4xf32> to vector<8x40x4xf32>
    %c2_120 = arith.constant 2 : index
    %c2_121 = arith.constant 2 : index
    %c0_122 = arith.constant 0 : index
    %c0_123 = arith.constant 0 : index
    %126 = vector.load %arg7[%c2_120, %c2_121, %c0_122, %c0_123] : memref<3x3x4x4xf32, #tpu.memory_space<vmem>>, vector<1x1x4x4xf32>
    %127 = vector.shape_cast %126 : vector<1x1x4x4xf32> to vector<4x4xf32>
    %cst_124 = arith.constant dense<0.000000e+00> : vector<8x40x4xf32>
    %128 = tpu.matmul %125, %127, %cst_124 {dimension_numbers = #tpu.dot_dimension_numbers<[2], [1], [0, 1], [0], [0, 0, 0, 1, 1, 0], [], []>} : vector<8x40x4xf32>, vector<4x4xf32>, vector<8x40x4xf32> -> vector<8x40x4xf32>
    %129 = arith.addf %124, %128 : vector<8x40x4xf32>
    %c0_125 = arith.constant 0 : index
    %c0_126 = arith.constant 0 : index
    %c0_127 = arith.constant 0 : index
    %130 = vector.load %arg8[%c0_125, %c0_126, %c0_127] : memref<1x1x4xf32, #tpu.memory_space<vmem>>, vector<1x1x4xf32>
    %131 = vector.broadcast %130 : vector<1x1x4xf32> to vector<8x40x4xf32>
    %132 = arith.addf %129, %131 : vector<8x40x4xf32>
    %cst_128 = arith.constant 0.000000e+00 : f32
    %133 = vector.broadcast %cst_128 : f32 to vector<8x40x4xf32>
    %134 = arith.maximumf %132, %133 : vector<8x40x4xf32>
    %135 = vector.shape_cast %134 : vector<8x40x4xf32> to vector<320x4xf32>
    %c0_129 = arith.constant 0 : index
    %c0_130 = arith.constant 0 : index
    %136 = vector.load %arg9[%c0_129, %c0_130] : memref<6x4xf32, #tpu.memory_space<vmem>>, vector<6x4xf32>
    %cst_131 = arith.constant dense<0.000000e+00> : vector<6x320xf32>
    %137 = tpu.matmul %136, %135, %cst_131 {dimension_numbers = #tpu.dot_dimension_numbers<[1], [1], [0], [0], [0, 0, 1, 0], [], []>} : vector<6x4xf32>, vector<320x4xf32>, vector<6x320xf32> -> vector<6x320xf32>
    %c0_132 = arith.constant 0 : index
    %c0_133 = arith.constant 0 : index
    %138 = vector.load %arg10[%c0_132, %c0_133] : memref<6x1xf32, #tpu.memory_space<vmem>>, vector<6x1xf32>
    %139 = vector.broadcast %138 : vector<6x1xf32> to vector<6x320xf32>
    %140 = arith.addf %137, %139 : vector<6x320xf32>
    %cst_134 = arith.constant 0.000000e+00 : f32
    %141 = vector.broadcast %cst_134 : f32 to vector<6x320xf32>
    %142 = arith.subf %141, %140 : vector<6x320xf32>
    %143 = math.exp %142 : vector<6x320xf32>
    %cst_135 = arith.constant 1.000000e+00 : f32
    %144 = vector.broadcast %cst_135 : f32 to vector<6x320xf32>
    %145 = arith.addf %144, %143 : vector<6x320xf32>
    %146 = tpu.reciprocal %145 : vector<6x320xf32> -> vector<6x320xf32>
    %147 = vector.extract_strided_slice %146 {offsets = [0, 0], sizes = [6, 40], strides = [1, 1]} : vector<6x320xf32> to vector<6x40xf32>
    %c0_136 = arith.constant 0 : index
    %c0_137 = arith.constant 0 : index
    %c0_138 = arith.constant 0 : index
    %c0_139 = arith.constant 0 : index
    %148 = vector.load %arg11[%c0_136, %c0_137, %c0_138, %c0_139] : memref<1x6x8x40xf32, #tpu.memory_space<vmem>>, vector<1x6x1x40xf32>
    %149 = vector.shape_cast %148 : vector<1x6x1x40xf32> to vector<6x40xf32>
    %150 = vector.shape_cast %147 : vector<6x40xf32> to vector<1x6x1x40xf32>
    tpu.vector_store %arg11[%c0_136, %c0_137, %c0_138, %c0_139], %150 {strides = array<i32>} : memref<1x6x8x40xf32, #tpu.memory_space<vmem>>, vector<1x6x1x40xf32>,
    %151 = vector.extract_strided_slice %146 {offsets = [0, 40], sizes = [6, 40], strides = [1, 1]} : vector<6x320xf32> to vector<6x40xf32>
    %c0_140 = arith.constant 0 : index
    %c0_141 = arith.constant 0 : index
    %c1_142 = arith.constant 1 : index
    %c0_143 = arith.constant 0 : index
    %152 = vector.load %arg11[%c0_140, %c0_141, %c1_142, %c0_143] : memref<1x6x8x40xf32, #tpu.memory_space<vmem>>, vector<1x6x1x40xf32>
    %153 = vector.shape_cast %152 : vector<1x6x1x40xf32> to vector<6x40xf32>
    %154 = vector.shape_cast %151 : vector<6x40xf32> to vector<1x6x1x40xf32>
    tpu.vector_store %arg11[%c0_140, %c0_141, %c1_142, %c0_143], %154 {strides = array<i32>} : memref<1x6x8x40xf32, #tpu.memory_space<vmem>>, vector<1x6x1x40xf32>,
    %155 = vector.extract_strided_slice %146 {offsets = [0, 80], sizes = [6, 40], strides = [1, 1]} : vector<6x320xf32> to vector<6x40xf32>
    %c0_144 = arith.constant 0 : index
    %c0_145 = arith.constant 0 : index
    %c2_146 = arith.constant 2 : index
    %c0_147 = arith.constant 0 : index
    %156 = vector.load %arg11[%c0_144, %c0_145, %c2_146, %c0_147] : memref<1x6x8x40xf32, #tpu.memory_space<vmem>>, vector<1x6x1x40xf32>
    %157 = vector.shape_cast %156 : vector<1x6x1x40xf32> to vector<6x40xf32>
    %158 = vector.shape_cast %155 : vector<6x40xf32> to vector<1x6x1x40xf32>
    tpu.vector_store %arg11[%c0_144, %c0_145, %c2_146, %c0_147], %158 {strides = array<i32>} : memref<1x6x8x40xf32, #tpu.memory_space<vmem>>, vector<1x6x1x40xf32>,
    %159 = vector.extract_strided_slice %146 {offsets = [0, 120], sizes = [6, 40], strides = [1, 1]} : vector<6x320xf32> to vector<6x40xf32>
    %c0_148 = arith.constant 0 : index
    %c0_149 = arith.constant 0 : index
    %c3 = arith.constant 3 : index
    %c0_150 = arith.constant 0 : index
    %160 = vector.load %arg11[%c0_148, %c0_149, %c3, %c0_150] : memref<1x6x8x40xf32, #tpu.memory_space<vmem>>, vector<1x6x1x40xf32>
    %161 = vector.shape_cast %160 : vector<1x6x1x40xf32> to vector<6x40xf32>
    %162 = vector.shape_cast %159 : vector<6x40xf32> to vector<1x6x1x40xf32>
    tpu.vector_store %arg11[%c0_148, %c0_149, %c3, %c0_150], %162 {strides = array<i32>} : memref<1x6x8x40xf32, #tpu.memory_space<vmem>>, vector<1x6x1x40xf32>,
    %163 = vector.extract_strided_slice %146 {offsets = [0, 160], sizes = [6, 40], strides = [1, 1]} : vector<6x320xf32> to vector<6x40xf32>
    %c0_151 = arith.constant 0 : index
    %c0_152 = arith.constant 0 : index
    %c4 = arith.constant 4 : index
    %c0_153 = arith.constant 0 : index
    %164 = vector.load %arg11[%c0_151, %c0_152, %c4, %c0_153] : memref<1x6x8x40xf32, #tpu.memory_space<vmem>>, vector<1x6x1x40xf32>
    %165 = vector.shape_cast %164 : vector<1x6x1x40xf32> to vector<6x40xf32>
    %166 = vector.shape_cast %163 : vector<6x40xf32> to vector<1x6x1x40xf32>
    tpu.vector_store %arg11[%c0_151, %c0_152, %c4, %c0_153], %166 {strides = array<i32>} : memref<1x6x8x40xf32, #tpu.memory_space<vmem>>, vector<1x6x1x40xf32>,
    %167 = vector.extract_strided_slice %146 {offsets = [0, 200], sizes = [6, 40], strides = [1, 1]} : vector<6x320xf32> to vector<6x40xf32>
    %c0_154 = arith.constant 0 : index
    %c0_155 = arith.constant 0 : index
    %c5 = arith.constant 5 : index
    %c0_156 = arith.constant 0 : index
    %168 = vector.load %arg11[%c0_154, %c0_155, %c5, %c0_156] : memref<1x6x8x40xf32, #tpu.memory_space<vmem>>, vector<1x6x1x40xf32>
    %169 = vector.shape_cast %168 : vector<1x6x1x40xf32> to vector<6x40xf32>
    %170 = vector.shape_cast %167 : vector<6x40xf32> to vector<1x6x1x40xf32>
    tpu.vector_store %arg11[%c0_154, %c0_155, %c5, %c0_156], %170 {strides = array<i32>} : memref<1x6x8x40xf32, #tpu.memory_space<vmem>>, vector<1x6x1x40xf32>,
    %171 = vector.extract_strided_slice %146 {offsets = [0, 240], sizes = [6, 40], strides = [1, 1]} : vector<6x320xf32> to vector<6x40xf32>
    %c0_157 = arith.constant 0 : index
    %c0_158 = arith.constant 0 : index
    %c6 = arith.constant 6 : index
    %c0_159 = arith.constant 0 : index
    %172 = vector.load %arg11[%c0_157, %c0_158, %c6, %c0_159] : memref<1x6x8x40xf32, #tpu.memory_space<vmem>>, vector<1x6x1x40xf32>
    %173 = vector.shape_cast %172 : vector<1x6x1x40xf32> to vector<6x40xf32>
    %174 = vector.shape_cast %171 : vector<6x40xf32> to vector<1x6x1x40xf32>
    tpu.vector_store %arg11[%c0_157, %c0_158, %c6, %c0_159], %174 {strides = array<i32>} : memref<1x6x8x40xf32, #tpu.memory_space<vmem>>, vector<1x6x1x40xf32>,
    %175 = vector.extract_strided_slice %146 {offsets = [0, 280], sizes = [6, 40], strides = [1, 1]} : vector<6x320xf32> to vector<6x40xf32>
    %c0_160 = arith.constant 0 : index
    %c0_161 = arith.constant 0 : index
    %c7 = arith.constant 7 : index
    %c0_162 = arith.constant 0 : index
    %176 = vector.load %arg11[%c0_160, %c0_161, %c7, %c0_162] : memref<1x6x8x40xf32, #tpu.memory_space<vmem>>, vector<1x6x1x40xf32>
    %177 = vector.shape_cast %176 : vector<1x6x1x40xf32> to vector<6x40xf32>
    %178 = vector.shape_cast %175 : vector<6x40xf32> to vector<1x6x1x40xf32>
    tpu.vector_store %arg11[%c0_160, %c0_161, %c7, %c0_162], %178 {strides = array<i32>} : memref<1x6x8x40xf32, #tpu.memory_space<vmem>>, vector<1x6x1x40xf32>,
    return
  }
  func.func @transform_0(%arg0: i32, %arg1: i32, %arg2: memref<44xi32, #tpu.memory_space<smem>>) -> (i32, i32, i32, i32) {
    %c0_i32 = arith.constant 0 : i32
    %c0_i32_0 = arith.constant 0 : i32
    %c0_i32_1 = arith.constant 0 : i32
    %c0_i32_2 = arith.constant 0 : i32
    return %arg0, %c0_i32, %c0_i32_0, %c0_i32_1 : i32, i32, i32, i32
  }
  func.func @transform_1(%arg0: i32, %arg1: i32, %arg2: memref<44xi32, #tpu.memory_space<smem>>) -> (i32, i32) {
    %c0_i32 = arith.constant 0 : i32
    %c0_i32_0 = arith.constant 0 : i32
    %c0_i32_1 = arith.constant 0 : i32
    return %c0_i32, %c0_i32_0 : i32, i32
  }
  func.func @transform_2(%arg0: i32, %arg1: i32, %arg2: memref<44xi32, #tpu.memory_space<smem>>) -> (i32, i32, i32, i32) {
    %c0_i32 = arith.constant 0 : i32
    %c0_i32_0 = arith.constant 0 : i32
    %c0_i32_1 = arith.constant 0 : i32
    %c0_i32_2 = arith.constant 0 : i32
    %c0_i32_3 = arith.constant 0 : i32
    return %c0_i32, %c0_i32_0, %c0_i32_1, %c0_i32_2 : i32, i32, i32, i32
  }
  func.func @transform_3(%arg0: i32, %arg1: i32, %arg2: memref<44xi32, #tpu.memory_space<smem>>) -> (i32, i32, i32) {
    %c0_i32 = arith.constant 0 : i32
    %c0_i32_0 = arith.constant 0 : i32
    %c0_i32_1 = arith.constant 0 : i32
    %c0_i32_2 = arith.constant 0 : i32
    return %c0_i32, %c0_i32_0, %c0_i32_1 : i32, i32, i32
  }
  func.func @transform_4(%arg0: i32, %arg1: i32, %arg2: memref<44xi32, #tpu.memory_space<smem>>) -> (i32, i32, i32, i32) {
    %c0_i32 = arith.constant 0 : i32
    %c0_i32_0 = arith.constant 0 : i32
    %c0_i32_1 = arith.constant 0 : i32
    %c0_i32_2 = arith.constant 0 : i32
    %c0_i32_3 = arith.constant 0 : i32
    return %c0_i32, %c0_i32_0, %c0_i32_1, %c0_i32_2 : i32, i32, i32, i32
  }
  func.func @transform_5(%arg0: i32, %arg1: i32, %arg2: memref<44xi32, #tpu.memory_space<smem>>) -> (i32, i32, i32) {
    %c0_i32 = arith.constant 0 : i32
    %c0_i32_0 = arith.constant 0 : i32
    %c0_i32_1 = arith.constant 0 : i32
    %c0_i32_2 = arith.constant 0 : i32
    return %c0_i32, %c0_i32_0, %c0_i32_1 : i32, i32, i32
  }
  func.func @transform_6(%arg0: i32, %arg1: i32, %arg2: memref<44xi32, #tpu.memory_space<smem>>) -> (i32, i32) {
    %c0_i32 = arith.constant 0 : i32
    %c0_i32_0 = arith.constant 0 : i32
    %c0_i32_1 = arith.constant 0 : i32
    return %c0_i32, %c0_i32_0 : i32, i32
  }
  func.func @transform_7(%arg0: i32, %arg1: i32, %arg2: memref<44xi32, #tpu.memory_space<smem>>) -> (i32, i32) {
    %c0_i32 = arith.constant 0 : i32
    %c0_i32_0 = arith.constant 0 : i32
    %c0_i32_1 = arith.constant 0 : i32
    return %c0_i32, %c0_i32_0 : i32, i32
  }
  func.func @transform_8(%arg0: i32, %arg1: i32, %arg2: memref<44xi32, #tpu.memory_space<smem>>) -> (i32, i32, i32, i32) {
    %c0_i32 = arith.constant 0 : i32
    %c0_i32_0 = arith.constant 0 : i32
    %c0_i32_1 = arith.constant 0 : i32
    return %arg0, %c0_i32, %arg1, %c0_i32_0 : i32, i32, i32, i32
  }
}

</mosaic_0001>

<llo_original>
// kernel: tpu_custom_call.1
$region0: #{tpu_custom_call.1}
  #allocation0 [shape = 'u32[]', space=smem, size = 0x4, offset = 0x4, fixed_abs, tag = 'smem constant byte address 0x4 - core index']
  #allocation1 [shape = 'u32[144,128]{1,0:T(1,128)}', space=vmem, size = 0x12000, scoped, tag = 'internal scratch']
  #allocation2 [shape = 'f32[12,42,4]{2,1,0:T(8,128)}', space=vmem, size = 0x48000, scoped, tag = 'scratch operand']
  #allocation3 [shape = 'f32[10,42,4]{2,1,0:T(8,128)}', space=vmem, size = 0x3c000, scoped, tag = 'scratch operand']
  #allocation4 [shape = 's32[1]{0}', space=sflag, size = 0x4, scoped, tag = 'scoped memory for tpu_custom_call.1']
  #allocation5 [shape = 'u8[512]{0}', space=smem, size = 0x200, scoped, tag = 'prefetched SMEM operand 0']
  %s0 = inlined_call_operand.vmem [shape: s32[44], index: 0, kind: input, shape index: {}]
  %s1 = inlined_call_operand.vmem [shape: f32[2,16,16,4], index: 1, kind: input, shape index: {}]
  %s2 = inlined_call_operand.vmem [shape: f32[42,16], index: 2, kind: input, shape index: {}]
  %s3 = inlined_call_operand.vmem [shape: f32[3,3,4,4], index: 3, kind: input, shape index: {}]
  %s4 = inlined_call_operand.vmem [shape: f32[1,1,4], index: 4, kind: input, shape index: {}]
  %s5 = inlined_call_operand.vmem [shape: f32[3,3,4,4], index: 5, kind: input, shape index: {}]
  %s6 = inlined_call_operand.vmem [shape: f32[1,1,4], index: 6, kind: input, shape index: {}]
  %s7 = inlined_call_operand.vmem [shape: f32[6,4], index: 7, kind: input, shape index: {}]
  %s8 = inlined_call_operand.vmem [shape: f32[6,1], index: 8, kind: input, shape index: {}]
  %s9 = inlined_call_operand.hbm [shape: f32[2,6,40,40], index: 9, kind: output, shape index: {}]
  %s10 = sld [smem:[#allocation0]]
  $region72: #{tpu_custom_call.1} parent=0
    _
  %s12 = ssub.s32 1, %s10
  %s13 = scalar_select 0, %s12, %s10
  %s14 = sshll.u32 %s0, 4
  %s15 = int_to_ptr.vmem [resolvable:$true] %s14
  %17 = dma.vmem_to_smem %s15, 16, [#allocation5], [#allocation4]
  %18 = dma.done [#allocation4], 16
  %19 = sfence
  $region1: #{tpu_custom_call.1} parent=0
    #allocation6 [shape = 'u8[49152]{0}', space=vmem, size = 0xc000, scoped, tag = 'output window, operand 0']
    #allocation7 [shape = 's32[2]{0}', space=sflag, size = 0x8, scoped, tag = 'scoped memory for tpu_custom_call.1']
    %20 = vsyncpa [#allocation7], 0
    %s21 = scalar_lea.sflag [#allocation7], 1
    %22 = vsyncpa %s21, 0
    loop: start=0, step=1, limit=12
    $region2: #{tpu_custom_call.1} parent=1 // loop_pre_header
      _
    $region3: #{tpu_custom_call.1} parent=1 // loop_header
      %s24 = sphi 0, %s28
      %p25 = scmp.ge.s32.totalorder %s24, 12
      %s31 = sphi 0, %s43
      %s32 = sphi 0, %s39
      %s33 = sphi 0, %s31
      %s34 = sphi 0, %s32
      %s35 = sphi 0, %s33
      %s36 = sphi 0, %s34
      %s46 = sphi 0, %s48
      %s49 = sphi 0, %s46
      %s50 = sphi 0, %s49
      %s66 = sphi 0, %s50
      %s70 = sphi 0, %s70
      %s72 = sphi 0, %s70
      %s73 = sphi 0, %s72
      %s87 = sphi 0, %s73
      %s91 = sphi 0, %s91
      %s93 = sphi 0, %s91
      %s94 = sphi 0, %s93
      %s108 = sphi 0, %s94
      %s112 = sphi 0, %s112
      %s114 = sphi 0, %s112
      %s115 = sphi 0, %s114
      %s129 = sphi 0, %s115
      %s133 = sphi 0, %s133
      %s135 = sphi 0, %s133
      %s136 = sphi 0, %s135
      %s150 = sphi 0, %s136
      %s154 = sphi 0, %s154
      %s156 = sphi 0, %s154
      %s157 = sphi 0, %s156
      %s171 = sphi 0, %s157
      %s175 = sphi 0, %s175
      %s177 = sphi 0, %s175
      %s178 = sphi 0, %s177
      %s192 = sphi 0, %s178
      %s196 = sphi 0, %s196
      %s198 = sphi 0, %s196
      %s199 = sphi 0, %s198
      %s213 = sphi 0, %s199
      %s221 = sphi 0, %s223
      %s224 = sphi 0, %s221
      %s225 = sphi 0, %s224
      %s241 = sphi 0, %s225
    $region4: #{tpu_custom_call.1} parent=1 // loop_header_branch
      %27 = sbr.rel (%p25) target = $region8
    $region5: #{tpu_custom_call.1} parent=1 // loop_body
      %s29 = ssub.s32 %s24, 1
      %s30 = ssub.s32 %s24, 2
      %s37 = sadd.s32 1, %s32
      %p38 = scmp.ge.s32.totalorder %s37, 5
      %s39 = scalar_select %p38, 0, %s37
      %s40 = sadd.s32 1, %s31
      %s41 = scalar_select %p38, %s40, %s31
      %p42 = scmp.ge.s32.totalorder %s41, 2
      %s43 = scalar_select %p42, 0, %s41
      %s44 = ssub.s32 %s31, %s43
      %p45 = scmp.eq.s32.totalorder %s44, 0
      %s47 = sadd.s32 %s46, 1
      %s48 = scalar_select %p45, %s46, %s47
      %p51 = pneg %p45
      %p52 = scmp.eq.s32.totalorder %s24, 9
      %p53 = por %p51, %p52
      %p54 = scmp.ne.s32.totalorder %s46, %s49
      %p55 = scmp.eq.s32.totalorder %s24, 0
      %p56 = por %p54, %p55
      %p57 = scmp.ne.s32.totalorder %s46, %s49
      %p58 = scmp.eq.s32.totalorder %s29, 9
      %p59 = por %p57, %p58
      %p60 = scmp.ne.s32.totalorder %s49, %s50
      %p61 = scmp.eq.s32.totalorder %s29, 0
      %p62 = por %p60, %p61
      %p63 = scmp.ne.s32.totalorder %s49, %s50
      %p64 = scmp.eq.s32.totalorder %s30, 9
      %p65 = por %p63, %p64
      %p67 = scmp.ne.s32.totalorder %s50, %s66
      %p68 = scmp.eq.s32.totalorder %s30, 0
      %p69 = por %p67, %p68
      %s71 = sadd.s32 %s70, 1
      %p74 = scmp.eq.s32.totalorder %s24, 9
      %p75 = scmp.ne.s32.totalorder %s70, %s72
      %p76 = scmp.eq.s32.totalorder %s24, 0
      %p77 = por %p75, %p76
      %p78 = scmp.ne.s32.totalorder %s70, %s72
      %p79 = scmp.eq.s32.totalorder %s29, 9
      %p80 = por %p78, %p79
      %p81 = scmp.ne.s32.totalorder %s72, %s73
      %p82 = scmp.eq.s32.totalorder %s29, 0
      %p83 = por %p81, %p82
      %p84 = scmp.ne.s32.totalorder %s72, %s73
      %p85 = scmp.eq.s32.totalorder %s30, 9
      %p86 = por %p84, %p85
      %p88 = scmp.ne.s32.totalorder %s73, %s87
      %p89 = scmp.eq.s32.totalorder %s30, 0
      %p90 = por %p88, %p89
      %s92 = sadd.s32 %s91, 1
      %p95 = scmp.eq.s32.totalorder %s24, 9
      %p96 = scmp.ne.s32.totalorder %s91, %s93
      %p97 = scmp.eq.s32.totalorder %s24, 0
      %p98 = por %p96, %p97
      %p99 = scmp.ne.s32.totalorder %s91, %s93
      %p100 = scmp.eq.s32.totalorder %s29, 9
      %p101 = por %p99, %p100
      %p102 = scmp.ne.s32.totalorder %s93, %s94
      %p103 = scmp.eq.s32.totalorder %s29, 0
      %p104 = por %p102, %p103
      %p105 = scmp.ne.s32.totalorder %s93, %s94
      %p106 = scmp.eq.s32.totalorder %s30, 9
      %p107 = por %p105, %p106
      %p109 = scmp.ne.s32.totalorder %s94, %s108
      %p110 = scmp.eq.s32.totalorder %s30, 0
      %p111 = por %p109, %p110
      %s113 = sadd.s32 %s112, 1
      %p116 = scmp.eq.s32.totalorder %s24, 9
      %p117 = scmp.ne.s32.totalorder %s112, %s114
      %p118 = scmp.eq.s32.totalorder %s24, 0
      %p119 = por %p117, %p118
      %p120 = scmp.ne.s32.totalorder %s112, %s114
      %p121 = scmp.eq.s32.totalorder %s29, 9
      %p122 = por %p120, %p121
      %p123 = scmp.ne.s32.totalorder %s114, %s115
      %p124 = scmp.eq.s32.totalorder %s29, 0
      %p125 = por %p123, %p124
      %p126 = scmp.ne.s32.totalorder %s114, %s115
      %p127 = scmp.eq.s32.totalorder %s30, 9
      %p128 = por %p126, %p127
      %p130 = scmp.ne.s32.totalorder %s115, %s129
      %p131 = scmp.eq.s32.totalorder %s30, 0
      %p132 = por %p130, %p131
      %s134 = sadd.s32 %s133, 1
      %p137 = scmp.eq.s32.totalorder %s24, 9
      %p138 = scmp.ne.s32.totalorder %s133, %s135
      %p139 = scmp.eq.s32.totalorder %s24, 0
      %p140 = por %p138, %p139
      %p141 = scmp.ne.s32.totalorder %s133, %s135
      %p142 = scmp.eq.s32.totalorder %s29, 9
      %p143 = por %p141, %p142
      %p144 = scmp.ne.s32.totalorder %s135, %s136
      %p145 = scmp.eq.s32.totalorder %s29, 0
      %p146 = por %p144, %p145
      %p147 = scmp.ne.s32.totalorder %s135, %s136
      %p148 = scmp.eq.s32.totalorder %s30, 9
      %p149 = por %p147, %p148
      %p151 = scmp.ne.s32.totalorder %s136, %s150
      %p152 = scmp.eq.s32.totalorder %s30, 0
      %p153 = por %p151, %p152
      %s155 = sadd.s32 %s154, 1
      %p158 = scmp.eq.s32.totalorder %s24, 9
      %p159 = scmp.ne.s32.totalorder %s154, %s156
      %p160 = scmp.eq.s32.totalorder %s24, 0
      %p161 = por %p159, %p160
      %p162 = scmp.ne.s32.totalorder %s154, %s156
      %p163 = scmp.eq.s32.totalorder %s29, 9
      %p164 = por %p162, %p163
      %p165 = scmp.ne.s32.totalorder %s156, %s157
      %p166 = scmp.eq.s32.totalorder %s29, 0
      %p167 = por %p165, %p166
      %p168 = scmp.ne.s32.totalorder %s156, %s157
      %p169 = scmp.eq.s32.totalorder %s30, 9
      %p170 = por %p168, %p169
      %p172 = scmp.ne.s32.totalorder %s157, %s171
      %p173 = scmp.eq.s32.totalorder %s30, 0
      %p174 = por %p172, %p173
      %s176 = sadd.s32 %s175, 1
      %p179 = scmp.eq.s32.totalorder %s24, 9
      %p180 = scmp.ne.s32.totalorder %s175, %s177
      %p181 = scmp.eq.s32.totalorder %s24, 0
      %p182 = por %p180, %p181
      %p183 = scmp.ne.s32.totalorder %s175, %s177
      %p184 = scmp.eq.s32.totalorder %s29, 9
      %p185 = por %p183, %p184
      %p186 = scmp.ne.s32.totalorder %s177, %s178
      %p187 = scmp.eq.s32.totalorder %s29, 0
      %p188 = por %p186, %p187
      %p189 = scmp.ne.s32.totalorder %s177, %s178
      %p190 = scmp.eq.s32.totalorder %s30, 9
      %p191 = por %p189, %p190
      %p193 = scmp.ne.s32.totalorder %s178, %s192
      %p194 = scmp.eq.s32.totalorder %s30, 0
      %p195 = por %p193, %p194
      %s197 = sadd.s32 %s196, 1
      %p200 = scmp.eq.s32.totalorder %s24, 9
      %p201 = scmp.ne.s32.totalorder %s196, %s198
      %p202 = scmp.eq.s32.totalorder %s24, 0
      %p203 = por %p201, %p202
      %p204 = scmp.ne.s32.totalorder %s196, %s198
      %p205 = scmp.eq.s32.totalorder %s29, 9
      %p206 = por %p204, %p205
      %p207 = scmp.ne.s32.totalorder %s198, %s199
      %p208 = scmp.eq.s32.totalorder %s29, 0
      %p209 = por %p207, %p208
      %p210 = scmp.ne.s32.totalorder %s198, %s199
      %p211 = scmp.eq.s32.totalorder %s30, 9
      %p212 = por %p210, %p211
      %p214 = scmp.ne.s32.totalorder %s199, %s213
      %p215 = scmp.eq.s32.totalorder %s30, 0
      %p216 = por %p214, %p215
      %s217 = ssub.s32 %s31, %s43
      %s218 = ssub.s32 %s32, %s39
      %s219 = sor.u32 %s217, %s218
      %p220 = scmp.eq.s32.totalorder %s219, 0
      %s222 = sadd.s32 %s221, 1
      %s223 = scalar_select %p220, %s221, %s222
      %p226 = pneg %p220
      %p227 = scmp.eq.s32.totalorder %s24, 9
      %p228 = por %p226, %p227
      %p229 = scmp.ne.s32.totalorder %s221, %s224
      %p230 = scmp.eq.s32.totalorder %s24, 0
      %p231 = por %p229, %p230
      %p232 = scmp.ne.s32.totalorder %s221, %s224
      %p233 = scmp.eq.s32.totalorder %s29, 9
      %p234 = por %p232, %p233
      %p235 = scmp.ne.s32.totalorder %s224, %s225
      %p236 = scmp.eq.s32.totalorder %s29, 0
      %p237 = por %p235, %p236
      %p238 = scmp.ne.s32.totalorder %s224, %s225
      %p239 = scmp.eq.s32.totalorder %s30, 9
      %p240 = por %p238, %p239
      %p242 = scmp.ne.s32.totalorder %s225, %s241
      %p243 = scmp.eq.s32.totalorder %s30, 0
      %p244 = por %p242, %p243
      %p245 = scmp.le.s32.totalorder 1, %s24
      %p246 = scmp.lt.s32.totalorder %s24, 11
      %p247 = pnand %p245, %p246
      %p248 = pneg %p247
      // Predicated region
      $region9: #{tpu_custom_call.1} parent=5 // pred_check
        _
      $region10: #{tpu_custom_call.1} parent=5 // pred_check_branch
        %250 = sbr.rel (%p247) target = $region12
      $region11: #{tpu_custom_call.1} parent=5 // pred_region
        %s251 = ssub.s32 %s24, 1
        // Predicated region
        $region13: #{tpu_custom_call.1} parent=11 // pred_check
          %p252 = pneg %p83
        $region14: #{tpu_custom_call.1} parent=11 // pred_check_branch
          %254 = sbr.rel (%p252) target = $region16
        $region15: #{tpu_custom_call.1} parent=11 // pred_region
          _
        $region16: #{tpu_custom_call.1} parent=11 // pred_fallthru
          _
        // Predicated region
        $region17: #{tpu_custom_call.1} parent=11 // pred_check
          %p255 = pneg %p104
        $region18: #{tpu_custom_call.1} parent=11 // pred_check_branch
          %257 = sbr.rel (%p255) target = $region20
        $region19: #{tpu_custom_call.1} parent=11 // pred_region
          _
        $region20: #{tpu_custom_call.1} parent=11 // pred_fallthru
          _
        // Predicated region
        $region21: #{tpu_custom_call.1} parent=11 // pred_check
          %p258 = pneg %p125
        $region22: #{tpu_custom_call.1} parent=11 // pred_check_branch
          %260 = sbr.rel (%p258) target = $region24
        $region23: #{tpu_custom_call.1} parent=11 // pred_region
          _
        $region24: #{tpu_custom_call.1} parent=11 // pred_fallthru
          _
        // Predicated region
        $region25: #{tpu_custom_call.1} parent=11 // pred_check
          %p261 = pneg %p146
        $region26: #{tpu_custom_call.1} parent=11 // pred_check_branch
          %263 = sbr.rel (%p261) target = $region28
        $region27: #{tpu_custom_call.1} parent=11 // pred_region
          _
        $region28: #{tpu_custom_call.1} parent=11 // pred_fallthru
          _
        // Predicated region
        $region29: #{tpu_custom_call.1} parent=11 // pred_check
          %p264 = pneg %p167
        $region30: #{tpu_custom_call.1} parent=11 // pred_check_branch
          %266 = sbr.rel (%p264) target = $region32
        $region31: #{tpu_custom_call.1} parent=11 // pred_region
          _
        $region32: #{tpu_custom_call.1} parent=11 // pred_fallthru
          _
        // Predicated region
        $region33: #{tpu_custom_call.1} parent=11 // pred_check
          %p267 = pneg %p188
        $region34: #{tpu_custom_call.1} parent=11 // pred_check_branch
          %269 = sbr.rel (%p267) target = $region36
        $region35: #{tpu_custom_call.1} parent=11 // pred_region
          _
        $region36: #{tpu_custom_call.1} parent=11 // pred_fallthru
          _
        // Predicated region
        $region37: #{tpu_custom_call.1} parent=11 // pred_check
          %p270 = pneg %p209
        $region38: #{tpu_custom_call.1} parent=11 // pred_check_branch
          %272 = sbr.rel (%p270) target = $region40
        $region39: #{tpu_custom_call.1} parent=11 // pred_region
          _
        $region40: #{tpu_custom_call.1} parent=11 // pred_fallthru
          _
      $region12: #{tpu_custom_call.1} parent=5 // pred_fallthru
        _
      %p273 = scmp.lt.s32.totalorder %s24, 10
      // Predicated region
      $region41: #{tpu_custom_call.1} parent=5 // pred_check
        %p274 = pneg %p273
      $region42: #{tpu_custom_call.1} parent=5 // pred_check_branch
        %276 = sbr.rel (%p274) target = $region44
      $region43: #{tpu_custom_call.1} parent=5 // pred_region
        // Predicated region
        $region45: #{tpu_custom_call.1} parent=43 // pred_check
          %p277 = pneg %p56
        $region46: #{tpu_custom_call.1} parent=43 // pred_check_branch
          %279 = sbr.rel (%p277) target = $region48
        $region47: #{tpu_custom_call.1} parent=43 // pred_region
          %p280 = scmp.lt.s32.totalorder %s31, 1
          %s281 = scalar_select %p280, %s31, 1
          %s282 = smul.addr %s281, 32
          %s283 = smul.addr %s282, 8
          %s284 = scalar_lea.vmem %s1, %s283
        $region48: #{tpu_custom_call.1} parent=43 // pred_fallthru
          _
      $region44: #{tpu_custom_call.1} parent=5 // pred_fallthru
        _
      %p285 = scmp.le.s32.totalorder 1, %s24
      %p286 = scmp.lt.s32.totalorder %s24, 11
      %p287 = pnand %p285, %p286
      %p288 = pneg %p287
      // Predicated region
      $region49: #{tpu_custom_call.1} parent=5 // pred_check
        _
      $region50: #{tpu_custom_call.1} parent=5 // pred_check_branch
        %290 = sbr.rel (%p287) target = $region52
      $region51: #{tpu_custom_call.1} parent=5 // pred_region
        %s291 = ssub.s32 %s24, 1
        %p292 = scmp.lt.s32.totalorder %s33, 1
        %s293 = scalar_select %p292, %s33, 1
        %s294 = smul.addr %s293, 32
        %s295 = smul.addr %s294, 8
        %s296 = scalar_lea.vmem %s1, %s295
        %p297 = pneg %p62
        %p298 = pneg %p59
        %p299 = pneg %p83
        %p300 = pneg %p80
        %p301 = pneg %p104
        %p302 = pneg %p101
        %p303 = pneg %p125
        %p304 = pneg %p122
        %p305 = pneg %p146
        %p306 = pneg %p143
        %p307 = pneg %p167
        %p308 = pneg %p164
        %p309 = pneg %p188
        %p310 = pneg %p185
        %p311 = pneg %p209
        %p312 = pneg %p206
        %p313 = pneg %p237
        %p314 = pneg %p234
        %s315 = sand.u32 %s224, 1
        %s316 = scalar_lea.sflag [#allocation7], %s315
        %s317 = sand.u32 %s224, 1
        %s318 = smul.addr %s317, 48
        %s319 = scalar_lea.vmem [#allocation6], %s318
        %p320 = scmp.lt.s32.totalorder %s33, 1
        %s321 = scalar_select %p320, %s33, 1
        %s322 = smul.addr %s321, 32
        %s323 = smul.addr %s322, 8
        %s324 = scalar_lea.vmem %s1, %s323
        %s325 = smul.u32 %s34, 8
        %v326 = vld [vmem:[%s2] sm:$0xff]
        %v327 = vld [vmem:[%s2 + $0x8] sm:$0xff]
        %v328 = vld [vmem:[%s2 + $0x10] sm:$0xff]
        %v329 = vld [vmem:[%s2 + $0x18] sm:$0xff]
        %v330 = vld [vmem:[%s2 + $0x20] sm:$0xff]
        %v331 = vld [vmem:[%s2 + $0x28] sm:$0x3]
        loop: start=0, step=1, limit=12
        $region53: #{tpu_custom_call.1} parent=51 // loop_pre_header
          _
        $region54: #{tpu_custom_call.1} parent=51 // loop_header
          %s333 = sphi 0, %s337
          %p334 = scmp.ge.s32.totalorder %s333, 12
        $region55: #{tpu_custom_call.1} parent=51 // loop_header_branch
          %336 = sbr.rel (%p334) target = $region59
        $region56: #{tpu_custom_call.1} parent=51 // loop_body
          %s338 = sadd.s32 %s325, %s333
          %s339 = sld [smem:[#allocation5 + %s338]]
          %p340 = scmp.ge.s32.totalorder %s339, 0
          %s341 = scalar_select %p340, 1, 0
          %s342 = scvt.s32.f32 %s341
          %p343 = scmp.gt.s32.totalorder %s339, 0
          %s344 = scalar_select %p343, %s339, 0
          %s345 = smul.u32 %s344, 16
          %s346 = scalar_lea.vmem %s324, %s345
          %v347 = vld [vmem:[%s346] sm:$0xff]
          %v348 = vld [vmem:[%s346 + $0x8] sm:$0xff]
          %vm349 = vcmask 130048
          %v351 = vsel %vm349, %v326, 0
          %v354 = vsel %vm349, %v327, 0
          %v357 = vsel %vm349, %v328, 0
          %v360 = vsel %vm349, %v329, 0
          %v363 = vsel %vm349, %v330, 0
          %v366 = vsel %vm349, %v331, 0
          %368 = vmatprep.subr.mxu0 0.0
          %369 = vmatpush1.msra.mxu0 %v347
          %370 = vmatprep.subr.mxu0 0.0
          %371 = vmatpush1.msra.mxu0 %v348
          %372 = vmatprep.subr.mxu0 0.0
          %373 = vmatpush1.msra.mxu0 0.0
          %374 = vmatprep.subr.mxu0 0.0
          %375 = vmatpush1.msra.mxu0 0.0
          %376 = vmatprep.subr.mxu0 0.0
          %377 = vmatpush1.msra.mxu0 0.0
          %378 = vmatprep.subr.mxu0 0.0
          %379 = vmatpush1.msra.mxu0 0.0
          %380 = vmatprep.subr.mxu0 0.0
          %381 = vmatpush1.msra.mxu0 0.0
          %382 = vmatprep.subr.mxu0 0.0
          %383 = vmatpush1.msra.mxu0 0.0
          %384 = vmatprep.subr.mxu0 0.0
          %385 = vmatpush1.msra.mxu0 0.0
          %386 = vmatprep.subr.mxu0 0.0
          %387 = vmatpush1.msra.mxu0 0.0
          %388 = vmatprep.subr.mxu0 0.0
          %389 = vmatpush1.msra.mxu0 0.0
          %390 = vmatprep.subr.mxu0 0.0
          %391 = vmatpush1.msra.mxu0 0.0
          %392 = vmatprep.subr.mxu0 0.0
          %393 = vmatpush1.msra.mxu0 0.0
          %394 = vmatprep.subr.mxu0 0.0
          %395 = vmatpush1.msra.mxu0 0.0
          %396 = vmatprep.subr.mxu0 0.0
          %397 = vmatpush1.msra.mxu0 0.0
          %398 = vmatprep.subr.mxu0 0.0
          %399 = vmatpush1.msra.mxu0 0.0
          %400 = vmatprep.subr.mxu0 0.0
          %401 = vmatpush1.msra.mxu0 0.0
          %402 = vmatprep.subr.mxu0 0.0
          %403 = vmatpush1.msra.mxu0 0.0
          %404 = vmatprep.subr.mxu0 0.0
          %405 = vmatpush1.msra.mxu0 0.0
          %406 = vmatprep.subr.mxu0 0.0
          %407 = vmatpush1.msra.mxu0 0.0
          %408 = vmatprep.subr.mxu0 0.0
          %409 = vmatpush1.msra.mxu0 0.0
          %410 = vmatprep.subr.mxu0 0.0
          %411 = vmatpush1.msra.mxu0 0.0
          %412 = vmatprep.subr.mxu0 0.0
          %413 = vmatpush1.msra.mxu0 0.0
          %414 = vmatprep.subr.mxu0 0.0
          %415 = vmatpush1.msra.mxu0 0.0
          %416 = vmatprep.subr.mxu0 0.0
          %417 = vmatpush1.msra.mxu0 0.0
          %418 = vmatprep.subr.mxu0 0.0
          %419 = vmatpush1.msra.mxu0 0.0
          %420 = vmatprep.subr.mxu0 0.0
          %421 = vmatpush1.msra.mxu0 0.0
          %422 = vmatprep.subr.mxu0 0.0
          %423 = vmatpush1.msra.mxu0 0.0
          %424 = vmatprep.subr.mxu0 0.0
          %425 = vmatpush1.msra.mxu0 0.0
          %426 = vmatprep.subr.mxu0 0.0
          %427 = vmatpush1.msra.mxu0 0.0
          %428 = vmatprep.subr.mxu0 0.0
          %429 = vmatpush1.msra.mxu0 0.0
          %430 = vmatprep.subr.mxu0 0.0
          %431 = vmatpush1.msra.mxu0 0.0
          %432 = vmatprep.mubr.f32.mxu0 0.0
          %433 = vmatmul.mubr.f32.gmra.mrb[0].mxu0 %v351
          %v434 = vpop.f32.mrb[0].mxu0
          %v435 = vadd.f32 0.0, %v434
          %v436 = vpop.f32.mrb[0].mxu0
          %437 = vmatprep.mubr.f32.mxu0 0.0
          %438 = vmatmul.mubr.f32.gmra.mrb[0].mxu0 %v354
          %v439 = vpop.f32.mrb[0].mxu0
          %v440 = vadd.f32 0.0, %v439
          %v441 = vpop.f32.mrb[0].mxu0
          %442 = vmatprep.mubr.f32.mxu0 0.0
          %443 = vmatmul.mubr.f32.gmra.mrb[0].mxu0 %v357
          %v444 = vpop.f32.mrb[0].mxu0
          %v445 = vadd.f32 0.0, %v444
          %v446 = vpop.f32.mrb[0].mxu0
          %447 = vmatprep.mubr.f32.mxu0 0.0
          %448 = vmatmul.mubr.f32.gmra.mrb[0].mxu0 %v360
          %v449 = vpop.f32.mrb[0].mxu0
          %v450 = vadd.f32 0.0, %v449
          %v451 = vpop.f32.mrb[0].mxu0
          %452 = vmatprep.mubr.f32.mxu0 0.0
          %453 = vmatmul.mubr.f32.gmra.mrb[0].mxu0 %v363
          %v454 = vpop.f32.mrb[0].mxu0
          %v455 = vadd.f32 0.0, %v454
          %v456 = vpop.f32.mrb[0].mxu0
          %457 = vmatprep.mubr.f32.mxu0 0.0
          %458 = vmatmul.mubr.f32.gmra.mrb[0].mxu0 %v366
          %v459 = vpop.f32.mrb[0].mxu0
          %v460 = vadd.f32 0.0, %v459
          %v461 = vpop.f32.mrb[0].mxu0
          %462 = vdwg.mxu0
          %v463 = vstv %s342
          %v464 = vmul.f32 %v435, %v463
          %v465 = vmul.f32 %v440, %v463
          %v466 = vmul.f32 %v445, %v463
          %v467 = vmul.f32 %v450, %v463
          %v468 = vmul.f32 %v455, %v463
          %v469 = vmul.f32 %v460, %v463
          %s470 = smul.u32 %s333, 48
          %s471 = scalar_lea.vmem [#allocation2], %s470
          %vm472 = vcmask 31744
          %473 = vst.msk [vmem:[%s471] sm:$0xff] %vm472, %v464
          %474 = vst.msk [vmem:[%s471 + $0x8] sm:$0xff] %vm472, %v465
          %475 = vst.msk [vmem:[%s471 + $0x10] sm:$0xff] %vm472, %v466
          %476 = vst.msk [vmem:[%s471 + $0x18] sm:$0xff] %vm472, %v467
          %477 = vst.msk [vmem:[%s471 + $0x20] sm:$0xff] %vm472, %v468
          %vm478 = vcmask 25600
          %479 = vst.msk [vmem:[%s471 + $0x28] sm:$0x3] %vm478, %v469
        $region57: #{tpu_custom_call.1} parent=51 // loop_footer
          %s337 = sadd.s32 1, %s333
        $region58: #{tpu_custom_call.1} parent=51 // loop_footer_branch
          %332 = sbr.rel target = $region54
        $region59: #{tpu_custom_call.1} parent=51 // loop_exit
          _
        %v480 = vld [vmem:[#allocation2] sm:$0xff]
        %v481 = vld [vmem:[#allocation2 + $0x8] sm:$0xff]
        %v482 = vld [vmem:[#allocation2 + $0x10] sm:$0xff]
        %v483 = vld [vmem:[#allocation2 + $0x18] sm:$0xff]
        %v484 = vld [vmem:[#allocation2 + $0x20] sm:$0xff]
        %v485 = vld [vmem:[#allocation2 + $0x30] sm:$0xff]
        %v486 = vld [vmem:[#allocation2 + $0x38] sm:$0xff]
        %v487 = vld [vmem:[#allocation2 + $0x40] sm:$0xff]
        %v488 = vld [vmem:[#allocation2 + $0x48] sm:$0xff]
        %v489 = vld [vmem:[#allocation2 + $0x50] sm:$0xff]
        %v490 = vld [vmem:[#allocation2 + $0x60] sm:$0xff]
        %v491 = vld [vmem:[#allocation2 + $0x68] sm:$0xff]
        %v492 = vld [vmem:[#allocation2 + $0x70] sm:$0xff]
        %v493 = vld [vmem:[#allocation2 + $0x78] sm:$0xff]
        %v494 = vld [vmem:[#allocation2 + $0x80] sm:$0xff]
        %v495 = vld [vmem:[#allocation2 + $0x90] sm:$0xff]
        %v496 = vld [vmem:[#allocation2 + $0x98] sm:$0xff]
        %v497 = vld [vmem:[#allocation2 + $0xa0] sm:$0xff]
        %v498 = vld [vmem:[#allocation2 + $0xa8] sm:$0xff]
        %v499 = vld [vmem:[#allocation2 + $0xb0] sm:$0xff]
        %v500 = vld [vmem:[#allocation2 + $0xc0] sm:$0xff]
        %v501 = vld [vmem:[#allocation2 + $0xc8] sm:$0xff]
        %v502 = vld [vmem:[#allocation2 + $0xd0] sm:$0xff]
        %v503 = vld [vmem:[#allocation2 + $0xd8] sm:$0xff]
        %v504 = vld [vmem:[#allocation2 + $0xe0] sm:$0xff]
        %v505 = vld [vmem:[#allocation2 + $0xf0] sm:$0xff]
        %v506 = vld [vmem:[#allocation2 + $0xf8] sm:$0xff]
        %v507 = vld [vmem:[#allocation2 + $0x100] sm:$0xff]
        %v508 = vld [vmem:[#allocation2 + $0x108] sm:$0xff]
        %v509 = vld [vmem:[#allocation2 + $0x110] sm:$0xff]
        %v510 = vld [vmem:[#allocation2 + $0x120] sm:$0xff]
        %v511 = vld [vmem:[#allocation2 + $0x128] sm:$0xff]
        %v512 = vld [vmem:[#allocation2 + $0x130] sm:$0xff]
        %v513 = vld [vmem:[#allocation2 + $0x138] sm:$0xff]
        %v514 = vld [vmem:[#allocation2 + $0x140] sm:$0xff]
        %v515 = vld [vmem:[#allocation2 + $0x150] sm:$0xff]
        %v516 = vld [vmem:[#allocation2 + $0x158] sm:$0xff]
        %v517 = vld [vmem:[#allocation2 + $0x160] sm:$0xff]
        %v518 = vld [vmem:[#allocation2 + $0x168] sm:$0xff]
        %v519 = vld [vmem:[#allocation2 + $0x170] sm:$0xff]
        %v520 = vld [vmem:[#allocation2 + $0x180] sm:$0xff]
        %v521 = vld [vmem:[#allocation2 + $0x188] sm:$0xff]
        %v522 = vld [vmem:[#allocation2 + $0x190] sm:$0xff]
        %v523 = vld [vmem:[#allocation2 + $0x198] sm:$0xff]
        %v524 = vld [vmem:[#allocation2 + $0x1a0] sm:$0xff]
        %v525 = vld [vmem:[#allocation2 + $0x1b0] sm:$0xff]
        %v526 = vld [vmem:[#allocation2 + $0x1b8] sm:$0xff]
        %v527 = vld [vmem:[#allocation2 + $0x1c0] sm:$0xff]
        %v528 = vld [vmem:[#allocation2 + $0x1c8] sm:$0xff]
        %v529 = vld [vmem:[#allocation2 + $0x1d0] sm:$0xff]
        %v530 = vld [vmem:[#allocation2 + $0x1e0] sm:$0xff]
        %v531 = vld [vmem:[#allocation2 + $0x1e8] sm:$0xff]
        %v532 = vld [vmem:[#allocation2 + $0x1f0] sm:$0xff]
        %v533 = vld [vmem:[#allocation2 + $0x1f8] sm:$0xff]
        %v534 = vld [vmem:[#allocation2 + $0x200] sm:$0xff]
        %v535 = vld [vmem:[#allocation2 + $0x210] sm:$0xff]
        %v536 = vld [vmem:[#allocation2 + $0x218] sm:$0xff]
        %v537 = vld [vmem:[#allocation2 + $0x220] sm:$0xff]
        %v538 = vld [vmem:[#allocation2 + $0x228] sm:$0xff]
        %v539 = vld [vmem:[#allocation2 + $0x230] sm:$0xff]
        %v540 = vld [vmem:[%s3] sm:$0xf]
        %s541 = scalar_lea.vmem %s3, 12
        %v542 = vld [vmem:[%s541] sm:$0xf]
        %vm543 = vcmask 31744
        %v545 = vsel %vm543, %v485, 0
        %v548 = vsel %vm543, %v486, 0
        %v551 = vsel %vm543, %v487, 0
        %v554 = vsel %vm543, %v488, 0
        %v557 = vsel %vm543, %v489, 0
        %v560 = vsel %vm543, %v490, 0
        %v563 = vsel %vm543, %v491, 0
        %v566 = vsel %vm543, %v492, 0
        %v569 = vsel %vm543, %v493, 0
        %v572 = vsel %vm543, %v494, 0
        %v575 = vsel %vm543, %v495, 0
        %v578 = vsel %vm543, %v496, 0
        %v581 = vsel %vm543, %v497, 0
        %v584 = vsel %vm543, %v498, 0
        %v587 = vsel %vm543, %v499, 0
        %v590 = vsel %vm543, %v500, 0
        %v593 = vsel %vm543, %v501, 0
        %v596 = vsel %vm543, %v502, 0
        %v599 = vsel %vm543, %v503, 0
        %v602 = vsel %vm543, %v504, 0
        %v605 = vsel %vm543, %v505, 0
        %v608 = vsel %vm543, %v506, 0
        %v611 = vsel %vm543, %v507, 0
        %v614 = vsel %vm543, %v508, 0
        %v617 = vsel %vm543, %v509, 0
        %v620 = vsel %vm543, %v510, 0
        %v623 = vsel %vm543, %v511, 0
        %v626 = vsel %vm543, %v512, 0
        %v629 = vsel %vm543, %v513, 0
        %v632 = vsel %vm543, %v514, 0
        %v635 = vsel %vm543, %v515, 0
        %v638 = vsel %vm543, %v516, 0
        %v641 = vsel %vm543, %v517, 0
        %v644 = vsel %vm543, %v518, 0
        %v647 = vsel %vm543, %v519, 0
        %v650 = vsel %vm543, %v520, 0
        %v653 = vsel %vm543, %v521, 0
        %v656 = vsel %vm543, %v522, 0
        %v659 = vsel %vm543, %v523, 0
        %v662 = vsel %vm543, %v524, 0
        %v665 = vsel %vm543, %v525, 0
        %v668 = vsel %vm543, %v526, 0
        %v671 = vsel %vm543, %v527, 0
        %v674 = vsel %vm543, %v528, 0
        %v677 = vsel %vm543, %v529, 0
        %v680 = vsel %vm543, %v530, 0
        %v683 = vsel %vm543, %v531, 0
        %v686 = vsel %vm543, %v532, 0
        %v689 = vsel %vm543, %v533, 0
        %v692 = vsel %vm543, %v534, 0
        %v695 = vsel %vm543, %v542, 0
        %697 = vmatprep.subr.mxu0 0.0
        %698 = vmatpush1.xpose.msra.mxu0 %v695
        %699 = vmatprep.subr.mxu0 0.0
        %700 = vmatpush1.xpose.msra.mxu0 0.0
        %701 = vmatprep.subr.mxu0 0.0
        %702 = vmatpush1.xpose.msra.mxu0 0.0
        %703 = vmatprep.subr.mxu0 0.0
        %704 = vmatpush1.xpose.msra.mxu0 0.0
        %705 = vmatprep.subr.mxu0 0.0
        %706 = vmatpush1.xpose.msra.mxu0 0.0
        %707 = vmatprep.subr.mxu0 0.0
        %708 = vmatpush1.xpose.msra.mxu0 0.0
        %709 = vmatprep.subr.mxu0 0.0
        %710 = vmatpush1.xpose.msra.mxu0 0.0
        %711 = vmatprep.subr.mxu0 0.0
        %712 = vmatpush1.xpose.msra.mxu0 0.0
        %713 = vmatprep.subr.mxu0 0.0
        %714 = vmatpush1.xpose.msra.mxu0 0.0
        %715 = vmatprep.subr.mxu0 0.0
        %716 = vmatpush1.xpose.msra.mxu0 0.0
        %717 = vmatprep.subr.mxu0 0.0
        %718 = vmatpush1.xpose.msra.mxu0 0.0
        %719 = vmatprep.subr.mxu0 0.0
        %720 = vmatpush1.xpose.msra.mxu0 0.0
        %721 = vmatprep.subr.mxu0 0.0
        %722 = vmatpush1.xpose.msra.mxu0 0.0
        %723 = vmatprep.subr.mxu0 0.0
        %724 = vmatpush1.xpose.msra.mxu0 0.0
        %725 = vmatprep.subr.mxu0 0.0
        %726 = vmatpush1.xpose.msra.mxu0 0.0
        %727 = vmatprep.subr.mxu0 0.0
        %728 = vmatpush1.xpose.msra.mxu0 0.0
        %729 = vmatprep.subr.mxu0 0.0
        %730 = vmatpush1.xpose.msra.mxu0 0.0
        %731 = vmatprep.subr.mxu0 0.0
        %732 = vmatpush1.xpose.msra.mxu0 0.0
        %733 = vmatprep.subr.mxu0 0.0
        %734 = vmatpush1.xpose.msra.mxu0 0.0
        %735 = vmatprep.subr.mxu0 0.0
        %736 = vmatpush1.xpose.msra.mxu0 0.0
        %737 = vmatprep.subr.mxu0 0.0
        %738 = vmatpush1.xpose.msra.mxu0 0.0
        %739 = vmatprep.subr.mxu0 0.0
        %740 = vmatpush1.xpose.msra.mxu0 0.0
        %741 = vmatprep.subr.mxu0 0.0
        %742 = vmatpush1.xpose.msra.mxu0 0.0
        %743 = vmatprep.subr.mxu0 0.0
        %744 = vmatpush1.xpose.msra.mxu0 0.0
        %745 = vmatprep.subr.mxu0 0.0
        %746 = vmatpush1.xpose.msra.mxu0 0.0
        %747 = vmatprep.subr.mxu0 0.0
        %748 = vmatpush1.xpose.msra.mxu0 0.0
        %749 = vmatprep.subr.mxu0 0.0
        %750 = vmatpush1.xpose.msra.mxu0 0.0
        %751 = vmatprep.subr.mxu0 0.0
        %752 = vmatpush1.xpose.msra.mxu0 0.0
        %753 = vmatprep.subr.mxu0 0.0
        %754 = vmatpush1.xpose.msra.mxu0 0.0
        %755 = vmatprep.subr.mxu0 0.0
        %756 = vmatpush1.xpose.msra.mxu0 0.0
        %757 = vmatprep.subr.mxu0 0.0
        %758 = vmatpush1.xpose.msra.mxu0 0.0
        %759 = vmatprep.subr.mxu0 0.0
        %760 = vmatpush1.xpose.msra.mxu0 0.0
        %761 = vmatprep.mubr.f32.mxu0 0.0
        %762 = vmatmul.mubr.f32.gmra.mrb[0].mxu0 %v545
        %v763 = vpop.f32.mrb[0].mxu0
        %v764 = vadd.f32 0.0, %v763
        %v765 = vpop.f32.mrb[0].mxu0
        %766 = vmatprep.mubr.f32.mxu0 0.0
        %767 = vmatmul.mubr.f32.gmra.mrb[0].mxu0 %v548
        %v768 = vpop.f32.mrb[0].mxu0
        %v769 = vadd.f32 0.0, %v768
        %v770 = vpop.f32.mrb[0].mxu0
        %771 = vmatprep.mubr.f32.mxu0 0.0
        %772 = vmatmul.mubr.f32.gmra.mrb[0].mxu0 %v551
        %v773 = vpop.f32.mrb[0].mxu0
        %v774 = vadd.f32 0.0, %v773
        %v775 = vpop.f32.mrb[0].mxu0
        %776 = vmatprep.mubr.f32.mxu0 0.0
        %777 = vmatmul.mubr.f32.gmra.mrb[0].mxu0 %v554
        %v778 = vpop.f32.mrb[0].mxu0
        %v779 = vadd.f32 0.0, %v778
        %v780 = vpop.f32.mrb[0].mxu0
        %781 = vmatprep.mubr.f32.mxu0 0.0
        %782 = vmatmul.mubr.f32.gmra.mrb[0].mxu0 %v557
        %v783 = vpop.f32.mrb[0].mxu0
        %v784 = vadd.f32 0.0, %v783
        %v785 = vpop.f32.mrb[0].mxu0
        %786 = vmatprep.mubr.f32.mxu0 0.0
        %787 = vmatmul.mubr.f32.gmra.mrb[0].mxu0 %v560
        %v788 = vpop.f32.mrb[0].mxu0
        %v789 = vadd.f32 0.0, %v788
        %v790 = vpop.f32.mrb[0].mxu0
        %791 = vmatprep.mubr.f32.mxu0 0.0
        %792 = vmatmul.mubr.f32.gmra.mrb[0].mxu0 %v563
        %v793 = vpop.f32.mrb[0].mxu0
        %v794 = vadd.f32 0.0, %v793
        %v795 = vpop.f32.mrb[0].mxu0
        %796 = vmatprep.mubr.f32.mxu0 0.0
        %797 = vmatmul.mubr.f32.gmra.mrb[0].mxu0 %v566
        %v798 = vpop.f32.mrb[0].mxu0
        %v799 = vadd.f32 0.0, %v798
        %v800 = vpop.f32.mrb[0].mxu0
        %801 = vmatprep.mubr.f32.mxu0 0.0
        %802 = vmatmul.mubr.f32.gmra.mrb[0].mxu0 %v569
        %v803 = vpop.f32.mrb[0].mxu0
        %v804 = vadd.f32 0.0, %v803
        %v805 = vpop.f32.mrb[0].mxu0
        %806 = vmatprep.mubr.f32.mxu0 0.0
        %807 = vmatmul.mubr.f32.gmra.mrb[0].mxu0 %v572
        %v808 = vpop.f32.mrb[0].mxu0
        %v809 = vadd.f32 0.0, %v808
        %v810 = vpop.f32.mrb[0].mxu0
        %811 = vmatprep.mubr.f32.mxu0 0.0
        %812 = vmatmul.mubr.f32.gmra.mrb[0].mxu0 %v575
        %v813 = vpop.f32.mrb[0].mxu0
        %v814 = vadd.f32 0.0, %v813
        %v815 = vpop.f32.mrb[0].mxu0
        %816 = vmatprep.mubr.f32.mxu0 0.0
        %817 = vmatmul.mubr.f32.gmra.mrb[0].mxu0 %v578
        %v818 = vpop.f32.mrb[0].mxu0
        %v819 = vadd.f32 0.0, %v818
        %v820 = vpop.f32.mrb[0].mxu0
        %821 = vmatprep.mubr.f32.mxu0 0.0
        %822 = vmatmul.mubr.f32.gmra.mrb[0].mxu0 %v581
        %v823 = vpop.f32.mrb[0].mxu0
        %v824 = vadd.f32 0.0, %v823
        %v825 = vpop.f32.mrb[0].mxu0
        %826 = vmatprep.mubr.f32.mxu0 0.0
        %827 = vmatmul.mubr.f32.gmra.mrb[0].mxu0 %v584
        %v828 = vpop.f32.mrb[0].mxu0
        %v829 = vadd.f32 0.0, %v828
        %v830 = vpop.f32.mrb[0].mxu0
        %831 = vmatprep.mubr.f32.mxu0 0.0
        %832 = vmatmul.mubr.f32.gmra.mrb[0].mxu0 %v587
        %v833 = vpop.f32.mrb[0].mxu0
        %v834 = vadd.f32 0.0, %v833
        %v835 = vpop.f32.mrb[0].mxu0
        %836 = vmatprep.mubr.f32.mxu0 0.0
        %837 = vmatmul.mubr.f32.gmra.mrb[0].mxu0 %v590
        %v838 = vpop.f32.mrb[0].mxu0
        %v839 = vadd.f32 0.0, %v838
        %v840 = vpop.f32.mrb[0].mxu0
        %841 = vmatprep.mubr.f32.mxu0 0.0
        %842 = vmatmul.mubr.f32.gmra.mrb[0].mxu0 %v593
        %v843 = vpop.f32.mrb[0].mxu0
        %v844 = vadd.f32 0.0, %v843
        %v845 = vpop.f32.mrb[0].mxu0
        %846 = vmatprep.mubr.f32.mxu0 0.0
        %847 = vmatmul.mubr.f32.gmra.mrb[0].mxu0 %v596
        %v848 = vpop.f32.mrb[0].mxu0
        %v849 = vadd.f32 0.0, %v848
        %v850 = vpop.f32.mrb[0].mxu0
        %851 = vmatprep.mubr.f32.mxu0 0.0
        %852 = vmatmul.mubr.f32.gmra.mrb[0].mxu0 %v599
        %v853 = vpop.f32.mrb[0].mxu0
        %v854 = vadd.f32 0.0, %v853
        %v855 = vpop.f32.mrb[0].mxu0
        %856 = vmatprep.mubr.f32.mxu0 0.0
        %857 = vmatmul.mubr.f32.gmra.mrb[0].mxu0 %v602
        %v858 = vpop.f32.mrb[0].mxu0
        %v859 = vadd.f32 0.0, %v858
        %v860 = vpop.f32.mrb[0].mxu0
        %861 = vmatprep.mubr.f32.mxu0 0.0
        %862 = vmatmul.mubr.f32.gmra.mrb[0].mxu0 %v605
        %v863 = vpop.f32.mrb[0].mxu0
        %v864 = vadd.f32 0.0, %v863
        %v865 = vpop.f32.mrb[0].mxu0
        %866 = vmatprep.mubr.f32.mxu0 0.0
        %867 = vmatmul.mubr.f32.gmra.mrb[0].mxu0 %v608
        %v868 = vpop.f32.mrb[0].mxu0
        %v869 = vadd.f32 0.0, %v868
        %v870 = vpop.f32.mrb[0].mxu0
        %871 = vmatprep.mubr.f32.mxu0 0.0
        %872 = vmatmul.mubr.f32.gmra.mrb[0].mxu0 %v611
        %v873 = vpop.f32.mrb[0].mxu0
        %v874 = vadd.f32 0.0, %v873
        %v875 = vpop.f32.mrb[0].mxu0
        %876 = vmatprep.mubr.f32.mxu0 0.0
        %877 = vmatmul.mubr.f32.gmra.mrb[0].mxu0 %v614
        %v878 = vpop.f32.mrb[0].mxu0
        %v879 = vadd.f32 0.0, %v878
        %v880 = vpop.f32.mrb[0].mxu0
        %881 = vmatprep.mubr.f32.mxu0 0.0
        %882 = vmatmul.mubr.f32.gmra.mrb[0].mxu0 %v617
        %v883 = vpop.f32.mrb[0].mxu0
        %v884 = vadd.f32 0.0, %v883
        %v885 = vpop.f32.mrb[0].mxu0
        %886 = vmatprep.mubr.f32.mxu0 0.0
        %887 = vmatmul.mubr.f32.gmra.mrb[0].mxu0 %v620
        %v888 = vpop.f32.mrb[0].mxu0
        %v889 = vadd.f32 0.0, %v888
        %v890 = vpop.f32.mrb[0].mxu0
        %891 = vmatprep.mubr.f32.mxu0 0.0
        %892 = vmatmul.mubr.f32.gmra.mrb[0].mxu0 %v623
        %v893 = vpop.f32.mrb[0].mxu0
        %v894 = vadd.f32 0.0, %v893
        %v895 = vpop.f32.mrb[0].mxu0
        %896 = vmatprep.mubr.f32.mxu0 0.0
        %897 = vmatmul.mubr.f32.gmra.mrb[0].mxu0 %v626
        %v898 = vpop.f32.mrb[0].mxu0
        %v899 = vadd.f32 0.0, %v898
        %v900 = vpop.f32.mrb[0].mxu0
        %901 = vmatprep.mubr.f32.mxu0 0.0
        %902 = vmatmul.mubr.f32.gmra.mrb[0].mxu0 %v629
        %v903 = vpop.f32.mrb[0].mxu0
        %v904 = vadd.f32 0.0, %v903
        %v905 = vpop.f32.mrb[0].mxu0
        %906 = vmatprep.mubr.f32.mxu0 0.0
        %907 = vmatmul.mubr.f32.gmra.mrb[0].mxu0 %v632
        %v908 = vpop.f32.mrb[0].mxu0
        %v909 = vadd.f32 0.0, %v908
        %v910 = vpop.f32.mrb[0].mxu0
        %911 = vmatprep.mubr.f32.mxu0 0.0
        %912 = vmatmul.mubr.f32.gmra.mrb[0].mxu0 %v635
        %v913 = vpop.f32.mrb[0].mxu0
        %v914 = vadd.f32 0.0, %v913
        %v915 = vpop.f32.mrb[0].mxu0
        %916 = vmatprep.mubr.f32.mxu0 0.0
        %917 = vmatmul.mubr.f32.gmra.mrb[0].mxu0 %v638
        %v918 = vpop.f32.mrb[0].mxu0
        %v919 = vadd.f32 0.0, %v918
        %v920 = vpop.f32.mrb[0].mxu0
        %921 = vmatprep.mubr.f32.mxu0 0.0
        %922 = vmatmul.mubr.f32.gmra.mrb[0].mxu0 %v641
        %v923 = vpop.f32.mrb[0].mxu0
        %v924 = vadd.f32 0.0, %v923
        %v925 = vpop.f32.mrb[0].mxu0
        %926 = vmatprep.mubr.f32.mxu0 0.0
        %927 = vmatmul.mubr.f32.gmra.mrb[0].mxu0 %v644
        %v928 = vpop.f32.mrb[0].mxu0
        %v929 = vadd.f32 0.0, %v928
        %v930 = vpop.f32.mrb[0].mxu0
        %931 = vmatprep.mubr.f32.mxu0 0.0
        %932 = vmatmul.mubr.f32.gmra.mrb[0].mxu0 %v647
        %v933 = vpop.f32.mrb[0].mxu0
        %v934 = vadd.f32 0.0, %v933
        %v935 = vpop.f32.mrb[0].mxu0
        %936 = vmatprep.mubr.f32.mxu0 0.0
        %937 = vmatmul.mubr.f32.gmra.mrb[0].mxu0 %v650
        %v938 = vpop.f32.mrb[0].mxu0
        %v939 = vadd.f32 0.0, %v938
        %v940 = vpop.f32.mrb[0].mxu0
        %941 = vmatprep.mubr.f32.mxu0 0.0
        %942 = vmatmul.mubr.f32.gmra.mrb[0].mxu0 %v653
        %v943 = vpop.f32.mrb[0].mxu0
        %v944 = vadd.f32 0.0, %v943
        %v945 = vpop.f32.mrb[0].mxu0
        %946 = vmatprep.mubr.f32.mxu0 0.0
        %947 = vmatmul.mubr.f32.gmra.mrb[0].mxu0 %v656
        %v948 = vpop.f32.mrb[0].mxu0
        %v949 = vadd.f32 0.0, %v948
        %v950 = vpop.f32.mrb[0].mxu0
        %951 = vmatprep.mubr.f32.mxu0 0.0
        %952 = vmatmul.mubr.f32.gmra.mrb[0].mxu0 %v659
        %v953 = vpop.f32.mrb[0].mxu0
        %v954 = vadd.f32 0.0, %v953
        %v955 = vpop.f32.mrb[0].mxu0
        %956 = vmatprep.mubr.f32.mxu0 0.0
        %957 = vmatmul.mubr.f32.gmra.mrb[0].mxu0 %v662
        %v958 = vpop.f32.mrb[0].mxu0
        %v959 = vadd.f32 0.0, %v958
        %v960 = vpop.f32.mrb[0].mxu0
        %961 = vmatprep.mubr.f32.mxu0 0.0
        %962 = vmatmul.mubr.f32.gmra.mrb[0].mxu0 %v665
        %v963 = vpop.f32.mrb[0].mxu0
        %v964 = vadd.f32 0.0, %v963
        %v965 = vpop.f32.mrb[0].mxu0
        %966 = vmatprep.mubr.f32.mxu0 0.0
        %967 = vmatmul.mubr.f32.gmra.mrb[0].mxu0 %v668
        %v968 = vpop.f32.mrb[0].mxu0
        %v969 = vadd.f32 0.0, %v968
        %v970 = vpop.f32.mrb[0].mxu0
        %971 = vmatprep.mubr.f32.mxu0 0.0
        %972 = vmatmul.mubr.f32.gmra.mrb[0].mxu0 %v671
        %v973 = vpop.f32.mrb[0].mxu0
        %v974 = vadd.f32 0.0, %v973
        %v975 = vpop.f32.mrb[0].mxu0
        %976 = vmatprep.mubr.f32.mxu0 0.0
        %977 = vmatmul.mubr.f32.gmra.mrb[0].mxu0 %v674
        %v978 = vpop.f32.mrb[0].mxu0
        %v979 = vadd.f32 0.0, %v978
        %v980 = vpop.f32.mrb[0].mxu0
        %981 = vmatprep.mubr.f32.mxu0 0.0
        %982 = vmatmul.mubr.f32.gmra.mrb[0].mxu0 %v677
        %v983 = vpop.f32.mrb[0].mxu0
        %v984 = vadd.f32 0.0, %v983
        %v985 = vpop.f32.mrb[0].mxu0
        %986 = vmatprep.mubr.f32.mxu0 0.0
        %987 = vmatmul.mubr.f32.gmra.mrb[0].mxu0 %v680
        %v988 = vpop.f32.mrb[0].mxu0
        %v989 = vadd.f32 0.0, %v988
        %v990 = vpop.f32.mrb[0].mxu0
        %991 = vmatprep.mubr.f32.mxu0 0.0
        %992 = vmatmul.mubr.f32.gmra.mrb[0].mxu0 %v683
        %v993 = vpop.f32.mrb[0].mxu0
        %v994 = vadd.f32 0.0, %v993
        %v995 = vpop.f32.mrb[0].mxu0
        %996 = vmatprep.mubr.f32.mxu0 0.0
        %997 = vmatmul.mubr.f32.gmra.mrb[0].mxu0 %v686
        %v998 = vpop.f32.mrb[0].mxu0
        %v999 = vadd.f32 0.0, %v998
        %v1000 = vpop.f32.mrb[0].mxu0
        %1001 = vmatprep.mubr.f32.mxu0 0.0
        %1002 = vmatmul.mubr.f32.gmra.mrb[0].mxu0 %v689
        %v1003 = vpop.f32.mrb[0].mxu0
        %v1004 = vadd.f32 0.0, %v1003
        %v1005 = vpop.f32.mrb[0].mxu0
        %1006 = vmatprep.mubr.f32.mxu0 0.0
        %1007 = vmatmul.mubr.f32.gmra.mrb[0].mxu0 %v692
        %v1008 = vpop.f32.mrb[0].mxu0
        %v1009 = vadd.f32 0.0, %v1008
        %v1010 = vpop.f32.mrb[0].mxu0
        %1011 = vdwg.mxu0
        %v1013 = vsel %vm543, %v480, 0
        %v1016 = vsel %vm543, %v481, 0
        %v1019 = vsel %vm543, %v482, 0
        %v1022 = vsel %vm543, %v483, 0
        %v1025 = vsel %vm543, %v484, 0
        %v1028 = vsel %vm543, %v540, 0
        %1030 = vmatprep.subr.mxu0 0.0
        %1031 = vmatpush1.xpose.msra.mxu0 %v1028
        %1032 = vmatprep.subr.mxu0 0.0
        %1033 = vmatpush1.xpose.msra.mxu0 0.0
        %1034 = vmatprep.subr.mxu0 0.0
        %1035 = vmatpush1.xpose.msra.mxu0 0.0
        %1036 = vmatprep.subr.mxu0 0.0
        %1037 = vmatpush1.xpose.msra.mxu0 0.0
        %1038 = vmatprep.subr.mxu0 0.0
        %1039 = vmatpush1.xpose.msra.mxu0 0.0
        %1040 = vmatprep.subr.mxu0 0.0
        %1041 = vmatpush1.xpose.msra.mxu0 0.0
        %1042 = vmatprep.subr.mxu0 0.0
        %1043 = vmatpush1.xpose.msra.mxu0 0.0
        %1044 = vmatprep.subr.mxu0 0.0
        %1045 = vmatpush1.xpose.msra.mxu0 0.0
        %1046 = vmatprep.subr.mxu0 0.0
        %1047 = vmatpush1.xpose.msra.mxu0 0.0
        %1048 = vmatprep.subr.mxu0 0.0
        %1049 = vmatpush1.xpose.msra.mxu0 0.0
        %1050 = vmatprep.subr.mxu0 0.0
        %1051 = vmatpush1.xpose.msra.mxu0 0.0
        %1052 = vmatprep.subr.mxu0 0.0
        %1053 = vmatpush1.xpose.msra.mxu0 0.0
        %1054 = vmatprep.subr.mxu0 0.0
        %1055 = vmatpush1.xpose.msra.mxu0 0.0
        %1056 = vmatprep.subr.mxu0 0.0
        %1057 = vmatpush1.xpose.msra.mxu0 0.0
        %1058 = vmatprep.subr.mxu0 0.0
        %1059 = vmatpush1.xpose.msra.mxu0 0.0
        %1060 = vmatprep.subr.mxu0 0.0
        %1061 = vmatpush1.xpose.msra.mxu0 0.0
        %1062 = vmatprep.subr.mxu0 0.0
        %1063 = vmatpush1.xpose.msra.mxu0 0.0
        %1064 = vmatprep.subr.mxu0 0.0
        %1065 = vmatpush1.xpose.msra.mxu0 0.0
        %1066 = vmatprep.subr.mxu0 0.0
        %1067 = vmatpush1.xpose.msra.mxu0 0.0
        %1068 = vmatprep.subr.mxu0 0.0
        %1069 = vmatpush1.xpose.msra.mxu0 0.0
        %1070 = vmatprep.subr.mxu0 0.0
        %1071 = vmatpush1.xpose.msra.mxu0 0.0
        %1072 = vmatprep.subr.mxu0 0.0
        %1073 = vmatpush1.xpose.msra.mxu0 0.0
        %1074 = vmatprep.subr.mxu0 0.0
        %1075 = vmatpush1.xpose.msra.mxu0 0.0
        %1076 = vmatprep.subr.mxu0 0.0
        %1077 = vmatpush1.xpose.msra.mxu0 0.0
        %1078 = vmatprep.subr.mxu0 0.0
        %1079 = vmatpush1.xpose.msra.mxu0 0.0
        %1080 = vmatprep.subr.mxu0 0.0
        %1081 = vmatpush1.xpose.msra.mxu0 0.0
        %1082 = vmatprep.subr.mxu0 0.0
        %1083 = vmatpush1.xpose.msra.mxu0 0.0
        %1084 = vmatprep.subr.mxu0 0.0
        %1085 = vmatpush1.xpose.msra.mxu0 0.0
        %1086 = vmatprep.subr.mxu0 0.0
        %1087 = vmatpush1.xpose.msra.mxu0 0.0
        %1088 = vmatprep.subr.mxu0 0.0
        %1089 = vmatpush1.xpose.msra.mxu0 0.0
        %1090 = vmatprep.subr.mxu0 0.0
        %1091 = vmatpush1.xpose.msra.mxu0 0.0
        %1092 = vmatprep.subr.mxu0 0.0
        %1093 = vmatpush1.xpose.msra.mxu0 0.0
        %1094 = vmatprep.mubr.f32.mxu0 0.0
        %1095 = vmatmul.mubr.f32.gmra.mrb[0].mxu0 %v1013
        %v1096 = vpop.f32.mrb[0].mxu0
        %v1097 = vadd.f32 %v764, %v1096
        %v1098 = vpop.f32.mrb[0].mxu0
        %1099 = vmatprep.mubr.f32.mxu0 0.0
        %1100 = vmatmul.mubr.f32.gmra.mrb[0].mxu0 %v1016
        %v1101 = vpop.f32.mrb[0].mxu0
        %v1102 = vadd.f32 %v769, %v1101
        %v1103 = vpop.f32.mrb[0].mxu0
        %1104 = vmatprep.mubr.f32.mxu0 0.0
        %1105 = vmatmul.mubr.f32.gmra.mrb[0].mxu0 %v1019
        %v1106 = vpop.f32.mrb[0].mxu0
        %v1107 = vadd.f32 %v774, %v1106
        %v1108 = vpop.f32.mrb[0].mxu0
        %1109 = vmatprep.mubr.f32.mxu0 0.0
        %1110 = vmatmul.mubr.f32.gmra.mrb[0].mxu0 %v1022
        %v1111 = vpop.f32.mrb[0].mxu0
        %v1112 = vadd.f32 %v779, %v1111
        %v1113 = vpop.f32.mrb[0].mxu0
        %1114 = vmatprep.mubr.f32.mxu0 0.0
        %1115 = vmatmul.mubr.f32.gmra.mrb[0].mxu0 %v1025
        %v1116 = vpop.f32.mrb[0].mxu0
        %v1117 = vadd.f32 %v784, %v1116
        %v1118 = vpop.f32.mrb[0].mxu0
        %1119 = vmatprep.mubr.f32.mxu0 0.0
        %1120 = vmatmul.mubr.f32.gmra.mrb[0].mxu0 %v545
        %v1121 = vpop.f32.mrb[0].mxu0
        %v1122 = vadd.f32 %v789, %v1121
        %v1123 = vpop.f32.mrb[0].mxu0
        %1124 = vmatprep.mubr.f32.mxu0 0.0
        %1125 = vmatmul.mubr.f32.gmra.mrb[0].mxu0 %v548
        %v1126 = vpop.f32.mrb[0].mxu0
        %v1127 = vadd.f32 %v794, %v1126
        %v1128 = vpop.f32.mrb[0].mxu0
        %1129 = vmatprep.mubr.f32.mxu0 0.0
        %1130 = vmatmul.mubr.f32.gmra.mrb[0].mxu0 %v551
        %v1131 = vpop.f32.mrb[0].mxu0
        %v1132 = vadd.f32 %v799, %v1131
        %v1133 = vpop.f32.mrb[0].mxu0
        %1134 = vmatprep.mubr.f32.mxu0 0.0
        %1135 = vmatmul.mubr.f32.gmra.mrb[0].mxu0 %v554
        %v1136 = vpop.f32.mrb[0].mxu0
        %v1137 = vadd.f32 %v804, %v1136
        %v1138 = vpop.f32.mrb[0].mxu0
        %1139 = vmatprep.mubr.f32.mxu0 0.0
        %1140 = vmatmul.mubr.f32.gmra.mrb[0].mxu0 %v557
        %v1141 = vpop.f32.mrb[0].mxu0
        %v1142 = vadd.f32 %v809, %v1141
        %v1143 = vpop.f32.mrb[0].mxu0
        %1144 = vmatprep.mubr.f32.mxu0 0.0
        %1145 = vmatmul.mubr.f32.gmra.mrb[0].mxu0 %v560
        %v1146 = vpop.f32.mrb[0].mxu0
        %v1147 = vadd.f32 %v814, %v1146
        %v1148 = vpop.f32.mrb[0].mxu0
        %1149 = vmatprep.mubr.f32.mxu0 0.0
        %1150 = vmatmul.mubr.f32.gmra.mrb[0].mxu0 %v563
        %v1151 = vpop.f32.mrb[0].mxu0
        %v1152 = vadd.f32 %v819, %v1151
        %v1153 = vpop.f32.mrb[0].mxu0
        %1154 = vmatprep.mubr.f32.mxu0 0.0
        %1155 = vmatmul.mubr.f32.gmra.mrb[0].mxu0 %v566
        %v1156 = vpop.f32.mrb[0].mxu0
        %v1157 = vadd.f32 %v824, %v1156
        %v1158 = vpop.f32.mrb[0].mxu0
        %1159 = vmatprep.mubr.f32.mxu0 0.0
        %1160 = vmatmul.mubr.f32.gmra.mrb[0].mxu0 %v569
        %v1161 = vpop.f32.mrb[0].mxu0
        %v1162 = vadd.f32 %v829, %v1161
        %v1163 = vpop.f32.mrb[0].mxu0
        %1164 = vmatprep.mubr.f32.mxu0 0.0
        %1165 = vmatmul.mubr.f32.gmra.mrb[0].mxu0 %v572
        %v1166 = vpop.f32.mrb[0].mxu0
        %v1167 = vadd.f32 %v834, %v1166
        %v1168 = vpop.f32.mrb[0].mxu0
        %1169 = vmatprep.mubr.f32.mxu0 0.0
        %1170 = vmatmul.mubr.f32.gmra.mrb[0].mxu0 %v575
        %v1171 = vpop.f32.mrb[0].mxu0
        %v1172 = vadd.f32 %v839, %v1171
        %v1173 = vpop.f32.mrb[0].mxu0
        %1174 = vmatprep.mubr.f32.mxu0 0.0
        %1175 = vmatmul.mubr.f32.gmra.mrb[0].mxu0 %v578
        %v1176 = vpop.f32.mrb[0].mxu0
        %v1177 = vadd.f32 %v844, %v1176
        %v1178 = vpop.f32.mrb[0].mxu0
        %1179 = vmatprep.mubr.f32.mxu0 0.0
        %1180 = vmatmul.mubr.f32.gmra.mrb[0].mxu0 %v581
        %v1181 = vpop.f32.mrb[0].mxu0
        %v1182 = vadd.f32 %v849, %v1181
        %v1183 = vpop.f32.mrb[0].mxu0
        %1184 = vmatprep.mubr.f32.mxu0 0.0
        %1185 = vmatmul.mubr.f32.gmra.mrb[0].mxu0 %v584
        %v1186 = vpop.f32.mrb[0].mxu0
        %v1187 = vadd.f32 %v854, %v1186
        %v1188 = vpop.f32.mrb[0].mxu0
        %1189 = vmatprep.mubr.f32.mxu0 0.0
        %1190 = vmatmul.mubr.f32.gmra.mrb[0].mxu0 %v587
        %v1191 = vpop.f32.mrb[0].mxu0
        %v1192 = vadd.f32 %v859, %v1191
        %v1193 = vpop.f32.mrb[0].mxu0
        %1194 = vmatprep.mubr.f32.mxu0 0.0
        %1195 = vmatmul.mubr.f32.gmra.mrb[0].mxu0 %v590
        %v1196 = vpop.f32.mrb[0].mxu0
        %v1197 = vadd.f32 %v864, %v1196
        %v1198 = vpop.f32.mrb[0].mxu0
        %1199 = vmatprep.mubr.f32.mxu0 0.0
        %1200 = vmatmul.mubr.f32.gmra.mrb[0].mxu0 %v593
        %v1201 = vpop.f32.mrb[0].mxu0
        %v1202 = vadd.f32 %v869, %v1201
        %v1203 = vpop.f32.mrb[0].mxu0
        %1204 = vmatprep.mubr.f32.mxu0 0.0
        %1205 = vmatmul.mubr.f32.gmra.mrb[0].mxu0 %v596
        %v1206 = vpop.f32.mrb[0].mxu0
        %v1207 = vadd.f32 %v874, %v1206
        %v1208 = vpop.f32.mrb[0].mxu0
        %1209 = vmatprep.mubr.f32.mxu0 0.0
        %1210 = vmatmul.mubr.f32.gmra.mrb[0].mxu0 %v599
        %v1211 = vpop.f32.mrb[0].mxu0
        %v1212 = vadd.f32 %v879, %v1211
        %v1213 = vpop.f32.mrb[0].mxu0
        %1214 = vmatprep.mubr.f32.mxu0 0.0
        %1215 = vmatmul.mubr.f32.gmra.mrb[0].mxu0 %v602
        %v1216 = vpop.f32.mrb[0].mxu0
        %v1217 = vadd.f32 %v884, %v1216
        %v1218 = vpop.f32.mrb[0].mxu0
        %1219 = vmatprep.mubr.f32.mxu0 0.0
        %1220 = vmatmul.mubr.f32.gmra.mrb[0].mxu0 %v605
        %v1221 = vpop.f32.mrb[0].mxu0
        %v1222 = vadd.f32 %v889, %v1221
        %v1223 = vpop.f32.mrb[0].mxu0
        %1224 = vmatprep.mubr.f32.mxu0 0.0
        %1225 = vmatmul.mubr.f32.gmra.mrb[0].mxu0 %v608
        %v1226 = vpop.f32.mrb[0].mxu0
        %v1227 = vadd.f32 %v894, %v1226
        %v1228 = vpop.f32.mrb[0].mxu0
        %1229 = vmatprep.mubr.f32.mxu0 0.0
        %1230 = vmatmul.mubr.f32.gmra.mrb[0].mxu0 %v611
        %v1231 = vpop.f32.mrb[0].mxu0
        %v1232 = vadd.f32 %v899, %v1231
        %v1233 = vpop.f32.mrb[0].mxu0
        %1234 = vmatprep.mubr.f32.mxu0 0.0
        %1235 = vmatmul.mubr.f32.gmra.mrb[0].mxu0 %v614
        %v1236 = vpop.f32.mrb[0].mxu0
        %v1237 = vadd.f32 %v904, %v1236
        %v1238 = vpop.f32.mrb[0].mxu0
        %1239 = vmatprep.mubr.f32.mxu0 0.0
        %1240 = vmatmul.mubr.f32.gmra.mrb[0].mxu0 %v617
        %v1241 = vpop.f32.mrb[0].mxu0
        %v1242 = vadd.f32 %v909, %v1241
        %v1243 = vpop.f32.mrb[0].mxu0
        %1244 = vmatprep.mubr.f32.mxu0 0.0
        %1245 = vmatmul.mubr.f32.gmra.mrb[0].mxu0 %v620
        %v1246 = vpop.f32.mrb[0].mxu0
        %v1247 = vadd.f32 %v914, %v1246
        %v1248 = vpop.f32.mrb[0].mxu0
        %1249 = vmatprep.mubr.f32.mxu0 0.0
        %1250 = vmatmul.mubr.f32.gmra.mrb[0].mxu0 %v623
        %v1251 = vpop.f32.mrb[0].mxu0
        %v1252 = vadd.f32 %v919, %v1251
        %v1253 = vpop.f32.mrb[0].mxu0
        %1254 = vmatprep.mubr.f32.mxu0 0.0
        %1255 = vmatmul.mubr.f32.gmra.mrb[0].mxu0 %v626
        %v1256 = vpop.f32.mrb[0].mxu0
        %v1257 = vadd.f32 %v924, %v1256
        %v1258 = vpop.f32.mrb[0].mxu0
        %1259 = vmatprep.mubr.f32.mxu0 0.0
        %1260 = vmatmul.mubr.f32.gmra.mrb[0].mxu0 %v629
        %v1261 = vpop.f32.mrb[0].mxu0
        %v1262 = vadd.f32 %v929, %v1261
        %v1263 = vpop.f32.mrb[0].mxu0
        %1264 = vmatprep.mubr.f32.mxu0 0.0
        %1265 = vmatmul.mubr.f32.gmra.mrb[0].mxu0 %v632
        %v1266 = vpop.f32.mrb[0].mxu0
        %v1267 = vadd.f32 %v934, %v1266
        %v1268 = vpop.f32.mrb[0].mxu0
        %1269 = vmatprep.mubr.f32.mxu0 0.0
        %1270 = vmatmul.mubr.f32.gmra.mrb[0].mxu0 %v635
        %v1271 = vpop.f32.mrb[0].mxu0
        %v1272 = vadd.f32 %v939, %v1271
        %v1273 = vpop.f32.mrb[0].mxu0
        %1274 = vmatprep.mubr.f32.mxu0 0.0
        %1275 = vmatmul.mubr.f32.gmra.mrb[0].mxu0 %v638
        %v1276 = vpop.f32.mrb[0].mxu0
        %v1277 = vadd.f32 %v944, %v1276
        %v1278 = vpop.f32.mrb[0].mxu0
        %1279 = vmatprep.mubr.f32.mxu0 0.0
        %1280 = vmatmul.mubr.f32.gmra.mrb[0].mxu0 %v641
        %v1281 = vpop.f32.mrb[0].mxu0
        %v1282 = vadd.f32 %v949, %v1281
        %v1283 = vpop.f32.mrb[0].mxu0
        %1284 = vmatprep.mubr.f32.mxu0 0.0
        %1285 = vmatmul.mubr.f32.gmra.mrb[0].mxu0 %v644
        %v1286 = vpop.f32.mrb[0].mxu0
        %v1287 = vadd.f32 %v954, %v1286
        %v1288 = vpop.f32.mrb[0].mxu0
        %1289 = vmatprep.mubr.f32.mxu0 0.0
        %1290 = vmatmul.mubr.f32.gmra.mrb[0].mxu0 %v647
        %v1291 = vpop.f32.mrb[0].mxu0
        %v1292 = vadd.f32 %v959, %v1291
        %v1293 = vpop.f32.mrb[0].mxu0
        %1294 = vmatprep.mubr.f32.mxu0 0.0
        %1295 = vmatmul.mubr.f32.gmra.mrb[0].mxu0 %v650
        %v1296 = vpop.f32.mrb[0].mxu0
        %v1297 = vadd.f32 %v964, %v1296
        %v1298 = vpop.f32.mrb[0].mxu0
        %1299 = vmatprep.mubr.f32.mxu0 0.0
        %1300 = vmatmul.mubr.f32.gmra.mrb[0].mxu0 %v653
        %v1301 = vpop.f32.mrb[0].mxu0
        %v1302 = vadd.f32 %v969, %v1301
        %v1303 = vpop.f32.mrb[0].mxu0
        %1304 = vmatprep.mubr.f32.mxu0 0.0
        %1305 = vmatmul.mubr.f32.gmra.mrb[0].mxu0 %v656
        %v1306 = vpop.f32.mrb[0].mxu0
        %v1307 = vadd.f32 %v974, %v1306
        %v1308 = vpop.f32.mrb[0].mxu0
        %1309 = vmatprep.mubr.f32.mxu0 0.0
        %1310 = vmatmul.mubr.f32.gmra.mrb[0].mxu0 %v659
        %v1311 = vpop.f32.mrb[0].mxu0
        %v1312 = vadd.f32 %v979, %v1311
        %v1313 = vpop.f32.mrb[0].mxu0
        %1314 = vmatprep.mubr.f32.mxu0 0.0
        %1315 = vmatmul.mubr.f32.gmra.mrb[0].mxu0 %v662
        %v1316 = vpop.f32.mrb[0].mxu0
        %v1317 = vadd.f32 %v984, %v1316
        %v1318 = vpop.f32.mrb[0].mxu0
        %1319 = vmatprep.mubr.f32.mxu0 0.0
        %1320 = vmatmul.mubr.f32.gmra.mrb[0].mxu0 %v665
        %v1321 = vpop.f32.mrb[0].mxu0
        %v1322 = vadd.f32 %v989, %v1321
        %v1323 = vpop.f32.mrb[0].mxu0
        %1324 = vmatprep.mubr.f32.mxu0 0.0
        %1325 = vmatmul.mubr.f32.gmra.mrb[0].mxu0 %v668
        %v1326 = vpop.f32.mrb[0].mxu0
        %v1327 = vadd.f32 %v994, %v1326
        %v1328 = vpop.f32.mrb[0].mxu0
        %1329 = vmatprep.mubr.f32.mxu0 0.0
        %1330 = vmatmul.mubr.f32.gmra.mrb[0].mxu0 %v671
        %v1331 = vpop.f32.mrb[0].mxu0
        %v1332 = vadd.f32 %v999, %v1331
        %v1333 = vpop.f32.mrb[0].mxu0
        %1334 = vmatprep.mubr.f32.mxu0 0.0
        %1335 = vmatmul.mubr.f32.gmra.mrb[0].mxu0 %v674
        %v1336 = vpop.f32.mrb[0].mxu0
        %v1337 = vadd.f32 %v1004, %v1336
        %v1338 = vpop.f32.mrb[0].mxu0
        %1339 = vmatprep.mubr.f32.mxu0 0.0
        %1340 = vmatmul.mubr.f32.gmra.mrb[0].mxu0 %v677
        %v1341 = vpop.f32.mrb[0].mxu0
        %v1342 = vadd.f32 %v1009, %v1341
        %v1343 = vpop.f32.mrb[0].mxu0
        %1344 = vdwg.mxu0
        %s1345 = scalar_lea.vmem %s3, 24
        %v1346 = vld [vmem:[%s1345] sm:$0xf]
        %v1348 = vsel %vm543, %v535, 0
        %v1351 = vsel %vm543, %v536, 0
        %v1354 = vsel %vm543, %v537, 0
        %v1357 = vsel %vm543, %v538, 0
        %v1360 = vsel %vm543, %v539, 0
        %v1363 = vsel %vm543, %v1346, 0
        %1365 = vmatprep.subr.mxu0 0.0
        %1366 = vmatpush1.xpose.msra.mxu0 %v1363
        %1367 = vmatprep.subr.mxu0 0.0
        %1368 = vmatpush1.xpose.msra.mxu0 0.0
        %1369 = vmatprep.subr.mxu0 0.0
        %1370 = vmatpush1.xpose.msra.mxu0 0.0
        %1371 = vmatprep.subr.mxu0 0.0
        %1372 = vmatpush1.xpose.msra.mxu0 0.0
        %1373 = vmatprep.subr.mxu0 0.0
        %1374 = vmatpush1.xpose.msra.mxu0 0.0
        %1375 = vmatprep.subr.mxu0 0.0
        %1376 = vmatpush1.xpose.msra.mxu0 0.0
        %1377 = vmatprep.subr.mxu0 0.0
        %1378 = vmatpush1.xpose.msra.mxu0 0.0
        %1379 = vmatprep.subr.mxu0 0.0
        %1380 = vmatpush1.xpose.msra.mxu0 0.0
        %1381 = vmatprep.subr.mxu0 0.0
        %1382 = vmatpush1.xpose.msra.mxu0 0.0
        %1383 = vmatprep.subr.mxu0 0.0
        %1384 = vmatpush1.xpose.msra.mxu0 0.0
        %1385 = vmatprep.subr.mxu0 0.0
        %1386 = vmatpush1.xpose.msra.mxu0 0.0
        %1387 = vmatprep.subr.mxu0 0.0
        %1388 = vmatpush1.xpose.msra.mxu0 0.0
        %1389 = vmatprep.subr.mxu0 0.0
        %1390 = vmatpush1.xpose.msra.mxu0 0.0
        %1391 = vmatprep.subr.mxu0 0.0
        %1392 = vmatpush1.xpose.msra.mxu0 0.0
        %1393 = vmatprep.subr.mxu0 0.0
        %1394 = vmatpush1.xpose.msra.mxu0 0.0
        %1395 = vmatprep.subr.mxu0 0.0
        %1396 = vmatpush1.xpose.msra.mxu0 0.0
        %1397 = vmatprep.subr.mxu0 0.0
        %1398 = vmatpush1.xpose.msra.mxu0 0.0
        %1399 = vmatprep.subr.mxu0 0.0
        %1400 = vmatpush1.xpose.msra.mxu0 0.0
        %1401 = vmatprep.subr.mxu0 0.0
        %1402 = vmatpush1.xpose.msra.mxu0 0.0
        %1403 = vmatprep.subr.mxu0 0.0
        %1404 = vmatpush1.xpose.msra.mxu0 0.0
        %1405 = vmatprep.subr.mxu0 0.0
        %1406 = vmatpush1.xpose.msra.mxu0 0.0
        %1407 = vmatprep.subr.mxu0 0.0
        %1408 = vmatpush1.xpose.msra.mxu0 0.0
        %1409 = vmatprep.subr.mxu0 0.0
        %1410 = vmatpush1.xpose.msra.mxu0 0.0
        %1411 = vmatprep.subr.mxu0 0.0
        %1412 = vmatpush1.xpose.msra.mxu0 0.0
        %1413 = vmatprep.subr.mxu0 0.0
        %1414 = vmatpush1.xpose.msra.mxu0 0.0
        %1415 = vmatprep.subr.mxu0 0.0
        %1416 = vmatpush1.xpose.msra.mxu0 0.0
        %1417 = vmatprep.subr.mxu0 0.0
        %1418 = vmatpush1.xpose.msra.mxu0 0.0
        %1419 = vmatprep.subr.mxu0 0.0
        %1420 = vmatpush1.xpose.msra.mxu0 0.0
        %1421 = vmatprep.subr.mxu0 0.0
        %1422 = vmatpush1.xpose.msra.mxu0 0.0
        %1423 = vmatprep.subr.mxu0 0.0
        %1424 = vmatpush1.xpose.msra.mxu0 0.0
        %1425 = vmatprep.subr.mxu0 0.0
        %1426 = vmatpush1.xpose.msra.mxu0 0.0
        %1427 = vmatprep.subr.mxu0 0.0
        %1428 = vmatpush1.xpose.msra.mxu0 0.0
        %1429 = vmatprep.mubr.f32.mxu0 0.0
        %1430 = vmatmul.mubr.f32.gmra.mrb[0].mxu0 %v560
        %v1431 = vpop.f32.mrb[0].mxu0
        %v1432 = vadd.f32 0.0, %v1431
        %v1433 = vpop.f32.mrb[0].mxu0
        %1434 = vmatprep.mubr.f32.mxu0 0.0
        %1435 = vmatmul.mubr.f32.gmra.mrb[0].mxu0 %v563
        %v1436 = vpop.f32.mrb[0].mxu0
        %v1437 = vadd.f32 0.0, %v1436
        %v1438 = vpop.f32.mrb[0].mxu0
        %1439 = vmatprep.mubr.f32.mxu0 0.0
        %1440 = vmatmul.mubr.f32.gmra.mrb[0].mxu0 %v566
        %v1441 = vpop.f32.mrb[0].mxu0
        %v1442 = vadd.f32 0.0, %v1441
        %v1443 = vpop.f32.mrb[0].mxu0
        %1444 = vmatprep.mubr.f32.mxu0 0.0
        %1445 = vmatmul.mubr.f32.gmra.mrb[0].mxu0 %v569
        %v1446 = vpop.f32.mrb[0].mxu0
        %v1447 = vadd.f32 0.0, %v1446
        %v1448 = vpop.f32.mrb[0].mxu0
        %1449 = vmatprep.mubr.f32.mxu0 0.0
        %1450 = vmatmul.mubr.f32.gmra.mrb[0].mxu0 %v572
        %v1451 = vpop.f32.mrb[0].mxu0
        %v1452 = vadd.f32 0.0, %v1451
        %v1453 = vpop.f32.mrb[0].mxu0
        %1454 = vmatprep.mubr.f32.mxu0 0.0
        %1455 = vmatmul.mubr.f32.gmra.mrb[0].mxu0 %v575
        %v1456 = vpop.f32.mrb[0].mxu0
        %v1457 = vadd.f32 0.0, %v1456
        %v1458 = vpop.f32.mrb[0].mxu0
        %1459 = vmatprep.mubr.f32.mxu0 0.0
        %1460 = vmatmul.mubr.f32.gmra.mrb[0].mxu0 %v578
        %v1461 = vpop.f32.mrb[0].mxu0
        %v1462 = vadd.f32 0.0, %v1461
        %v1463 = vpop.f32.mrb[0].mxu0
        %1464 = vmatprep.mubr.f32.mxu0 0.0
        %1465 = vmatmul.mubr.f32.gmra.mrb[0].mxu0 %v581
        %v1466 = vpop.f32.mrb[0].mxu0
        %v1467 = vadd.f32 0.0, %v1466
        %v1468 = vpop.f32.mrb[0].mxu0
        %1469 = vmatprep.mubr.f32.mxu0 0.0
        %1470 = vmatmul.mubr.f32.gmra.mrb[0].mxu0 %v584
        %v1471 = vpop.f32.mrb[0].mxu0
        %v1472 = vadd.f32 0.0, %v1471
        %v1473 = vpop.f32.mrb[0].mxu0
        %1474 = vmatprep.mubr.f32.mxu0 0.0
        %1475 = vmatmul.mubr.f32.gmra.mrb[0].mxu0 %v587
        %v1476 = vpop.f32.mrb[0].mxu0
        %v1477 = vadd.f32 0.0, %v1476
        %v1478 = vpop.f32.mrb[0].mxu0
        %1479 = vmatprep.mubr.f32.mxu0 0.0
        %1480 = vmatmul.mubr.f32.gmra.mrb[0].mxu0 %v590
        %v1481 = vpop.f32.mrb[0].mxu0
        %v1482 = vadd.f32 0.0, %v1481
        %v1483 = vpop.f32.mrb[0].mxu0
        %1484 = vmatprep.mubr.f32.mxu0 0.0
        %1485 = vmatmul.mubr.f32.gmra.mrb[0].mxu0 %v593
        %v1486 = vpop.f32.mrb[0].mxu0
        %v1487 = vadd.f32 0.0, %v1486
        %v1488 = vpop.f32.mrb[0].mxu0
        %1489 = vmatprep.mubr.f32.mxu0 0.0
        %1490 = vmatmul.mubr.f32.gmra.mrb[0].mxu0 %v596
        %v1491 = vpop.f32.mrb[0].mxu0
        %v1492 = vadd.f32 0.0, %v1491
        %v1493 = vpop.f32.mrb[0].mxu0
        %1494 = vmatprep.mubr.f32.mxu0 0.0
        %1495 = vmatmul.mubr.f32.gmra.mrb[0].mxu0 %v599
        %v1496 = vpop.f32.mrb[0].mxu0
        %v1497 = vadd.f32 0.0, %v1496
        %v1498 = vpop.f32.mrb[0].mxu0
        %1499 = vmatprep.mubr.f32.mxu0 0.0
        %1500 = vmatmul.mubr.f32.gmra.mrb[0].mxu0 %v602
        %v1501 = vpop.f32.mrb[0].mxu0
        %v1502 = vadd.f32 0.0, %v1501
        %v1503 = vpop.f32.mrb[0].mxu0
        %1504 = vmatprep.mubr.f32.mxu0 0.0
        %1505 = vmatmul.mubr.f32.gmra.mrb[0].mxu0 %v605
        %v1506 = vpop.f32.mrb[0].mxu0
        %v1507 = vadd.f32 0.0, %v1506
        %v1508 = vpop.f32.mrb[0].mxu0
        %1509 = vmatprep.mubr.f32.mxu0 0.0
        %1510 = vmatmul.mubr.f32.gmra.mrb[0].mxu0 %v608
        %v1511 = vpop.f32.mrb[0].mxu0
        %v1512 = vadd.f32 0.0, %v1511
        %v1513 = vpop.f32.mrb[0].mxu0
        %1514 = vmatprep.mubr.f32.mxu0 0.0
        %1515 = vmatmul.mubr.f32.gmra.mrb[0].mxu0 %v611
        %v1516 = vpop.f32.mrb[0].mxu0
        %v1517 = vadd.f32 0.0, %v1516
        %v1518 = vpop.f32.mrb[0].mxu0
        %1519 = vmatprep.mubr.f32.mxu0 0.0
        %1520 = vmatmul.mubr.f32.gmra.mrb[0].mxu0 %v614
        %v1521 = vpop.f32.mrb[0].mxu0
        %v1522 = vadd.f32 0.0, %v1521
        %v1523 = vpop.f32.mrb[0].mxu0
        %1524 = vmatprep.mubr.f32.mxu0 0.0
        %1525 = vmatmul.mubr.f32.gmra.mrb[0].mxu0 %v617
        %v1526 = vpop.f32.mrb[0].mxu0
        %v1527 = vadd.f32 0.0, %v1526
        %v1528 = vpop.f32.mrb[0].mxu0
        %1529 = vmatprep.mubr.f32.mxu0 0.0
        %1530 = vmatmul.mubr.f32.gmra.mrb[0].mxu0 %v620
        %v1531 = vpop.f32.mrb[0].mxu0
        %v1532 = vadd.f32 0.0, %v1531
        %v1533 = vpop.f32.mrb[0].mxu0
        %1534 = vmatprep.mubr.f32.mxu0 0.0
        %1535 = vmatmul.mubr.f32.gmra.mrb[0].mxu0 %v623
        %v1536 = vpop.f32.mrb[0].mxu0
        %v1537 = vadd.f32 0.0, %v1536
        %v1538 = vpop.f32.mrb[0].mxu0
        %1539 = vmatprep.mubr.f32.mxu0 0.0
        %1540 = vmatmul.mubr.f32.gmra.mrb[0].mxu0 %v626
        %v1541 = vpop.f32.mrb[0].mxu0
        %v1542 = vadd.f32 0.0, %v1541
        %v1543 = vpop.f32.mrb[0].mxu0
        %1544 = vmatprep.mubr.f32.mxu0 0.0
        %1545 = vmatmul.mubr.f32.gmra.mrb[0].mxu0 %v629
        %v1546 = vpop.f32.mrb[0].mxu0
        %v1547 = vadd.f32 0.0, %v1546
        %v1548 = vpop.f32.mrb[0].mxu0
        %1549 = vmatprep.mubr.f32.mxu0 0.0
        %1550 = vmatmul.mubr.f32.gmra.mrb[0].mxu0 %v632
        %v1551 = vpop.f32.mrb[0].mxu0
        %v1552 = vadd.f32 0.0, %v1551
        %v1553 = vpop.f32.mrb[0].mxu0
        %1554 = vmatprep.mubr.f32.mxu0 0.0
        %1555 = vmatmul.mubr.f32.gmra.mrb[0].mxu0 %v635
        %v1556 = vpop.f32.mrb[0].mxu0
        %v1557 = vadd.f32 0.0, %v1556
        %v1558 = vpop.f32.mrb[0].mxu0
        %1559 = vmatprep.mubr.f32.mxu0 0.0
        %1560 = vmatmul.mubr.f32.gmra.mrb[0].mxu0 %v638
        %v1561 = vpop.f32.mrb[0].mxu0
        %v1562 = vadd.f32 0.0, %v1561
        %v1563 = vpop.f32.mrb[0].mxu0
        %1564 = vmatprep.mubr.f32.mxu0 0.0
        %1565 = vmatmul.mubr.f32.gmra.mrb[0].mxu0 %v641
        %v1566 = vpop.f32.mrb[0].mxu0
        %v1567 = vadd.f32 0.0, %v1566
        %v1568 = vpop.f32.mrb[0].mxu0
        %1569 = vmatprep.mubr.f32.mxu0 0.0
        %1570 = vmatmul.mubr.f32.gmra.mrb[0].mxu0 %v644
        %v1571 = vpop.f32.mrb[0].mxu0
        %v1572 = vadd.f32 0.0, %v1571
        %v1573 = vpop.f32.mrb[0].mxu0
        %1574 = vmatprep.mubr.f32.mxu0 0.0
        %1575 = vmatmul.mubr.f32.gmra.mrb[0].mxu0 %v647
        %v1576 = vpop.f32.mrb[0].mxu0
        %v1577 = vadd.f32 0.0, %v1576
        %v1578 = vpop.f32.mrb[0].mxu0
        %1579 = vmatprep.mubr.f32.mxu0 0.0
        %1580 = vmatmul.mubr.f32.gmra.mrb[0].mxu0 %v650
        %v1581 = vpop.f32.mrb[0].mxu0
        %v1582 = vadd.f32 0.0, %v1581
        %v1583 = vpop.f32.mrb[0].mxu0
        %1584 = vmatprep.mubr.f32.mxu0 0.0
        %1585 = vmatmul.mubr.f32.gmra.mrb[0].mxu0 %v653
        %v1586 = vpop.f32.mrb[0].mxu0
        %v1587 = vadd.f32 0.0, %v1586
        %v1588 = vpop.f32.mrb[0].mxu0
        %1589 = vmatprep.mubr.f32.mxu0 0.0
        %1590 = vmatmul.mubr.f32.gmra.mrb[0].mxu0 %v656
        %v1591 = vpop.f32.mrb[0].mxu0
        %v1592 = vadd.f32 0.0, %v1591
        %v1593 = vpop.f32.mrb[0].mxu0
        %1594 = vmatprep.mubr.f32.mxu0 0.0
        %1595 = vmatmul.mubr.f32.gmra.mrb[0].mxu0 %v659
        %v1596 = vpop.f32.mrb[0].mxu0
        %v1597 = vadd.f32 0.0, %v1596
        %v1598 = vpop.f32.mrb[0].mxu0
        %1599 = vmatprep.mubr.f32.mxu0 0.0
        %1600 = vmatmul.mubr.f32.gmra.mrb[0].mxu0 %v662
        %v1601 = vpop.f32.mrb[0].mxu0
        %v1602 = vadd.f32 0.0, %v1601
        %v1603 = vpop.f32.mrb[0].mxu0
        %1604 = vmatprep.mubr.f32.mxu0 0.0
        %1605 = vmatmul.mubr.f32.gmra.mrb[0].mxu0 %v665
        %v1606 = vpop.f32.mrb[0].mxu0
        %v1607 = vadd.f32 0.0, %v1606
        %v1608 = vpop.f32.mrb[0].mxu0
        %1609 = vmatprep.mubr.f32.mxu0 0.0
        %1610 = vmatmul.mubr.f32.gmra.mrb[0].mxu0 %v668
        %v1611 = vpop.f32.mrb[0].mxu0
        %v1612 = vadd.f32 0.0, %v1611
        %v1613 = vpop.f32.mrb[0].mxu0
        %1614 = vmatprep.mubr.f32.mxu0 0.0
        %1615 = vmatmul.mubr.f32.gmra.mrb[0].mxu0 %v671
        %v1616 = vpop.f32.mrb[0].mxu0
        %v1617 = vadd.f32 0.0, %v1616
        %v1618 = vpop.f32.mrb[0].mxu0
        %1619 = vmatprep.mubr.f32.mxu0 0.0
        %1620 = vmatmul.mubr.f32.gmra.mrb[0].mxu0 %v674
        %v1621 = vpop.f32.mrb[0].mxu0
        %v1622 = vadd.f32 0.0, %v1621
        %v1623 = vpop.f32.mrb[0].mxu0
        %1624 = vmatprep.mubr.f32.mxu0 0.0
        %1625 = vmatmul.mubr.f32.gmra.mrb[0].mxu0 %v677
        %v1626 = vpop.f32.mrb[0].mxu0
        %v1627 = vadd.f32 0.0, %v1626
        %v1628 = vpop.f32.mrb[0].mxu0
        %1629 = vmatprep.mubr.f32.mxu0 0.0
        %1630 = vmatmul.mubr.f32.gmra.mrb[0].mxu0 %v680
        %v1631 = vpop.f32.mrb[0].mxu0
        %v1632 = vadd.f32 0.0, %v1631
        %v1633 = vpop.f32.mrb[0].mxu0
        %1634 = vmatprep.mubr.f32.mxu0 0.0
        %1635 = vmatmul.mubr.f32.gmra.mrb[0].mxu0 %v683
        %v1636 = vpop.f32.mrb[0].mxu0
        %v1637 = vadd.f32 0.0, %v1636
        %v1638 = vpop.f32.mrb[0].mxu0
        %1639 = vmatprep.mubr.f32.mxu0 0.0
        %1640 = vmatmul.mubr.f32.gmra.mrb[0].mxu0 %v686
        %v1641 = vpop.f32.mrb[0].mxu0
        %v1642 = vadd.f32 0.0, %v1641
        %v1643 = vpop.f32.mrb[0].mxu0
        %1644 = vmatprep.mubr.f32.mxu0 0.0
        %1645 = vmatmul.mubr.f32.gmra.mrb[0].mxu0 %v689
        %v1646 = vpop.f32.mrb[0].mxu0
        %v1647 = vadd.f32 0.0, %v1646
        %v1648 = vpop.f32.mrb[0].mxu0
        %1649 = vmatprep.mubr.f32.mxu0 0.0
        %1650 = vmatmul.mubr.f32.gmra.mrb[0].mxu0 %v692
        %v1651 = vpop.f32.mrb[0].mxu0
        %v1652 = vadd.f32 0.0, %v1651
        %v1653 = vpop.f32.mrb[0].mxu0
        %1654 = vmatprep.mubr.f32.mxu0 0.0
        %1655 = vmatmul.mubr.f32.gmra.mrb[0].mxu0 %v1348
        %v1656 = vpop.f32.mrb[0].mxu0
        %v1657 = vadd.f32 0.0, %v1656
        %v1658 = vpop.f32.mrb[0].mxu0
        %1659 = vmatprep.mubr.f32.mxu0 0.0
        %1660 = vmatmul.mubr.f32.gmra.mrb[0].mxu0 %v1351
        %v1661 = vpop.f32.mrb[0].mxu0
        %v1662 = vadd.f32 0.0, %v1661
        %v1663 = vpop.f32.mrb[0].mxu0
        %1664 = vmatprep.mubr.f32.mxu0 0.0
        %1665 = vmatmul.mubr.f32.gmra.mrb[0].mxu0 %v1354
        %v1666 = vpop.f32.mrb[0].mxu0
        %v1667 = vadd.f32 0.0, %v1666
        %v1668 = vpop.f32.mrb[0].mxu0
        %1669 = vmatprep.mubr.f32.mxu0 0.0
        %1670 = vmatmul.mubr.f32.gmra.mrb[0].mxu0 %v1357
        %v1671 = vpop.f32.mrb[0].mxu0
        %v1672 = vadd.f32 0.0, %v1671
        %v1673 = vpop.f32.mrb[0].mxu0
        %1674 = vmatprep.mubr.f32.mxu0 0.0
        %1675 = vmatmul.mubr.f32.gmra.mrb[0].mxu0 %v1360
        %v1676 = vpop.f32.mrb[0].mxu0
        %v1677 = vadd.f32 0.0, %v1676
        %v1678 = vpop.f32.mrb[0].mxu0
        %1679 = vdwg.mxu0
        %v1680 = vadd.f32 %v1097, %v1432
        %v1681 = vadd.f32 %v1102, %v1437
        %v1682 = vadd.f32 %v1107, %v1442
        %v1683 = vadd.f32 %v1112, %v1447
        %v1684 = vadd.f32 %v1117, %v1452
        %v1685 = vadd.f32 %v1122, %v1457
        %v1686 = vadd.f32 %v1127, %v1462
        %v1687 = vadd.f32 %v1132, %v1467
        %v1688 = vadd.f32 %v1137, %v1472
        %v1689 = vadd.f32 %v1142, %v1477
        %v1690 = vadd.f32 %v1147, %v1482
        %v1691 = vadd.f32 %v1152, %v1487
        %v1692 = vadd.f32 %v1157, %v1492
        %v1693 = vadd.f32 %v1162, %v1497
        %v1694 = vadd.f32 %v1167, %v1502
        %v1695 = vadd.f32 %v1172, %v1507
        %v1696 = vadd.f32 %v1177, %v1512
        %v1697 = vadd.f32 %v1182, %v1517
        %v1698 = vadd.f32 %v1187, %v1522
        %v1699 = vadd.f32 %v1192, %v1527
        %v1700 = vadd.f32 %v1197, %v1532
        %v1701 = vadd.f32 %v1202, %v1537
        %v1702 = vadd.f32 %v1207, %v1542
        %v1703 = vadd.f32 %v1212, %v1547
        %v1704 = vadd.f32 %v1217, %v1552
        %v1705 = vadd.f32 %v1222, %v1557
        %v1706 = vadd.f32 %v1227, %v1562
        %v1707 = vadd.f32 %v1232, %v1567
        %v1708 = vadd.f32 %v1237, %v1572
        %v1709 = vadd.f32 %v1242, %v1577
        %v1710 = vadd.f32 %v1247, %v1582
        %v1711 = vadd.f32 %v1252, %v1587
        %v1712 = vadd.f32 %v1257, %v1592
        %v1713 = vadd.f32 %v1262, %v1597
        %v1714 = vadd.f32 %v1267, %v1602
        %v1715 = vadd.f32 %v1272, %v1607
        %v1716 = vadd.f32 %v1277, %v1612
        %v1717 = vadd.f32 %v1282, %v1617
        %v1718 = vadd.f32 %v1287, %v1622
        %v1719 = vadd.f32 %v1292, %v1627
        %v1720 = vadd.f32 %v1297, %v1632
        %v1721 = vadd.f32 %v1302, %v1637
        %v1722 = vadd.f32 %v1307, %v1642
        %v1723 = vadd.f32 %v1312, %v1647
        %v1724 = vadd.f32 %v1317, %v1652
        %v1725 = vadd.f32 %v1322, %v1657
        %v1726 = vadd.f32 %v1327, %v1662
        %v1727 = vadd.f32 %v1332, %v1667
        %v1728 = vadd.f32 %v1337, %v1672
        %v1729 = vadd.f32 %v1342, %v1677
        %v1730 = vld [vmem:[#allocation2 + $0x1] sm:$0xff]
        %v1731 = vld [vmem:[#allocation2 + $0x9] sm:$0xff]
        %v1732 = vld [vmem:[#allocation2 + $0x11] sm:$0xff]
        %v1733 = vld [vmem:[#allocation2 + $0x19] sm:$0xff]
        %v1734 = vld [vmem:[#allocation2 + $0x21] sm:$0xff]
        %v1735 = vld [vmem:[#allocation2 + $0x31] sm:$0xff]
        %v1736 = vld [vmem:[#allocation2 + $0x39] sm:$0xff]
        %v1737 = vld [vmem:[#allocation2 + $0x41] sm:$0xff]
        %v1738 = vld [vmem:[#allocation2 + $0x49] sm:$0xff]
        %v1739 = vld [vmem:[#allocation2 + $0x51] sm:$0xff]
        %v1740 = vld [vmem:[#allocation2 + $0x61] sm:$0xff]
        %v1741 = vld [vmem:[#allocation2 + $0x69] sm:$0xff]
        %v1742 = vld [vmem:[#allocation2 + $0x71] sm:$0xff]
        %v1743 = vld [vmem:[#allocation2 + $0x79] sm:$0xff]
        %v1744 = vld [vmem:[#allocation2 + $0x81] sm:$0xff]
        %v1745 = vld [vmem:[#allocation2 + $0x91] sm:$0xff]
        %v1746 = vld [vmem:[#allocation2 + $0x99] sm:$0xff]
        %v1747 = vld [vmem:[#allocation2 + $0xa1] sm:$0xff]
        %v1748 = vld [vmem:[#allocation2 + $0xa9] sm:$0xff]
        %v1749 = vld [vmem:[#allocation2 + $0xb1] sm:$0xff]
        %v1750 = vld [vmem:[#allocation2 + $0xc1] sm:$0xff]
        %v1751 = vld [vmem:[#allocation2 + $0xc9] sm:$0xff]
        %v1752 = vld [vmem:[#allocation2 + $0xd1] sm:$0xff]
        %v1753 = vld [vmem:[#allocation2 + $0xd9] sm:$0xff]
        %v1754 = vld [vmem:[#allocation2 + $0xe1] sm:$0xff]
        %v1755 = vld [vmem:[#allocation2 + $0xf1] sm:$0xff]
        %v1756 = vld [vmem:[#allocation2 + $0xf9] sm:$0xff]
        %v1757 = vld [vmem:[#allocation2 + $0x101] sm:$0xff]
        %v1758 = vld [vmem:[#allocation2 + $0x109] sm:$0xff]
        %v1759 = vld [vmem:[#allocation2 + $0x111] sm:$0xff]
        %v1760 = vld [vmem:[#allocation2 + $0x121] sm:$0xff]
        %v1761 = vld [vmem:[#allocation2 + $0x129] sm:$0xff]
        %v1762 = vld [vmem:[#allocation2 + $0x131] sm:$0xff]
        %v1763 = vld [vmem:[#allocation2 + $0x139] sm:$0xff]
        %v1764 = vld [vmem:[#allocation2 + $0x141] sm:$0xff]
        %v1765 = vld [vmem:[#allocation2 + $0x151] sm:$0xff]
        %v1766 = vld [vmem:[#allocation2 + $0x159] sm:$0xff]
        %v1767 = vld [vmem:[#allocation2 + $0x161] sm:$0xff]
        %v1768 = vld [vmem:[#allocation2 + $0x169] sm:$0xff]
        %v1769 = vld [vmem:[#allocation2 + $0x171] sm:$0xff]
        %v1770 = vld [vmem:[#allocation2 + $0x181] sm:$0xff]
        %v1771 = vld [vmem:[#allocation2 + $0x189] sm:$0xff]
        %v1772 = vld [vmem:[#allocation2 + $0x191] sm:$0xff]
        %v1773 = vld [vmem:[#allocation2 + $0x199] sm:$0xff]
        %v1774 = vld [vmem:[#allocation2 + $0x1a1] sm:$0xff]
        %v1775 = vld [vmem:[#allocation2 + $0x1b1] sm:$0xff]
        %v1776 = vld [vmem:[#allocation2 + $0x1b9] sm:$0xff]
        %v1777 = vld [vmem:[#allocation2 + $0x1c1] sm:$0xff]
        %v1778 = vld [vmem:[#allocation2 + $0x1c9] sm:$0xff]
        %v1779 = vld [vmem:[#allocation2 + $0x1d1] sm:$0xff]
        %v1780 = vld [vmem:[#allocation2 + $0x1e1] sm:$0xff]
        %v1781 = vld [vmem:[#allocation2 + $0x1e9] sm:$0xff]
        %v1782 = vld [vmem:[#allocation2 + $0x1f1] sm:$0xff]
        %v1783 = vld [vmem:[#allocation2 + $0x1f9] sm:$0xff]
        %v1784 = vld [vmem:[#allocation2 + $0x201] sm:$0xff]
        %v1785 = vld [vmem:[#allocation2 + $0x211] sm:$0xff]
        %v1786 = vld [vmem:[#allocation2 + $0x219] sm:$0xff]
        %v1787 = vld [vmem:[#allocation2 + $0x221] sm:$0xff]
        %v1788 = vld [vmem:[#allocation2 + $0x229] sm:$0xff]
        %v1789 = vld [vmem:[#allocation2 + $0x231] sm:$0xff]
        %s1790 = scalar_lea.vmem %s3, 4
        %v1791 = vld [vmem:[%s1790] sm:$0xf]
        %v1793 = vsel %vm543, %v1730, 0
        %v1796 = vsel %vm543, %v1731, 0
        %v1799 = vsel %vm543, %v1732, 0
        %v1802 = vsel %vm543, %v1733, 0
        %v1805 = vsel %vm543, %v1734, 0
        %v1808 = vsel %vm543, %v1735, 0
        %v1811 = vsel %vm543, %v1736, 0
        %v1814 = vsel %vm543, %v1737, 0
        %v1817 = vsel %vm543, %v1738, 0
        %v1820 = vsel %vm543, %v1739, 0
        %v1823 = vsel %vm543, %v1740, 0
        %v1826 = vsel %vm543, %v1741, 0
        %v1829 = vsel %vm543, %v1742, 0
        %v1832 = vsel %vm543, %v1743, 0
        %v1835 = vsel %vm543, %v1744, 0
        %v1838 = vsel %vm543, %v1745, 0
        %v1841 = vsel %vm543, %v1746, 0
        %v1844 = vsel %vm543, %v1747, 0
        %v1847 = vsel %vm543, %v1748, 0
        %v1850 = vsel %vm543, %v1749, 0
        %v1853 = vsel %vm543, %v1750, 0
        %v1856 = vsel %vm543, %v1751, 0
        %v1859 = vsel %vm543, %v1752, 0
        %v1862 = vsel %vm543, %v1753, 0
        %v1865 = vsel %vm543, %v1754, 0
        %v1868 = vsel %vm543, %v1755, 0
        %v1871 = vsel %vm543, %v1756, 0
        %v1874 = vsel %vm543, %v1757, 0
        %v1877 = vsel %vm543, %v1758, 0
        %v1880 = vsel %vm543, %v1759, 0
        %v1883 = vsel %vm543, %v1760, 0
        %v1886 = vsel %vm543, %v1761, 0
        %v1889 = vsel %vm543, %v1762, 0
        %v1892 = vsel %vm543, %v1763, 0
        %v1895 = vsel %vm543, %v1764, 0
        %v1898 = vsel %vm543, %v1765, 0
        %v1901 = vsel %vm543, %v1766, 0
        %v1904 = vsel %vm543, %v1767, 0
        %v1907 = vsel %vm543, %v1768, 0
        %v1910 = vsel %vm543, %v1769, 0
        %v1913 = vsel %vm543, %v1770, 0
        %v1916 = vsel %vm543, %v1771, 0
        %v1919 = vsel %vm543, %v1772, 0
        %v1922 = vsel %vm543, %v1773, 0
        %v1925 = vsel %vm543, %v1774, 0
        %v1928 = vsel %vm543, %v1775, 0
        %v1931 = vsel %vm543, %v1776, 0
        %v1934 = vsel %vm543, %v1777, 0
        %v1937 = vsel %vm543, %v1778, 0
        %v1940 = vsel %vm543, %v1779, 0
        %v1943 = vsel %vm543, %v1791, 0
        %1945 = vmatprep.subr.mxu0 0.0
        %1946 = vmatpush1.xpose.msra.mxu0 %v1943
        %1947 = vmatprep.subr.mxu0 0.0
        %1948 = vmatpush1.xpose.msra.mxu0 0.0
        %1949 = vmatprep.subr.mxu0 0.0
        %1950 = vmatpush1.xpose.msra.mxu0 0.0
        %1951 = vmatprep.subr.mxu0 0.0
        %1952 = vmatpush1.xpose.msra.mxu0 0.0
        %1953 = vmatprep.subr.mxu0 0.0
        %1954 = vmatpush1.xpose.msra.mxu0 0.0
        %1955 = vmatprep.subr.mxu0 0.0
        %1956 = vmatpush1.xpose.msra.mxu0 0.0
        %1957 = vmatprep.subr.mxu0 0.0
        %1958 = vmatpush1.xpose.msra.mxu0 0.0
        %1959 = vmatprep.subr.mxu0 0.0
        %1960 = vmatpush1.xpose.msra.mxu0 0.0
        %1961 = vmatprep.subr.mxu0 0.0
        %1962 = vmatpush1.xpose.msra.mxu0 0.0
        %1963 = vmatprep.subr.mxu0 0.0
        %1964 = vmatpush1.xpose.msra.mxu0 0.0
        %1965 = vmatprep.subr.mxu0 0.0
        %1966 = vmatpush1.xpose.msra.mxu0 0.0
        %1967 = vmatprep.subr.mxu0 0.0
        %1968 = vmatpush1.xpose.msra.mxu0 0.0
        %1969 = vmatprep.subr.mxu0 0.0
        %1970 = vmatpush1.xpose.msra.mxu0 0.0
        %1971 = vmatprep.subr.mxu0 0.0
        %1972 = vmatpush1.xpose.msra.mxu0 0.0
        %1973 = vmatprep.subr.mxu0 0.0
        %1974 = vmatpush1.xpose.msra.mxu0 0.0
        %1975 = vmatprep.subr.mxu0 0.0
        %1976 = vmatpush1.xpose.msra.mxu0 0.0
        %1977 = vmatprep.subr.mxu0 0.0
        %1978 = vmatpush1.xpose.msra.mxu0 0.0
        %1979 = vmatprep.subr.mxu0 0.0
        %1980 = vmatpush1.xpose.msra.mxu0 0.0
        %1981 = vmatprep.subr.mxu0 0.0
        %1982 = vmatpush1.xpose.msra.mxu0 0.0
        %1983 = vmatprep.subr.mxu0 0.0
        %1984 = vmatpush1.xpose.msra.mxu0 0.0
        %1985 = vmatprep.subr.mxu0 0.0
        %1986 = vmatpush1.xpose.msra.mxu0 0.0
        %1987 = vmatprep.subr.mxu0 0.0
        %1988 = vmatpush1.xpose.msra.mxu0 0.0
        %1989 = vmatprep.subr.mxu0 0.0
        %1990 = vmatpush1.xpose.msra.mxu0 0.0
        %1991 = vmatprep.subr.mxu0 0.0
        %1992 = vmatpush1.xpose.msra.mxu0 0.0
        %1993 = vmatprep.subr.mxu0 0.0
        %1994 = vmatpush1.xpose.msra.mxu0 0.0
        %1995 = vmatprep.subr.mxu0 0.0
        %1996 = vmatpush1.xpose.msra.mxu0 0.0
        %1997 = vmatprep.subr.mxu0 0.0
        %1998 = vmatpush1.xpose.msra.mxu0 0.0
        %1999 = vmatprep.subr.mxu0 0.0
        %2000 = vmatpush1.xpose.msra.mxu0 0.0
        %2001 = vmatprep.subr.mxu0 0.0
        %2002 = vmatpush1.xpose.msra.mxu0 0.0
        %2003 = vmatprep.subr.mxu0 0.0
        %2004 = vmatpush1.xpose.msra.mxu0 0.0
        %2005 = vmatprep.subr.mxu0 0.0
        %2006 = vmatpush1.xpose.msra.mxu0 0.0
        %2007 = vmatprep.subr.mxu0 0.0
        %2008 = vmatpush1.xpose.msra.mxu0 0.0
        %2009 = vmatprep.mubr.f32.mxu0 0.0
        %2010 = vmatmul.mubr.f32.gmra.mrb[0].mxu0 %v1793
        %v2011 = vpop.f32.mrb[0].mxu0
        %v2012 = vadd.f32 0.0, %v2011
        %v2013 = vpop.f32.mrb[0].mxu0
        %2014 = vmatprep.mubr.f32.mxu0 0.0
        %2015 = vmatmul.mubr.f32.gmra.mrb[0].mxu0 %v1796
        %v2016 = vpop.f32.mrb[0].mxu0
        %v2017 = vadd.f32 0.0, %v2016
        %v2018 = vpop.f32.mrb[0].mxu0
        %2019 = vmatprep.mubr.f32.mxu0 0.0
        %2020 = vmatmul.mubr.f32.gmra.mrb[0].mxu0 %v1799
        %v2021 = vpop.f32.mrb[0].mxu0
        %v2022 = vadd.f32 0.0, %v2021
        %v2023 = vpop.f32.mrb[0].mxu0
        %2024 = vmatprep.mubr.f32.mxu0 0.0
        %2025 = vmatmul.mubr.f32.gmra.mrb[0].mxu0 %v1802
        %v2026 = vpop.f32.mrb[0].mxu0
        %v2027 = vadd.f32 0.0, %v2026
        %v2028 = vpop.f32.mrb[0].mxu0
        %2029 = vmatprep.mubr.f32.mxu0 0.0
        %2030 = vmatmul.mubr.f32.gmra.mrb[0].mxu0 %v1805
        %v2031 = vpop.f32.mrb[0].mxu0
        %v2032 = vadd.f32 0.0, %v2031
        %v2033 = vpop.f32.mrb[0].mxu0
        %2034 = vmatprep.mubr.f32.mxu0 0.0
        %2035 = vmatmul.mubr.f32.gmra.mrb[0].mxu0 %v1808
        %v2036 = vpop.f32.mrb[0].mxu0
        %v2037 = vadd.f32 0.0, %v2036
        %v2038 = vpop.f32.mrb[0].mxu0
        %2039 = vmatprep.mubr.f32.mxu0 0.0
        %2040 = vmatmul.mubr.f32.gmra.mrb[0].mxu0 %v1811
        %v2041 = vpop.f32.mrb[0].mxu0
        %v2042 = vadd.f32 0.0, %v2041
        %v2043 = vpop.f32.mrb[0].mxu0
        %2044 = vmatprep.mubr.f32.mxu0 0.0
        %2045 = vmatmul.mubr.f32.gmra.mrb[0].mxu0 %v1814
        %v2046 = vpop.f32.mrb[0].mxu0
        %v2047 = vadd.f32 0.0, %v2046
        %v2048 = vpop.f32.mrb[0].mxu0
        %2049 = vmatprep.mubr.f32.mxu0 0.0
        %2050 = vmatmul.mubr.f32.gmra.mrb[0].mxu0 %v1817
        %v2051 = vpop.f32.mrb[0].mxu0
        %v2052 = vadd.f32 0.0, %v2051
        %v2053 = vpop.f32.mrb[0].mxu0
        %2054 = vmatprep.mubr.f32.mxu0 0.0
        %2055 = vmatmul.mubr.f32.gmra.mrb[0].mxu0 %v1820
        %v2056 = vpop.f32.mrb[0].mxu0
        %v2057 = vadd.f32 0.0, %v2056
        %v2058 = vpop.f32.mrb[0].mxu0
        %2059 = vmatprep.mubr.f32.mxu0 0.0
        %2060 = vmatmul.mubr.f32.gmra.mrb[0].mxu0 %v1823
        %v2061 = vpop.f32.mrb[0].mxu0
        %v2062 = vadd.f32 0.0, %v2061
        %v2063 = vpop.f32.mrb[0].mxu0
        %2064 = vmatprep.mubr.f32.mxu0 0.0
        %2065 = vmatmul.mubr.f32.gmra.mrb[0].mxu0 %v1826
        %v2066 = vpop.f32.mrb[0].mxu0
        %v2067 = vadd.f32 0.0, %v2066
        %v2068 = vpop.f32.mrb[0].mxu0
        %2069 = vmatprep.mubr.f32.mxu0 0.0
        %2070 = vmatmul.mubr.f32.gmra.mrb[0].mxu0 %v1829
        %v2071 = vpop.f32.mrb[0].mxu0
        %v2072 = vadd.f32 0.0, %v2071
        %v2073 = vpop.f32.mrb[0].mxu0
        %2074 = vmatprep.mubr.f32.mxu0 0.0
        %2075 = vmatmul.mubr.f32.gmra.mrb[0].mxu0 %v1832
        %v2076 = vpop.f32.mrb[0].mxu0
        %v2077 = vadd.f32 0.0, %v2076
        %v2078 = vpop.f32.mrb[0].mxu0
        %2079 = vmatprep.mubr.f32.mxu0 0.0
        %2080 = vmatmul.mubr.f32.gmra.mrb[0].mxu0 %v1835
        %v2081 = vpop.f32.mrb[0].mxu0
        %v2082 = vadd.f32 0.0, %v2081
        %v2083 = vpop.f32.mrb[0].mxu0
        %2084 = vmatprep.mubr.f32.mxu0 0.0
        %2085 = vmatmul.mubr.f32.gmra.mrb[0].mxu0 %v1838
        %v2086 = vpop.f32.mrb[0].mxu0
        %v2087 = vadd.f32 0.0, %v2086
        %v2088 = vpop.f32.mrb[0].mxu0
        %2089 = vmatprep.mubr.f32.mxu0 0.0
        %2090 = vmatmul.mubr.f32.gmra.mrb[0].mxu0 %v1841
        %v2091 = vpop.f32.mrb[0].mxu0
        %v2092 = vadd.f32 0.0, %v2091
        %v2093 = vpop.f32.mrb[0].mxu0
        %2094 = vmatprep.mubr.f32.mxu0 0.0
        %2095 = vmatmul.mubr.f32.gmra.mrb[0].mxu0 %v1844
        %v2096 = vpop.f32.mrb[0].mxu0
        %v2097 = vadd.f32 0.0, %v2096
        %v2098 = vpop.f32.mrb[0].mxu0
        %2099 = vmatprep.mubr.f32.mxu0 0.0
        %2100 = vmatmul.mubr.f32.gmra.mrb[0].mxu0 %v1847
        %v2101 = vpop.f32.mrb[0].mxu0
        %v2102 = vadd.f32 0.0, %v2101
        %v2103 = vpop.f32.mrb[0].mxu0
        %2104 = vmatprep.mubr.f32.mxu0 0.0
        %2105 = vmatmul.mubr.f32.gmra.mrb[0].mxu0 %v1850
        %v2106 = vpop.f32.mrb[0].mxu0
        %v2107 = vadd.f32 0.0, %v2106
        %v2108 = vpop.f32.mrb[0].mxu0
        %2109 = vmatprep.mubr.f32.mxu0 0.0
        %2110 = vmatmul.mubr.f32.gmra.mrb[0].mxu0 %v1853
        %v2111 = vpop.f32.mrb[0].mxu0
        %v2112 = vadd.f32 0.0, %v2111
        %v2113 = vpop.f32.mrb[0].mxu0
        %2114 = vmatprep.mubr.f32.mxu0 0.0
        %2115 = vmatmul.mubr.f32.gmra.mrb[0].mxu0 %v1856
        %v2116 = vpop.f32.mrb[0].mxu0
        %v2117 = vadd.f32 0.0, %v2116
        %v2118 = vpop.f32.mrb[0].mxu0
        %2119 = vmatprep.mubr.f32.mxu0 0.0
        %2120 = vmatmul.mubr.f32.gmra.mrb[0].mxu0 %v1859
        %v2121 = vpop.f32.mrb[0].mxu0
        %v2122 = vadd.f32 0.0, %v2121
        %v2123 = vpop.f32.mrb[0].mxu0
        %2124 = vmatprep.mubr.f32.mxu0 0.0
        %2125 = vmatmul.mubr.f32.gmra.mrb[0].mxu0 %v1862
        %v2126 = vpop.f32.mrb[0].mxu0
        %v2127 = vadd.f32 0.0, %v2126
        %v2128 = vpop.f32.mrb[0].mxu0
        %2129 = vmatprep.mubr.f32.mxu0 0.0
        %2130 = vmatmul.mubr.f32.gmra.mrb[0].mxu0 %v1865
        %v2131 = vpop.f32.mrb[0].mxu0
        %v2132 = vadd.f32 0.0, %v2131
        %v2133 = vpop.f32.mrb[0].mxu0
        %2134 = vmatprep.mubr.f32.mxu0 0.0
        %2135 = vmatmul.mubr.f32.gmra.mrb[0].mxu0 %v1868
        %v2136 = vpop.f32.mrb[0].mxu0
        %v2137 = vadd.f32 0.0, %v2136
        %v2138 = vpop.f32.mrb[0].mxu0
        %2139 = vmatprep.mubr.f32.mxu0 0.0
        %2140 = vmatmul.mubr.f32.gmra.mrb[0].mxu0 %v1871
        %v2141 = vpop.f32.mrb[0].mxu0
        %v2142 = vadd.f32 0.0, %v2141
        %v2143 = vpop.f32.mrb[0].mxu0
        %2144 = vmatprep.mubr.f32.mxu0 0.0
        %2145 = vmatmul.mubr.f32.gmra.mrb[0].mxu0 %v1874
        %v2146 = vpop.f32.mrb[0].mxu0
        %v2147 = vadd.f32 0.0, %v2146
        %v2148 = vpop.f32.mrb[0].mxu0
        %2149 = vmatprep.mubr.f32.mxu0 0.0
        %2150 = vmatmul.mubr.f32.gmra.mrb[0].mxu0 %v1877
        %v2151 = vpop.f32.mrb[0].mxu0
        %v2152 = vadd.f32 0.0, %v2151
        %v2153 = vpop.f32.mrb[0].mxu0
        %2154 = vmatprep.mubr.f32.mxu0 0.0
        %2155 = vmatmul.mubr.f32.gmra.mrb[0].mxu0 %v1880
        %v2156 = vpop.f32.mrb[0].mxu0
        %v2157 = vadd.f32 0.0, %v2156
        %v2158 = vpop.f32.mrb[0].mxu0
        %2159 = vmatprep.mubr.f32.mxu0 0.0
        %2160 = vmatmul.mubr.f32.gmra.mrb[0].mxu0 %v1883
        %v2161 = vpop.f32.mrb[0].mxu0
        %v2162 = vadd.f32 0.0, %v2161
        %v2163 = vpop.f32.mrb[0].mxu0
        %2164 = vmatprep.mubr.f32.mxu0 0.0
        %2165 = vmatmul.mubr.f32.gmra.mrb[0].mxu0 %v1886
        %v2166 = vpop.f32.mrb[0].mxu0
        %v2167 = vadd.f32 0.0, %v2166
        %v2168 = vpop.f32.mrb[0].mxu0
        %2169 = vmatprep.mubr.f32.mxu0 0.0
        %2170 = vmatmul.mubr.f32.gmra.mrb[0].mxu0 %v1889
        %v2171 = vpop.f32.mrb[0].mxu0
        %v2172 = vadd.f32 0.0, %v2171
        %v2173 = vpop.f32.mrb[0].mxu0
        %2174 = vmatprep.mubr.f32.mxu0 0.0
        %2175 = vmatmul.mubr.f32.gmra.mrb[0].mxu0 %v1892
        %v2176 = vpop.f32.mrb[0].mxu0
        %v2177 = vadd.f32 0.0, %v2176
        %v2178 = vpop.f32.mrb[0].mxu0
        %2179 = vmatprep.mubr.f32.mxu0 0.0
        %2180 = vmatmul.mubr.f32.gmra.mrb[0].mxu0 %v1895
        %v2181 = vpop.f32.mrb[0].mxu0
        %v2182 = vadd.f32 0.0, %v2181
        %v2183 = vpop.f32.mrb[0].mxu0
        %2184 = vmatprep.mubr.f32.mxu0 0.0
        %2185 = vmatmul.mubr.f32.gmra.mrb[0].mxu0 %v1898
        %v2186 = vpop.f32.mrb[0].mxu0
        %v2187 = vadd.f32 0.0, %v2186
        %v2188 = vpop.f32.mrb[0].mxu0
        %2189 = vmatprep.mubr.f32.mxu0 0.0
        %2190 = vmatmul.mubr.f32.gmra.mrb[0].mxu0 %v1901
        %v2191 = vpop.f32.mrb[0].mxu0
        %v2192 = vadd.f32 0.0, %v2191
        %v2193 = vpop.f32.mrb[0].mxu0
        %2194 = vmatprep.mubr.f32.mxu0 0.0
        %2195 = vmatmul.mubr.f32.gmra.mrb[0].mxu0 %v1904
        %v2196 = vpop.f32.mrb[0].mxu0
        %v2197 = vadd.f32 0.0, %v2196
        %v2198 = vpop.f32.mrb[0].mxu0
        %2199 = vmatprep.mubr.f32.mxu0 0.0
        %2200 = vmatmul.mubr.f32.gmra.mrb[0].mxu0 %v1907
        %v2201 = vpop.f32.mrb[0].mxu0
        %v2202 = vadd.f32 0.0, %v2201
        %v2203 = vpop.f32.mrb[0].mxu0
        %2204 = vmatprep.mubr.f32.mxu0 0.0
        %2205 = vmatmul.mubr.f32.gmra.mrb[0].mxu0 %v1910
        %v2206 = vpop.f32.mrb[0].mxu0
        %v2207 = vadd.f32 0.0, %v2206
        %v2208 = vpop.f32.mrb[0].mxu0
        %2209 = vmatprep.mubr.f32.mxu0 0.0
        %2210 = vmatmul.mubr.f32.gmra.mrb[0].mxu0 %v1913
        %v2211 = vpop.f32.mrb[0].mxu0
        %v2212 = vadd.f32 0.0, %v2211
        %v2213 = vpop.f32.mrb[0].mxu0
        %2214 = vmatprep.mubr.f32.mxu0 0.0
        %2215 = vmatmul.mubr.f32.gmra.mrb[0].mxu0 %v1916
        %v2216 = vpop.f32.mrb[0].mxu0
        %v2217 = vadd.f32 0.0, %v2216
        %v2218 = vpop.f32.mrb[0].mxu0
        %2219 = vmatprep.mubr.f32.mxu0 0.0
        %2220 = vmatmul.mubr.f32.gmra.mrb[0].mxu0 %v1919
        %v2221 = vpop.f32.mrb[0].mxu0
        %v2222 = vadd.f32 0.0, %v2221
        %v2223 = vpop.f32.mrb[0].mxu0
        %2224 = vmatprep.mubr.f32.mxu0 0.0
        %2225 = vmatmul.mubr.f32.gmra.mrb[0].mxu0 %v1922
        %v2226 = vpop.f32.mrb[0].mxu0
        %v2227 = vadd.f32 0.0, %v2226
        %v2228 = vpop.f32.mrb[0].mxu0
        %2229 = vmatprep.mubr.f32.mxu0 0.0
        %2230 = vmatmul.mubr.f32.gmra.mrb[0].mxu0 %v1925
        %v2231 = vpop.f32.mrb[0].mxu0
        %v2232 = vadd.f32 0.0, %v2231
        %v2233 = vpop.f32.mrb[0].mxu0
        %2234 = vmatprep.mubr.f32.mxu0 0.0
        %2235 = vmatmul.mubr.f32.gmra.mrb[0].mxu0 %v1928
        %v2236 = vpop.f32.mrb[0].mxu0
        %v2237 = vadd.f32 0.0, %v2236
        %v2238 = vpop.f32.mrb[0].mxu0
        %2239 = vmatprep.mubr.f32.mxu0 0.0
        %2240 = vmatmul.mubr.f32.gmra.mrb[0].mxu0 %v1931
        %v2241 = vpop.f32.mrb[0].mxu0
        %v2242 = vadd.f32 0.0, %v2241
        %v2243 = vpop.f32.mrb[0].mxu0
        %2244 = vmatprep.mubr.f32.mxu0 0.0
        %2245 = vmatmul.mubr.f32.gmra.mrb[0].mxu0 %v1934
        %v2246 = vpop.f32.mrb[0].mxu0
        %v2247 = vadd.f32 0.0, %v2246
        %v2248 = vpop.f32.mrb[0].mxu0
        %2249 = vmatprep.mubr.f32.mxu0 0.0
        %2250 = vmatmul.mubr.f32.gmra.mrb[0].mxu0 %v1937
        %v2251 = vpop.f32.mrb[0].mxu0
        %v2252 = vadd.f32 0.0, %v2251
        %v2253 = vpop.f32.mrb[0].mxu0
        %2254 = vmatprep.mubr.f32.mxu0 0.0
        %2255 = vmatmul.mubr.f32.gmra.mrb[0].mxu0 %v1940
        %v2256 = vpop.f32.mrb[0].mxu0
        %v2257 = vadd.f32 0.0, %v2256
        %v2258 = vpop.f32.mrb[0].mxu0
        %2259 = vdwg.mxu0
        %v2260 = vadd.f32 %v1680, %v2012
        %v2261 = vadd.f32 %v1681, %v2017
        %v2262 = vadd.f32 %v1682, %v2022
        %v2263 = vadd.f32 %v1683, %v2027
        %v2264 = vadd.f32 %v1684, %v2032
        %v2265 = vadd.f32 %v1685, %v2037
        %v2266 = vadd.f32 %v1686, %v2042
        %v2267 = vadd.f32 %v1687, %v2047
        %v2268 = vadd.f32 %v1688, %v2052
        %v2269 = vadd.f32 %v1689, %v2057
        %v2270 = vadd.f32 %v1690, %v2062
        %v2271 = vadd.f32 %v1691, %v2067
        %v2272 = vadd.f32 %v1692, %v2072
        %v2273 = vadd.f32 %v1693, %v2077
        %v2274 = vadd.f32 %v1694, %v2082
        %v2275 = vadd.f32 %v1695, %v2087
        %v2276 = vadd.f32 %v1696, %v2092
        %v2277 = vadd.f32 %v1697, %v2097
        %v2278 = vadd.f32 %v1698, %v2102
        %v2279 = vadd.f32 %v1699, %v2107
        %v2280 = vadd.f32 %v1700, %v2112
        %v2281 = vadd.f32 %v1701, %v2117
        %v2282 = vadd.f32 %v1702, %v2122
        %v2283 = vadd.f32 %v1703, %v2127
        %v2284 = vadd.f32 %v1704, %v2132
        %v2285 = vadd.f32 %v1705, %v2137
        %v2286 = vadd.f32 %v1706, %v2142
        %v2287 = vadd.f32 %v1707, %v2147
        %v2288 = vadd.f32 %v1708, %v2152
        %v2289 = vadd.f32 %v1709, %v2157
        %v2290 = vadd.f32 %v1710, %v2162
        %v2291 = vadd.f32 %v1711, %v2167
        %v2292 = vadd.f32 %v1712, %v2172
        %v2293 = vadd.f32 %v1713, %v2177
        %v2294 = vadd.f32 %v1714, %v2182
        %v2295 = vadd.f32 %v1715, %v2187
        %v2296 = vadd.f32 %v1716, %v2192
        %v2297 = vadd.f32 %v1717, %v2197
        %v2298 = vadd.f32 %v1718, %v2202
        %v2299 = vadd.f32 %v1719, %v2207
        %v2300 = vadd.f32 %v1720, %v2212
        %v2301 = vadd.f32 %v1721, %v2217
        %v2302 = vadd.f32 %v1722, %v2222
        %v2303 = vadd.f32 %v1723, %v2227
        %v2304 = vadd.f32 %v1724, %v2232
        %v2305 = vadd.f32 %v1725, %v2237
        %v2306 = vadd.f32 %v1726, %v2242
        %v2307 = vadd.f32 %v1727, %v2247
        %v2308 = vadd.f32 %v1728, %v2252
        %v2309 = vadd.f32 %v1729, %v2257
        %s2310 = scalar_lea.vmem %s3, 16
        %v2311 = vld [vmem:[%s2310] sm:$0xf]
        %v2313 = vsel %vm543, %v1780, 0
        %v2316 = vsel %vm543, %v1781, 0
        %v2319 = vsel %vm543, %v1782, 0
        %v2322 = vsel %vm543, %v1783, 0
        %v2325 = vsel %vm543, %v1784, 0
        %v2328 = vsel %vm543, %v2311, 0
        %2330 = vmatprep.subr.mxu0 0.0
        %2331 = vmatpush1.xpose.msra.mxu0 %v2328
        %2332 = vmatprep.subr.mxu0 0.0
        %2333 = vmatpush1.xpose.msra.mxu0 0.0
        %2334 = vmatprep.subr.mxu0 0.0
        %2335 = vmatpush1.xpose.msra.mxu0 0.0
        %2336 = vmatprep.subr.mxu0 0.0
        %2337 = vmatpush1.xpose.msra.mxu0 0.0
        %2338 = vmatprep.subr.mxu0 0.0
        %2339 = vmatpush1.xpose.msra.mxu0 0.0
        %2340 = vmatprep.subr.mxu0 0.0
        %2341 = vmatpush1.xpose.msra.mxu0 0.0
        %2342 = vmatprep.subr.mxu0 0.0
        %2343 = vmatpush1.xpose.msra.mxu0 0.0
        %2344 = vmatprep.subr.mxu0 0.0
        %2345 = vmatpush1.xpose.msra.mxu0 0.0
        %2346 = vmatprep.subr.mxu0 0.0
        %2347 = vmatpush1.xpose.msra.mxu0 0.0
        %2348 = vmatprep.subr.mxu0 0.0
        %2349 = vmatpush1.xpose.msra.mxu0 0.0
        %2350 = vmatprep.subr.mxu0 0.0
        %2351 = vmatpush1.xpose.msra.mxu0 0.0
        %2352 = vmatprep.subr.mxu0 0.0
        %2353 = vmatpush1.xpose.msra.mxu0 0.0
        %2354 = vmatprep.subr.mxu0 0.0
        %2355 = vmatpush1.xpose.msra.mxu0 0.0
        %2356 = vmatprep.subr.mxu0 0.0
        %2357 = vmatpush1.xpose.msra.mxu0 0.0
        %2358 = vmatprep.subr.mxu0 0.0
        %2359 = vmatpush1.xpose.msra.mxu0 0.0
        %2360 = vmatprep.subr.mxu0 0.0
        %2361 = vmatpush1.xpose.msra.mxu0 0.0
        %2362 = vmatprep.subr.mxu0 0.0
        %2363 = vmatpush1.xpose.msra.mxu0 0.0
        %2364 = vmatprep.subr.mxu0 0.0
        %2365 = vmatpush1.xpose.msra.mxu0 0.0
        %2366 = vmatprep.subr.mxu0 0.0
        %2367 = vmatpush1.xpose.msra.mxu0 0.0
        %2368 = vmatprep.subr.mxu0 0.0
        %2369 = vmatpush1.xpose.msra.mxu0 0.0
        %2370 = vmatprep.subr.mxu0 0.0
        %2371 = vmatpush1.xpose.msra.mxu0 0.0
        %2372 = vmatprep.subr.mxu0 0.0
        %2373 = vmatpush1.xpose.msra.mxu0 0.0
        %2374 = vmatprep.subr.mxu0 0.0
        %2375 = vmatpush1.xpose.msra.mxu0 0.0
        %2376 = vmatprep.subr.mxu0 0.0
        %2377 = vmatpush1.xpose.msra.mxu0 0.0
        %2378 = vmatprep.subr.mxu0 0.0
        %2379 = vmatpush1.xpose.msra.mxu0 0.0
        %2380 = vmatprep.subr.mxu0 0.0
        %2381 = vmatpush1.xpose.msra.mxu0 0.0
        %2382 = vmatprep.subr.mxu0 0.0
        %2383 = vmatpush1.xpose.msra.mxu0 0.0
        %2384 = vmatprep.subr.mxu0 0.0
        %2385 = vmatpush1.xpose.msra.mxu0 0.0
        %2386 = vmatprep.subr.mxu0 0.0
        %2387 = vmatpush1.xpose.msra.mxu0 0.0
        %2388 = vmatprep.subr.mxu0 0.0
        %2389 = vmatpush1.xpose.msra.mxu0 0.0
        %2390 = vmatprep.subr.mxu0 0.0
        %2391 = vmatpush1.xpose.msra.mxu0 0.0
        %2392 = vmatprep.subr.mxu0 0.0
        %2393 = vmatpush1.xpose.msra.mxu0 0.0
        %2394 = vmatprep.mubr.f32.mxu0 0.0
        %2395 = vmatmul.mubr.f32.gmra.mrb[0].mxu0 %v1808
        %v2396 = vpop.f32.mrb[0].mxu0
        %v2397 = vadd.f32 0.0, %v2396
        %v2398 = vpop.f32.mrb[0].mxu0
        %2399 = vmatprep.mubr.f32.mxu0 0.0
        %2400 = vmatmul.mubr.f32.gmra.mrb[0].mxu0 %v1811
        %v2401 = vpop.f32.mrb[0].mxu0
        %v2402 = vadd.f32 0.0, %v2401
        %v2403 = vpop.f32.mrb[0].mxu0
        %2404 = vmatprep.mubr.f32.mxu0 0.0
        %2405 = vmatmul.mubr.f32.gmra.mrb[0].mxu0 %v1814
        %v2406 = vpop.f32.mrb[0].mxu0
        %v2407 = vadd.f32 0.0, %v2406
        %v2408 = vpop.f32.mrb[0].mxu0
        %2409 = vmatprep.mubr.f32.mxu0 0.0
        %2410 = vmatmul.mubr.f32.gmra.mrb[0].mxu0 %v1817
        %v2411 = vpop.f32.mrb[0].mxu0
        %v2412 = vadd.f32 0.0, %v2411
        %v2413 = vpop.f32.mrb[0].mxu0
        %2414 = vmatprep.mubr.f32.mxu0 0.0
        %2415 = vmatmul.mubr.f32.gmra.mrb[0].mxu0 %v1820
        %v2416 = vpop.f32.mrb[0].mxu0
        %v2417 = vadd.f32 0.0, %v2416
        %v2418 = vpop.f32.mrb[0].mxu0
        %2419 = vmatprep.mubr.f32.mxu0 0.0
        %2420 = vmatmul.mubr.f32.gmra.mrb[0].mxu0 %v1823
        %v2421 = vpop.f32.mrb[0].mxu0
        %v2422 = vadd.f32 0.0, %v2421
        %v2423 = vpop.f32.mrb[0].mxu0
        %2424 = vmatprep.mubr.f32.mxu0 0.0
        %2425 = vmatmul.mubr.f32.gmra.mrb[0].mxu0 %v1826
        %v2426 = vpop.f32.mrb[0].mxu0
        %v2427 = vadd.f32 0.0, %v2426
        %v2428 = vpop.f32.mrb[0].mxu0
        %2429 = vmatprep.mubr.f32.mxu0 0.0
        %2430 = vmatmul.mubr.f32.gmra.mrb[0].mxu0 %v1829
        %v2431 = vpop.f32.mrb[0].mxu0
        %v2432 = vadd.f32 0.0, %v2431
        %v2433 = vpop.f32.mrb[0].mxu0
        %2434 = vmatprep.mubr.f32.mxu0 0.0
        %2435 = vmatmul.mubr.f32.gmra.mrb[0].mxu0 %v1832
        %v2436 = vpop.f32.mrb[0].mxu0
        %v2437 = vadd.f32 0.0, %v2436
        %v2438 = vpop.f32.mrb[0].mxu0
        %2439 = vmatprep.mubr.f32.mxu0 0.0
        %2440 = vmatmul.mubr.f32.gmra.mrb[0].mxu0 %v1835
        %v2441 = vpop.f32.mrb[0].mxu0
        %v2442 = vadd.f32 0.0, %v2441
        %v2443 = vpop.f32.mrb[0].mxu0
        %2444 = vmatprep.mubr.f32.mxu0 0.0
        %2445 = vmatmul.mubr.f32.gmra.mrb[0].mxu0 %v1838
        %v2446 = vpop.f32.mrb[0].mxu0
        %v2447 = vadd.f32 0.0, %v2446
        %v2448 = vpop.f32.mrb[0].mxu0
        %2449 = vmatprep.mubr.f32.mxu0 0.0
        %2450 = vmatmul.mubr.f32.gmra.mrb[0].mxu0 %v1841
        %v2451 = vpop.f32.mrb[0].mxu0
        %v2452 = vadd.f32 0.0, %v2451
        %v2453 = vpop.f32.mrb[0].mxu0
        %2454 = vmatprep.mubr.f32.mxu0 0.0
        %2455 = vmatmul.mubr.f32.gmra.mrb[0].mxu0 %v1844
        %v2456 = vpop.f32.mrb[0].mxu0
        %v2457 = vadd.f32 0.0, %v2456
        %v2458 = vpop.f32.mrb[0].mxu0
        %2459 = vmatprep.mubr.f32.mxu0 0.0
        %2460 = vmatmul.mubr.f32.gmra.mrb[0].mxu0 %v1847
        %v2461 = vpop.f32.mrb[0].mxu0
        %v2462 = vadd.f32 0.0, %v2461
        %v2463 = vpop.f32.mrb[0].mxu0
        %2464 = vmatprep.mubr.f32.mxu0 0.0
        %2465 = vmatmul.mubr.f32.gmra.mrb[0].mxu0 %v1850
        %v2466 = vpop.f32.mrb[0].mxu0
        %v2467 = vadd.f32 0.0, %v2466
        %v2468 = vpop.f32.mrb[0].mxu0
        %2469 = vmatprep.mubr.f32.mxu0 0.0
        %2470 = vmatmul.mubr.f32.gmra.mrb[0].mxu0 %v1853
        %v2471 = vpop.f32.mrb[0].mxu0
        %v2472 = vadd.f32 0.0, %v2471
        %v2473 = vpop.f32.mrb[0].mxu0
        %2474 = vmatprep.mubr.f32.mxu0 0.0
        %2475 = vmatmul.mubr.f32.gmra.mrb[0].mxu0 %v1856
        %v2476 = vpop.f32.mrb[0].mxu0
        %v2477 = vadd.f32 0.0, %v2476
        %v2478 = vpop.f32.mrb[0].mxu0
        %2479 = vmatprep.mubr.f32.mxu0 0.0
        %2480 = vmatmul.mubr.f32.gmra.mrb[0].mxu0 %v1859
        %v2481 = vpop.f32.mrb[0].mxu0
        %v2482 = vadd.f32 0.0, %v2481
        %v2483 = vpop.f32.mrb[0].mxu0
        %2484 = vmatprep.mubr.f32.mxu0 0.0
        %2485 = vmatmul.mubr.f32.gmra.mrb[0].mxu0 %v1862
        %v2486 = vpop.f32.mrb[0].mxu0
        %v2487 = vadd.f32 0.0, %v2486
        %v2488 = vpop.f32.mrb[0].mxu0
        %2489 = vmatprep.mubr.f32.mxu0 0.0
        %2490 = vmatmul.mubr.f32.gmra.mrb[0].mxu0 %v1865
        %v2491 = vpop.f32.mrb[0].mxu0
        %v2492 = vadd.f32 0.0, %v2491
        %v2493 = vpop.f32.mrb[0].mxu0
        %2494 = vmatprep.mubr.f32.mxu0 0.0
        %2495 = vmatmul.mubr.f32.gmra.mrb[0].mxu0 %v1868
        %v2496 = vpop.f32.mrb[0].mxu0
        %v2497 = vadd.f32 0.0, %v2496
        %v2498 = vpop.f32.mrb[0].mxu0
        %2499 = vmatprep.mubr.f32.mxu0 0.0
        %2500 = vmatmul.mubr.f32.gmra.mrb[0].mxu0 %v1871
        %v2501 = vpop.f32.mrb[0].mxu0
        %v2502 = vadd.f32 0.0, %v2501
        %v2503 = vpop.f32.mrb[0].mxu0
        %2504 = vmatprep.mubr.f32.mxu0 0.0
        %2505 = vmatmul.mubr.f32.gmra.mrb[0].mxu0 %v1874
        %v2506 = vpop.f32.mrb[0].mxu0
        %v2507 = vadd.f32 0.0, %v2506
        %v2508 = vpop.f32.mrb[0].mxu0
        %2509 = vmatprep.mubr.f32.mxu0 0.0
        %2510 = vmatmul.mubr.f32.gmra.mrb[0].mxu0 %v1877
        %v2511 = vpop.f32.mrb[0].mxu0
        %v2512 = vadd.f32 0.0, %v2511
        %v2513 = vpop.f32.mrb[0].mxu0
        %2514 = vmatprep.mubr.f32.mxu0 0.0
        %2515 = vmatmul.mubr.f32.gmra.mrb[0].mxu0 %v1880
        %v2516 = vpop.f32.mrb[0].mxu0
        %v2517 = vadd.f32 0.0, %v2516
        %v2518 = vpop.f32.mrb[0].mxu0
        %2519 = vmatprep.mubr.f32.mxu0 0.0
        %2520 = vmatmul.mubr.f32.gmra.mrb[0].mxu0 %v1883
        %v2521 = vpop.f32.mrb[0].mxu0
        %v2522 = vadd.f32 0.0, %v2521
        %v2523 = vpop.f32.mrb[0].mxu0
        %2524 = vmatprep.mubr.f32.mxu0 0.0
        %2525 = vmatmul.mubr.f32.gmra.mrb[0].mxu0 %v1886
        %v2526 = vpop.f32.mrb[0].mxu0
        %v2527 = vadd.f32 0.0, %v2526
        %v2528 = vpop.f32.mrb[0].mxu0
        %2529 = vmatprep.mubr.f32.mxu0 0.0
        %2530 = vmatmul.mubr.f32.gmra.mrb[0].mxu0 %v1889
        %v2531 = vpop.f32.mrb[0].mxu0
        %v2532 = vadd.f32 0.0, %v2531
        %v2533 = vpop.f32.mrb[0].mxu0
        %2534 = vmatprep.mubr.f32.mxu0 0.0
        %2535 = vmatmul.mubr.f32.gmra.mrb[0].mxu0 %v1892
        %v2536 = vpop.f32.mrb[0].mxu0
        %v2537 = vadd.f32 0.0, %v2536
        %v2538 = vpop.f32.mrb[0].mxu0
        %2539 = vmatprep.mubr.f32.mxu0 0.0
        %2540 = vmatmul.mubr.f32.gmra.mrb[0].mxu0 %v1895
        %v2541 = vpop.f32.mrb[0].mxu0
        %v2542 = vadd.f32 0.0, %v2541
        %v2543 = vpop.f32.mrb[0].mxu0
        %2544 = vmatprep.mubr.f32.mxu0 0.0
        %2545 = vmatmul.mubr.f32.gmra.mrb[0].mxu0 %v1898
        %v2546 = vpop.f32.mrb[0].mxu0
        %v2547 = vadd.f32 0.0, %v2546
        %v2548 = vpop.f32.mrb[0].mxu0
        %2549 = vmatprep.mubr.f32.mxu0 0.0
        %2550 = vmatmul.mubr.f32.gmra.mrb[0].mxu0 %v1901
        %v2551 = vpop.f32.mrb[0].mxu0
        %v2552 = vadd.f32 0.0, %v2551
        %v2553 = vpop.f32.mrb[0].mxu0
        %2554 = vmatprep.mubr.f32.mxu0 0.0
        %2555 = vmatmul.mubr.f32.gmra.mrb[0].mxu0 %v1904
        %v2556 = vpop.f32.mrb[0].mxu0
        %v2557 = vadd.f32 0.0, %v2556
        %v2558 = vpop.f32.mrb[0].mxu0
        %2559 = vmatprep.mubr.f32.mxu0 0.0
        %2560 = vmatmul.mubr.f32.gmra.mrb[0].mxu0 %v1907
        %v2561 = vpop.f32.mrb[0].mxu0
        %v2562 = vadd.f32 0.0, %v2561
        %v2563 = vpop.f32.mrb[0].mxu0
        %2564 = vmatprep.mubr.f32.mxu0 0.0
        %2565 = vmatmul.mubr.f32.gmra.mrb[0].mxu0 %v1910
        %v2566 = vpop.f32.mrb[0].mxu0
        %v2567 = vadd.f32 0.0, %v2566
        %v2568 = vpop.f32.mrb[0].mxu0
        %2569 = vmatprep.mubr.f32.mxu0 0.0
        %2570 = vmatmul.mubr.f32.gmra.mrb[0].mxu0 %v1913
        %v2571 = vpop.f32.mrb[0].mxu0
        %v2572 = vadd.f32 0.0, %v2571
        %v2573 = vpop.f32.mrb[0].mxu0
        %2574 = vmatprep.mubr.f32.mxu0 0.0
        %2575 = vmatmul.mubr.f32.gmra.mrb[0].mxu0 %v1916
        %v2576 = vpop.f32.mrb[0].mxu0
        %v2577 = vadd.f32 0.0, %v2576
        %v2578 = vpop.f32.mrb[0].mxu0
        %2579 = vmatprep.mubr.f32.mxu0 0.0
        %2580 = vmatmul.mubr.f32.gmra.mrb[0].mxu0 %v1919
        %v2581 = vpop.f32.mrb[0].mxu0
        %v2582 = vadd.f32 0.0, %v2581
        %v2583 = vpop.f32.mrb[0].mxu0
        %2584 = vmatprep.mubr.f32.mxu0 0.0
        %2585 = vmatmul.mubr.f32.gmra.mrb[0].mxu0 %v1922
        %v2586 = vpop.f32.mrb[0].mxu0
        %v2587 = vadd.f32 0.0, %v2586
        %v2588 = vpop.f32.mrb[0].mxu0
        %2589 = vmatprep.mubr.f32.mxu0 0.0
        %2590 = vmatmul.mubr.f32.gmra.mrb[0].mxu0 %v1925
        %v2591 = vpop.f32.mrb[0].mxu0
        %v2592 = vadd.f32 0.0, %v2591
        %v2593 = vpop.f32.mrb[0].mxu0
        %2594 = vmatprep.mubr.f32.mxu0 0.0
        %2595 = vmatmul.mubr.f32.gmra.mrb[0].mxu0 %v1928
        %v2596 = vpop.f32.mrb[0].mxu0
        %v2597 = vadd.f32 0.0, %v2596
        %v2598 = vpop.f32.mrb[0].mxu0
        %2599 = vmatprep.mubr.f32.mxu0 0.0
        %2600 = vmatmul.mubr.f32.gmra.mrb[0].mxu0 %v1931
        %v2601 = vpop.f32.mrb[0].mxu0
        %v2602 = vadd.f32 0.0, %v2601
        %v2603 = vpop.f32.mrb[0].mxu0
        %2604 = vmatprep.mubr.f32.mxu0 0.0
        %2605 = vmatmul.mubr.f32.gmra.mrb[0].mxu0 %v1934
        %v2606 = vpop.f32.mrb[0].mxu0
        %v2607 = vadd.f32 0.0, %v2606
        %v2608 = vpop.f32.mrb[0].mxu0
        %2609 = vmatprep.mubr.f32.mxu0 0.0
        %2610 = vmatmul.mubr.f32.gmra.mrb[0].mxu0 %v1937
        %v2611 = vpop.f32.mrb[0].mxu0
        %v2612 = vadd.f32 0.0, %v2611
        %v2613 = vpop.f32.mrb[0].mxu0
        %2614 = vmatprep.mubr.f32.mxu0 0.0
        %2615 = vmatmul.mubr.f32.gmra.mrb[0].mxu0 %v1940
        %v2616 = vpop.f32.mrb[0].mxu0
        %v2617 = vadd.f32 0.0, %v2616
        %v2618 = vpop.f32.mrb[0].mxu0
        %2619 = vmatprep.mubr.f32.mxu0 0.0
        %2620 = vmatmul.mubr.f32.gmra.mrb[0].mxu0 %v2313
        %v2621 = vpop.f32.mrb[0].mxu0
        %v2622 = vadd.f32 0.0, %v2621
        %v2623 = vpop.f32.mrb[0].mxu0
        %2624 = vmatprep.mubr.f32.mxu0 0.0
        %2625 = vmatmul.mubr.f32.gmra.mrb[0].mxu0 %v2316
        %v2626 = vpop.f32.mrb[0].mxu0
        %v2627 = vadd.f32 0.0, %v2626
        %v2628 = vpop.f32.mrb[0].mxu0
        %2629 = vmatprep.mubr.f32.mxu0 0.0
        %2630 = vmatmul.mubr.f32.gmra.mrb[0].mxu0 %v2319
        %v2631 = vpop.f32.mrb[0].mxu0
        %v2632 = vadd.f32 0.0, %v2631
        %v2633 = vpop.f32.mrb[0].mxu0
        %2634 = vmatprep.mubr.f32.mxu0 0.0
        %2635 = vmatmul.mubr.f32.gmra.mrb[0].mxu0 %v2322
        %v2636 = vpop.f32.mrb[0].mxu0
        %v2637 = vadd.f32 0.0, %v2636
        %v2638 = vpop.f32.mrb[0].mxu0
        %2639 = vmatprep.mubr.f32.mxu0 0.0
        %2640 = vmatmul.mubr.f32.gmra.mrb[0].mxu0 %v2325
        %v2641 = vpop.f32.mrb[0].mxu0
        %v2642 = vadd.f32 0.0, %v2641
        %v2643 = vpop.f32.mrb[0].mxu0
        %2644 = vdwg.mxu0
        %v2645 = vadd.f32 %v2260, %v2397
        %v2646 = vadd.f32 %v2261, %v2402
        %v2647 = vadd.f32 %v2262, %v2407
        %v2648 = vadd.f32 %v2263, %v2412
        %v2649 = vadd.f32 %v2264, %v2417
        %v2650 = vadd.f32 %v2265, %v2422
        %v2651 = vadd.f32 %v2266, %v2427
        %v2652 = vadd.f32 %v2267, %v2432
        %v2653 = vadd.f32 %v2268, %v2437
        %v2654 = vadd.f32 %v2269, %v2442
        %v2655 = vadd.f32 %v2270, %v2447
        %v2656 = vadd.f32 %v2271, %v2452
        %v2657 = vadd.f32 %v2272, %v2457
        %v2658 = vadd.f32 %v2273, %v2462
        %v2659 = vadd.f32 %v2274, %v2467
        %v2660 = vadd.f32 %v2275, %v2472
        %v2661 = vadd.f32 %v2276, %v2477
        %v2662 = vadd.f32 %v2277, %v2482
        %v2663 = vadd.f32 %v2278, %v2487
        %v2664 = vadd.f32 %v2279, %v2492
        %v2665 = vadd.f32 %v2280, %v2497
        %v2666 = vadd.f32 %v2281, %v2502
        %v2667 = vadd.f32 %v2282, %v2507
        %v2668 = vadd.f32 %v2283, %v2512
        %v2669 = vadd.f32 %v2284, %v2517
        %v2670 = vadd.f32 %v2285, %v2522
        %v2671 = vadd.f32 %v2286, %v2527
        %v2672 = vadd.f32 %v2287, %v2532
        %v2673 = vadd.f32 %v2288, %v2537
        %v2674 = vadd.f32 %v2289, %v2542
        %v2675 = vadd.f32 %v2290, %v2547
        %v2676 = vadd.f32 %v2291, %v2552
        %v2677 = vadd.f32 %v2292, %v2557
        %v2678 = vadd.f32 %v2293, %v2562
        %v2679 = vadd.f32 %v2294, %v2567
        %v2680 = vadd.f32 %v2295, %v2572
        %v2681 = vadd.f32 %v2296, %v2577
        %v2682 = vadd.f32 %v2297, %v2582
        %v2683 = vadd.f32 %v2298, %v2587
        %v2684 = vadd.f32 %v2299, %v2592
        %v2685 = vadd.f32 %v2300, %v2597
        %v2686 = vadd.f32 %v2301, %v2602
        %v2687 = vadd.f32 %v2302, %v2607
        %v2688 = vadd.f32 %v2303, %v2612
        %v2689 = vadd.f32 %v2304, %v2617
        %v2690 = vadd.f32 %v2305, %v2622
        %v2691 = vadd.f32 %v2306, %v2627
        %v2692 = vadd.f32 %v2307, %v2632
        %v2693 = vadd.f32 %v2308, %v2637
        %v2694 = vadd.f32 %v2309, %v2642
        %s2695 = scalar_lea.vmem %s3, 28
        %v2696 = vld [vmem:[%s2695] sm:$0xf]
        %v2698 = vsel %vm543, %v1785, 0
        %v2701 = vsel %vm543, %v1786, 0
        %v2704 = vsel %vm543, %v1787, 0
        %v2707 = vsel %vm543, %v1788, 0
        %v2710 = vsel %vm543, %v1789, 0
        %v2713 = vsel %vm543, %v2696, 0
        %2715 = vmatprep.subr.mxu0 0.0
        %2716 = vmatpush1.xpose.msra.mxu0 %v2713
        %2717 = vmatprep.subr.mxu0 0.0
        %2718 = vmatpush1.xpose.msra.mxu0 0.0
        %2719 = vmatprep.subr.mxu0 0.0
        %2720 = vmatpush1.xpose.msra.mxu0 0.0
        %2721 = vmatprep.subr.mxu0 0.0
        %2722 = vmatpush1.xpose.msra.mxu0 0.0
        %2723 = vmatprep.subr.mxu0 0.0
        %2724 = vmatpush1.xpose.msra.mxu0 0.0
        %2725 = vmatprep.subr.mxu0 0.0
        %2726 = vmatpush1.xpose.msra.mxu0 0.0
        %2727 = vmatprep.subr.mxu0 0.0
        %2728 = vmatpush1.xpose.msra.mxu0 0.0
        %2729 = vmatprep.subr.mxu0 0.0
        %2730 = vmatpush1.xpose.msra.mxu0 0.0
        %2731 = vmatprep.subr.mxu0 0.0
        %2732 = vmatpush1.xpose.msra.mxu0 0.0
        %2733 = vmatprep.subr.mxu0 0.0
        %2734 = vmatpush1.xpose.msra.mxu0 0.0
        %2735 = vmatprep.subr.mxu0 0.0
        %2736 = vmatpush1.xpose.msra.mxu0 0.0
        %2737 = vmatprep.subr.mxu0 0.0
        %2738 = vmatpush1.xpose.msra.mxu0 0.0
        %2739 = vmatprep.subr.mxu0 0.0
        %2740 = vmatpush1.xpose.msra.mxu0 0.0
        %2741 = vmatprep.subr.mxu0 0.0
        %2742 = vmatpush1.xpose.msra.mxu0 0.0
        %2743 = vmatprep.subr.mxu0 0.0
        %2744 = vmatpush1.xpose.msra.mxu0 0.0
        %2745 = vmatprep.subr.mxu0 0.0
        %2746 = vmatpush1.xpose.msra.mxu0 0.0
        %2747 = vmatprep.subr.mxu0 0.0
        %2748 = vmatpush1.xpose.msra.mxu0 0.0
        %2749 = vmatprep.subr.mxu0 0.0
        %2750 = vmatpush1.xpose.msra.mxu0 0.0
        %2751 = vmatprep.subr.mxu0 0.0
        %2752 = vmatpush1.xpose.msra.mxu0 0.0
        %2753 = vmatprep.subr.mxu0 0.0
        %2754 = vmatpush1.xpose.msra.mxu0 0.0
        %2755 = vmatprep.subr.mxu0 0.0
        %2756 = vmatpush1.xpose.msra.mxu0 0.0
        %2757 = vmatprep.subr.mxu0 0.0
        %2758 = vmatpush1.xpose.msra.mxu0 0.0
        %2759 = vmatprep.subr.mxu0 0.0
        %2760 = vmatpush1.xpose.msra.mxu0 0.0
        %2761 = vmatprep.subr.mxu0 0.0
        %2762 = vmatpush1.xpose.msra.mxu0 0.0
        %2763 = vmatprep.subr.mxu0 0.0
        %2764 = vmatpush1.xpose.msra.mxu0 0.0
        %2765 = vmatprep.subr.mxu0 0.0
        %2766 = vmatpush1.xpose.msra.mxu0 0.0
        %2767 = vmatprep.subr.mxu0 0.0
        %2768 = vmatpush1.xpose.msra.mxu0 0.0
        %2769 = vmatprep.subr.mxu0 0.0
        %2770 = vmatpush1.xpose.msra.mxu0 0.0
        %2771 = vmatprep.subr.mxu0 0.0
        %2772 = vmatpush1.xpose.msra.mxu0 0.0
        %2773 = vmatprep.subr.mxu0 0.0
        %2774 = vmatpush1.xpose.msra.mxu0 0.0
        %2775 = vmatprep.subr.mxu0 0.0
        %2776 = vmatpush1.xpose.msra.mxu0 0.0
        %2777 = vmatprep.subr.mxu0 0.0
        %2778 = vmatpush1.xpose.msra.mxu0 0.0
        %2779 = vmatprep.mubr.f32.mxu0 0.0
        %2780 = vmatmul.mubr.f32.gmra.mrb[0].mxu0 %v1823
        %v2781 = vpop.f32.mrb[0].mxu0
        %v2782 = vadd.f32 0.0, %v2781
        %v2783 = vpop.f32.mrb[0].mxu0
        %2784 = vmatprep.mubr.f32.mxu0 0.0
        %2785 = vmatmul.mubr.f32.gmra.mrb[0].mxu0 %v1826
        %v2786 = vpop.f32.mrb[0].mxu0
        %v2787 = vadd.f32 0.0, %v2786
        %v2788 = vpop.f32.mrb[0].mxu0
        %2789 = vmatprep.mubr.f32.mxu0 0.0
        %2790 = vmatmul.mubr.f32.gmra.mrb[0].mxu0 %v1829
        %v2791 = vpop.f32.mrb[0].mxu0
        %v2792 = vadd.f32 0.0, %v2791
        %v2793 = vpop.f32.mrb[0].mxu0
        %2794 = vmatprep.mubr.f32.mxu0 0.0
        %2795 = vmatmul.mubr.f32.gmra.mrb[0].mxu0 %v1832
        %v2796 = vpop.f32.mrb[0].mxu0
        %v2797 = vadd.f32 0.0, %v2796
        %v2798 = vpop.f32.mrb[0].mxu0
        %2799 = vmatprep.mubr.f32.mxu0 0.0
        %2800 = vmatmul.mubr.f32.gmra.mrb[0].mxu0 %v1835
        %v2801 = vpop.f32.mrb[0].mxu0
        %v2802 = vadd.f32 0.0, %v2801
        %v2803 = vpop.f32.mrb[0].mxu0
        %2804 = vmatprep.mubr.f32.mxu0 0.0
        %2805 = vmatmul.mubr.f32.gmra.mrb[0].mxu0 %v1838
        %v2806 = vpop.f32.mrb[0].mxu0
        %v2807 = vadd.f32 0.0, %v2806
        %v2808 = vpop.f32.mrb[0].mxu0
        %2809 = vmatprep.mubr.f32.mxu0 0.0
        %2810 = vmatmul.mubr.f32.gmra.mrb[0].mxu0 %v1841
        %v2811 = vpop.f32.mrb[0].mxu0
        %v2812 = vadd.f32 0.0, %v2811
        %v2813 = vpop.f32.mrb[0].mxu0
        %2814 = vmatprep.mubr.f32.mxu0 0.0
        %2815 = vmatmul.mubr.f32.gmra.mrb[0].mxu0 %v1844
        %v2816 = vpop.f32.mrb[0].mxu0
        %v2817 = vadd.f32 0.0, %v2816
        %v2818 = vpop.f32.mrb[0].mxu0
        %2819 = vmatprep.mubr.f32.mxu0 0.0
        %2820 = vmatmul.mubr.f32.gmra.mrb[0].mxu0 %v1847
        %v2821 = vpop.f32.mrb[0].mxu0
        %v2822 = vadd.f32 0.0, %v2821
        %v2823 = vpop.f32.mrb[0].mxu0
        %2824 = vmatprep.mubr.f32.mxu0 0.0
        %2825 = vmatmul.mubr.f32.gmra.mrb[0].mxu0 %v1850
        %v2826 = vpop.f32.mrb[0].mxu0
        %v2827 = vadd.f32 0.0, %v2826
        %v2828 = vpop.f32.mrb[0].mxu0
        %2829 = vmatprep.mubr.f32.mxu0 0.0
        %2830 = vmatmul.mubr.f32.gmra.mrb[0].mxu0 %v1853
        %v2831 = vpop.f32.mrb[0].mxu0
        %v2832 = vadd.f32 0.0, %v2831
        %v2833 = vpop.f32.mrb[0].mxu0
        %2834 = vmatprep.mubr.f32.mxu0 0.0
        %2835 = vmatmul.mubr.f32.gmra.mrb[0].mxu0 %v1856
        %v2836 = vpop.f32.mrb[0].mxu0
        %v2837 = vadd.f32 0.0, %v2836
        %v2838 = vpop.f32.mrb[0].mxu0
        %2839 = vmatprep.mubr.f32.mxu0 0.0
        %2840 = vmatmul.mubr.f32.gmra.mrb[0].mxu0 %v1859
        %v2841 = vpop.f32.mrb[0].mxu0
        %v2842 = vadd.f32 0.0, %v2841
        %v2843 = vpop.f32.mrb[0].mxu0
        %2844 = vmatprep.mubr.f32.mxu0 0.0
        %2845 = vmatmul.mubr.f32.gmra.mrb[0].mxu0 %v1862
        %v2846 = vpop.f32.mrb[0].mxu0
        %v2847 = vadd.f32 0.0, %v2846
        %v2848 = vpop.f32.mrb[0].mxu0
        %2849 = vmatprep.mubr.f32.mxu0 0.0
        %2850 = vmatmul.mubr.f32.gmra.mrb[0].mxu0 %v1865
        %v2851 = vpop.f32.mrb[0].mxu0
        %v2852 = vadd.f32 0.0, %v2851
        %v2853 = vpop.f32.mrb[0].mxu0
        %2854 = vmatprep.mubr.f32.mxu0 0.0
        %2855 = vmatmul.mubr.f32.gmra.mrb[0].mxu0 %v1868
        %v2856 = vpop.f32.mrb[0].mxu0
        %v2857 = vadd.f32 0.0, %v2856
        %v2858 = vpop.f32.mrb[0].mxu0
        %2859 = vmatprep.mubr.f32.mxu0 0.0
        %2860 = vmatmul.mubr.f32.gmra.mrb[0].mxu0 %v1871
        %v2861 = vpop.f32.mrb[0].mxu0
        %v2862 = vadd.f32 0.0, %v2861
        %v2863 = vpop.f32.mrb[0].mxu0
        %2864 = vmatprep.mubr.f32.mxu0 0.0
        %2865 = vmatmul.mubr.f32.gmra.mrb[0].mxu0 %v1874
        %v2866 = vpop.f32.mrb[0].mxu0
        %v2867 = vadd.f32 0.0, %v2866
        %v2868 = vpop.f32.mrb[0].mxu0
        %2869 = vmatprep.mubr.f32.mxu0 0.0
        %2870 = vmatmul.mubr.f32.gmra.mrb[0].mxu0 %v1877
        %v2871 = vpop.f32.mrb[0].mxu0
        %v2872 = vadd.f32 0.0, %v2871
        %v2873 = vpop.f32.mrb[0].mxu0
        %2874 = vmatprep.mubr.f32.mxu0 0.0
        %2875 = vmatmul.mubr.f32.gmra.mrb[0].mxu0 %v1880
        %v2876 = vpop.f32.mrb[0].mxu0
        %v2877 = vadd.f32 0.0, %v2876
        %v2878 = vpop.f32.mrb[0].mxu0
        %2879 = vmatprep.mubr.f32.mxu0 0.0
        %2880 = vmatmul.mubr.f32.gmra.mrb[0].mxu0 %v1883
        %v2881 = vpop.f32.mrb[0].mxu0
        %v2882 = vadd.f32 0.0, %v2881
        %v2883 = vpop.f32.mrb[0].mxu0
        %2884 = vmatprep.mubr.f32.mxu0 0.0
        %2885 = vmatmul.mubr.f32.gmra.mrb[0].mxu0 %v1886
        %v2886 = vpop.f32.mrb[0].mxu0
        %v2887 = vadd.f32 0.0, %v2886
        %v2888 = vpop.f32.mrb[0].mxu0
        %2889 = vmatprep.mubr.f32.mxu0 0.0
        %2890 = vmatmul.mubr.f32.gmra.mrb[0].mxu0 %v1889
        %v2891 = vpop.f32.mrb[0].mxu0
        %v2892 = vadd.f32 0.0, %v2891
        %v2893 = vpop.f32.mrb[0].mxu0
        %2894 = vmatprep.mubr.f32.mxu0 0.0
        %2895 = vmatmul.mubr.f32.gmra.mrb[0].mxu0 %v1892
        %v2896 = vpop.f32.mrb[0].mxu0
        %v2897 = vadd.f32 0.0, %v2896
        %v2898 = vpop.f32.mrb[0].mxu0
        %2899 = vmatprep.mubr.f32.mxu0 0.0
        %2900 = vmatmul.mubr.f32.gmra.mrb[0].mxu0 %v1895
        %v2901 = vpop.f32.mrb[0].mxu0
        %v2902 = vadd.f32 0.0, %v2901
        %v2903 = vpop.f32.mrb[0].mxu0
        %2904 = vmatprep.mubr.f32.mxu0 0.0
        %2905 = vmatmul.mubr.f32.gmra.mrb[0].mxu0 %v1898
        %v2906 = vpop.f32.mrb[0].mxu0
        %v2907 = vadd.f32 0.0, %v2906
        %v2908 = vpop.f32.mrb[0].mxu0
        %2909 = vmatprep.mubr.f32.mxu0 0.0
        %2910 = vmatmul.mubr.f32.gmra.mrb[0].mxu0 %v1901
        %v2911 = vpop.f32.mrb[0].mxu0
        %v2912 = vadd.f32 0.0, %v2911
        %v2913 = vpop.f32.mrb[0].mxu0
        %2914 = vmatprep.mubr.f32.mxu0 0.0
        %2915 = vmatmul.mubr.f32.gmra.mrb[0].mxu0 %v1904
        %v2916 = vpop.f32.mrb[0].mxu0
        %v2917 = vadd.f32 0.0, %v2916
        %v2918 = vpop.f32.mrb[0].mxu0
        %2919 = vmatprep.mubr.f32.mxu0 0.0
        %2920 = vmatmul.mubr.f32.gmra.mrb[0].mxu0 %v1907
        %v2921 = vpop.f32.mrb[0].mxu0
        %v2922 = vadd.f32 0.0, %v2921
        %v2923 = vpop.f32.mrb[0].mxu0
        %2924 = vmatprep.mubr.f32.mxu0 0.0
        %2925 = vmatmul.mubr.f32.gmra.mrb[0].mxu0 %v1910
        %v2926 = vpop.f32.mrb[0].mxu0
        %v2927 = vadd.f32 0.0, %v2926
        %v2928 = vpop.f32.mrb[0].mxu0
        %2929 = vmatprep.mubr.f32.mxu0 0.0
        %2930 = vmatmul.mubr.f32.gmra.mrb[0].mxu0 %v1913
        %v2931 = vpop.f32.mrb[0].mxu0
        %v2932 = vadd.f32 0.0, %v2931
        %v2933 = vpop.f32.mrb[0].mxu0
        %2934 = vmatprep.mubr.f32.mxu0 0.0
        %2935 = vmatmul.mubr.f32.gmra.mrb[0].mxu0 %v1916
        %v2936 = vpop.f32.mrb[0].mxu0
        %v2937 = vadd.f32 0.0, %v2936
        %v2938 = vpop.f32.mrb[0].mxu0
        %2939 = vmatprep.mubr.f32.mxu0 0.0
        %2940 = vmatmul.mubr.f32.gmra.mrb[0].mxu0 %v1919
        %v2941 = vpop.f32.mrb[0].mxu0
        %v2942 = vadd.f32 0.0, %v2941
        %v2943 = vpop.f32.mrb[0].mxu0
        %2944 = vmatprep.mubr.f32.mxu0 0.0
        %2945 = vmatmul.mubr.f32.gmra.mrb[0].mxu0 %v1922
        %v2946 = vpop.f32.mrb[0].mxu0
        %v2947 = vadd.f32 0.0, %v2946
        %v2948 = vpop.f32.mrb[0].mxu0
        %2949 = vmatprep.mubr.f32.mxu0 0.0
        %2950 = vmatmul.mubr.f32.gmra.mrb[0].mxu0 %v1925
        %v2951 = vpop.f32.mrb[0].mxu0
        %v2952 = vadd.f32 0.0, %v2951
        %v2953 = vpop.f32.mrb[0].mxu0
        %2954 = vmatprep.mubr.f32.mxu0 0.0
        %2955 = vmatmul.mubr.f32.gmra.mrb[0].mxu0 %v1928
        %v2956 = vpop.f32.mrb[0].mxu0
        %v2957 = vadd.f32 0.0, %v2956
        %v2958 = vpop.f32.mrb[0].mxu0
        %2959 = vmatprep.mubr.f32.mxu0 0.0
        %2960 = vmatmul.mubr.f32.gmra.mrb[0].mxu0 %v1931
        %v2961 = vpop.f32.mrb[0].mxu0
        %v2962 = vadd.f32 0.0, %v2961
        %v2963 = vpop.f32.mrb[0].mxu0
        %2964 = vmatprep.mubr.f32.mxu0 0.0
        %2965 = vmatmul.mubr.f32.gmra.mrb[0].mxu0 %v1934
        %v2966 = vpop.f32.mrb[0].mxu0
        %v2967 = vadd.f32 0.0, %v2966
        %v2968 = vpop.f32.mrb[0].mxu0
        %2969 = vmatprep.mubr.f32.mxu0 0.0
        %2970 = vmatmul.mubr.f32.gmra.mrb[0].mxu0 %v1937
        %v2971 = vpop.f32.mrb[0].mxu0
        %v2972 = vadd.f32 0.0, %v2971
        %v2973 = vpop.f32.mrb[0].mxu0
        %2974 = vmatprep.mubr.f32.mxu0 0.0
        %2975 = vmatmul.mubr.f32.gmra.mrb[0].mxu0 %v1940
        %v2976 = vpop.f32.mrb[0].mxu0
        %v2977 = vadd.f32 0.0, %v2976
        %v2978 = vpop.f32.mrb[0].mxu0
        %2979 = vmatprep.mubr.f32.mxu0 0.0
        %2980 = vmatmul.mubr.f32.gmra.mrb[0].mxu0 %v2313
        %v2981 = vpop.f32.mrb[0].mxu0
        %v2982 = vadd.f32 0.0, %v2981
        %v2983 = vpop.f32.mrb[0].mxu0
        %2984 = vmatprep.mubr.f32.mxu0 0.0
        %2985 = vmatmul.mubr.f32.gmra.mrb[0].mxu0 %v2316
        %v2986 = vpop.f32.mrb[0].mxu0
        %v2987 = vadd.f32 0.0, %v2986
        %v2988 = vpop.f32.mrb[0].mxu0
        %2989 = vmatprep.mubr.f32.mxu0 0.0
        %2990 = vmatmul.mubr.f32.gmra.mrb[0].mxu0 %v2319
        %v2991 = vpop.f32.mrb[0].mxu0
        %v2992 = vadd.f32 0.0, %v2991
        %v2993 = vpop.f32.mrb[0].mxu0
        %2994 = vmatprep.mubr.f32.mxu0 0.0
        %2995 = vmatmul.mubr.f32.gmra.mrb[0].mxu0 %v2322
        %v2996 = vpop.f32.mrb[0].mxu0
        %v2997 = vadd.f32 0.0, %v2996
        %v2998 = vpop.f32.mrb[0].mxu0
        %2999 = vmatprep.mubr.f32.mxu0 0.0
        %3000 = vmatmul.mubr.f32.gmra.mrb[0].mxu0 %v2325
        %v3001 = vpop.f32.mrb[0].mxu0
        %v3002 = vadd.f32 0.0, %v3001
        %v3003 = vpop.f32.mrb[0].mxu0
        %3004 = vmatprep.mubr.f32.mxu0 0.0
        %3005 = vmatmul.mubr.f32.gmra.mrb[0].mxu0 %v2698
        %v3006 = vpop.f32.mrb[0].mxu0
        %v3007 = vadd.f32 0.0, %v3006
        %v3008 = vpop.f32.mrb[0].mxu0
        %3009 = vmatprep.mubr.f32.mxu0 0.0
        %3010 = vmatmul.mubr.f32.gmra.mrb[0].mxu0 %v2701
        %v3011 = vpop.f32.mrb[0].mxu0
        %v3012 = vadd.f32 0.0, %v3011
        %v3013 = vpop.f32.mrb[0].mxu0
        %3014 = vmatprep.mubr.f32.mxu0 0.0
        %3015 = vmatmul.mubr.f32.gmra.mrb[0].mxu0 %v2704
        %v3016 = vpop.f32.mrb[0].mxu0
        %v3017 = vadd.f32 0.0, %v3016
        %v3018 = vpop.f32.mrb[0].mxu0
        %3019 = vmatprep.mubr.f32.mxu0 0.0
        %3020 = vmatmul.mubr.f32.gmra.mrb[0].mxu0 %v2707
        %v3021 = vpop.f32.mrb[0].mxu0
        %v3022 = vadd.f32 0.0, %v3021
        %v3023 = vpop.f32.mrb[0].mxu0
        %3024 = vmatprep.mubr.f32.mxu0 0.0
        %3025 = vmatmul.mubr.f32.gmra.mrb[0].mxu0 %v2710
        %v3026 = vpop.f32.mrb[0].mxu0
        %v3027 = vadd.f32 0.0, %v3026
        %v3028 = vpop.f32.mrb[0].mxu0
        %3029 = vdwg.mxu0
        %v3030 = vadd.f32 %v2645, %v2782
        %v3031 = vadd.f32 %v2646, %v2787
        %v3032 = vadd.f32 %v2647, %v2792
        %v3033 = vadd.f32 %v2648, %v2797
        %v3034 = vadd.f32 %v2649, %v2802
        %v3035 = vadd.f32 %v2650, %v2807
        %v3036 = vadd.f32 %v2651, %v2812
        %v3037 = vadd.f32 %v2652, %v2817
        %v3038 = vadd.f32 %v2653, %v2822
        %v3039 = vadd.f32 %v2654, %v2827
        %v3040 = vadd.f32 %v2655, %v2832
        %v3041 = vadd.f32 %v2656, %v2837
        %v3042 = vadd.f32 %v2657, %v2842
        %v3043 = vadd.f32 %v2658, %v2847
        %v3044 = vadd.f32 %v2659, %v2852
        %v3045 = vadd.f32 %v2660, %v2857
        %v3046 = vadd.f32 %v2661, %v2862
        %v3047 = vadd.f32 %v2662, %v2867
        %v3048 = vadd.f32 %v2663, %v2872
        %v3049 = vadd.f32 %v2664, %v2877
        %v3050 = vadd.f32 %v2665, %v2882
        %v3051 = vadd.f32 %v2666, %v2887
        %v3052 = vadd.f32 %v2667, %v2892
        %v3053 = vadd.f32 %v2668, %v2897
        %v3054 = vadd.f32 %v2669, %v2902
        %v3055 = vadd.f32 %v2670, %v2907
        %v3056 = vadd.f32 %v2671, %v2912
        %v3057 = vadd.f32 %v2672, %v2917
        %v3058 = vadd.f32 %v2673, %v2922
        %v3059 = vadd.f32 %v2674, %v2927
        %v3060 = vadd.f32 %v2675, %v2932
        %v3061 = vadd.f32 %v2676, %v2937
        %v3062 = vadd.f32 %v2677, %v2942
        %v3063 = vadd.f32 %v2678, %v2947
        %v3064 = vadd.f32 %v2679, %v2952
        %v3065 = vadd.f32 %v2680, %v2957
        %v3066 = vadd.f32 %v2681, %v2962
        %v3067 = vadd.f32 %v2682, %v2967
        %v3068 = vadd.f32 %v2683, %v2972
        %v3069 = vadd.f32 %v2684, %v2977
        %v3070 = vadd.f32 %v2685, %v2982
        %v3071 = vadd.f32 %v2686, %v2987
        %v3072 = vadd.f32 %v2687, %v2992
        %v3073 = vadd.f32 %v2688, %v2997
        %v3074 = vadd.f32 %v2689, %v3002
        %v3075 = vadd.f32 %v2690, %v3007
        %v3076 = vadd.f32 %v2691, %v3012
        %v3077 = vadd.f32 %v2692, %v3017
        %v3078 = vadd.f32 %v2693, %v3022
        %v3079 = vadd.f32 %v2694, %v3027
        %v3080 = vld [vmem:[#allocation2 + $0x2] sm:$0xff]
        %v3081 = vld [vmem:[#allocation2 + $0xa] sm:$0xff]
        %v3082 = vld [vmem:[#allocation2 + $0x12] sm:$0xff]
        %v3083 = vld [vmem:[#allocation2 + $0x1a] sm:$0xff]
        %v3084 = vld [vmem:[#allocation2 + $0x22] sm:$0xff]
        %v3085 = vld [vmem:[#allocation2 + $0x32] sm:$0xff]
        %v3086 = vld [vmem:[#allocation2 + $0x3a] sm:$0xff]
        %v3087 = vld [vmem:[#allocation2 + $0x42] sm:$0xff]
        %v3088 = vld [vmem:[#allocation2 + $0x4a] sm:$0xff]
        %v3089 = vld [vmem:[#allocation2 + $0x52] sm:$0xff]
        %v3090 = vld [vmem:[#allocation2 + $0x62] sm:$0xff]
        %v3091 = vld [vmem:[#allocation2 + $0x6a] sm:$0xff]
        %v3092 = vld [vmem:[#allocation2 + $0x72] sm:$0xff]
        %v3093 = vld [vmem:[#allocation2 + $0x7a] sm:$0xff]
        %v3094 = vld [vmem:[#allocation2 + $0x82] sm:$0xff]
        %v3095 = vld [vmem:[#allocation2 + $0x92] sm:$0xff]
        %v3096 = vld [vmem:[#allocation2 + $0x9a] sm:$0xff]
        %v3097 = vld [vmem:[#allocation2 + $0xa2] sm:$0xff]
        %v3098 = vld [vmem:[#allocation2 + $0xaa] sm:$0xff]
        %v3099 = vld [vmem:[#allocation2 + $0xb2] sm:$0xff]
        %v3100 = vld [vmem:[#allocation2 + $0xc2] sm:$0xff]
        %v3101 = vld [vmem:[#allocation2 + $0xca] sm:$0xff]
        %v3102 = vld [vmem:[#allocation2 + $0xd2] sm:$0xff]
        %v3103 = vld [vmem:[#allocation2 + $0xda] sm:$0xff]
        %v3104 = vld [vmem:[#allocation2 + $0xe2] sm:$0xff]
        %v3105 = vld [vmem:[#allocation2 + $0xf2] sm:$0xff]
        %v3106 = vld [vmem:[#allocation2 + $0xfa] sm:$0xff]
        %v3107 = vld [vmem:[#allocation2 + $0x102] sm:$0xff]
        %v3108 = vld [vmem:[#allocation2 + $0x10a] sm:$0xff]
        %v3109 = vld [vmem:[#allocation2 + $0x112] sm:$0xff]
        %v3110 = vld [vmem:[#allocation2 + $0x122] sm:$0xff]
        %v3111 = vld [vmem:[#allocation2 + $0x12a] sm:$0xff]
        %v3112 = vld [vmem:[#allocation2 + $0x132] sm:$0xff]
        %v3113 = vld [vmem:[#allocation2 + $0x13a] sm:$0xff]
        %v3114 = vld [vmem:[#allocation2 + $0x142] sm:$0xff]
        %v3115 = vld [vmem:[#allocation2 + $0x152] sm:$0xff]
        %v3116 = vld [vmem:[#allocation2 + $0x15a] sm:$0xff]
        %v3117 = vld [vmem:[#allocation2 + $0x162] sm:$0xff]
        %v3118 = vld [vmem:[#allocation2 + $0x16a] sm:$0xff]
        %v3119 = vld [vmem:[#allocation2 + $0x172] sm:$0xff]
        %v3120 = vld [vmem:[#allocation2 + $0x182] sm:$0xff]
        %v3121 = vld [vmem:[#allocation2 + $0x18a] sm:$0xff]
        %v3122 = vld [vmem:[#allocation2 + $0x192] sm:$0xff]
        %v3123 = vld [vmem:[#allocation2 + $0x19a] sm:$0xff]
        %v3124 = vld [vmem:[#allocation2 + $0x1a2] sm:$0xff]
        %v3125 = vld [vmem:[#allocation2 + $0x1b2] sm:$0xff]
        %v3126 = vld [vmem:[#allocation2 + $0x1ba] sm:$0xff]
        %v3127 = vld [vmem:[#allocation2 + $0x1c2] sm:$0xff]
        %v3128 = vld [vmem:[#allocation2 + $0x1ca] sm:$0xff]
        %v3129 = vld [vmem:[#allocation2 + $0x1d2] sm:$0xff]
        %v3130 = vld [vmem:[#allocation2 + $0x1e2] sm:$0xff]
        %v3131 = vld [vmem:[#allocation2 + $0x1ea] sm:$0xff]
        %v3132 = vld [vmem:[#allocation2 + $0x1f2] sm:$0xff]
        %v3133 = vld [vmem:[#allocation2 + $0x1fa] sm:$0xff]
        %v3134 = vld [vmem:[#allocation2 + $0x202] sm:$0xff]
        %v3135 = vld [vmem:[#allocation2 + $0x212] sm:$0xff]
        %v3136 = vld [vmem:[#allocation2 + $0x21a] sm:$0xff]
        %v3137 = vld [vmem:[#allocation2 + $0x222] sm:$0xff]
        %v3138 = vld [vmem:[#allocation2 + $0x22a] sm:$0xff]
        %v3139 = vld [vmem:[#allocation2 + $0x232] sm:$0xff]
        %s3140 = scalar_lea.vmem %s3, 8
        %v3141 = vld [vmem:[%s3140] sm:$0xf]
        %v3143 = vsel %vm543, %v3080, 0
        %v3146 = vsel %vm543, %v3081, 0
        %v3149 = vsel %vm543, %v3082, 0
        %v3152 = vsel %vm543, %v3083, 0
        %v3155 = vsel %vm543, %v3084, 0
        %v3158 = vsel %vm543, %v3085, 0
        %v3161 = vsel %vm543, %v3086, 0
        %v3164 = vsel %vm543, %v3087, 0
        %v3167 = vsel %vm543, %v3088, 0
        %v3170 = vsel %vm543, %v3089, 0
        %v3173 = vsel %vm543, %v3090, 0
        %v3176 = vsel %vm543, %v3091, 0
        %v3179 = vsel %vm543, %v3092, 0
        %v3182 = vsel %vm543, %v3093, 0
        %v3185 = vsel %vm543, %v3094, 0
        %v3188 = vsel %vm543, %v3095, 0
        %v3191 = vsel %vm543, %v3096, 0
        %v3194 = vsel %vm543, %v3097, 0
        %v3197 = vsel %vm543, %v3098, 0
        %v3200 = vsel %vm543, %v3099, 0
        %v3203 = vsel %vm543, %v3100, 0
        %v3206 = vsel %vm543, %v3101, 0
        %v3209 = vsel %vm543, %v3102, 0
        %v3212 = vsel %vm543, %v3103, 0
        %v3215 = vsel %vm543, %v3104, 0
        %v3218 = vsel %vm543, %v3105, 0
        %v3221 = vsel %vm543, %v3106, 0
        %v3224 = vsel %vm543, %v3107, 0
        %v3227 = vsel %vm543, %v3108, 0
        %v3230 = vsel %vm543, %v3109, 0
        %v3233 = vsel %vm543, %v3110, 0
        %v3236 = vsel %vm543, %v3111, 0
        %v3239 = vsel %vm543, %v3112, 0
        %v3242 = vsel %vm543, %v3113, 0
        %v3245 = vsel %vm543, %v3114, 0
        %v3248 = vsel %vm543, %v3115, 0
        %v3251 = vsel %vm543, %v3116, 0
        %v3254 = vsel %vm543, %v3117, 0
        %v3257 = vsel %vm543, %v3118, 0
        %v3260 = vsel %vm543, %v3119, 0
        %v3263 = vsel %vm543, %v3120, 0
        %v3266 = vsel %vm543, %v3121, 0
        %v3269 = vsel %vm543, %v3122, 0
        %v3272 = vsel %vm543, %v3123, 0
        %v3275 = vsel %vm543, %v3124, 0
        %v3278 = vsel %vm543, %v3125, 0
        %v3281 = vsel %vm543, %v3126, 0
        %v3284 = vsel %vm543, %v3127, 0
        %v3287 = vsel %vm543, %v3128, 0
        %v3290 = vsel %vm543, %v3129, 0
        %v3293 = vsel %vm543, %v3141, 0
        %3295 = vmatprep.subr.mxu0 0.0
        %3296 = vmatpush1.xpose.msra.mxu0 %v3293
        %3297 = vmatprep.subr.mxu0 0.0
        %3298 = vmatpush1.xpose.msra.mxu0 0.0
        %3299 = vmatprep.subr.mxu0 0.0
        %3300 = vmatpush1.xpose.msra.mxu0 0.0
        %3301 = vmatprep.subr.mxu0 0.0
        %3302 = vmatpush1.xpose.msra.mxu0 0.0
        %3303 = vmatprep.subr.mxu0 0.0
        %3304 = vmatpush1.xpose.msra.mxu0 0.0
        %3305 = vmatprep.subr.mxu0 0.0
        %3306 = vmatpush1.xpose.msra.mxu0 0.0
        %3307 = vmatprep.subr.mxu0 0.0
        %3308 = vmatpush1.xpose.msra.mxu0 0.0
        %3309 = vmatprep.subr.mxu0 0.0
        %3310 = vmatpush1.xpose.msra.mxu0 0.0
        %3311 = vmatprep.subr.mxu0 0.0
        %3312 = vmatpush1.xpose.msra.mxu0 0.0
        %3313 = vmatprep.subr.mxu0 0.0
        %3314 = vmatpush1.xpose.msra.mxu0 0.0
        %3315 = vmatprep.subr.mxu0 0.0
        %3316 = vmatpush1.xpose.msra.mxu0 0.0
        %3317 = vmatprep.subr.mxu0 0.0
        %3318 = vmatpush1.xpose.msra.mxu0 0.0
        %3319 = vmatprep.subr.mxu0 0.0
        %3320 = vmatpush1.xpose.msra.mxu0 0.0
        %3321 = vmatprep.subr.mxu0 0.0
        %3322 = vmatpush1.xpose.msra.mxu0 0.0
        %3323 = vmatprep.subr.mxu0 0.0
        %3324 = vmatpush1.xpose.msra.mxu0 0.0
        %3325 = vmatprep.subr.mxu0 0.0
        %3326 = vmatpush1.xpose.msra.mxu0 0.0
        %3327 = vmatprep.subr.mxu0 0.0
        %3328 = vmatpush1.xpose.msra.mxu0 0.0
        %3329 = vmatprep.subr.mxu0 0.0
        %3330 = vmatpush1.xpose.msra.mxu0 0.0
        %3331 = vmatprep.subr.mxu0 0.0
        %3332 = vmatpush1.xpose.msra.mxu0 0.0
        %3333 = vmatprep.subr.mxu0 0.0
        %3334 = vmatpush1.xpose.msra.mxu0 0.0
        %3335 = vmatprep.subr.mxu0 0.0
        %3336 = vmatpush1.xpose.msra.mxu0 0.0
        %3337 = vmatprep.subr.mxu0 0.0
        %3338 = vmatpush1.xpose.msra.mxu0 0.0
        %3339 = vmatprep.subr.mxu0 0.0
        %3340 = vmatpush1.xpose.msra.mxu0 0.0
        %3341 = vmatprep.subr.mxu0 0.0
        %3342 = vmatpush1.xpose.msra.mxu0 0.0
        %3343 = vmatprep.subr.mxu0 0.0
        %3344 = vmatpush1.xpose.msra.mxu0 0.0
        %3345 = vmatprep.subr.mxu0 0.0
        %3346 = vmatpush1.xpose.msra.mxu0 0.0
        %3347 = vmatprep.subr.mxu0 0.0
        %3348 = vmatpush1.xpose.msra.mxu0 0.0
        %3349 = vmatprep.subr.mxu0 0.0
        %3350 = vmatpush1.xpose.msra.mxu0 0.0
        %3351 = vmatprep.subr.mxu0 0.0
        %3352 = vmatpush1.xpose.msra.mxu0 0.0
        %3353 = vmatprep.subr.mxu0 0.0
        %3354 = vmatpush1.xpose.msra.mxu0 0.0
        %3355 = vmatprep.subr.mxu0 0.0
        %3356 = vmatpush1.xpose.msra.mxu0 0.0
        %3357 = vmatprep.subr.mxu0 0.0
        %3358 = vmatpush1.xpose.msra.mxu0 0.0
        %3359 = vmatprep.mubr.f32.mxu0 0.0
        %3360 = vmatmul.mubr.f32.gmra.mrb[0].mxu0 %v3143
        %v3361 = vpop.f32.mrb[0].mxu0
        %v3362 = vadd.f32 0.0, %v3361
        %v3363 = vpop.f32.mrb[0].mxu0
        %3364 = vmatprep.mubr.f32.mxu0 0.0
        %3365 = vmatmul.mubr.f32.gmra.mrb[0].mxu0 %v3146
        %v3366 = vpop.f32.mrb[0].mxu0
        %v3367 = vadd.f32 0.0, %v3366
        %v3368 = vpop.f32.mrb[0].mxu0
        %3369 = vmatprep.mubr.f32.mxu0 0.0
        %3370 = vmatmul.mubr.f32.gmra.mrb[0].mxu0 %v3149
        %v3371 = vpop.f32.mrb[0].mxu0
        %v3372 = vadd.f32 0.0, %v3371
        %v3373 = vpop.f32.mrb[0].mxu0
        %3374 = vmatprep.mubr.f32.mxu0 0.0
        %3375 = vmatmul.mubr.f32.gmra.mrb[0].mxu0 %v3152
        %v3376 = vpop.f32.mrb[0].mxu0
        %v3377 = vadd.f32 0.0, %v3376
        %v3378 = vpop.f32.mrb[0].mxu0
        %3379 = vmatprep.mubr.f32.mxu0 0.0
        %3380 = vmatmul.mubr.f32.gmra.mrb[0].mxu0 %v3155
        %v3381 = vpop.f32.mrb[0].mxu0
        %v3382 = vadd.f32 0.0, %v3381
        %v3383 = vpop.f32.mrb[0].mxu0
        %3384 = vmatprep.mubr.f32.mxu0 0.0
        %3385 = vmatmul.mubr.f32.gmra.mrb[0].mxu0 %v3158
        %v3386 = vpop.f32.mrb[0].mxu0
        %v3387 = vadd.f32 0.0, %v3386
        %v3388 = vpop.f32.mrb[0].mxu0
        %3389 = vmatprep.mubr.f32.mxu0 0.0
        %3390 = vmatmul.mubr.f32.gmra.mrb[0].mxu0 %v3161
        %v3391 = vpop.f32.mrb[0].mxu0
        %v3392 = vadd.f32 0.0, %v3391
        %v3393 = vpop.f32.mrb[0].mxu0
        %3394 = vmatprep.mubr.f32.mxu0 0.0
        %3395 = vmatmul.mubr.f32.gmra.mrb[0].mxu0 %v3164
        %v3396 = vpop.f32.mrb[0].mxu0
        %v3397 = vadd.f32 0.0, %v3396
        %v3398 = vpop.f32.mrb[0].mxu0
        %3399 = vmatprep.mubr.f32.mxu0 0.0
        %3400 = vmatmul.mubr.f32.gmra.mrb[0].mxu0 %v3167
        %v3401 = vpop.f32.mrb[0].mxu0
        %v3402 = vadd.f32 0.0, %v3401
        %v3403 = vpop.f32.mrb[0].mxu0
        %3404 = vmatprep.mubr.f32.mxu0 0.0
        %3405 = vmatmul.mubr.f32.gmra.mrb[0].mxu0 %v3170
        %v3406 = vpop.f32.mrb[0].mxu0
        %v3407 = vadd.f32 0.0, %v3406
        %v3408 = vpop.f32.mrb[0].mxu0
        %3409 = vmatprep.mubr.f32.mxu0 0.0
        %3410 = vmatmul.mubr.f32.gmra.mrb[0].mxu0 %v3173
        %v3411 = vpop.f32.mrb[0].mxu0
        %v3412 = vadd.f32 0.0, %v3411
        %v3413 = vpop.f32.mrb[0].mxu0
        %3414 = vmatprep.mubr.f32.mxu0 0.0
        %3415 = vmatmul.mubr.f32.gmra.mrb[0].mxu0 %v3176
        %v3416 = vpop.f32.mrb[0].mxu0
        %v3417 = vadd.f32 0.0, %v3416
        %v3418 = vpop.f32.mrb[0].mxu0
        %3419 = vmatprep.mubr.f32.mxu0 0.0
        %3420 = vmatmul.mubr.f32.gmra.mrb[0].mxu0 %v3179
        %v3421 = vpop.f32.mrb[0].mxu0
        %v3422 = vadd.f32 0.0, %v3421
        %v3423 = vpop.f32.mrb[0].mxu0
        %3424 = vmatprep.mubr.f32.mxu0 0.0
        %3425 = vmatmul.mubr.f32.gmra.mrb[0].mxu0 %v3182
        %v3426 = vpop.f32.mrb[0].mxu0
        %v3427 = vadd.f32 0.0, %v3426
        %v3428 = vpop.f32.mrb[0].mxu0
        %3429 = vmatprep.mubr.f32.mxu0 0.0
        %3430 = vmatmul.mubr.f32.gmra.mrb[0].mxu0 %v3185
        %v3431 = vpop.f32.mrb[0].mxu0
        %v3432 = vadd.f32 0.0, %v3431
        %v3433 = vpop.f32.mrb[0].mxu0
        %3434 = vmatprep.mubr.f32.mxu0 0.0
        %3435 = vmatmul.mubr.f32.gmra.mrb[0].mxu0 %v3188
        %v3436 = vpop.f32.mrb[0].mxu0
        %v3437 = vadd.f32 0.0, %v3436
        %v3438 = vpop.f32.mrb[0].mxu0
        %3439 = vmatprep.mubr.f32.mxu0 0.0
        %3440 = vmatmul.mubr.f32.gmra.mrb[0].mxu0 %v3191
        %v3441 = vpop.f32.mrb[0].mxu0
        %v3442 = vadd.f32 0.0, %v3441
        %v3443 = vpop.f32.mrb[0].mxu0
        %3444 = vmatprep.mubr.f32.mxu0 0.0
        %3445 = vmatmul.mubr.f32.gmra.mrb[0].mxu0 %v3194
        %v3446 = vpop.f32.mrb[0].mxu0
        %v3447 = vadd.f32 0.0, %v3446
        %v3448 = vpop.f32.mrb[0].mxu0
        %3449 = vmatprep.mubr.f32.mxu0 0.0
        %3450 = vmatmul.mubr.f32.gmra.mrb[0].mxu0 %v3197
        %v3451 = vpop.f32.mrb[0].mxu0
        %v3452 = vadd.f32 0.0, %v3451
        %v3453 = vpop.f32.mrb[0].mxu0
        %3454 = vmatprep.mubr.f32.mxu0 0.0
        %3455 = vmatmul.mubr.f32.gmra.mrb[0].mxu0 %v3200
        %v3456 = vpop.f32.mrb[0].mxu0
        %v3457 = vadd.f32 0.0, %v3456
        %v3458 = vpop.f32.mrb[0].mxu0
        %3459 = vmatprep.mubr.f32.mxu0 0.0
        %3460 = vmatmul.mubr.f32.gmra.mrb[0].mxu0 %v3203
        %v3461 = vpop.f32.mrb[0].mxu0
        %v3462 = vadd.f32 0.0, %v3461
        %v3463 = vpop.f32.mrb[0].mxu0
        %3464 = vmatprep.mubr.f32.mxu0 0.0
        %3465 = vmatmul.mubr.f32.gmra.mrb[0].mxu0 %v3206
        %v3466 = vpop.f32.mrb[0].mxu0
        %v3467 = vadd.f32 0.0, %v3466
        %v3468 = vpop.f32.mrb[0].mxu0
        %3469 = vmatprep.mubr.f32.mxu0 0.0
        %3470 = vmatmul.mubr.f32.gmra.mrb[0].mxu0 %v3209
        %v3471 = vpop.f32.mrb[0].mxu0
        %v3472 = vadd.f32 0.0, %v3471
        %v3473 = vpop.f32.mrb[0].mxu0
        %3474 = vmatprep.mubr.f32.mxu0 0.0
        %3475 = vmatmul.mubr.f32.gmra.mrb[0].mxu0 %v3212
        %v3476 = vpop.f32.mrb[0].mxu0
        %v3477 = vadd.f32 0.0, %v3476
        %v3478 = vpop.f32.mrb[0].mxu0
        %3479 = vmatprep.mubr.f32.mxu0 0.0
        %3480 = vmatmul.mubr.f32.gmra.mrb[0].mxu0 %v3215
        %v3481 = vpop.f32.mrb[0].mxu0
        %v3482 = vadd.f32 0.0, %v3481
        %v3483 = vpop.f32.mrb[0].mxu0
        %3484 = vmatprep.mubr.f32.mxu0 0.0
        %3485 = vmatmul.mubr.f32.gmra.mrb[0].mxu0 %v3218
        %v3486 = vpop.f32.mrb[0].mxu0
        %v3487 = vadd.f32 0.0, %v3486
        %v3488 = vpop.f32.mrb[0].mxu0
        %3489 = vmatprep.mubr.f32.mxu0 0.0
        %3490 = vmatmul.mubr.f32.gmra.mrb[0].mxu0 %v3221
        %v3491 = vpop.f32.mrb[0].mxu0
        %v3492 = vadd.f32 0.0, %v3491
        %v3493 = vpop.f32.mrb[0].mxu0
        %3494 = vmatprep.mubr.f32.mxu0 0.0
        %3495 = vmatmul.mubr.f32.gmra.mrb[0].mxu0 %v3224
        %v3496 = vpop.f32.mrb[0].mxu0
        %v3497 = vadd.f32 0.0, %v3496
        %v3498 = vpop.f32.mrb[0].mxu0
        %3499 = vmatprep.mubr.f32.mxu0 0.0
        %3500 = vmatmul.mubr.f32.gmra.mrb[0].mxu0 %v3227
        %v3501 = vpop.f32.mrb[0].mxu0
        %v3502 = vadd.f32 0.0, %v3501
        %v3503 = vpop.f32.mrb[0].mxu0
        %3504 = vmatprep.mubr.f32.mxu0 0.0
        %3505 = vmatmul.mubr.f32.gmra.mrb[0].mxu0 %v3230
        %v3506 = vpop.f32.mrb[0].mxu0
        %v3507 = vadd.f32 0.0, %v3506
        %v3508 = vpop.f32.mrb[0].mxu0
        %3509 = vmatprep.mubr.f32.mxu0 0.0
        %3510 = vmatmul.mubr.f32.gmra.mrb[0].mxu0 %v3233
        %v3511 = vpop.f32.mrb[0].mxu0
        %v3512 = vadd.f32 0.0, %v3511
        %v3513 = vpop.f32.mrb[0].mxu0
        %3514 = vmatprep.mubr.f32.mxu0 0.0
        %3515 = vmatmul.mubr.f32.gmra.mrb[0].mxu0 %v3236
        %v3516 = vpop.f32.mrb[0].mxu0
        %v3517 = vadd.f32 0.0, %v3516
        %v3518 = vpop.f32.mrb[0].mxu0
        %3519 = vmatprep.mubr.f32.mxu0 0.0
        %3520 = vmatmul.mubr.f32.gmra.mrb[0].mxu0 %v3239
        %v3521 = vpop.f32.mrb[0].mxu0
        %v3522 = vadd.f32 0.0, %v3521
        %v3523 = vpop.f32.mrb[0].mxu0
        %3524 = vmatprep.mubr.f32.mxu0 0.0
        %3525 = vmatmul.mubr.f32.gmra.mrb[0].mxu0 %v3242
        %v3526 = vpop.f32.mrb[0].mxu0
        %v3527 = vadd.f32 0.0, %v3526
        %v3528 = vpop.f32.mrb[0].mxu0
        %3529 = vmatprep.mubr.f32.mxu0 0.0
        %3530 = vmatmul.mubr.f32.gmra.mrb[0].mxu0 %v3245
        %v3531 = vpop.f32.mrb[0].mxu0
        %v3532 = vadd.f32 0.0, %v3531
        %v3533 = vpop.f32.mrb[0].mxu0
        %3534 = vmatprep.mubr.f32.mxu0 0.0
        %3535 = vmatmul.mubr.f32.gmra.mrb[0].mxu0 %v3248
        %v3536 = vpop.f32.mrb[0].mxu0
        %v3537 = vadd.f32 0.0, %v3536
        %v3538 = vpop.f32.mrb[0].mxu0
        %3539 = vmatprep.mubr.f32.mxu0 0.0
        %3540 = vmatmul.mubr.f32.gmra.mrb[0].mxu0 %v3251
        %v3541 = vpop.f32.mrb[0].mxu0
        %v3542 = vadd.f32 0.0, %v3541
        %v3543 = vpop.f32.mrb[0].mxu0
        %3544 = vmatprep.mubr.f32.mxu0 0.0
        %3545 = vmatmul.mubr.f32.gmra.mrb[0].mxu0 %v3254
        %v3546 = vpop.f32.mrb[0].mxu0
        %v3547 = vadd.f32 0.0, %v3546
        %v3548 = vpop.f32.mrb[0].mxu0
        %3549 = vmatprep.mubr.f32.mxu0 0.0
        %3550 = vmatmul.mubr.f32.gmra.mrb[0].mxu0 %v3257
        %v3551 = vpop.f32.mrb[0].mxu0
        %v3552 = vadd.f32 0.0, %v3551
        %v3553 = vpop.f32.mrb[0].mxu0
        %3554 = vmatprep.mubr.f32.mxu0 0.0
        %3555 = vmatmul.mubr.f32.gmra.mrb[0].mxu0 %v3260
        %v3556 = vpop.f32.mrb[0].mxu0
        %v3557 = vadd.f32 0.0, %v3556
        %v3558 = vpop.f32.mrb[0].mxu0
        %3559 = vmatprep.mubr.f32.mxu0 0.0
        %3560 = vmatmul.mubr.f32.gmra.mrb[0].mxu0 %v3263
        %v3561 = vpop.f32.mrb[0].mxu0
        %v3562 = vadd.f32 0.0, %v3561
        %v3563 = vpop.f32.mrb[0].mxu0
        %3564 = vmatprep.mubr.f32.mxu0 0.0
        %3565 = vmatmul.mubr.f32.gmra.mrb[0].mxu0 %v3266
        %v3566 = vpop.f32.mrb[0].mxu0
        %v3567 = vadd.f32 0.0, %v3566
        %v3568 = vpop.f32.mrb[0].mxu0
        %3569 = vmatprep.mubr.f32.mxu0 0.0
        %3570 = vmatmul.mubr.f32.gmra.mrb[0].mxu0 %v3269
        %v3571 = vpop.f32.mrb[0].mxu0
        %v3572 = vadd.f32 0.0, %v3571
        %v3573 = vpop.f32.mrb[0].mxu0
        %3574 = vmatprep.mubr.f32.mxu0 0.0
        %3575 = vmatmul.mubr.f32.gmra.mrb[0].mxu0 %v3272
        %v3576 = vpop.f32.mrb[0].mxu0
        %v3577 = vadd.f32 0.0, %v3576
        %v3578 = vpop.f32.mrb[0].mxu0
        %3579 = vmatprep.mubr.f32.mxu0 0.0
        %3580 = vmatmul.mubr.f32.gmra.mrb[0].mxu0 %v3275
        %v3581 = vpop.f32.mrb[0].mxu0
        %v3582 = vadd.f32 0.0, %v3581
        %v3583 = vpop.f32.mrb[0].mxu0
        %3584 = vmatprep.mubr.f32.mxu0 0.0
        %3585 = vmatmul.mubr.f32.gmra.mrb[0].mxu0 %v3278
        %v3586 = vpop.f32.mrb[0].mxu0
        %v3587 = vadd.f32 0.0, %v3586
        %v3588 = vpop.f32.mrb[0].mxu0
        %3589 = vmatprep.mubr.f32.mxu0 0.0
        %3590 = vmatmul.mubr.f32.gmra.mrb[0].mxu0 %v3281
        %v3591 = vpop.f32.mrb[0].mxu0
        %v3592 = vadd.f32 0.0, %v3591
        %v3593 = vpop.f32.mrb[0].mxu0
        %3594 = vmatprep.mubr.f32.mxu0 0.0
        %3595 = vmatmul.mubr.f32.gmra.mrb[0].mxu0 %v3284
        %v3596 = vpop.f32.mrb[0].mxu0
        %v3597 = vadd.f32 0.0, %v3596
        %v3598 = vpop.f32.mrb[0].mxu0
        %3599 = vmatprep.mubr.f32.mxu0 0.0
        %3600 = vmatmul.mubr.f32.gmra.mrb[0].mxu0 %v3287
        %v3601 = vpop.f32.mrb[0].mxu0
        %v3602 = vadd.f32 0.0, %v3601
        %v3603 = vpop.f32.mrb[0].mxu0
        %3604 = vmatprep.mubr.f32.mxu0 0.0
        %3605 = vmatmul.mubr.f32.gmra.mrb[0].mxu0 %v3290
        %v3606 = vpop.f32.mrb[0].mxu0
        %v3607 = vadd.f32 0.0, %v3606
        %v3608 = vpop.f32.mrb[0].mxu0
        %3609 = vdwg.mxu0
        %v3610 = vadd.f32 %v3030, %v3362
        %v3611 = vadd.f32 %v3031, %v3367
        %v3612 = vadd.f32 %v3032, %v3372
        %v3613 = vadd.f32 %v3033, %v3377
        %v3614 = vadd.f32 %v3034, %v3382
        %v3615 = vadd.f32 %v3035, %v3387
        %v3616 = vadd.f32 %v3036, %v3392
        %v3617 = vadd.f32 %v3037, %v3397
        %v3618 = vadd.f32 %v3038, %v3402
        %v3619 = vadd.f32 %v3039, %v3407
        %v3620 = vadd.f32 %v3040, %v3412
        %v3621 = vadd.f32 %v3041, %v3417
        %v3622 = vadd.f32 %v3042, %v3422
        %v3623 = vadd.f32 %v3043, %v3427
        %v3624 = vadd.f32 %v3044, %v3432
        %v3625 = vadd.f32 %v3045, %v3437
        %v3626 = vadd.f32 %v3046, %v3442
        %v3627 = vadd.f32 %v3047, %v3447
        %v3628 = vadd.f32 %v3048, %v3452
        %v3629 = vadd.f32 %v3049, %v3457
        %v3630 = vadd.f32 %v3050, %v3462
        %v3631 = vadd.f32 %v3051, %v3467
        %v3632 = vadd.f32 %v3052, %v3472
        %v3633 = vadd.f32 %v3053, %v3477
        %v3634 = vadd.f32 %v3054, %v3482
        %v3635 = vadd.f32 %v3055, %v3487
        %v3636 = vadd.f32 %v3056, %v3492
        %v3637 = vadd.f32 %v3057, %v3497
        %v3638 = vadd.f32 %v3058, %v3502
        %v3639 = vadd.f32 %v3059, %v3507
        %v3640 = vadd.f32 %v3060, %v3512
        %v3641 = vadd.f32 %v3061, %v3517
        %v3642 = vadd.f32 %v3062, %v3522
        %v3643 = vadd.f32 %v3063, %v3527
        %v3644 = vadd.f32 %v3064, %v3532
        %v3645 = vadd.f32 %v3065, %v3537
        %v3646 = vadd.f32 %v3066, %v3542
        %v3647 = vadd.f32 %v3067, %v3547
        %v3648 = vadd.f32 %v3068, %v3552
        %v3649 = vadd.f32 %v3069, %v3557
        %v3650 = vadd.f32 %v3070, %v3562
        %v3651 = vadd.f32 %v3071, %v3567
        %v3652 = vadd.f32 %v3072, %v3572
        %v3653 = vadd.f32 %v3073, %v3577
        %v3654 = vadd.f32 %v3074, %v3582
        %v3655 = vadd.f32 %v3075, %v3587
        %v3656 = vadd.f32 %v3076, %v3592
        %v3657 = vadd.f32 %v3077, %v3597
        %v3658 = vadd.f32 %v3078, %v3602
        %v3659 = vadd.f32 %v3079, %v3607
        %s3660 = scalar_lea.vmem %s3, 20
        %v3661 = vld [vmem:[%s3660] sm:$0xf]
        %v3663 = vsel %vm543, %v3130, 0
        %v3666 = vsel %vm543, %v3131, 0
        %v3669 = vsel %vm543, %v3132, 0
        %v3672 = vsel %vm543, %v3133, 0
        %v3675 = vsel %vm543, %v3134, 0
        %v3678 = vsel %vm543, %v3661, 0
        %3680 = vmatprep.subr.mxu0 0.0
        %3681 = vmatpush1.xpose.msra.mxu0 %v3678
        %3682 = vmatprep.subr.mxu0 0.0
        %3683 = vmatpush1.xpose.msra.mxu0 0.0
        %3684 = vmatprep.subr.mxu0 0.0
        %3685 = vmatpush1.xpose.msra.mxu0 0.0
        %3686 = vmatprep.subr.mxu0 0.0
        %3687 = vmatpush1.xpose.msra.mxu0 0.0
        %3688 = vmatprep.subr.mxu0 0.0
        %3689 = vmatpush1.xpose.msra.mxu0 0.0
        %3690 = vmatprep.subr.mxu0 0.0
        %3691 = vmatpush1.xpose.msra.mxu0 0.0
        %3692 = vmatprep.subr.mxu0 0.0
        %3693 = vmatpush1.xpose.msra.mxu0 0.0
        %3694 = vmatprep.subr.mxu0 0.0
        %3695 = vmatpush1.xpose.msra.mxu0 0.0
        %3696 = vmatprep.subr.mxu0 0.0
        %3697 = vmatpush1.xpose.msra.mxu0 0.0
        %3698 = vmatprep.subr.mxu0 0.0
        %3699 = vmatpush1.xpose.msra.mxu0 0.0
        %3700 = vmatprep.subr.mxu0 0.0
        %3701 = vmatpush1.xpose.msra.mxu0 0.0
        %3702 = vmatprep.subr.mxu0 0.0
        %3703 = vmatpush1.xpose.msra.mxu0 0.0
        %3704 = vmatprep.subr.mxu0 0.0
        %3705 = vmatpush1.xpose.msra.mxu0 0.0
        %3706 = vmatprep.subr.mxu0 0.0
        %3707 = vmatpush1.xpose.msra.mxu0 0.0
        %3708 = vmatprep.subr.mxu0 0.0
        %3709 = vmatpush1.xpose.msra.mxu0 0.0
        %3710 = vmatprep.subr.mxu0 0.0
        %3711 = vmatpush1.xpose.msra.mxu0 0.0
        %3712 = vmatprep.subr.mxu0 0.0
        %3713 = vmatpush1.xpose.msra.mxu0 0.0
        %3714 = vmatprep.subr.mxu0 0.0
        %3715 = vmatpush1.xpose.msra.mxu0 0.0
        %3716 = vmatprep.subr.mxu0 0.0
        %3717 = vmatpush1.xpose.msra.mxu0 0.0
        %3718 = vmatprep.subr.mxu0 0.0
        %3719 = vmatpush1.xpose.msra.mxu0 0.0
        %3720 = vmatprep.subr.mxu0 0.0
        %3721 = vmatpush1.xpose.msra.mxu0 0.0
        %3722 = vmatprep.subr.mxu0 0.0
        %3723 = vmatpush1.xpose.msra.mxu0 0.0
        %3724 = vmatprep.subr.mxu0 0.0
        %3725 = vmatpush1.xpose.msra.mxu0 0.0
        %3726 = vmatprep.subr.mxu0 0.0
        %3727 = vmatpush1.xpose.msra.mxu0 0.0
        %3728 = vmatprep.subr.mxu0 0.0
        %3729 = vmatpush1.xpose.msra.mxu0 0.0
        %3730 = vmatprep.subr.mxu0 0.0
        %3731 = vmatpush1.xpose.msra.mxu0 0.0
        %3732 = vmatprep.subr.mxu0 0.0
        %3733 = vmatpush1.xpose.msra.mxu0 0.0
        %3734 = vmatprep.subr.mxu0 0.0
        %3735 = vmatpush1.xpose.msra.mxu0 0.0
        %3736 = vmatprep.subr.mxu0 0.0
        %3737 = vmatpush1.xpose.msra.mxu0 0.0
        %3738 = vmatprep.subr.mxu0 0.0
        %3739 = vmatpush1.xpose.msra.mxu0 0.0
        %3740 = vmatprep.subr.mxu0 0.0
        %3741 = vmatpush1.xpose.msra.mxu0 0.0
        %3742 = vmatprep.subr.mxu0 0.0
        %3743 = vmatpush1.xpose.msra.mxu0 0.0
        %3744 = vmatprep.mubr.f32.mxu0 0.0
        %3745 = vmatmul.mubr.f32.gmra.mrb[0].mxu0 %v3158
        %v3746 = vpop.f32.mrb[0].mxu0
        %v3747 = vadd.f32 0.0, %v3746
        %v3748 = vpop.f32.mrb[0].mxu0
        %3749 = vmatprep.mubr.f32.mxu0 0.0
        %3750 = vmatmul.mubr.f32.gmra.mrb[0].mxu0 %v3161
        %v3751 = vpop.f32.mrb[0].mxu0
        %v3752 = vadd.f32 0.0, %v3751
        %v3753 = vpop.f32.mrb[0].mxu0
        %3754 = vmatprep.mubr.f32.mxu0 0.0
        %3755 = vmatmul.mubr.f32.gmra.mrb[0].mxu0 %v3164
        %v3756 = vpop.f32.mrb[0].mxu0
        %v3757 = vadd.f32 0.0, %v3756
        %v3758 = vpop.f32.mrb[0].mxu0
        %3759 = vmatprep.mubr.f32.mxu0 0.0
        %3760 = vmatmul.mubr.f32.gmra.mrb[0].mxu0 %v3167
        %v3761 = vpop.f32.mrb[0].mxu0
        %v3762 = vadd.f32 0.0, %v3761
        %v3763 = vpop.f32.mrb[0].mxu0
        %3764 = vmatprep.mubr.f32.mxu0 0.0
        %3765 = vmatmul.mubr.f32.gmra.mrb[0].mxu0 %v3170
        %v3766 = vpop.f32.mrb[0].mxu0
        %v3767 = vadd.f32 0.0, %v3766
        %v3768 = vpop.f32.mrb[0].mxu0
        %3769 = vmatprep.mubr.f32.mxu0 0.0
        %3770 = vmatmul.mubr.f32.gmra.mrb[0].mxu0 %v3173
        %v3771 = vpop.f32.mrb[0].mxu0
        %v3772 = vadd.f32 0.0, %v3771
        %v3773 = vpop.f32.mrb[0].mxu0
        %3774 = vmatprep.mubr.f32.mxu0 0.0
        %3775 = vmatmul.mubr.f32.gmra.mrb[0].mxu0 %v3176
        %v3776 = vpop.f32.mrb[0].mxu0
        %v3777 = vadd.f32 0.0, %v3776
        %v3778 = vpop.f32.mrb[0].mxu0
        %3779 = vmatprep.mubr.f32.mxu0 0.0
        %3780 = vmatmul.mubr.f32.gmra.mrb[0].mxu0 %v3179
        %v3781 = vpop.f32.mrb[0].mxu0
        %v3782 = vadd.f32 0.0, %v3781
        %v3783 = vpop.f32.mrb[0].mxu0
        %3784 = vmatprep.mubr.f32.mxu0 0.0
        %3785 = vmatmul.mubr.f32.gmra.mrb[0].mxu0 %v3182
        %v3786 = vpop.f32.mrb[0].mxu0
        %v3787 = vadd.f32 0.0, %v3786
        %v3788 = vpop.f32.mrb[0].mxu0
        %3789 = vmatprep.mubr.f32.mxu0 0.0
        %3790 = vmatmul.mubr.f32.gmra.mrb[0].mxu0 %v3185
        %v3791 = vpop.f32.mrb[0].mxu0
        %v3792 = vadd.f32 0.0, %v3791
        %v3793 = vpop.f32.mrb[0].mxu0
        %3794 = vmatprep.mubr.f32.mxu0 0.0
        %3795 = vmatmul.mubr.f32.gmra.mrb[0].mxu0 %v3188
        %v3796 = vpop.f32.mrb[0].mxu0
        %v3797 = vadd.f32 0.0, %v3796
        %v3798 = vpop.f32.mrb[0].mxu0
        %3799 = vmatprep.mubr.f32.mxu0 0.0
        %3800 = vmatmul.mubr.f32.gmra.mrb[0].mxu0 %v3191
        %v3801 = vpop.f32.mrb[0].mxu0
        %v3802 = vadd.f32 0.0, %v3801
        %v3803 = vpop.f32.mrb[0].mxu0
        %3804 = vmatprep.mubr.f32.mxu0 0.0
        %3805 = vmatmul.mubr.f32.gmra.mrb[0].mxu0 %v3194
        %v3806 = vpop.f32.mrb[0].mxu0
        %v3807 = vadd.f32 0.0, %v3806
        %v3808 = vpop.f32.mrb[0].mxu0
        %3809 = vmatprep.mubr.f32.mxu0 0.0
        %3810 = vmatmul.mubr.f32.gmra.mrb[0].mxu0 %v3197
        %v3811 = vpop.f32.mrb[0].mxu0
        %v3812 = vadd.f32 0.0, %v3811
        %v3813 = vpop.f32.mrb[0].mxu0
        %3814 = vmatprep.mubr.f32.mxu0 0.0
        %3815 = vmatmul.mubr.f32.gmra.mrb[0].mxu0 %v3200
        %v3816 = vpop.f32.mrb[0].mxu0
        %v3817 = vadd.f32 0.0, %v3816
        %v3818 = vpop.f32.mrb[0].mxu0
        %3819 = vmatprep.mubr.f32.mxu0 0.0
        %3820 = vmatmul.mubr.f32.gmra.mrb[0].mxu0 %v3203
        %v3821 = vpop.f32.mrb[0].mxu0
        %v3822 = vadd.f32 0.0, %v3821
        %v3823 = vpop.f32.mrb[0].mxu0
        %3824 = vmatprep.mubr.f32.mxu0 0.0
        %3825 = vmatmul.mubr.f32.gmra.mrb[0].mxu0 %v3206
        %v3826 = vpop.f32.mrb[0].mxu0
        %v3827 = vadd.f32 0.0, %v3826
        %v3828 = vpop.f32.mrb[0].mxu0
        %3829 = vmatprep.mubr.f32.mxu0 0.0
        %3830 = vmatmul.mubr.f32.gmra.mrb[0].mxu0 %v3209
        %v3831 = vpop.f32.mrb[0].mxu0
        %v3832 = vadd.f32 0.0, %v3831
        %v3833 = vpop.f32.mrb[0].mxu0
        %3834 = vmatprep.mubr.f32.mxu0 0.0
        %3835 = vmatmul.mubr.f32.gmra.mrb[0].mxu0 %v3212
        %v3836 = vpop.f32.mrb[0].mxu0
        %v3837 = vadd.f32 0.0, %v3836
        %v3838 = vpop.f32.mrb[0].mxu0
        %3839 = vmatprep.mubr.f32.mxu0 0.0
        %3840 = vmatmul.mubr.f32.gmra.mrb[0].mxu0 %v3215
        %v3841 = vpop.f32.mrb[0].mxu0
        %v3842 = vadd.f32 0.0, %v3841
        %v3843 = vpop.f32.mrb[0].mxu0
        %3844 = vmatprep.mubr.f32.mxu0 0.0
        %3845 = vmatmul.mubr.f32.gmra.mrb[0].mxu0 %v3218
        %v3846 = vpop.f32.mrb[0].mxu0
        %v3847 = vadd.f32 0.0, %v3846
        %v3848 = vpop.f32.mrb[0].mxu0
        %3849 = vmatprep.mubr.f32.mxu0 0.0
        %3850 = vmatmul.mubr.f32.gmra.mrb[0].mxu0 %v3221
        %v3851 = vpop.f32.mrb[0].mxu0
        %v3852 = vadd.f32 0.0, %v3851
        %v3853 = vpop.f32.mrb[0].mxu0
        %3854 = vmatprep.mubr.f32.mxu0 0.0
        %3855 = vmatmul.mubr.f32.gmra.mrb[0].mxu0 %v3224
        %v3856 = vpop.f32.mrb[0].mxu0
        %v3857 = vadd.f32 0.0, %v3856
        %v3858 = vpop.f32.mrb[0].mxu0
        %3859 = vmatprep.mubr.f32.mxu0 0.0
        %3860 = vmatmul.mubr.f32.gmra.mrb[0].mxu0 %v3227
        %v3861 = vpop.f32.mrb[0].mxu0
        %v3862 = vadd.f32 0.0, %v3861
        %v3863 = vpop.f32.mrb[0].mxu0
        %3864 = vmatprep.mubr.f32.mxu0 0.0
        %3865 = vmatmul.mubr.f32.gmra.mrb[0].mxu0 %v3230
        %v3866 = vpop.f32.mrb[0].mxu0
        %v3867 = vadd.f32 0.0, %v3866
        %v3868 = vpop.f32.mrb[0].mxu0
        %3869 = vmatprep.mubr.f32.mxu0 0.0
        %3870 = vmatmul.mubr.f32.gmra.mrb[0].mxu0 %v3233
        %v3871 = vpop.f32.mrb[0].mxu0
        %v3872 = vadd.f32 0.0, %v3871
        %v3873 = vpop.f32.mrb[0].mxu0
        %3874 = vmatprep.mubr.f32.mxu0 0.0
        %3875 = vmatmul.mubr.f32.gmra.mrb[0].mxu0 %v3236
        %v3876 = vpop.f32.mrb[0].mxu0
        %v3877 = vadd.f32 0.0, %v3876
        %v3878 = vpop.f32.mrb[0].mxu0
        %3879 = vmatprep.mubr.f32.mxu0 0.0
        %3880 = vmatmul.mubr.f32.gmra.mrb[0].mxu0 %v3239
        %v3881 = vpop.f32.mrb[0].mxu0
        %v3882 = vadd.f32 0.0, %v3881
        %v3883 = vpop.f32.mrb[0].mxu0
        %3884 = vmatprep.mubr.f32.mxu0 0.0
        %3885 = vmatmul.mubr.f32.gmra.mrb[0].mxu0 %v3242
        %v3886 = vpop.f32.mrb[0].mxu0
        %v3887 = vadd.f32 0.0, %v3886
        %v3888 = vpop.f32.mrb[0].mxu0
        %3889 = vmatprep.mubr.f32.mxu0 0.0
        %3890 = vmatmul.mubr.f32.gmra.mrb[0].mxu0 %v3245
        %v3891 = vpop.f32.mrb[0].mxu0
        %v3892 = vadd.f32 0.0, %v3891
        %v3893 = vpop.f32.mrb[0].mxu0
        %3894 = vmatprep.mubr.f32.mxu0 0.0
        %3895 = vmatmul.mubr.f32.gmra.mrb[0].mxu0 %v3248
        %v3896 = vpop.f32.mrb[0].mxu0
        %v3897 = vadd.f32 0.0, %v3896
        %v3898 = vpop.f32.mrb[0].mxu0
        %3899 = vmatprep.mubr.f32.mxu0 0.0
        %3900 = vmatmul.mubr.f32.gmra.mrb[0].mxu0 %v3251
        %v3901 = vpop.f32.mrb[0].mxu0
        %v3902 = vadd.f32 0.0, %v3901
        %v3903 = vpop.f32.mrb[0].mxu0
        %3904 = vmatprep.mubr.f32.mxu0 0.0
        %3905 = vmatmul.mubr.f32.gmra.mrb[0].mxu0 %v3254
        %v3906 = vpop.f32.mrb[0].mxu0
        %v3907 = vadd.f32 0.0, %v3906
        %v3908 = vpop.f32.mrb[0].mxu0
        %3909 = vmatprep.mubr.f32.mxu0 0.0
        %3910 = vmatmul.mubr.f32.gmra.mrb[0].mxu0 %v3257
        %v3911 = vpop.f32.mrb[0].mxu0
        %v3912 = vadd.f32 0.0, %v3911
        %v3913 = vpop.f32.mrb[0].mxu0
        %3914 = vmatprep.mubr.f32.mxu0 0.0
        %3915 = vmatmul.mubr.f32.gmra.mrb[0].mxu0 %v3260
        %v3916 = vpop.f32.mrb[0].mxu0
        %v3917 = vadd.f32 0.0, %v3916
        %v3918 = vpop.f32.mrb[0].mxu0
        %3919 = vmatprep.mubr.f32.mxu0 0.0
        %3920 = vmatmul.mubr.f32.gmra.mrb[0].mxu0 %v3263
        %v3921 = vpop.f32.mrb[0].mxu0
        %v3922 = vadd.f32 0.0, %v3921
        %v3923 = vpop.f32.mrb[0].mxu0
        %3924 = vmatprep.mubr.f32.mxu0 0.0
        %3925 = vmatmul.mubr.f32.gmra.mrb[0].mxu0 %v3266
        %v3926 = vpop.f32.mrb[0].mxu0
        %v3927 = vadd.f32 0.0, %v3926
        %v3928 = vpop.f32.mrb[0].mxu0
        %3929 = vmatprep.mubr.f32.mxu0 0.0
        %3930 = vmatmul.mubr.f32.gmra.mrb[0].mxu0 %v3269
        %v3931 = vpop.f32.mrb[0].mxu0
        %v3932 = vadd.f32 0.0, %v3931
        %v3933 = vpop.f32.mrb[0].mxu0
        %3934 = vmatprep.mubr.f32.mxu0 0.0
        %3935 = vmatmul.mubr.f32.gmra.mrb[0].mxu0 %v3272
        %v3936 = vpop.f32.mrb[0].mxu0
        %v3937 = vadd.f32 0.0, %v3936
        %v3938 = vpop.f32.mrb[0].mxu0
        %3939 = vmatprep.mubr.f32.mxu0 0.0
        %3940 = vmatmul.mubr.f32.gmra.mrb[0].mxu0 %v3275
        %v3941 = vpop.f32.mrb[0].mxu0
        %v3942 = vadd.f32 0.0, %v3941
        %v3943 = vpop.f32.mrb[0].mxu0
        %3944 = vmatprep.mubr.f32.mxu0 0.0
        %3945 = vmatmul.mubr.f32.gmra.mrb[0].mxu0 %v3278
        %v3946 = vpop.f32.mrb[0].mxu0
        %v3947 = vadd.f32 0.0, %v3946
        %v3948 = vpop.f32.mrb[0].mxu0
        %3949 = vmatprep.mubr.f32.mxu0 0.0
        %3950 = vmatmul.mubr.f32.gmra.mrb[0].mxu0 %v3281
        %v3951 = vpop.f32.mrb[0].mxu0
        %v3952 = vadd.f32 0.0, %v3951
        %v3953 = vpop.f32.mrb[0].mxu0
        %3954 = vmatprep.mubr.f32.mxu0 0.0
        %3955 = vmatmul.mubr.f32.gmra.mrb[0].mxu0 %v3284
        %v3956 = vpop.f32.mrb[0].mxu0
        %v3957 = vadd.f32 0.0, %v3956
        %v3958 = vpop.f32.mrb[0].mxu0
        %3959 = vmatprep.mubr.f32.mxu0 0.0
        %3960 = vmatmul.mubr.f32.gmra.mrb[0].mxu0 %v3287
        %v3961 = vpop.f32.mrb[0].mxu0
        %v3962 = vadd.f32 0.0, %v3961
        %v3963 = vpop.f32.mrb[0].mxu0
        %3964 = vmatprep.mubr.f32.mxu0 0.0
        %3965 = vmatmul.mubr.f32.gmra.mrb[0].mxu0 %v3290
        %v3966 = vpop.f32.mrb[0].mxu0
        %v3967 = vadd.f32 0.0, %v3966
        %v3968 = vpop.f32.mrb[0].mxu0
        %3969 = vmatprep.mubr.f32.mxu0 0.0
        %3970 = vmatmul.mubr.f32.gmra.mrb[0].mxu0 %v3663
        %v3971 = vpop.f32.mrb[0].mxu0
        %v3972 = vadd.f32 0.0, %v3971
        %v3973 = vpop.f32.mrb[0].mxu0
        %3974 = vmatprep.mubr.f32.mxu0 0.0
        %3975 = vmatmul.mubr.f32.gmra.mrb[0].mxu0 %v3666
        %v3976 = vpop.f32.mrb[0].mxu0
        %v3977 = vadd.f32 0.0, %v3976
        %v3978 = vpop.f32.mrb[0].mxu0
        %3979 = vmatprep.mubr.f32.mxu0 0.0
        %3980 = vmatmul.mubr.f32.gmra.mrb[0].mxu0 %v3669
        %v3981 = vpop.f32.mrb[0].mxu0
        %v3982 = vadd.f32 0.0, %v3981
        %v3983 = vpop.f32.mrb[0].mxu0
        %3984 = vmatprep.mubr.f32.mxu0 0.0
        %3985 = vmatmul.mubr.f32.gmra.mrb[0].mxu0 %v3672
        %v3986 = vpop.f32.mrb[0].mxu0
        %v3987 = vadd.f32 0.0, %v3986
        %v3988 = vpop.f32.mrb[0].mxu0
        %3989 = vmatprep.mubr.f32.mxu0 0.0
        %3990 = vmatmul.mubr.f32.gmra.mrb[0].mxu0 %v3675
        %v3991 = vpop.f32.mrb[0].mxu0
        %v3992 = vadd.f32 0.0, %v3991
        %v3993 = vpop.f32.mrb[0].mxu0
        %3994 = vdwg.mxu0
        %v3995 = vadd.f32 %v3610, %v3747
        %v3996 = vadd.f32 %v3611, %v3752
        %v3997 = vadd.f32 %v3612, %v3757
        %v3998 = vadd.f32 %v3613, %v3762
        %v3999 = vadd.f32 %v3614, %v3767
        %v4000 = vadd.f32 %v3615, %v3772
        %v4001 = vadd.f32 %v3616, %v3777
        %v4002 = vadd.f32 %v3617, %v3782
        %v4003 = vadd.f32 %v3618, %v3787
        %v4004 = vadd.f32 %v3619, %v3792
        %v4005 = vadd.f32 %v3620, %v3797
        %v4006 = vadd.f32 %v3621, %v3802
        %v4007 = vadd.f32 %v3622, %v3807
        %v4008 = vadd.f32 %v3623, %v3812
        %v4009 = vadd.f32 %v3624, %v3817
        %v4010 = vadd.f32 %v3625, %v3822
        %v4011 = vadd.f32 %v3626, %v3827
        %v4012 = vadd.f32 %v3627, %v3832
        %v4013 = vadd.f32 %v3628, %v3837
        %v4014 = vadd.f32 %v3629, %v3842
        %v4015 = vadd.f32 %v3630, %v3847
        %v4016 = vadd.f32 %v3631, %v3852
        %v4017 = vadd.f32 %v3632, %v3857
        %v4018 = vadd.f32 %v3633, %v3862
        %v4019 = vadd.f32 %v3634, %v3867
        %v4020 = vadd.f32 %v3635, %v3872
        %v4021 = vadd.f32 %v3636, %v3877
        %v4022 = vadd.f32 %v3637, %v3882
        %v4023 = vadd.f32 %v3638, %v3887
        %v4024 = vadd.f32 %v3639, %v3892
        %v4025 = vadd.f32 %v3640, %v3897
        %v4026 = vadd.f32 %v3641, %v3902
        %v4027 = vadd.f32 %v3642, %v3907
        %v4028 = vadd.f32 %v3643, %v3912
        %v4029 = vadd.f32 %v3644, %v3917
        %v4030 = vadd.f32 %v3645, %v3922
        %v4031 = vadd.f32 %v3646, %v3927
        %v4032 = vadd.f32 %v3647, %v3932
        %v4033 = vadd.f32 %v3648, %v3937
        %v4034 = vadd.f32 %v3649, %v3942
        %v4035 = vadd.f32 %v3650, %v3947
        %v4036 = vadd.f32 %v3651, %v3952
        %v4037 = vadd.f32 %v3652, %v3957
        %v4038 = vadd.f32 %v3653, %v3962
        %v4039 = vadd.f32 %v3654, %v3967
        %v4040 = vadd.f32 %v3655, %v3972
        %v4041 = vadd.f32 %v3656, %v3977
        %v4042 = vadd.f32 %v3657, %v3982
        %v4043 = vadd.f32 %v3658, %v3987
        %v4044 = vadd.f32 %v3659, %v3992
        %s4045 = scalar_lea.vmem %s3, 32
        %v4046 = vld [vmem:[%s4045] sm:$0xf]
        %v4048 = vsel %vm543, %v3135, 0
        %v4051 = vsel %vm543, %v3136, 0
        %v4054 = vsel %vm543, %v3137, 0
        %v4057 = vsel %vm543, %v3138, 0
        %v4060 = vsel %vm543, %v3139, 0
        %v4063 = vsel %vm543, %v4046, 0
        %4065 = vmatprep.subr.mxu0 0.0
        %4066 = vmatpush1.xpose.msra.mxu0 %v4063
        %4067 = vmatprep.subr.mxu0 0.0
        %4068 = vmatpush1.xpose.msra.mxu0 0.0
        %4069 = vmatprep.subr.mxu0 0.0
        %4070 = vmatpush1.xpose.msra.mxu0 0.0
        %4071 = vmatprep.subr.mxu0 0.0
        %4072 = vmatpush1.xpose.msra.mxu0 0.0
        %4073 = vmatprep.subr.mxu0 0.0
        %4074 = vmatpush1.xpose.msra.mxu0 0.0
        %4075 = vmatprep.subr.mxu0 0.0
        %4076 = vmatpush1.xpose.msra.mxu0 0.0
        %4077 = vmatprep.subr.mxu0 0.0
        %4078 = vmatpush1.xpose.msra.mxu0 0.0
        %4079 = vmatprep.subr.mxu0 0.0
        %4080 = vmatpush1.xpose.msra.mxu0 0.0
        %4081 = vmatprep.subr.mxu0 0.0
        %4082 = vmatpush1.xpose.msra.mxu0 0.0
        %4083 = vmatprep.subr.mxu0 0.0
        %4084 = vmatpush1.xpose.msra.mxu0 0.0
        %4085 = vmatprep.subr.mxu0 0.0
        %4086 = vmatpush1.xpose.msra.mxu0 0.0
        %4087 = vmatprep.subr.mxu0 0.0
        %4088 = vmatpush1.xpose.msra.mxu0 0.0
        %4089 = vmatprep.subr.mxu0 0.0
        %4090 = vmatpush1.xpose.msra.mxu0 0.0
        %4091 = vmatprep.subr.mxu0 0.0
        %4092 = vmatpush1.xpose.msra.mxu0 0.0
        %4093 = vmatprep.subr.mxu0 0.0
        %4094 = vmatpush1.xpose.msra.mxu0 0.0
        %4095 = vmatprep.subr.mxu0 0.0
        %4096 = vmatpush1.xpose.msra.mxu0 0.0
        %4097 = vmatprep.subr.mxu0 0.0
        %4098 = vmatpush1.xpose.msra.mxu0 0.0
        %4099 = vmatprep.subr.mxu0 0.0
        %4100 = vmatpush1.xpose.msra.mxu0 0.0
        %4101 = vmatprep.subr.mxu0 0.0
        %4102 = vmatpush1.xpose.msra.mxu0 0.0
        %4103 = vmatprep.subr.mxu0 0.0
        %4104 = vmatpush1.xpose.msra.mxu0 0.0
        %4105 = vmatprep.subr.mxu0 0.0
        %4106 = vmatpush1.xpose.msra.mxu0 0.0
        %4107 = vmatprep.subr.mxu0 0.0
        %4108 = vmatpush1.xpose.msra.mxu0 0.0
        %4109 = vmatprep.subr.mxu0 0.0
        %4110 = vmatpush1.xpose.msra.mxu0 0.0
        %4111 = vmatprep.subr.mxu0 0.0
        %4112 = vmatpush1.xpose.msra.mxu0 0.0
        %4113 = vmatprep.subr.mxu0 0.0
        %4114 = vmatpush1.xpose.msra.mxu0 0.0
        %4115 = vmatprep.subr.mxu0 0.0
        %4116 = vmatpush1.xpose.msra.mxu0 0.0
        %4117 = vmatprep.subr.mxu0 0.0
        %4118 = vmatpush1.xpose.msra.mxu0 0.0
        %4119 = vmatprep.subr.mxu0 0.0
        %4120 = vmatpush1.xpose.msra.mxu0 0.0
        %4121 = vmatprep.subr.mxu0 0.0
        %4122 = vmatpush1.xpose.msra.mxu0 0.0
        %4123 = vmatprep.subr.mxu0 0.0
        %4124 = vmatpush1.xpose.msra.mxu0 0.0
        %4125 = vmatprep.subr.mxu0 0.0
        %4126 = vmatpush1.xpose.msra.mxu0 0.0
        %4127 = vmatprep.subr.mxu0 0.0
        %4128 = vmatpush1.xpose.msra.mxu0 0.0
        %4129 = vmatprep.mubr.f32.mxu0 0.0
        %4130 = vmatmul.mubr.f32.gmra.mrb[0].mxu0 %v3173
        %v4131 = vpop.f32.mrb[0].mxu0
        %v4132 = vadd.f32 0.0, %v4131
        %v4133 = vpop.f32.mrb[0].mxu0
        %4134 = vmatprep.mubr.f32.mxu0 0.0
        %4135 = vmatmul.mubr.f32.gmra.mrb[0].mxu0 %v3176
        %v4136 = vpop.f32.mrb[0].mxu0
        %v4137 = vadd.f32 0.0, %v4136
        %v4138 = vpop.f32.mrb[0].mxu0
        %4139 = vmatprep.mubr.f32.mxu0 0.0
        %4140 = vmatmul.mubr.f32.gmra.mrb[0].mxu0 %v3179
        %v4141 = vpop.f32.mrb[0].mxu0
        %v4142 = vadd.f32 0.0, %v4141
        %v4143 = vpop.f32.mrb[0].mxu0
        %4144 = vmatprep.mubr.f32.mxu0 0.0
        %4145 = vmatmul.mubr.f32.gmra.mrb[0].mxu0 %v3182
        %v4146 = vpop.f32.mrb[0].mxu0
        %v4147 = vadd.f32 0.0, %v4146
        %v4148 = vpop.f32.mrb[0].mxu0
        %4149 = vmatprep.mubr.f32.mxu0 0.0
        %4150 = vmatmul.mubr.f32.gmra.mrb[0].mxu0 %v3185
        %v4151 = vpop.f32.mrb[0].mxu0
        %v4152 = vadd.f32 0.0, %v4151
        %v4153 = vpop.f32.mrb[0].mxu0
        %4154 = vmatprep.mubr.f32.mxu0 0.0
        %4155 = vmatmul.mubr.f32.gmra.mrb[0].mxu0 %v3188
        %v4156 = vpop.f32.mrb[0].mxu0
        %v4157 = vadd.f32 0.0, %v4156
        %v4158 = vpop.f32.mrb[0].mxu0
        %4159 = vmatprep.mubr.f32.mxu0 0.0
        %4160 = vmatmul.mubr.f32.gmra.mrb[0].mxu0 %v3191
        %v4161 = vpop.f32.mrb[0].mxu0
        %v4162 = vadd.f32 0.0, %v4161
        %v4163 = vpop.f32.mrb[0].mxu0
        %4164 = vmatprep.mubr.f32.mxu0 0.0
        %4165 = vmatmul.mubr.f32.gmra.mrb[0].mxu0 %v3194
        %v4166 = vpop.f32.mrb[0].mxu0
        %v4167 = vadd.f32 0.0, %v4166
        %v4168 = vpop.f32.mrb[0].mxu0
        %4169 = vmatprep.mubr.f32.mxu0 0.0
        %4170 = vmatmul.mubr.f32.gmra.mrb[0].mxu0 %v3197
        %v4171 = vpop.f32.mrb[0].mxu0
        %v4172 = vadd.f32 0.0, %v4171
        %v4173 = vpop.f32.mrb[0].mxu0
        %4174 = vmatprep.mubr.f32.mxu0 0.0
        %4175 = vmatmul.mubr.f32.gmra.mrb[0].mxu0 %v3200
        %v4176 = vpop.f32.mrb[0].mxu0
        %v4177 = vadd.f32 0.0, %v4176
        %v4178 = vpop.f32.mrb[0].mxu0
        %4179 = vmatprep.mubr.f32.mxu0 0.0
        %4180 = vmatmul.mubr.f32.gmra.mrb[0].mxu0 %v3203
        %v4181 = vpop.f32.mrb[0].mxu0
        %v4182 = vadd.f32 0.0, %v4181
        %v4183 = vpop.f32.mrb[0].mxu0
        %4184 = vmatprep.mubr.f32.mxu0 0.0
        %4185 = vmatmul.mubr.f32.gmra.mrb[0].mxu0 %v3206
        %v4186 = vpop.f32.mrb[0].mxu0
        %v4187 = vadd.f32 0.0, %v4186
        %v4188 = vpop.f32.mrb[0].mxu0
        %4189 = vmatprep.mubr.f32.mxu0 0.0
        %4190 = vmatmul.mubr.f32.gmra.mrb[0].mxu0 %v3209
        %v4191 = vpop.f32.mrb[0].mxu0
        %v4192 = vadd.f32 0.0, %v4191
        %v4193 = vpop.f32.mrb[0].mxu0
        %4194 = vmatprep.mubr.f32.mxu0 0.0
        %4195 = vmatmul.mubr.f32.gmra.mrb[0].mxu0 %v3212
        %v4196 = vpop.f32.mrb[0].mxu0
        %v4197 = vadd.f32 0.0, %v4196
        %v4198 = vpop.f32.mrb[0].mxu0
        %4199 = vmatprep.mubr.f32.mxu0 0.0
        %4200 = vmatmul.mubr.f32.gmra.mrb[0].mxu0 %v3215
        %v4201 = vpop.f32.mrb[0].mxu0
        %v4202 = vadd.f32 0.0, %v4201
        %v4203 = vpop.f32.mrb[0].mxu0
        %4204 = vmatprep.mubr.f32.mxu0 0.0
        %4205 = vmatmul.mubr.f32.gmra.mrb[0].mxu0 %v3218
        %v4206 = vpop.f32.mrb[0].mxu0
        %v4207 = vadd.f32 0.0, %v4206
        %v4208 = vpop.f32.mrb[0].mxu0
        %4209 = vmatprep.mubr.f32.mxu0 0.0
        %4210 = vmatmul.mubr.f32.gmra.mrb[0].mxu0 %v3221
        %v4211 = vpop.f32.mrb[0].mxu0
        %v4212 = vadd.f32 0.0, %v4211
        %v4213 = vpop.f32.mrb[0].mxu0
        %4214 = vmatprep.mubr.f32.mxu0 0.0
        %4215 = vmatmul.mubr.f32.gmra.mrb[0].mxu0 %v3224
        %v4216 = vpop.f32.mrb[0].mxu0
        %v4217 = vadd.f32 0.0, %v4216
        %v4218 = vpop.f32.mrb[0].mxu0
        %4219 = vmatprep.mubr.f32.mxu0 0.0
        %4220 = vmatmul.mubr.f32.gmra.mrb[0].mxu0 %v3227
        %v4221 = vpop.f32.mrb[0].mxu0
        %v4222 = vadd.f32 0.0, %v4221
        %v4223 = vpop.f32.mrb[0].mxu0
        %4224 = vmatprep.mubr.f32.mxu0 0.0
        %4225 = vmatmul.mubr.f32.gmra.mrb[0].mxu0 %v3230
        %v4226 = vpop.f32.mrb[0].mxu0
        %v4227 = vadd.f32 0.0, %v4226
        %v4228 = vpop.f32.mrb[0].mxu0
        %4229 = vmatprep.mubr.f32.mxu0 0.0
        %4230 = vmatmul.mubr.f32.gmra.mrb[0].mxu0 %v3233
        %v4231 = vpop.f32.mrb[0].mxu0
        %v4232 = vadd.f32 0.0, %v4231
        %v4233 = vpop.f32.mrb[0].mxu0
        %4234 = vmatprep.mubr.f32.mxu0 0.0
        %4235 = vmatmul.mubr.f32.gmra.mrb[0].mxu0 %v3236
        %v4236 = vpop.f32.mrb[0].mxu0
        %v4237 = vadd.f32 0.0, %v4236
        %v4238 = vpop.f32.mrb[0].mxu0
        %4239 = vmatprep.mubr.f32.mxu0 0.0
        %4240 = vmatmul.mubr.f32.gmra.mrb[0].mxu0 %v3239
        %v4241 = vpop.f32.mrb[0].mxu0
        %v4242 = vadd.f32 0.0, %v4241
        %v4243 = vpop.f32.mrb[0].mxu0
        %4244 = vmatprep.mubr.f32.mxu0 0.0
        %4245 = vmatmul.mubr.f32.gmra.mrb[0].mxu0 %v3242
        %v4246 = vpop.f32.mrb[0].mxu0
        %v4247 = vadd.f32 0.0, %v4246
        %v4248 = vpop.f32.mrb[0].mxu0
        %4249 = vmatprep.mubr.f32.mxu0 0.0
        %4250 = vmatmul.mubr.f32.gmra.mrb[0].mxu0 %v3245
        %v4251 = vpop.f32.mrb[0].mxu0
        %v4252 = vadd.f32 0.0, %v4251
        %v4253 = vpop.f32.mrb[0].mxu0
        %4254 = vmatprep.mubr.f32.mxu0 0.0
        %4255 = vmatmul.mubr.f32.gmra.mrb[0].mxu0 %v3248
        %v4256 = vpop.f32.mrb[0].mxu0
        %v4257 = vadd.f32 0.0, %v4256
        %v4258 = vpop.f32.mrb[0].mxu0
        %4259 = vmatprep.mubr.f32.mxu0 0.0
        %4260 = vmatmul.mubr.f32.gmra.mrb[0].mxu0 %v3251
        %v4261 = vpop.f32.mrb[0].mxu0
        %v4262 = vadd.f32 0.0, %v4261
        %v4263 = vpop.f32.mrb[0].mxu0
        %4264 = vmatprep.mubr.f32.mxu0 0.0
        %4265 = vmatmul.mubr.f32.gmra.mrb[0].mxu0 %v3254
        %v4266 = vpop.f32.mrb[0].mxu0
        %v4267 = vadd.f32 0.0, %v4266
        %v4268 = vpop.f32.mrb[0].mxu0
        %4269 = vmatprep.mubr.f32.mxu0 0.0
        %4270 = vmatmul.mubr.f32.gmra.mrb[0].mxu0 %v3257
        %v4271 = vpop.f32.mrb[0].mxu0
        %v4272 = vadd.f32 0.0, %v4271
        %v4273 = vpop.f32.mrb[0].mxu0
        %4274 = vmatprep.mubr.f32.mxu0 0.0
        %4275 = vmatmul.mubr.f32.gmra.mrb[0].mxu0 %v3260
        %v4276 = vpop.f32.mrb[0].mxu0
        %v4277 = vadd.f32 0.0, %v4276
        %v4278 = vpop.f32.mrb[0].mxu0
        %4279 = vmatprep.mubr.f32.mxu0 0.0
        %4280 = vmatmul.mubr.f32.gmra.mrb[0].mxu0 %v3263
        %v4281 = vpop.f32.mrb[0].mxu0
        %v4282 = vadd.f32 0.0, %v4281
        %v4283 = vpop.f32.mrb[0].mxu0
        %4284 = vmatprep.mubr.f32.mxu0 0.0
        %4285 = vmatmul.mubr.f32.gmra.mrb[0].mxu0 %v3266
        %v4286 = vpop.f32.mrb[0].mxu0
        %v4287 = vadd.f32 0.0, %v4286
        %v4288 = vpop.f32.mrb[0].mxu0
        %4289 = vmatprep.mubr.f32.mxu0 0.0
        %4290 = vmatmul.mubr.f32.gmra.mrb[0].mxu0 %v3269
        %v4291 = vpop.f32.mrb[0].mxu0
        %v4292 = vadd.f32 0.0, %v4291
        %v4293 = vpop.f32.mrb[0].mxu0
        %4294 = vmatprep.mubr.f32.mxu0 0.0
        %4295 = vmatmul.mubr.f32.gmra.mrb[0].mxu0 %v3272
        %v4296 = vpop.f32.mrb[0].mxu0
        %v4297 = vadd.f32 0.0, %v4296
        %v4298 = vpop.f32.mrb[0].mxu0
        %4299 = vmatprep.mubr.f32.mxu0 0.0
        %4300 = vmatmul.mubr.f32.gmra.mrb[0].mxu0 %v3275
        %v4301 = vpop.f32.mrb[0].mxu0
        %v4302 = vadd.f32 0.0, %v4301
        %v4303 = vpop.f32.mrb[0].mxu0
        %4304 = vmatprep.mubr.f32.mxu0 0.0
        %4305 = vmatmul.mubr.f32.gmra.mrb[0].mxu0 %v3278
        %v4306 = vpop.f32.mrb[0].mxu0
        %v4307 = vadd.f32 0.0, %v4306
        %v4308 = vpop.f32.mrb[0].mxu0
        %4309 = vmatprep.mubr.f32.mxu0 0.0
        %4310 = vmatmul.mubr.f32.gmra.mrb[0].mxu0 %v3281
        %v4311 = vpop.f32.mrb[0].mxu0
        %v4312 = vadd.f32 0.0, %v4311
        %v4313 = vpop.f32.mrb[0].mxu0
        %4314 = vmatprep.mubr.f32.mxu0 0.0
        %4315 = vmatmul.mubr.f32.gmra.mrb[0].mxu0 %v3284
        %v4316 = vpop.f32.mrb[0].mxu0
        %v4317 = vadd.f32 0.0, %v4316
        %v4318 = vpop.f32.mrb[0].mxu0
        %4319 = vmatprep.mubr.f32.mxu0 0.0
        %4320 = vmatmul.mubr.f32.gmra.mrb[0].mxu0 %v3287
        %v4321 = vpop.f32.mrb[0].mxu0
        %v4322 = vadd.f32 0.0, %v4321
        %v4323 = vpop.f32.mrb[0].mxu0
        %4324 = vmatprep.mubr.f32.mxu0 0.0
        %4325 = vmatmul.mubr.f32.gmra.mrb[0].mxu0 %v3290
        %v4326 = vpop.f32.mrb[0].mxu0
        %v4327 = vadd.f32 0.0, %v4326
        %v4328 = vpop.f32.mrb[0].mxu0
        %4329 = vmatprep.mubr.f32.mxu0 0.0
        %4330 = vmatmul.mubr.f32.gmra.mrb[0].mxu0 %v3663
        %v4331 = vpop.f32.mrb[0].mxu0
        %v4332 = vadd.f32 0.0, %v4331
        %v4333 = vpop.f32.mrb[0].mxu0
        %4334 = vmatprep.mubr.f32.mxu0 0.0
        %4335 = vmatmul.mubr.f32.gmra.mrb[0].mxu0 %v3666
        %v4336 = vpop.f32.mrb[0].mxu0
        %v4337 = vadd.f32 0.0, %v4336
        %v4338 = vpop.f32.mrb[0].mxu0
        %4339 = vmatprep.mubr.f32.mxu0 0.0
        %4340 = vmatmul.mubr.f32.gmra.mrb[0].mxu0 %v3669
        %v4341 = vpop.f32.mrb[0].mxu0
        %v4342 = vadd.f32 0.0, %v4341
        %v4343 = vpop.f32.mrb[0].mxu0
        %4344 = vmatprep.mubr.f32.mxu0 0.0
        %4345 = vmatmul.mubr.f32.gmra.mrb[0].mxu0 %v3672
        %v4346 = vpop.f32.mrb[0].mxu0
        %v4347 = vadd.f32 0.0, %v4346
        %v4348 = vpop.f32.mrb[0].mxu0
        %4349 = vmatprep.mubr.f32.mxu0 0.0
        %4350 = vmatmul.mubr.f32.gmra.mrb[0].mxu0 %v3675
        %v4351 = vpop.f32.mrb[0].mxu0
        %v4352 = vadd.f32 0.0, %v4351
        %v4353 = vpop.f32.mrb[0].mxu0
        %4354 = vmatprep.mubr.f32.mxu0 0.0
        %4355 = vmatmul.mubr.f32.gmra.mrb[0].mxu0 %v4048
        %v4356 = vpop.f32.mrb[0].mxu0
        %v4357 = vadd.f32 0.0, %v4356
        %v4358 = vpop.f32.mrb[0].mxu0
        %4359 = vmatprep.mubr.f32.mxu0 0.0
        %4360 = vmatmul.mubr.f32.gmra.mrb[0].mxu0 %v4051
        %v4361 = vpop.f32.mrb[0].mxu0
        %v4362 = vadd.f32 0.0, %v4361
        %v4363 = vpop.f32.mrb[0].mxu0
        %4364 = vmatprep.mubr.f32.mxu0 0.0
        %4365 = vmatmul.mubr.f32.gmra.mrb[0].mxu0 %v4054
        %v4366 = vpop.f32.mrb[0].mxu0
        %v4367 = vadd.f32 0.0, %v4366
        %v4368 = vpop.f32.mrb[0].mxu0
        %4369 = vmatprep.mubr.f32.mxu0 0.0
        %4370 = vmatmul.mubr.f32.gmra.mrb[0].mxu0 %v4057
        %v4371 = vpop.f32.mrb[0].mxu0
        %v4372 = vadd.f32 0.0, %v4371
        %v4373 = vpop.f32.mrb[0].mxu0
        %4374 = vmatprep.mubr.f32.mxu0 0.0
        %4375 = vmatmul.mubr.f32.gmra.mrb[0].mxu0 %v4060
        %v4376 = vpop.f32.mrb[0].mxu0
        %v4377 = vadd.f32 0.0, %v4376
        %v4378 = vpop.f32.mrb[0].mxu0
        %4379 = vdwg.mxu0
        %v4380 = vadd.f32 %v3995, %v4132
        %v4381 = vadd.f32 %v3996, %v4137
        %v4382 = vadd.f32 %v3997, %v4142
        %v4383 = vadd.f32 %v3998, %v4147
        %v4384 = vadd.f32 %v3999, %v4152
        %v4385 = vadd.f32 %v4000, %v4157
        %v4386 = vadd.f32 %v4001, %v4162
        %v4387 = vadd.f32 %v4002, %v4167
        %v4388 = vadd.f32 %v4003, %v4172
        %v4389 = vadd.f32 %v4004, %v4177
        %v4390 = vadd.f32 %v4005, %v4182
        %v4391 = vadd.f32 %v4006, %v4187
        %v4392 = vadd.f32 %v4007, %v4192
        %v4393 = vadd.f32 %v4008, %v4197
        %v4394 = vadd.f32 %v4009, %v4202
        %v4395 = vadd.f32 %v4010, %v4207
        %v4396 = vadd.f32 %v4011, %v4212
        %v4397 = vadd.f32 %v4012, %v4217
        %v4398 = vadd.f32 %v4013, %v4222
        %v4399 = vadd.f32 %v4014, %v4227
        %v4400 = vadd.f32 %v4015, %v4232
        %v4401 = vadd.f32 %v4016, %v4237
        %v4402 = vadd.f32 %v4017, %v4242
        %v4403 = vadd.f32 %v4018, %v4247
        %v4404 = vadd.f32 %v4019, %v4252
        %v4405 = vadd.f32 %v4020, %v4257
        %v4406 = vadd.f32 %v4021, %v4262
        %v4407 = vadd.f32 %v4022, %v4267
        %v4408 = vadd.f32 %v4023, %v4272
        %v4409 = vadd.f32 %v4024, %v4277
        %v4410 = vadd.f32 %v4025, %v4282
        %v4411 = vadd.f32 %v4026, %v4287
        %v4412 = vadd.f32 %v4027, %v4292
        %v4413 = vadd.f32 %v4028, %v4297
        %v4414 = vadd.f32 %v4029, %v4302
        %v4415 = vadd.f32 %v4030, %v4307
        %v4416 = vadd.f32 %v4031, %v4312
        %v4417 = vadd.f32 %v4032, %v4317
        %v4418 = vadd.f32 %v4033, %v4322
        %v4419 = vadd.f32 %v4034, %v4327
        %v4420 = vadd.f32 %v4035, %v4332
        %v4421 = vadd.f32 %v4036, %v4337
        %v4422 = vadd.f32 %v4037, %v4342
        %v4423 = vadd.f32 %v4038, %v4347
        %v4424 = vadd.f32 %v4039, %v4352
        %v4425 = vadd.f32 %v4040, %v4357
        %v4426 = vadd.f32 %v4041, %v4362
        %v4427 = vadd.f32 %v4042, %v4367
        %v4428 = vadd.f32 %v4043, %v4372
        %v4429 = vadd.f32 %v4044, %v4377
        %v4430 = vld [vmem:[%s4] sm:$0x1]
        %v4432 = vlaneseq
        %v4433 = vshrl.u32 %v4432, 7
        %v4434 = vsub.s32 0, %v4433
        %v4435 = vrot.slane %v4430, %v4434
        %v4437 = vadd.f32 %v4380, %v4435
        %v4438 = vadd.f32 %v4381, %v4435
        %v4439 = vadd.f32 %v4382, %v4435
        %v4440 = vadd.f32 %v4383, %v4435
        %v4441 = vadd.f32 %v4384, %v4435
        %v4442 = vadd.f32 %v4385, %v4435
        %v4443 = vadd.f32 %v4386, %v4435
        %v4444 = vadd.f32 %v4387, %v4435
        %v4445 = vadd.f32 %v4388, %v4435
        %v4446 = vadd.f32 %v4389, %v4435
        %v4447 = vadd.f32 %v4390, %v4435
        %v4448 = vadd.f32 %v4391, %v4435
        %v4449 = vadd.f32 %v4392, %v4435
        %v4450 = vadd.f32 %v4393, %v4435
        %v4451 = vadd.f32 %v4394, %v4435
        %v4452 = vadd.f32 %v4395, %v4435
        %v4453 = vadd.f32 %v4396, %v4435
        %v4454 = vadd.f32 %v4397, %v4435
        %v4455 = vadd.f32 %v4398, %v4435
        %v4456 = vadd.f32 %v4399, %v4435
        %v4457 = vadd.f32 %v4400, %v4435
        %v4458 = vadd.f32 %v4401, %v4435
        %v4459 = vadd.f32 %v4402, %v4435
        %v4460 = vadd.f32 %v4403, %v4435
        %v4461 = vadd.f32 %v4404, %v4435
        %v4462 = vadd.f32 %v4405, %v4435
        %v4463 = vadd.f32 %v4406, %v4435
        %v4464 = vadd.f32 %v4407, %v4435
        %v4465 = vadd.f32 %v4408, %v4435
        %v4466 = vadd.f32 %v4409, %v4435
        %v4467 = vadd.f32 %v4410, %v4435
        %v4468 = vadd.f32 %v4411, %v4435
        %v4469 = vadd.f32 %v4412, %v4435
        %v4470 = vadd.f32 %v4413, %v4435
        %v4471 = vadd.f32 %v4414, %v4435
        %v4472 = vadd.f32 %v4415, %v4435
        %v4473 = vadd.f32 %v4416, %v4435
        %v4474 = vadd.f32 %v4417, %v4435
        %v4475 = vadd.f32 %v4418, %v4435
        %v4476 = vadd.f32 %v4419, %v4435
        %v4477 = vadd.f32 %v4420, %v4435
        %v4478 = vadd.f32 %v4421, %v4435
        %v4479 = vadd.f32 %v4422, %v4435
        %v4480 = vadd.f32 %v4423, %v4435
        %v4481 = vadd.f32 %v4424, %v4435
        %v4482 = vadd.f32 %v4425, %v4435
        %v4483 = vadd.f32 %v4426, %v4435
        %v4484 = vadd.f32 %v4427, %v4435
        %v4485 = vadd.f32 %v4428, %v4435
        %v4486 = vadd.f32 %v4429, %v4435
        %v4487 = vmax.f32 %v4437, 0.0
        %v4488 = vmax.f32 %v4438, 0.0
        %v4489 = vmax.f32 %v4439, 0.0
        %v4490 = vmax.f32 %v4440, 0.0
        %v4491 = vmax.f32 %v4441, 0.0
        %v4492 = vmax.f32 %v4442, 0.0
        %v4493 = vmax.f32 %v4443, 0.0
        %v4494 = vmax.f32 %v4444, 0.0
        %v4495 = vmax.f32 %v4445, 0.0
        %v4496 = vmax.f32 %v4446, 0.0
        %v4497 = vmax.f32 %v4447, 0.0
        %v4498 = vmax.f32 %v4448, 0.0
        %v4499 = vmax.f32 %v4449, 0.0
        %v4500 = vmax.f32 %v4450, 0.0
        %v4501 = vmax.f32 %v4451, 0.0
        %v4502 = vmax.f32 %v4452, 0.0
        %v4503 = vmax.f32 %v4453, 0.0
        %v4504 = vmax.f32 %v4454, 0.0
        %v4505 = vmax.f32 %v4455, 0.0
        %v4506 = vmax.f32 %v4456, 0.0
        %v4507 = vmax.f32 %v4457, 0.0
        %v4508 = vmax.f32 %v4458, 0.0
        %v4509 = vmax.f32 %v4459, 0.0
        %v4510 = vmax.f32 %v4460, 0.0
        %v4511 = vmax.f32 %v4461, 0.0
        %v4512 = vmax.f32 %v4462, 0.0
        %v4513 = vmax.f32 %v4463, 0.0
        %v4514 = vmax.f32 %v4464, 0.0
        %v4515 = vmax.f32 %v4465, 0.0
        %v4516 = vmax.f32 %v4466, 0.0
        %v4517 = vmax.f32 %v4467, 0.0
        %v4518 = vmax.f32 %v4468, 0.0
        %v4519 = vmax.f32 %v4469, 0.0
        %v4520 = vmax.f32 %v4470, 0.0
        %v4521 = vmax.f32 %v4471, 0.0
        %v4522 = vmax.f32 %v4472, 0.0
        %v4523 = vmax.f32 %v4473, 0.0
        %v4524 = vmax.f32 %v4474, 0.0
        %v4525 = vmax.f32 %v4475, 0.0
        %v4526 = vmax.f32 %v4476, 0.0
        %v4527 = vmax.f32 %v4477, 0.0
        %v4528 = vmax.f32 %v4478, 0.0
        %v4529 = vmax.f32 %v4479, 0.0
        %v4530 = vmax.f32 %v4480, 0.0
        %v4531 = vmax.f32 %v4481, 0.0
        %v4532 = vmax.f32 %v4482, 0.0
        %v4533 = vmax.f32 %v4483, 0.0
        %v4534 = vmax.f32 %v4484, 0.0
        %v4535 = vmax.f32 %v4485, 0.0
        %v4536 = vmax.f32 %v4486, 0.0
        %s4537 = ssub.s32 %s325, 1
        %v4538 = vstv %s4537
        %v4539 = vadd.s32 %v4538, 1
        %v4540 = vadd.s32 %v4538, 2
        %v4541 = vadd.s32 %v4538, 3
        %v4542 = vadd.s32 %v4538, 4
        %v4543 = vadd.s32 %v4538, 5
        %v4544 = vadd.s32 %v4538, 6
        %v4545 = vadd.s32 %v4538, 7
        %v4546 = vadd.s32 %v4538, 8
        %v4547 = vadd.s32 %v4538, 9
        %vm4548 = vcmp.ge.s32.totalorder %v4538, 0
        %vm4549 = vcmp.ge.s32.totalorder %v4539, 0
        %vm4550 = vcmp.ge.s32.totalorder %v4540, 0
        %vm4551 = vcmp.ge.s32.totalorder %v4541, 0
        %vm4552 = vcmp.ge.s32.totalorder %v4542, 0
        %vm4553 = vcmp.ge.s32.totalorder %v4543, 0
        %vm4554 = vcmp.ge.s32.totalorder %v4544, 0
        %vm4555 = vcmp.ge.s32.totalorder %v4545, 0
        %vm4556 = vcmp.ge.s32.totalorder %v4546, 0
        %vm4557 = vcmp.ge.s32.totalorder %v4547, 0
        %vm4558 = vcmp.lt.s32.totalorder %v4538, 40
        %vm4559 = vcmp.lt.s32.totalorder %v4539, 40
        %vm4560 = vcmp.lt.s32.totalorder %v4540, 40
        %vm4561 = vcmp.lt.s32.totalorder %v4541, 40
        %vm4562 = vcmp.lt.s32.totalorder %v4542, 40
        %vm4563 = vcmp.lt.s32.totalorder %v4543, 40
        %vm4564 = vcmp.lt.s32.totalorder %v4544, 40
        %vm4565 = vcmp.lt.s32.totalorder %v4545, 40
        %vm4566 = vcmp.lt.s32.totalorder %v4546, 40
        %vm4567 = vcmp.lt.s32.totalorder %v4547, 40
        %vm4568 = vmand %vm4548, %vm4558
        %vm4569 = vmand %vm4549, %vm4559
        %vm4570 = vmand %vm4550, %vm4560
        %vm4571 = vmand %vm4551, %vm4561
        %vm4572 = vmand %vm4552, %vm4562
        %vm4573 = vmand %vm4553, %vm4563
        %vm4574 = vmand %vm4554, %vm4564
        %vm4575 = vmand %vm4555, %vm4565
        %vm4576 = vmand %vm4556, %vm4566
        %vm4577 = vmand %vm4557, %vm4567
        %v4578 = vsel %vm4568, 1, 0
        %v4579 = vsel %vm4569, 1, 0
        %v4580 = vsel %vm4570, 1, 0
        %v4581 = vsel %vm4571, 1, 0
        %v4582 = vsel %vm4572, 1, 0
        %v4583 = vsel %vm4573, 1, 0
        %v4584 = vsel %vm4574, 1, 0
        %v4585 = vsel %vm4575, 1, 0
        %v4586 = vsel %vm4576, 1, 0
        %v4587 = vsel %vm4577, 1, 0
        %v4588 = vcvt.s32.f32 %v4578
        %v4589 = vcvt.s32.f32 %v4579
        %v4590 = vcvt.s32.f32 %v4580
        %v4591 = vcvt.s32.f32 %v4581
        %v4592 = vcvt.s32.f32 %v4582
        %v4593 = vcvt.s32.f32 %v4583
        %v4594 = vcvt.s32.f32 %v4584
        %v4595 = vcvt.s32.f32 %v4585
        %v4596 = vcvt.s32.f32 %v4586
        %v4597 = vcvt.s32.f32 %v4587
        %v4598 = vlaneseq
        %v4599 = vshrl.u32 %v4598, 7
        %v4600 = vadd.s32 %v4599, 8
        %v4601 = vadd.s32 %v4599, 16
        %v4602 = vadd.s32 %v4599, 24
        %v4603 = vadd.s32 %v4599, 32
        %vm4604 = vcmp.lt.s32.totalorder %v4599, 40
        %vm4605 = vcmp.lt.s32.totalorder %v4600, 40
        %vm4606 = vcmp.lt.s32.totalorder %v4601, 40
        %vm4607 = vcmp.lt.s32.totalorder %v4602, 40
        %vm4608 = vcmp.lt.s32.totalorder %v4603, 40
        %v4609 = vsel %vm4604, 1, 0
        %v4610 = vsel %vm4605, 1, 0
        %v4611 = vsel %vm4606, 1, 0
        %v4612 = vsel %vm4607, 1, 0
        %v4613 = vsel %vm4608, 1, 0
        %v4614 = vcvt.s32.f32 %v4609
        %v4615 = vcvt.s32.f32 %v4610
        %v4616 = vcvt.s32.f32 %v4611
        %v4617 = vcvt.s32.f32 %v4612
        %v4618 = vcvt.s32.f32 %v4613
        %v4619 = vmul.f32 %v4487, %v4588
        %v4620 = vmul.f32 %v4488, %v4588
        %v4621 = vmul.f32 %v4489, %v4588
        %v4622 = vmul.f32 %v4490, %v4588
        %v4623 = vmul.f32 %v4491, %v4588
        %v4624 = vmul.f32 %v4492, %v4589
        %v4625 = vmul.f32 %v4493, %v4589
        %v4626 = vmul.f32 %v4494, %v4589
        %v4627 = vmul.f32 %v4495, %v4589
        %v4628 = vmul.f32 %v4496, %v4589
        %v4629 = vmul.f32 %v4497, %v4590
        %v4630 = vmul.f32 %v4498, %v4590
        %v4631 = vmul.f32 %v4499, %v4590
        %v4632 = vmul.f32 %v4500, %v4590
        %v4633 = vmul.f32 %v4501, %v4590
        %v4634 = vmul.f32 %v4502, %v4591
        %v4635 = vmul.f32 %v4503, %v4591
        %v4636 = vmul.f32 %v4504, %v4591
        %v4637 = vmul.f32 %v4505, %v4591
        %v4638 = vmul.f32 %v4506, %v4591
        %v4639 = vmul.f32 %v4507, %v4592
        %v4640 = vmul.f32 %v4508, %v4592
        %v4641 = vmul.f32 %v4509, %v4592
        %v4642 = vmul.f32 %v4510, %v4592
        %v4643 = vmul.f32 %v4511, %v4592
        %v4644 = vmul.f32 %v4512, %v4593
        %v4645 = vmul.f32 %v4513, %v4593
        %v4646 = vmul.f32 %v4514, %v4593
        %v4647 = vmul.f32 %v4515, %v4593
        %v4648 = vmul.f32 %v4516, %v4593
        %v4649 = vmul.f32 %v4517, %v4594
        %v4650 = vmul.f32 %v4518, %v4594
        %v4651 = vmul.f32 %v4519, %v4594
        %v4652 = vmul.f32 %v4520, %v4594
        %v4653 = vmul.f32 %v4521, %v4594
        %v4654 = vmul.f32 %v4522, %v4595
        %v4655 = vmul.f32 %v4523, %v4595
        %v4656 = vmul.f32 %v4524, %v4595
        %v4657 = vmul.f32 %v4525, %v4595
        %v4658 = vmul.f32 %v4526, %v4595
        %v4659 = vmul.f32 %v4527, %v4596
        %v4660 = vmul.f32 %v4528, %v4596
        %v4661 = vmul.f32 %v4529, %v4596
        %v4662 = vmul.f32 %v4530, %v4596
        %v4663 = vmul.f32 %v4531, %v4596
        %v4664 = vmul.f32 %v4532, %v4597
        %v4665 = vmul.f32 %v4533, %v4597
        %v4666 = vmul.f32 %v4534, %v4597
        %v4667 = vmul.f32 %v4535, %v4597
        %v4668 = vmul.f32 %v4536, %v4597
        %v4669 = vmul.f32 %v4619, %v4614
        %v4670 = vmul.f32 %v4620, %v4615
        %v4671 = vmul.f32 %v4621, %v4616
        %v4672 = vmul.f32 %v4622, %v4617
        %v4673 = vmul.f32 %v4623, %v4618
        %v4674 = vmul.f32 %v4624, %v4614
        %v4675 = vmul.f32 %v4625, %v4615
        %v4676 = vmul.f32 %v4626, %v4616
        %v4677 = vmul.f32 %v4627, %v4617
        %v4678 = vmul.f32 %v4628, %v4618
        %v4679 = vmul.f32 %v4629, %v4614
        %v4680 = vmul.f32 %v4630, %v4615
        %v4681 = vmul.f32 %v4631, %v4616
        %v4682 = vmul.f32 %v4632, %v4617
        %v4683 = vmul.f32 %v4633, %v4618
        %v4684 = vmul.f32 %v4634, %v4614
        %v4685 = vmul.f32 %v4635, %v4615
        %v4686 = vmul.f32 %v4636, %v4616
        %v4687 = vmul.f32 %v4637, %v4617
        %v4688 = vmul.f32 %v4638, %v4618
        %v4689 = vmul.f32 %v4639, %v4614
        %v4690 = vmul.f32 %v4640, %v4615
        %v4691 = vmul.f32 %v4641, %v4616
        %v4692 = vmul.f32 %v4642, %v4617
        %v4693 = vmul.f32 %v4643, %v4618
        %v4694 = vmul.f32 %v4644, %v4614
        %v4695 = vmul.f32 %v4645, %v4615
        %v4696 = vmul.f32 %v4646, %v4616
        %v4697 = vmul.f32 %v4647, %v4617
        %v4698 = vmul.f32 %v4648, %v4618
        %v4699 = vmul.f32 %v4649, %v4614
        %v4700 = vmul.f32 %v4650, %v4615
        %v4701 = vmul.f32 %v4651, %v4616
        %v4702 = vmul.f32 %v4652, %v4617
        %v4703 = vmul.f32 %v4653, %v4618
        %v4704 = vmul.f32 %v4654, %v4614
        %v4705 = vmul.f32 %v4655, %v4615
        %v4706 = vmul.f32 %v4656, %v4616
        %v4707 = vmul.f32 %v4657, %v4617
        %v4708 = vmul.f32 %v4658, %v4618
        %v4709 = vmul.f32 %v4659, %v4614
        %v4710 = vmul.f32 %v4660, %v4615
        %v4711 = vmul.f32 %v4661, %v4616
        %v4712 = vmul.f32 %v4662, %v4617
        %v4713 = vmul.f32 %v4663, %v4618
        %v4714 = vmul.f32 %v4664, %v4614
        %v4715 = vmul.f32 %v4665, %v4615
        %v4716 = vmul.f32 %v4666, %v4616
        %v4717 = vmul.f32 %v4667, %v4617
        %v4718 = vmul.f32 %v4668, %v4618
        %vm4719 = vcmask 24576
        %4720 = vst.msk [vmem:[#allocation3] sm:$0x1] %vm4719, 0.0
        %4721 = vst.msk [vmem:[#allocation3 + $0x30] sm:$0x1] %vm4719, 0.0
        %4722 = vst.msk [vmem:[#allocation3 + $0x60] sm:$0x1] %vm4719, 0.0
        %4723 = vst.msk [vmem:[#allocation3 + $0x90] sm:$0x1] %vm4719, 0.0
        %4724 = vst.msk [vmem:[#allocation3 + $0xc0] sm:$0x1] %vm4719, 0.0
        %4725 = vst.msk [vmem:[#allocation3 + $0xf0] sm:$0x1] %vm4719, 0.0
        %4726 = vst.msk [vmem:[#allocation3 + $0x120] sm:$0x1] %vm4719, 0.0
        %4727 = vst.msk [vmem:[#allocation3 + $0x150] sm:$0x1] %vm4719, 0.0
        %4728 = vst.msk [vmem:[#allocation3 + $0x180] sm:$0x1] %vm4719, 0.0
        %4729 = vst.msk [vmem:[#allocation3 + $0x1b0] sm:$0x1] %vm4719, 0.0
        %4730 = vst.msk [vmem:[#allocation3 + $0x29] sm:$0x1] %vm4719, 0.0
        %4731 = vst.msk [vmem:[#allocation3 + $0x59] sm:$0x1] %vm4719, 0.0
        %4732 = vst.msk [vmem:[#allocation3 + $0x89] sm:$0x1] %vm4719, 0.0
        %4733 = vst.msk [vmem:[#allocation3 + $0xb9] sm:$0x1] %vm4719, 0.0
        %4734 = vst.msk [vmem:[#allocation3 + $0xe9] sm:$0x1] %vm4719, 0.0
        %4735 = vst.msk [vmem:[#allocation3 + $0x119] sm:$0x1] %vm4719, 0.0
        %4736 = vst.msk [vmem:[#allocation3 + $0x149] sm:$0x1] %vm4719, 0.0
        %4737 = vst.msk [vmem:[#allocation3 + $0x179] sm:$0x1] %vm4719, 0.0
        %4738 = vst.msk [vmem:[#allocation3 + $0x1a9] sm:$0x1] %vm4719, 0.0
        %4739 = vst.msk [vmem:[#allocation3 + $0x1d9] sm:$0x1] %vm4719, 0.0
        %4740 = vst.msk [vmem:[#allocation3 + $0x1] sm:$0xff] %vm543, %v4669
        %4741 = vst.msk [vmem:[#allocation3 + $0x9] sm:$0xff] %vm543, %v4670
        %4742 = vst.msk [vmem:[#allocation3 + $0x11] sm:$0xff] %vm543, %v4671
        %4743 = vst.msk [vmem:[#allocation3 + $0x19] sm:$0xff] %vm543, %v4672
        %4744 = vst.msk [vmem:[#allocation3 + $0x21] sm:$0xff] %vm543, %v4673
        %4745 = vst.msk [vmem:[#allocation3 + $0x31] sm:$0xff] %vm543, %v4674
        %4746 = vst.msk [vmem:[#allocation3 + $0x39] sm:$0xff] %vm543, %v4675
        %4747 = vst.msk [vmem:[#allocation3 + $0x41] sm:$0xff] %vm543, %v4676
        %4748 = vst.msk [vmem:[#allocation3 + $0x49] sm:$0xff] %vm543, %v4677
        %4749 = vst.msk [vmem:[#allocation3 + $0x51] sm:$0xff] %vm543, %v4678
        %4750 = vst.msk [vmem:[#allocation3 + $0x61] sm:$0xff] %vm543, %v4679
        %4751 = vst.msk [vmem:[#allocation3 + $0x69] sm:$0xff] %vm543, %v4680
        %4752 = vst.msk [vmem:[#allocation3 + $0x71] sm:$0xff] %vm543, %v4681
        %4753 = vst.msk [vmem:[#allocation3 + $0x79] sm:$0xff] %vm543, %v4682
        %4754 = vst.msk [vmem:[#allocation3 + $0x81] sm:$0xff] %vm543, %v4683
        %4755 = vst.msk [vmem:[#allocation3 + $0x91] sm:$0xff] %vm543, %v4684
        %4756 = vst.msk [vmem:[#allocation3 + $0x99] sm:$0xff] %vm543, %v4685
        %4757 = vst.msk [vmem:[#allocation3 + $0xa1] sm:$0xff] %vm543, %v4686
        %4758 = vst.msk [vmem:[#allocation3 + $0xa9] sm:$0xff] %vm543, %v4687
        %4759 = vst.msk [vmem:[#allocation3 + $0xb1] sm:$0xff] %vm543, %v4688
        %4760 = vst.msk [vmem:[#allocation3 + $0xc1] sm:$0xff] %vm543, %v4689
        %4761 = vst.msk [vmem:[#allocation3 + $0xc9] sm:$0xff] %vm543, %v4690
        %4762 = vst.msk [vmem:[#allocation3 + $0xd1] sm:$0xff] %vm543, %v4691
        %4763 = vst.msk [vmem:[#allocation3 + $0xd9] sm:$0xff] %vm543, %v4692
        %4764 = vst.msk [vmem:[#allocation3 + $0xe1] sm:$0xff] %vm543, %v4693
        %4765 = vst.msk [vmem:[#allocation3 + $0xf1] sm:$0xff] %vm543, %v4694
        %4766 = vst.msk [vmem:[#allocation3 + $0xf9] sm:$0xff] %vm543, %v4695
        %4767 = vst.msk [vmem:[#allocation3 + $0x101] sm:$0xff] %vm543, %v4696
        %4768 = vst.msk [vmem:[#allocation3 + $0x109] sm:$0xff] %vm543, %v4697
        %4769 = vst.msk [vmem:[#allocation3 + $0x111] sm:$0xff] %vm543, %v4698
        %4770 = vst.msk [vmem:[#allocation3 + $0x121] sm:$0xff] %vm543, %v4699
        %4771 = vst.msk [vmem:[#allocation3 + $0x129] sm:$0xff] %vm543, %v4700
        %4772 = vst.msk [vmem:[#allocation3 + $0x131] sm:$0xff] %vm543, %v4701
        %4773 = vst.msk [vmem:[#allocation3 + $0x139] sm:$0xff] %vm543, %v4702
        %4774 = vst.msk [vmem:[#allocation3 + $0x141] sm:$0xff] %vm543, %v4703
        %4775 = vst.msk [vmem:[#allocation3 + $0x151] sm:$0xff] %vm543, %v4704
        %4776 = vst.msk [vmem:[#allocation3 + $0x159] sm:$0xff] %vm543, %v4705
        %4777 = vst.msk [vmem:[#allocation3 + $0x161] sm:$0xff] %vm543, %v4706
        %4778 = vst.msk [vmem:[#allocation3 + $0x169] sm:$0xff] %vm543, %v4707
        %4779 = vst.msk [vmem:[#allocation3 + $0x171] sm:$0xff] %vm543, %v4708
        %4780 = vst.msk [vmem:[#allocation3 + $0x181] sm:$0xff] %vm543, %v4709
        %4781 = vst.msk [vmem:[#allocation3 + $0x189] sm:$0xff] %vm543, %v4710
        %4782 = vst.msk [vmem:[#allocation3 + $0x191] sm:$0xff] %vm543, %v4711
        %4783 = vst.msk [vmem:[#allocation3 + $0x199] sm:$0xff] %vm543, %v4712
        %4784 = vst.msk [vmem:[#allocation3 + $0x1a1] sm:$0xff] %vm543, %v4713
        %4785 = vst.msk [vmem:[#allocation3 + $0x1b1] sm:$0xff] %vm543, %v4714
        %4786 = vst.msk [vmem:[#allocation3 + $0x1b9] sm:$0xff] %vm543, %v4715
        %4787 = vst.msk [vmem:[#allocation3 + $0x1c1] sm:$0xff] %vm543, %v4716
        %4788 = vst.msk [vmem:[#allocation3 + $0x1c9] sm:$0xff] %vm543, %v4717
        %4789 = vst.msk [vmem:[#allocation3 + $0x1d1] sm:$0xff] %vm543, %v4718
        %v4790 = vld [vmem:[#allocation3] sm:$0xff]
        %v4791 = vld [vmem:[#allocation3 + $0x8] sm:$0xff]
        %v4792 = vld [vmem:[#allocation3 + $0x10] sm:$0xff]
        %v4793 = vld [vmem:[#allocation3 + $0x18] sm:$0xff]
        %v4794 = vld [vmem:[#allocation3 + $0x20] sm:$0xff]
        %v4795 = vld [vmem:[#allocation3 + $0x30] sm:$0xff]
        %v4796 = vld [vmem:[#allocation3 + $0x38] sm:$0xff]
        %v4797 = vld [vmem:[#allocation3 + $0x40] sm:$0xff]
        %v4798 = vld [vmem:[#allocation3 + $0x48] sm:$0xff]
        %v4799 = vld [vmem:[#allocation3 + $0x50] sm:$0xff]
        %v4800 = vld [vmem:[#allocation3 + $0x60] sm:$0xff]
        %v4801 = vld [vmem:[#allocation3 + $0x68] sm:$0xff]
        %v4802 = vld [vmem:[#allocation3 + $0x70] sm:$0xff]
        %v4803 = vld [vmem:[#allocation3 + $0x78] sm:$0xff]
        %v4804 = vld [vmem:[#allocation3 + $0x80] sm:$0xff]
        %v4805 = vld [vmem:[#allocation3 + $0x90] sm:$0xff]
        %v4806 = vld [vmem:[#allocation3 + $0x98] sm:$0xff]
        %v4807 = vld [vmem:[#allocation3 + $0xa0] sm:$0xff]
        %v4808 = vld [vmem:[#allocation3 + $0xa8] sm:$0xff]
        %v4809 = vld [vmem:[#allocation3 + $0xb0] sm:$0xff]
        %v4810 = vld [vmem:[#allocation3 + $0xc0] sm:$0xff]
        %v4811 = vld [vmem:[#allocation3 + $0xc8] sm:$0xff]
        %v4812 = vld [vmem:[#allocation3 + $0xd0] sm:$0xff]
        %v4813 = vld [vmem:[#allocation3 + $0xd8] sm:$0xff]
        %v4814 = vld [vmem:[#allocation3 + $0xe0] sm:$0xff]
        %v4815 = vld [vmem:[#allocation3 + $0xf0] sm:$0xff]
        %v4816 = vld [vmem:[#allocation3 + $0xf8] sm:$0xff]
        %v4817 = vld [vmem:[#allocation3 + $0x100] sm:$0xff]
        %v4818 = vld [vmem:[#allocation3 + $0x108] sm:$0xff]
        %v4819 = vld [vmem:[#allocation3 + $0x110] sm:$0xff]
        %v4820 = vld [vmem:[#allocation3 + $0x120] sm:$0xff]
        %v4821 = vld [vmem:[#allocation3 + $0x128] sm:$0xff]
        %v4822 = vld [vmem:[#allocation3 + $0x130] sm:$0xff]
        %v4823 = vld [vmem:[#allocation3 + $0x138] sm:$0xff]
        %v4824 = vld [vmem:[#allocation3 + $0x140] sm:$0xff]
        %v4825 = vld [vmem:[#allocation3 + $0x150] sm:$0xff]
        %v4826 = vld [vmem:[#allocation3 + $0x158] sm:$0xff]
        %v4827 = vld [vmem:[#allocation3 + $0x160] sm:$0xff]
        %v4828 = vld [vmem:[#allocation3 + $0x168] sm:$0xff]
        %v4829 = vld [vmem:[#allocation3 + $0x170] sm:$0xff]
        %v4830 = vld [vmem:[#allocation3 + $0x180] sm:$0xff]
        %v4831 = vld [vmem:[#allocation3 + $0x188] sm:$0xff]
        %v4832 = vld [vmem:[#allocation3 + $0x190] sm:$0xff]
        %v4833 = vld [vmem:[#allocation3 + $0x198] sm:$0xff]
        %v4834 = vld [vmem:[#allocation3 + $0x1a0] sm:$0xff]
        %v4835 = vld [vmem:[#allocation3 + $0x1b0] sm:$0xff]
        %v4836 = vld [vmem:[#allocation3 + $0x1b8] sm:$0xff]
        %v4837 = vld [vmem:[#allocation3 + $0x1c0] sm:$0xff]
        %v4838 = vld [vmem:[#allocation3 + $0x1c8] sm:$0xff]
        %v4839 = vld [vmem:[#allocation3 + $0x1d0] sm:$0xff]
        %v4840 = vld [vmem:[%s5] sm:$0xf]
        %s4841 = scalar_lea.vmem %s5, 12
        %v4842 = vld [vmem:[%s4841] sm:$0xf]
        %v4844 = vsel %vm543, %v4795, 0
        %v4847 = vsel %vm543, %v4796, 0
        %v4850 = vsel %vm543, %v4797, 0
        %v4853 = vsel %vm543, %v4798, 0
        %v4856 = vsel %vm543, %v4799, 0
        %v4859 = vsel %vm543, %v4800, 0
        %v4862 = vsel %vm543, %v4801, 0
        %v4865 = vsel %vm543, %v4802, 0
        %v4868 = vsel %vm543, %v4803, 0
        %v4871 = vsel %vm543, %v4804, 0
        %v4874 = vsel %vm543, %v4805, 0
        %v4877 = vsel %vm543, %v4806, 0
        %v4880 = vsel %vm543, %v4807, 0
        %v4883 = vsel %vm543, %v4808, 0
        %v4886 = vsel %vm543, %v4809, 0
        %v4889 = vsel %vm543, %v4810, 0
        %v4892 = vsel %vm543, %v4811, 0
        %v4895 = vsel %vm543, %v4812, 0
        %v4898 = vsel %vm543, %v4813, 0
        %v4901 = vsel %vm543, %v4814, 0
        %v4904 = vsel %vm543, %v4815, 0
        %v4907 = vsel %vm543, %v4816, 0
        %v4910 = vsel %vm543, %v4817, 0
        %v4913 = vsel %vm543, %v4818, 0
        %v4916 = vsel %vm543, %v4819, 0
        %v4919 = vsel %vm543, %v4820, 0
        %v4922 = vsel %vm543, %v4821, 0
        %v4925 = vsel %vm543, %v4822, 0
        %v4928 = vsel %vm543, %v4823, 0
        %v4931 = vsel %vm543, %v4824, 0
        %v4934 = vsel %vm543, %v4825, 0
        %v4937 = vsel %vm543, %v4826, 0
        %v4940 = vsel %vm543, %v4827, 0
        %v4943 = vsel %vm543, %v4828, 0
        %v4946 = vsel %vm543, %v4829, 0
        %v4949 = vsel %vm543, %v4830, 0
        %v4952 = vsel %vm543, %v4831, 0
        %v4955 = vsel %vm543, %v4832, 0
        %v4958 = vsel %vm543, %v4833, 0
        %v4961 = vsel %vm543, %v4834, 0
        %v4964 = vsel %vm543, %v4842, 0
        %4966 = vmatprep.subr.mxu0 0.0
        %4967 = vmatpush1.xpose.msra.mxu0 %v4964
        %4968 = vmatprep.subr.mxu0 0.0
        %4969 = vmatpush1.xpose.msra.mxu0 0.0
        %4970 = vmatprep.subr.mxu0 0.0
        %4971 = vmatpush1.xpose.msra.mxu0 0.0
        %4972 = vmatprep.subr.mxu0 0.0
        %4973 = vmatpush1.xpose.msra.mxu0 0.0
        %4974 = vmatprep.subr.mxu0 0.0
        %4975 = vmatpush1.xpose.msra.mxu0 0.0
        %4976 = vmatprep.subr.mxu0 0.0
        %4977 = vmatpush1.xpose.msra.mxu0 0.0
        %4978 = vmatprep.subr.mxu0 0.0
        %4979 = vmatpush1.xpose.msra.mxu0 0.0
        %4980 = vmatprep.subr.mxu0 0.0
        %4981 = vmatpush1.xpose.msra.mxu0 0.0
        %4982 = vmatprep.subr.mxu0 0.0
        %4983 = vmatpush1.xpose.msra.mxu0 0.0
        %4984 = vmatprep.subr.mxu0 0.0
        %4985 = vmatpush1.xpose.msra.mxu0 0.0
        %4986 = vmatprep.subr.mxu0 0.0
        %4987 = vmatpush1.xpose.msra.mxu0 0.0
        %4988 = vmatprep.subr.mxu0 0.0
        %4989 = vmatpush1.xpose.msra.mxu0 0.0
        %4990 = vmatprep.subr.mxu0 0.0
        %4991 = vmatpush1.xpose.msra.mxu0 0.0
        %4992 = vmatprep.subr.mxu0 0.0
        %4993 = vmatpush1.xpose.msra.mxu0 0.0
        %4994 = vmatprep.subr.mxu0 0.0
        %4995 = vmatpush1.xpose.msra.mxu0 0.0
        %4996 = vmatprep.subr.mxu0 0.0
        %4997 = vmatpush1.xpose.msra.mxu0 0.0
        %4998 = vmatprep.subr.mxu0 0.0
        %4999 = vmatpush1.xpose.msra.mxu0 0.0
        %5000 = vmatprep.subr.mxu0 0.0
        %5001 = vmatpush1.xpose.msra.mxu0 0.0
        %5002 = vmatprep.subr.mxu0 0.0
        %5003 = vmatpush1.xpose.msra.mxu0 0.0
        %5004 = vmatprep.subr.mxu0 0.0
        %5005 = vmatpush1.xpose.msra.mxu0 0.0
        %5006 = vmatprep.subr.mxu0 0.0
        %5007 = vmatpush1.xpose.msra.mxu0 0.0
        %5008 = vmatprep.subr.mxu0 0.0
        %5009 = vmatpush1.xpose.msra.mxu0 0.0
        %5010 = vmatprep.subr.mxu0 0.0
        %5011 = vmatpush1.xpose.msra.mxu0 0.0
        %5012 = vmatprep.subr.mxu0 0.0
        %5013 = vmatpush1.xpose.msra.mxu0 0.0
        %5014 = vmatprep.subr.mxu0 0.0
        %5015 = vmatpush1.xpose.msra.mxu0 0.0
        %5016 = vmatprep.subr.mxu0 0.0
        %5017 = vmatpush1.xpose.msra.mxu0 0.0
        %5018 = vmatprep.subr.mxu0 0.0
        %5019 = vmatpush1.xpose.msra.mxu0 0.0
        %5020 = vmatprep.subr.mxu0 0.0
        %5021 = vmatpush1.xpose.msra.mxu0 0.0
        %5022 = vmatprep.subr.mxu0 0.0
        %5023 = vmatpush1.xpose.msra.mxu0 0.0
        %5024 = vmatprep.subr.mxu0 0.0
        %5025 = vmatpush1.xpose.msra.mxu0 0.0
        %5026 = vmatprep.subr.mxu0 0.0
        %5027 = vmatpush1.xpose.msra.mxu0 0.0
        %5028 = vmatprep.subr.mxu0 0.0
        %5029 = vmatpush1.xpose.msra.mxu0 0.0
        %5030 = vmatprep.mubr.f32.mxu0 0.0
        %5031 = vmatmul.mubr.f32.gmra.mrb[0].mxu0 %v4844
        %v5032 = vpop.f32.mrb[0].mxu0
        %v5033 = vadd.f32 0.0, %v5032
        %v5034 = vpop.f32.mrb[0].mxu0
        %5035 = vmatprep.mubr.f32.mxu0 0.0
        %5036 = vmatmul.mubr.f32.gmra.mrb[0].mxu0 %v4847
        %v5037 = vpop.f32.mrb[0].mxu0
        %v5038 = vadd.f32 0.0, %v5037
        %v5039 = vpop.f32.mrb[0].mxu0
        %5040 = vmatprep.mubr.f32.mxu0 0.0
        %5041 = vmatmul.mubr.f32.gmra.mrb[0].mxu0 %v4850
        %v5042 = vpop.f32.mrb[0].mxu0
        %v5043 = vadd.f32 0.0, %v5042
        %v5044 = vpop.f32.mrb[0].mxu0
        %5045 = vmatprep.mubr.f32.mxu0 0.0
        %5046 = vmatmul.mubr.f32.gmra.mrb[0].mxu0 %v4853
        %v5047 = vpop.f32.mrb[0].mxu0
        %v5048 = vadd.f32 0.0, %v5047
        %v5049 = vpop.f32.mrb[0].mxu0
        %5050 = vmatprep.mubr.f32.mxu0 0.0
        %5051 = vmatmul.mubr.f32.gmra.mrb[0].mxu0 %v4856
        %v5052 = vpop.f32.mrb[0].mxu0
        %v5053 = vadd.f32 0.0, %v5052
        %v5054 = vpop.f32.mrb[0].mxu0
        %5055 = vmatprep.mubr.f32.mxu0 0.0
        %5056 = vmatmul.mubr.f32.gmra.mrb[0].mxu0 %v4859
        %v5057 = vpop.f32.mrb[0].mxu0
        %v5058 = vadd.f32 0.0, %v5057
        %v5059 = vpop.f32.mrb[0].mxu0
        %5060 = vmatprep.mubr.f32.mxu0 0.0
        %5061 = vmatmul.mubr.f32.gmra.mrb[0].mxu0 %v4862
        %v5062 = vpop.f32.mrb[0].mxu0
        %v5063 = vadd.f32 0.0, %v5062
        %v5064 = vpop.f32.mrb[0].mxu0
        %5065 = vmatprep.mubr.f32.mxu0 0.0
        %5066 = vmatmul.mubr.f32.gmra.mrb[0].mxu0 %v4865
        %v5067 = vpop.f32.mrb[0].mxu0
        %v5068 = vadd.f32 0.0, %v5067
        %v5069 = vpop.f32.mrb[0].mxu0
        %5070 = vmatprep.mubr.f32.mxu0 0.0
        %5071 = vmatmul.mubr.f32.gmra.mrb[0].mxu0 %v4868
        %v5072 = vpop.f32.mrb[0].mxu0
        %v5073 = vadd.f32 0.0, %v5072
        %v5074 = vpop.f32.mrb[0].mxu0
        %5075 = vmatprep.mubr.f32.mxu0 0.0
        %5076 = vmatmul.mubr.f32.gmra.mrb[0].mxu0 %v4871
        %v5077 = vpop.f32.mrb[0].mxu0
        %v5078 = vadd.f32 0.0, %v5077
        %v5079 = vpop.f32.mrb[0].mxu0
        %5080 = vmatprep.mubr.f32.mxu0 0.0
        %5081 = vmatmul.mubr.f32.gmra.mrb[0].mxu0 %v4874
        %v5082 = vpop.f32.mrb[0].mxu0
        %v5083 = vadd.f32 0.0, %v5082
        %v5084 = vpop.f32.mrb[0].mxu0
        %5085 = vmatprep.mubr.f32.mxu0 0.0
        %5086 = vmatmul.mubr.f32.gmra.mrb[0].mxu0 %v4877
        %v5087 = vpop.f32.mrb[0].mxu0
        %v5088 = vadd.f32 0.0, %v5087
        %v5089 = vpop.f32.mrb[0].mxu0
        %5090 = vmatprep.mubr.f32.mxu0 0.0
        %5091 = vmatmul.mubr.f32.gmra.mrb[0].mxu0 %v4880
        %v5092 = vpop.f32.mrb[0].mxu0
        %v5093 = vadd.f32 0.0, %v5092
        %v5094 = vpop.f32.mrb[0].mxu0
        %5095 = vmatprep.mubr.f32.mxu0 0.0
        %5096 = vmatmul.mubr.f32.gmra.mrb[0].mxu0 %v4883
        %v5097 = vpop.f32.mrb[0].mxu0
        %v5098 = vadd.f32 0.0, %v5097
        %v5099 = vpop.f32.mrb[0].mxu0
        %5100 = vmatprep.mubr.f32.mxu0 0.0
        %5101 = vmatmul.mubr.f32.gmra.mrb[0].mxu0 %v4886
        %v5102 = vpop.f32.mrb[0].mxu0
        %v5103 = vadd.f32 0.0, %v5102
        %v5104 = vpop.f32.mrb[0].mxu0
        %5105 = vmatprep.mubr.f32.mxu0 0.0
        %5106 = vmatmul.mubr.f32.gmra.mrb[0].mxu0 %v4889
        %v5107 = vpop.f32.mrb[0].mxu0
        %v5108 = vadd.f32 0.0, %v5107
        %v5109 = vpop.f32.mrb[0].mxu0
        %5110 = vmatprep.mubr.f32.mxu0 0.0
        %5111 = vmatmul.mubr.f32.gmra.mrb[0].mxu0 %v4892
        %v5112 = vpop.f32.mrb[0].mxu0
        %v5113 = vadd.f32 0.0, %v5112
        %v5114 = vpop.f32.mrb[0].mxu0
        %5115 = vmatprep.mubr.f32.mxu0 0.0
        %5116 = vmatmul.mubr.f32.gmra.mrb[0].mxu0 %v4895
        %v5117 = vpop.f32.mrb[0].mxu0
        %v5118 = vadd.f32 0.0, %v5117
        %v5119 = vpop.f32.mrb[0].mxu0
        %5120 = vmatprep.mubr.f32.mxu0 0.0
        %5121 = vmatmul.mubr.f32.gmra.mrb[0].mxu0 %v4898
        %v5122 = vpop.f32.mrb[0].mxu0
        %v5123 = vadd.f32 0.0, %v5122
        %v5124 = vpop.f32.mrb[0].mxu0
        %5125 = vmatprep.mubr.f32.mxu0 0.0
        %5126 = vmatmul.mubr.f32.gmra.mrb[0].mxu0 %v4901
        %v5127 = vpop.f32.mrb[0].mxu0
        %v5128 = vadd.f32 0.0, %v5127
        %v5129 = vpop.f32.mrb[0].mxu0
        %5130 = vmatprep.mubr.f32.mxu0 0.0
        %5131 = vmatmul.mubr.f32.gmra.mrb[0].mxu0 %v4904
        %v5132 = vpop.f32.mrb[0].mxu0
        %v5133 = vadd.f32 0.0, %v5132
        %v5134 = vpop.f32.mrb[0].mxu0
        %5135 = vmatprep.mubr.f32.mxu0 0.0
        %5136 = vmatmul.mubr.f32.gmra.mrb[0].mxu0 %v4907
        %v5137 = vpop.f32.mrb[0].mxu0
        %v5138 = vadd.f32 0.0, %v5137
        %v5139 = vpop.f32.mrb[0].mxu0
        %5140 = vmatprep.mubr.f32.mxu0 0.0
        %5141 = vmatmul.mubr.f32.gmra.mrb[0].mxu0 %v4910
        %v5142 = vpop.f32.mrb[0].mxu0
        %v5143 = vadd.f32 0.0, %v5142
        %v5144 = vpop.f32.mrb[0].mxu0
        %5145 = vmatprep.mubr.f32.mxu0 0.0
        %5146 = vmatmul.mubr.f32.gmra.mrb[0].mxu0 %v4913
        %v5147 = vpop.f32.mrb[0].mxu0
        %v5148 = vadd.f32 0.0, %v5147
        %v5149 = vpop.f32.mrb[0].mxu0
        %5150 = vmatprep.mubr.f32.mxu0 0.0
        %5151 = vmatmul.mubr.f32.gmra.mrb[0].mxu0 %v4916
        %v5152 = vpop.f32.mrb[0].mxu0
        %v5153 = vadd.f32 0.0, %v5152
        %v5154 = vpop.f32.mrb[0].mxu0
        %5155 = vmatprep.mubr.f32.mxu0 0.0
        %5156 = vmatmul.mubr.f32.gmra.mrb[0].mxu0 %v4919
        %v5157 = vpop.f32.mrb[0].mxu0
        %v5158 = vadd.f32 0.0, %v5157
        %v5159 = vpop.f32.mrb[0].mxu0
        %5160 = vmatprep.mubr.f32.mxu0 0.0
        %5161 = vmatmul.mubr.f32.gmra.mrb[0].mxu0 %v4922
        %v5162 = vpop.f32.mrb[0].mxu0
        %v5163 = vadd.f32 0.0, %v5162
        %v5164 = vpop.f32.mrb[0].mxu0
        %5165 = vmatprep.mubr.f32.mxu0 0.0
        %5166 = vmatmul.mubr.f32.gmra.mrb[0].mxu0 %v4925
        %v5167 = vpop.f32.mrb[0].mxu0
        %v5168 = vadd.f32 0.0, %v5167
        %v5169 = vpop.f32.mrb[0].mxu0
        %5170 = vmatprep.mubr.f32.mxu0 0.0
        %5171 = vmatmul.mubr.f32.gmra.mrb[0].mxu0 %v4928
        %v5172 = vpop.f32.mrb[0].mxu0
        %v5173 = vadd.f32 0.0, %v5172
        %v5174 = vpop.f32.mrb[0].mxu0
        %5175 = vmatprep.mubr.f32.mxu0 0.0
        %5176 = vmatmul.mubr.f32.gmra.mrb[0].mxu0 %v4931
        %v5177 = vpop.f32.mrb[0].mxu0
        %v5178 = vadd.f32 0.0, %v5177
        %v5179 = vpop.f32.mrb[0].mxu0
        %5180 = vmatprep.mubr.f32.mxu0 0.0
        %5181 = vmatmul.mubr.f32.gmra.mrb[0].mxu0 %v4934
        %v5182 = vpop.f32.mrb[0].mxu0
        %v5183 = vadd.f32 0.0, %v5182
        %v5184 = vpop.f32.mrb[0].mxu0
        %5185 = vmatprep.mubr.f32.mxu0 0.0
        %5186 = vmatmul.mubr.f32.gmra.mrb[0].mxu0 %v4937
        %v5187 = vpop.f32.mrb[0].mxu0
        %v5188 = vadd.f32 0.0, %v5187
        %v5189 = vpop.f32.mrb[0].mxu0
        %5190 = vmatprep.mubr.f32.mxu0 0.0
        %5191 = vmatmul.mubr.f32.gmra.mrb[0].mxu0 %v4940
        %v5192 = vpop.f32.mrb[0].mxu0
        %v5193 = vadd.f32 0.0, %v5192
        %v5194 = vpop.f32.mrb[0].mxu0
        %5195 = vmatprep.mubr.f32.mxu0 0.0
        %5196 = vmatmul.mubr.f32.gmra.mrb[0].mxu0 %v4943
        %v5197 = vpop.f32.mrb[0].mxu0
        %v5198 = vadd.f32 0.0, %v5197
        %v5199 = vpop.f32.mrb[0].mxu0
        %5200 = vmatprep.mubr.f32.mxu0 0.0
        %5201 = vmatmul.mubr.f32.gmra.mrb[0].mxu0 %v4946
        %v5202 = vpop.f32.mrb[0].mxu0
        %v5203 = vadd.f32 0.0, %v5202
        %v5204 = vpop.f32.mrb[0].mxu0
        %5205 = vmatprep.mubr.f32.mxu0 0.0
        %5206 = vmatmul.mubr.f32.gmra.mrb[0].mxu0 %v4949
        %v5207 = vpop.f32.mrb[0].mxu0
        %v5208 = vadd.f32 0.0, %v5207
        %v5209 = vpop.f32.mrb[0].mxu0
        %5210 = vmatprep.mubr.f32.mxu0 0.0
        %5211 = vmatmul.mubr.f32.gmra.mrb[0].mxu0 %v4952
        %v5212 = vpop.f32.mrb[0].mxu0
        %v5213 = vadd.f32 0.0, %v5212
        %v5214 = vpop.f32.mrb[0].mxu0
        %5215 = vmatprep.mubr.f32.mxu0 0.0
        %5216 = vmatmul.mubr.f32.gmra.mrb[0].mxu0 %v4955
        %v5217 = vpop.f32.mrb[0].mxu0
        %v5218 = vadd.f32 0.0, %v5217
        %v5219 = vpop.f32.mrb[0].mxu0
        %5220 = vmatprep.mubr.f32.mxu0 0.0
        %5221 = vmatmul.mubr.f32.gmra.mrb[0].mxu0 %v4958
        %v5222 = vpop.f32.mrb[0].mxu0
        %v5223 = vadd.f32 0.0, %v5222
        %v5224 = vpop.f32.mrb[0].mxu0
        %5225 = vmatprep.mubr.f32.mxu0 0.0
        %5226 = vmatmul.mubr.f32.gmra.mrb[0].mxu0 %v4961
        %v5227 = vpop.f32.mrb[0].mxu0
        %v5228 = vadd.f32 0.0, %v5227
        %v5229 = vpop.f32.mrb[0].mxu0
        %5230 = vdwg.mxu0
        %v5232 = vsel %vm543, %v4790, 0
        %v5235 = vsel %vm543, %v4791, 0
        %v5238 = vsel %vm543, %v4792, 0
        %v5241 = vsel %vm543, %v4793, 0
        %v5244 = vsel %vm543, %v4794, 0
        %v5247 = vsel %vm543, %v4840, 0
        %5249 = vmatprep.subr.mxu0 0.0
        %5250 = vmatpush1.xpose.msra.mxu0 %v5247
        %5251 = vmatprep.subr.mxu0 0.0
        %5252 = vmatpush1.xpose.msra.mxu0 0.0
        %5253 = vmatprep.subr.mxu0 0.0
        %5254 = vmatpush1.xpose.msra.mxu0 0.0
        %5255 = vmatprep.subr.mxu0 0.0
        %5256 = vmatpush1.xpose.msra.mxu0 0.0
        %5257 = vmatprep.subr.mxu0 0.0
        %5258 = vmatpush1.xpose.msra.mxu0 0.0
        %5259 = vmatprep.subr.mxu0 0.0
        %5260 = vmatpush1.xpose.msra.mxu0 0.0
        %5261 = vmatprep.subr.mxu0 0.0
        %5262 = vmatpush1.xpose.msra.mxu0 0.0
        %5263 = vmatprep.subr.mxu0 0.0
        %5264 = vmatpush1.xpose.msra.mxu0 0.0
        %5265 = vmatprep.subr.mxu0 0.0
        %5266 = vmatpush1.xpose.msra.mxu0 0.0
        %5267 = vmatprep.subr.mxu0 0.0
        %5268 = vmatpush1.xpose.msra.mxu0 0.0
        %5269 = vmatprep.subr.mxu0 0.0
        %5270 = vmatpush1.xpose.msra.mxu0 0.0
        %5271 = vmatprep.subr.mxu0 0.0
        %5272 = vmatpush1.xpose.msra.mxu0 0.0
        %5273 = vmatprep.subr.mxu0 0.0
        %5274 = vmatpush1.xpose.msra.mxu0 0.0
        %5275 = vmatprep.subr.mxu0 0.0
        %5276 = vmatpush1.xpose.msra.mxu0 0.0
        %5277 = vmatprep.subr.mxu0 0.0
        %5278 = vmatpush1.xpose.msra.mxu0 0.0
        %5279 = vmatprep.subr.mxu0 0.0
        %5280 = vmatpush1.xpose.msra.mxu0 0.0
        %5281 = vmatprep.subr.mxu0 0.0
        %5282 = vmatpush1.xpose.msra.mxu0 0.0
        %5283 = vmatprep.subr.mxu0 0.0
        %5284 = vmatpush1.xpose.msra.mxu0 0.0
        %5285 = vmatprep.subr.mxu0 0.0
        %5286 = vmatpush1.xpose.msra.mxu0 0.0
        %5287 = vmatprep.subr.mxu0 0.0
        %5288 = vmatpush1.xpose.msra.mxu0 0.0
        %5289 = vmatprep.subr.mxu0 0.0
        %5290 = vmatpush1.xpose.msra.mxu0 0.0
        %5291 = vmatprep.subr.mxu0 0.0
        %5292 = vmatpush1.xpose.msra.mxu0 0.0
        %5293 = vmatprep.subr.mxu0 0.0
        %5294 = vmatpush1.xpose.msra.mxu0 0.0
        %5295 = vmatprep.subr.mxu0 0.0
        %5296 = vmatpush1.xpose.msra.mxu0 0.0
        %5297 = vmatprep.subr.mxu0 0.0
        %5298 = vmatpush1.xpose.msra.mxu0 0.0
        %5299 = vmatprep.subr.mxu0 0.0
        %5300 = vmatpush1.xpose.msra.mxu0 0.0
        %5301 = vmatprep.subr.mxu0 0.0
        %5302 = vmatpush1.xpose.msra.mxu0 0.0
        %5303 = vmatprep.subr.mxu0 0.0
        %5304 = vmatpush1.xpose.msra.mxu0 0.0
        %5305 = vmatprep.subr.mxu0 0.0
        %5306 = vmatpush1.xpose.msra.mxu0 0.0
        %5307 = vmatprep.subr.mxu0 0.0
        %5308 = vmatpush1.xpose.msra.mxu0 0.0
        %5309 = vmatprep.subr.mxu0 0.0
        %5310 = vmatpush1.xpose.msra.mxu0 0.0
        %5311 = vmatprep.subr.mxu0 0.0
        %5312 = vmatpush1.xpose.msra.mxu0 0.0
        %5313 = vmatprep.mubr.f32.mxu0 0.0
        %5314 = vmatmul.mubr.f32.gmra.mrb[0].mxu0 %v5232
        %v5315 = vpop.f32.mrb[0].mxu0
        %v5316 = vadd.f32 %v5033, %v5315
        %v5317 = vpop.f32.mrb[0].mxu0
        %5318 = vmatprep.mubr.f32.mxu0 0.0
        %5319 = vmatmul.mubr.f32.gmra.mrb[0].mxu0 %v5235
        %v5320 = vpop.f32.mrb[0].mxu0
        %v5321 = vadd.f32 %v5038, %v5320
        %v5322 = vpop.f32.mrb[0].mxu0
        %5323 = vmatprep.mubr.f32.mxu0 0.0
        %5324 = vmatmul.mubr.f32.gmra.mrb[0].mxu0 %v5238
        %v5325 = vpop.f32.mrb[0].mxu0
        %v5326 = vadd.f32 %v5043, %v5325
        %v5327 = vpop.f32.mrb[0].mxu0
        %5328 = vmatprep.mubr.f32.mxu0 0.0
        %5329 = vmatmul.mubr.f32.gmra.mrb[0].mxu0 %v5241
        %v5330 = vpop.f32.mrb[0].mxu0
        %v5331 = vadd.f32 %v5048, %v5330
        %v5332 = vpop.f32.mrb[0].mxu0
        %5333 = vmatprep.mubr.f32.mxu0 0.0
        %5334 = vmatmul.mubr.f32.gmra.mrb[0].mxu0 %v5244
        %v5335 = vpop.f32.mrb[0].mxu0
        %v5336 = vadd.f32 %v5053, %v5335
        %v5337 = vpop.f32.mrb[0].mxu0
        %5338 = vmatprep.mubr.f32.mxu0 0.0
        %5339 = vmatmul.mubr.f32.gmra.mrb[0].mxu0 %v4844
        %v5340 = vpop.f32.mrb[0].mxu0
        %v5341 = vadd.f32 %v5058, %v5340
        %v5342 = vpop.f32.mrb[0].mxu0
        %5343 = vmatprep.mubr.f32.mxu0 0.0
        %5344 = vmatmul.mubr.f32.gmra.mrb[0].mxu0 %v4847
        %v5345 = vpop.f32.mrb[0].mxu0
        %v5346 = vadd.f32 %v5063, %v5345
        %v5347 = vpop.f32.mrb[0].mxu0
        %5348 = vmatprep.mubr.f32.mxu0 0.0
        %5349 = vmatmul.mubr.f32.gmra.mrb[0].mxu0 %v4850
        %v5350 = vpop.f32.mrb[0].mxu0
        %v5351 = vadd.f32 %v5068, %v5350
        %v5352 = vpop.f32.mrb[0].mxu0
        %5353 = vmatprep.mubr.f32.mxu0 0.0
        %5354 = vmatmul.mubr.f32.gmra.mrb[0].mxu0 %v4853
        %v5355 = vpop.f32.mrb[0].mxu0
        %v5356 = vadd.f32 %v5073, %v5355
        %v5357 = vpop.f32.mrb[0].mxu0
        %5358 = vmatprep.mubr.f32.mxu0 0.0
        %5359 = vmatmul.mubr.f32.gmra.mrb[0].mxu0 %v4856
        %v5360 = vpop.f32.mrb[0].mxu0
        %v5361 = vadd.f32 %v5078, %v5360
        %v5362 = vpop.f32.mrb[0].mxu0
        %5363 = vmatprep.mubr.f32.mxu0 0.0
        %5364 = vmatmul.mubr.f32.gmra.mrb[0].mxu0 %v4859
        %v5365 = vpop.f32.mrb[0].mxu0
        %v5366 = vadd.f32 %v5083, %v5365
        %v5367 = vpop.f32.mrb[0].mxu0
        %5368 = vmatprep.mubr.f32.mxu0 0.0
        %5369 = vmatmul.mubr.f32.gmra.mrb[0].mxu0 %v4862
        %v5370 = vpop.f32.mrb[0].mxu0
        %v5371 = vadd.f32 %v5088, %v5370
        %v5372 = vpop.f32.mrb[0].mxu0
        %5373 = vmatprep.mubr.f32.mxu0 0.0
        %5374 = vmatmul.mubr.f32.gmra.mrb[0].mxu0 %v4865
        %v5375 = vpop.f32.mrb[0].mxu0
        %v5376 = vadd.f32 %v5093, %v5375
        %v5377 = vpop.f32.mrb[0].mxu0
        %5378 = vmatprep.mubr.f32.mxu0 0.0
        %5379 = vmatmul.mubr.f32.gmra.mrb[0].mxu0 %v4868
        %v5380 = vpop.f32.mrb[0].mxu0
        %v5381 = vadd.f32 %v5098, %v5380
        %v5382 = vpop.f32.mrb[0].mxu0
        %5383 = vmatprep.mubr.f32.mxu0 0.0
        %5384 = vmatmul.mubr.f32.gmra.mrb[0].mxu0 %v4871
        %v5385 = vpop.f32.mrb[0].mxu0
        %v5386 = vadd.f32 %v5103, %v5385
        %v5387 = vpop.f32.mrb[0].mxu0
        %5388 = vmatprep.mubr.f32.mxu0 0.0
        %5389 = vmatmul.mubr.f32.gmra.mrb[0].mxu0 %v4874
        %v5390 = vpop.f32.mrb[0].mxu0
        %v5391 = vadd.f32 %v5108, %v5390
        %v5392 = vpop.f32.mrb[0].mxu0
        %5393 = vmatprep.mubr.f32.mxu0 0.0
        %5394 = vmatmul.mubr.f32.gmra.mrb[0].mxu0 %v4877
        %v5395 = vpop.f32.mrb[0].mxu0
        %v5396 = vadd.f32 %v5113, %v5395
        %v5397 = vpop.f32.mrb[0].mxu0
        %5398 = vmatprep.mubr.f32.mxu0 0.0
        %5399 = vmatmul.mubr.f32.gmra.mrb[0].mxu0 %v4880
        %v5400 = vpop.f32.mrb[0].mxu0
        %v5401 = vadd.f32 %v5118, %v5400
        %v5402 = vpop.f32.mrb[0].mxu0
        %5403 = vmatprep.mubr.f32.mxu0 0.0
        %5404 = vmatmul.mubr.f32.gmra.mrb[0].mxu0 %v4883
        %v5405 = vpop.f32.mrb[0].mxu0
        %v5406 = vadd.f32 %v5123, %v5405
        %v5407 = vpop.f32.mrb[0].mxu0
        %5408 = vmatprep.mubr.f32.mxu0 0.0
        %5409 = vmatmul.mubr.f32.gmra.mrb[0].mxu0 %v4886
        %v5410 = vpop.f32.mrb[0].mxu0
        %v5411 = vadd.f32 %v5128, %v5410
        %v5412 = vpop.f32.mrb[0].mxu0
        %5413 = vmatprep.mubr.f32.mxu0 0.0
        %5414 = vmatmul.mubr.f32.gmra.mrb[0].mxu0 %v4889
        %v5415 = vpop.f32.mrb[0].mxu0
        %v5416 = vadd.f32 %v5133, %v5415
        %v5417 = vpop.f32.mrb[0].mxu0
        %5418 = vmatprep.mubr.f32.mxu0 0.0
        %5419 = vmatmul.mubr.f32.gmra.mrb[0].mxu0 %v4892
        %v5420 = vpop.f32.mrb[0].mxu0
        %v5421 = vadd.f32 %v5138, %v5420
        %v5422 = vpop.f32.mrb[0].mxu0
        %5423 = vmatprep.mubr.f32.mxu0 0.0
        %5424 = vmatmul.mubr.f32.gmra.mrb[0].mxu0 %v4895
        %v5425 = vpop.f32.mrb[0].mxu0
        %v5426 = vadd.f32 %v5143, %v5425
        %v5427 = vpop.f32.mrb[0].mxu0
        %5428 = vmatprep.mubr.f32.mxu0 0.0
        %5429 = vmatmul.mubr.f32.gmra.mrb[0].mxu0 %v4898
        %v5430 = vpop.f32.mrb[0].mxu0
        %v5431 = vadd.f32 %v5148, %v5430
        %v5432 = vpop.f32.mrb[0].mxu0
        %5433 = vmatprep.mubr.f32.mxu0 0.0
        %5434 = vmatmul.mubr.f32.gmra.mrb[0].mxu0 %v4901
        %v5435 = vpop.f32.mrb[0].mxu0
        %v5436 = vadd.f32 %v5153, %v5435
        %v5437 = vpop.f32.mrb[0].mxu0
        %5438 = vmatprep.mubr.f32.mxu0 0.0
        %5439 = vmatmul.mubr.f32.gmra.mrb[0].mxu0 %v4904
        %v5440 = vpop.f32.mrb[0].mxu0
        %v5441 = vadd.f32 %v5158, %v5440
        %v5442 = vpop.f32.mrb[0].mxu0
        %5443 = vmatprep.mubr.f32.mxu0 0.0
        %5444 = vmatmul.mubr.f32.gmra.mrb[0].mxu0 %v4907
        %v5445 = vpop.f32.mrb[0].mxu0
        %v5446 = vadd.f32 %v5163, %v5445
        %v5447 = vpop.f32.mrb[0].mxu0
        %5448 = vmatprep.mubr.f32.mxu0 0.0
        %5449 = vmatmul.mubr.f32.gmra.mrb[0].mxu0 %v4910
        %v5450 = vpop.f32.mrb[0].mxu0
        %v5451 = vadd.f32 %v5168, %v5450
        %v5452 = vpop.f32.mrb[0].mxu0
        %5453 = vmatprep.mubr.f32.mxu0 0.0
        %5454 = vmatmul.mubr.f32.gmra.mrb[0].mxu0 %v4913
        %v5455 = vpop.f32.mrb[0].mxu0
        %v5456 = vadd.f32 %v5173, %v5455
        %v5457 = vpop.f32.mrb[0].mxu0
        %5458 = vmatprep.mubr.f32.mxu0 0.0
        %5459 = vmatmul.mubr.f32.gmra.mrb[0].mxu0 %v4916
        %v5460 = vpop.f32.mrb[0].mxu0
        %v5461 = vadd.f32 %v5178, %v5460
        %v5462 = vpop.f32.mrb[0].mxu0
        %5463 = vmatprep.mubr.f32.mxu0 0.0
        %5464 = vmatmul.mubr.f32.gmra.mrb[0].mxu0 %v4919
        %v5465 = vpop.f32.mrb[0].mxu0
        %v5466 = vadd.f32 %v5183, %v5465
        %v5467 = vpop.f32.mrb[0].mxu0
        %5468 = vmatprep.mubr.f32.mxu0 0.0
        %5469 = vmatmul.mubr.f32.gmra.mrb[0].mxu0 %v4922
        %v5470 = vpop.f32.mrb[0].mxu0
        %v5471 = vadd.f32 %v5188, %v5470
        %v5472 = vpop.f32.mrb[0].mxu0
        %5473 = vmatprep.mubr.f32.mxu0 0.0
        %5474 = vmatmul.mubr.f32.gmra.mrb[0].mxu0 %v4925
        %v5475 = vpop.f32.mrb[0].mxu0
        %v5476 = vadd.f32 %v5193, %v5475
        %v5477 = vpop.f32.mrb[0].mxu0
        %5478 = vmatprep.mubr.f32.mxu0 0.0
        %5479 = vmatmul.mubr.f32.gmra.mrb[0].mxu0 %v4928
        %v5480 = vpop.f32.mrb[0].mxu0
        %v5481 = vadd.f32 %v5198, %v5480
        %v5482 = vpop.f32.mrb[0].mxu0
        %5483 = vmatprep.mubr.f32.mxu0 0.0
        %5484 = vmatmul.mubr.f32.gmra.mrb[0].mxu0 %v4931
        %v5485 = vpop.f32.mrb[0].mxu0
        %v5486 = vadd.f32 %v5203, %v5485
        %v5487 = vpop.f32.mrb[0].mxu0
        %5488 = vmatprep.mubr.f32.mxu0 0.0
        %5489 = vmatmul.mubr.f32.gmra.mrb[0].mxu0 %v4934
        %v5490 = vpop.f32.mrb[0].mxu0
        %v5491 = vadd.f32 %v5208, %v5490
        %v5492 = vpop.f32.mrb[0].mxu0
        %5493 = vmatprep.mubr.f32.mxu0 0.0
        %5494 = vmatmul.mubr.f32.gmra.mrb[0].mxu0 %v4937
        %v5495 = vpop.f32.mrb[0].mxu0
        %v5496 = vadd.f32 %v5213, %v5495
        %v5497 = vpop.f32.mrb[0].mxu0
        %5498 = vmatprep.mubr.f32.mxu0 0.0
        %5499 = vmatmul.mubr.f32.gmra.mrb[0].mxu0 %v4940
        %v5500 = vpop.f32.mrb[0].mxu0
        %v5501 = vadd.f32 %v5218, %v5500
        %v5502 = vpop.f32.mrb[0].mxu0
        %5503 = vmatprep.mubr.f32.mxu0 0.0
        %5504 = vmatmul.mubr.f32.gmra.mrb[0].mxu0 %v4943
        %v5505 = vpop.f32.mrb[0].mxu0
        %v5506 = vadd.f32 %v5223, %v5505
        %v5507 = vpop.f32.mrb[0].mxu0
        %5508 = vmatprep.mubr.f32.mxu0 0.0
        %5509 = vmatmul.mubr.f32.gmra.mrb[0].mxu0 %v4946
        %v5510 = vpop.f32.mrb[0].mxu0
        %v5511 = vadd.f32 %v5228, %v5510
        %v5512 = vpop.f32.mrb[0].mxu0
        %5513 = vdwg.mxu0
        %s5514 = scalar_lea.vmem %s5, 24
        %v5515 = vld [vmem:[%s5514] sm:$0xf]
        %v5517 = vsel %vm543, %v4835, 0
        %v5520 = vsel %vm543, %v4836, 0
        %v5523 = vsel %vm543, %v4837, 0
        %v5526 = vsel %vm543, %v4838, 0
        %v5529 = vsel %vm543, %v4839, 0
        %v5532 = vsel %vm543, %v5515, 0
        %5534 = vmatprep.subr.mxu0 0.0
        %5535 = vmatpush1.xpose.msra.mxu0 %v5532
        %5536 = vmatprep.subr.mxu0 0.0
        %5537 = vmatpush1.xpose.msra.mxu0 0.0
        %5538 = vmatprep.subr.mxu0 0.0
        %5539 = vmatpush1.xpose.msra.mxu0 0.0
        %5540 = vmatprep.subr.mxu0 0.0
        %5541 = vmatpush1.xpose.msra.mxu0 0.0
        %5542 = vmatprep.subr.mxu0 0.0
        %5543 = vmatpush1.xpose.msra.mxu0 0.0
        %5544 = vmatprep.subr.mxu0 0.0
        %5545 = vmatpush1.xpose.msra.mxu0 0.0
        %5546 = vmatprep.subr.mxu0 0.0
        %5547 = vmatpush1.xpose.msra.mxu0 0.0
        %5548 = vmatprep.subr.mxu0 0.0
        %5549 = vmatpush1.xpose.msra.mxu0 0.0
        %5550 = vmatprep.subr.mxu0 0.0
        %5551 = vmatpush1.xpose.msra.mxu0 0.0
        %5552 = vmatprep.subr.mxu0 0.0
        %5553 = vmatpush1.xpose.msra.mxu0 0.0
        %5554 = vmatprep.subr.mxu0 0.0
        %5555 = vmatpush1.xpose.msra.mxu0 0.0
        %5556 = vmatprep.subr.mxu0 0.0
        %5557 = vmatpush1.xpose.msra.mxu0 0.0
        %5558 = vmatprep.subr.mxu0 0.0
        %5559 = vmatpush1.xpose.msra.mxu0 0.0
        %5560 = vmatprep.subr.mxu0 0.0
        %5561 = vmatpush1.xpose.msra.mxu0 0.0
        %5562 = vmatprep.subr.mxu0 0.0
        %5563 = vmatpush1.xpose.msra.mxu0 0.0
        %5564 = vmatprep.subr.mxu0 0.0
        %5565 = vmatpush1.xpose.msra.mxu0 0.0
        %5566 = vmatprep.subr.mxu0 0.0
        %5567 = vmatpush1.xpose.msra.mxu0 0.0
        %5568 = vmatprep.subr.mxu0 0.0
        %5569 = vmatpush1.xpose.msra.mxu0 0.0
        %5570 = vmatprep.subr.mxu0 0.0
        %5571 = vmatpush1.xpose.msra.mxu0 0.0
        %5572 = vmatprep.subr.mxu0 0.0
        %5573 = vmatpush1.xpose.msra.mxu0 0.0
        %5574 = vmatprep.subr.mxu0 0.0
        %5575 = vmatpush1.xpose.msra.mxu0 0.0
        %5576 = vmatprep.subr.mxu0 0.0
        %5577 = vmatpush1.xpose.msra.mxu0 0.0
        %5578 = vmatprep.subr.mxu0 0.0
        %5579 = vmatpush1.xpose.msra.mxu0 0.0
        %5580 = vmatprep.subr.mxu0 0.0
        %5581 = vmatpush1.xpose.msra.mxu0 0.0
        %5582 = vmatprep.subr.mxu0 0.0
        %5583 = vmatpush1.xpose.msra.mxu0 0.0
        %5584 = vmatprep.subr.mxu0 0.0
        %5585 = vmatpush1.xpose.msra.mxu0 0.0
        %5586 = vmatprep.subr.mxu0 0.0
        %5587 = vmatpush1.xpose.msra.mxu0 0.0
        %5588 = vmatprep.subr.mxu0 0.0
        %5589 = vmatpush1.xpose.msra.mxu0 0.0
        %5590 = vmatprep.subr.mxu0 0.0
        %5591 = vmatpush1.xpose.msra.mxu0 0.0
        %5592 = vmatprep.subr.mxu0 0.0
        %5593 = vmatpush1.xpose.msra.mxu0 0.0
        %5594 = vmatprep.subr.mxu0 0.0
        %5595 = vmatpush1.xpose.msra.mxu0 0.0
        %5596 = vmatprep.subr.mxu0 0.0
        %5597 = vmatpush1.xpose.msra.mxu0 0.0
        %5598 = vmatprep.mubr.f32.mxu0 0.0
        %5599 = vmatmul.mubr.f32.gmra.mrb[0].mxu0 %v4859
        %v5600 = vpop.f32.mrb[0].mxu0
        %v5601 = vadd.f32 0.0, %v5600
        %v5602 = vpop.f32.mrb[0].mxu0
        %5603 = vmatprep.mubr.f32.mxu0 0.0
        %5604 = vmatmul.mubr.f32.gmra.mrb[0].mxu0 %v4862
        %v5605 = vpop.f32.mrb[0].mxu0
        %v5606 = vadd.f32 0.0, %v5605
        %v5607 = vpop.f32.mrb[0].mxu0
        %5608 = vmatprep.mubr.f32.mxu0 0.0
        %5609 = vmatmul.mubr.f32.gmra.mrb[0].mxu0 %v4865
        %v5610 = vpop.f32.mrb[0].mxu0
        %v5611 = vadd.f32 0.0, %v5610
        %v5612 = vpop.f32.mrb[0].mxu0
        %5613 = vmatprep.mubr.f32.mxu0 0.0
        %5614 = vmatmul.mubr.f32.gmra.mrb[0].mxu0 %v4868
        %v5615 = vpop.f32.mrb[0].mxu0
        %v5616 = vadd.f32 0.0, %v5615
        %v5617 = vpop.f32.mrb[0].mxu0
        %5618 = vmatprep.mubr.f32.mxu0 0.0
        %5619 = vmatmul.mubr.f32.gmra.mrb[0].mxu0 %v4871
        %v5620 = vpop.f32.mrb[0].mxu0
        %v5621 = vadd.f32 0.0, %v5620
        %v5622 = vpop.f32.mrb[0].mxu0
        %5623 = vmatprep.mubr.f32.mxu0 0.0
        %5624 = vmatmul.mubr.f32.gmra.mrb[0].mxu0 %v4874
        %v5625 = vpop.f32.mrb[0].mxu0
        %v5626 = vadd.f32 0.0, %v5625
        %v5627 = vpop.f32.mrb[0].mxu0
        %5628 = vmatprep.mubr.f32.mxu0 0.0
        %5629 = vmatmul.mubr.f32.gmra.mrb[0].mxu0 %v4877
        %v5630 = vpop.f32.mrb[0].mxu0
        %v5631 = vadd.f32 0.0, %v5630
        %v5632 = vpop.f32.mrb[0].mxu0
        %5633 = vmatprep.mubr.f32.mxu0 0.0
        %5634 = vmatmul.mubr.f32.gmra.mrb[0].mxu0 %v4880
        %v5635 = vpop.f32.mrb[0].mxu0
        %v5636 = vadd.f32 0.0, %v5635
        %v5637 = vpop.f32.mrb[0].mxu0
        %5638 = vmatprep.mubr.f32.mxu0 0.0
        %5639 = vmatmul.mubr.f32.gmra.mrb[0].mxu0 %v4883
        %v5640 = vpop.f32.mrb[0].mxu0
        %v5641 = vadd.f32 0.0, %v5640
        %v5642 = vpop.f32.mrb[0].mxu0
        %5643 = vmatprep.mubr.f32.mxu0 0.0
        %5644 = vmatmul.mubr.f32.gmra.mrb[0].mxu0 %v4886
        %v5645 = vpop.f32.mrb[0].mxu0
        %v5646 = vadd.f32 0.0, %v5645
        %v5647 = vpop.f32.mrb[0].mxu0
        %5648 = vmatprep.mubr.f32.mxu0 0.0
        %5649 = vmatmul.mubr.f32.gmra.mrb[0].mxu0 %v4889
        %v5650 = vpop.f32.mrb[0].mxu0
        %v5651 = vadd.f32 0.0, %v5650
        %v5652 = vpop.f32.mrb[0].mxu0
        %5653 = vmatprep.mubr.f32.mxu0 0.0
        %5654 = vmatmul.mubr.f32.gmra.mrb[0].mxu0 %v4892
        %v5655 = vpop.f32.mrb[0].mxu0
        %v5656 = vadd.f32 0.0, %v5655
        %v5657 = vpop.f32.mrb[0].mxu0
        %5658 = vmatprep.mubr.f32.mxu0 0.0
        %5659 = vmatmul.mubr.f32.gmra.mrb[0].mxu0 %v4895
        %v5660 = vpop.f32.mrb[0].mxu0
        %v5661 = vadd.f32 0.0, %v5660
        %v5662 = vpop.f32.mrb[0].mxu0
        %5663 = vmatprep.mubr.f32.mxu0 0.0
        %5664 = vmatmul.mubr.f32.gmra.mrb[0].mxu0 %v4898
        %v5665 = vpop.f32.mrb[0].mxu0
        %v5666 = vadd.f32 0.0, %v5665
        %v5667 = vpop.f32.mrb[0].mxu0
        %5668 = vmatprep.mubr.f32.mxu0 0.0
        %5669 = vmatmul.mubr.f32.gmra.mrb[0].mxu0 %v4901
        %v5670 = vpop.f32.mrb[0].mxu0
        %v5671 = vadd.f32 0.0, %v5670
        %v5672 = vpop.f32.mrb[0].mxu0
        %5673 = vmatprep.mubr.f32.mxu0 0.0
        %5674 = vmatmul.mubr.f32.gmra.mrb[0].mxu0 %v4904
        %v5675 = vpop.f32.mrb[0].mxu0
        %v5676 = vadd.f32 0.0, %v5675
        %v5677 = vpop.f32.mrb[0].mxu0
        %5678 = vmatprep.mubr.f32.mxu0 0.0
        %5679 = vmatmul.mubr.f32.gmra.mrb[0].mxu0 %v4907
        %v5680 = vpop.f32.mrb[0].mxu0
        %v5681 = vadd.f32 0.0, %v5680
        %v5682 = vpop.f32.mrb[0].mxu0
        %5683 = vmatprep.mubr.f32.mxu0 0.0
        %5684 = vmatmul.mubr.f32.gmra.mrb[0].mxu0 %v4910
        %v5685 = vpop.f32.mrb[0].mxu0
        %v5686 = vadd.f32 0.0, %v5685
        %v5687 = vpop.f32.mrb[0].mxu0
        %5688 = vmatprep.mubr.f32.mxu0 0.0
        %5689 = vmatmul.mubr.f32.gmra.mrb[0].mxu0 %v4913
        %v5690 = vpop.f32.mrb[0].mxu0
        %v5691 = vadd.f32 0.0, %v5690
        %v5692 = vpop.f32.mrb[0].mxu0
        %5693 = vmatprep.mubr.f32.mxu0 0.0
        %5694 = vmatmul.mubr.f32.gmra.mrb[0].mxu0 %v4916
        %v5695 = vpop.f32.mrb[0].mxu0
        %v5696 = vadd.f32 0.0, %v5695
        %v5697 = vpop.f32.mrb[0].mxu0
        %5698 = vmatprep.mubr.f32.mxu0 0.0
        %5699 = vmatmul.mubr.f32.gmra.mrb[0].mxu0 %v4919
        %v5700 = vpop.f32.mrb[0].mxu0
        %v5701 = vadd.f32 0.0, %v5700
        %v5702 = vpop.f32.mrb[0].mxu0
        %5703 = vmatprep.mubr.f32.mxu0 0.0
        %5704 = vmatmul.mubr.f32.gmra.mrb[0].mxu0 %v4922
        %v5705 = vpop.f32.mrb[0].mxu0
        %v5706 = vadd.f32 0.0, %v5705
        %v5707 = vpop.f32.mrb[0].mxu0
        %5708 = vmatprep.mubr.f32.mxu0 0.0
        %5709 = vmatmul.mubr.f32.gmra.mrb[0].mxu0 %v4925
        %v5710 = vpop.f32.mrb[0].mxu0
        %v5711 = vadd.f32 0.0, %v5710
        %v5712 = vpop.f32.mrb[0].mxu0
        %5713 = vmatprep.mubr.f32.mxu0 0.0
        %5714 = vmatmul.mubr.f32.gmra.mrb[0].mxu0 %v4928
        %v5715 = vpop.f32.mrb[0].mxu0
        %v5716 = vadd.f32 0.0, %v5715
        %v5717 = vpop.f32.mrb[0].mxu0
        %5718 = vmatprep.mubr.f32.mxu0 0.0
        %5719 = vmatmul.mubr.f32.gmra.mrb[0].mxu0 %v4931
        %v5720 = vpop.f32.mrb[0].mxu0
        %v5721 = vadd.f32 0.0, %v5720
        %v5722 = vpop.f32.mrb[0].mxu0
        %5723 = vmatprep.mubr.f32.mxu0 0.0
        %5724 = vmatmul.mubr.f32.gmra.mrb[0].mxu0 %v4934
        %v5725 = vpop.f32.mrb[0].mxu0
        %v5726 = vadd.f32 0.0, %v5725
        %v5727 = vpop.f32.mrb[0].mxu0
        %5728 = vmatprep.mubr.f32.mxu0 0.0
        %5729 = vmatmul.mubr.f32.gmra.mrb[0].mxu0 %v4937
        %v5730 = vpop.f32.mrb[0].mxu0
        %v5731 = vadd.f32 0.0, %v5730
        %v5732 = vpop.f32.mrb[0].mxu0
        %5733 = vmatprep.mubr.f32.mxu0 0.0
        %5734 = vmatmul.mubr.f32.gmra.mrb[0].mxu0 %v4940
        %v5735 = vpop.f32.mrb[0].mxu0
        %v5736 = vadd.f32 0.0, %v5735
        %v5737 = vpop.f32.mrb[0].mxu0
        %5738 = vmatprep.mubr.f32.mxu0 0.0
        %5739 = vmatmul.mubr.f32.gmra.mrb[0].mxu0 %v4943
        %v5740 = vpop.f32.mrb[0].mxu0
        %v5741 = vadd.f32 0.0, %v5740
        %v5742 = vpop.f32.mrb[0].mxu0
        %5743 = vmatprep.mubr.f32.mxu0 0.0
        %5744 = vmatmul.mubr.f32.gmra.mrb[0].mxu0 %v4946
        %v5745 = vpop.f32.mrb[0].mxu0
        %v5746 = vadd.f32 0.0, %v5745
        %v5747 = vpop.f32.mrb[0].mxu0
        %5748 = vmatprep.mubr.f32.mxu0 0.0
        %5749 = vmatmul.mubr.f32.gmra.mrb[0].mxu0 %v4949
        %v5750 = vpop.f32.mrb[0].mxu0
        %v5751 = vadd.f32 0.0, %v5750
        %v5752 = vpop.f32.mrb[0].mxu0
        %5753 = vmatprep.mubr.f32.mxu0 0.0
        %5754 = vmatmul.mubr.f32.gmra.mrb[0].mxu0 %v4952
        %v5755 = vpop.f32.mrb[0].mxu0
        %v5756 = vadd.f32 0.0, %v5755
        %v5757 = vpop.f32.mrb[0].mxu0
        %5758 = vmatprep.mubr.f32.mxu0 0.0
        %5759 = vmatmul.mubr.f32.gmra.mrb[0].mxu0 %v4955
        %v5760 = vpop.f32.mrb[0].mxu0
        %v5761 = vadd.f32 0.0, %v5760
        %v5762 = vpop.f32.mrb[0].mxu0
        %5763 = vmatprep.mubr.f32.mxu0 0.0
        %5764 = vmatmul.mubr.f32.gmra.mrb[0].mxu0 %v4958
        %v5765 = vpop.f32.mrb[0].mxu0
        %v5766 = vadd.f32 0.0, %v5765
        %v5767 = vpop.f32.mrb[0].mxu0
        %5768 = vmatprep.mubr.f32.mxu0 0.0
        %5769 = vmatmul.mubr.f32.gmra.mrb[0].mxu0 %v4961
        %v5770 = vpop.f32.mrb[0].mxu0
        %v5771 = vadd.f32 0.0, %v5770
        %v5772 = vpop.f32.mrb[0].mxu0
        %5773 = vmatprep.mubr.f32.mxu0 0.0
        %5774 = vmatmul.mubr.f32.gmra.mrb[0].mxu0 %v5517
        %v5775 = vpop.f32.mrb[0].mxu0
        %v5776 = vadd.f32 0.0, %v5775
        %v5777 = vpop.f32.mrb[0].mxu0
        %5778 = vmatprep.mubr.f32.mxu0 0.0
        %5779 = vmatmul.mubr.f32.gmra.mrb[0].mxu0 %v5520
        %v5780 = vpop.f32.mrb[0].mxu0
        %v5781 = vadd.f32 0.0, %v5780
        %v5782 = vpop.f32.mrb[0].mxu0
        %5783 = vmatprep.mubr.f32.mxu0 0.0
        %5784 = vmatmul.mubr.f32.gmra.mrb[0].mxu0 %v5523
        %v5785 = vpop.f32.mrb[0].mxu0
        %v5786 = vadd.f32 0.0, %v5785
        %v5787 = vpop.f32.mrb[0].mxu0
        %5788 = vmatprep.mubr.f32.mxu0 0.0
        %5789 = vmatmul.mubr.f32.gmra.mrb[0].mxu0 %v5526
        %v5790 = vpop.f32.mrb[0].mxu0
        %v5791 = vadd.f32 0.0, %v5790
        %v5792 = vpop.f32.mrb[0].mxu0
        %5793 = vmatprep.mubr.f32.mxu0 0.0
        %5794 = vmatmul.mubr.f32.gmra.mrb[0].mxu0 %v5529
        %v5795 = vpop.f32.mrb[0].mxu0
        %v5796 = vadd.f32 0.0, %v5795
        %v5797 = vpop.f32.mrb[0].mxu0
        %5798 = vdwg.mxu0
        %v5799 = vadd.f32 %v5316, %v5601
        %v5800 = vadd.f32 %v5321, %v5606
        %v5801 = vadd.f32 %v5326, %v5611
        %v5802 = vadd.f32 %v5331, %v5616
        %v5803 = vadd.f32 %v5336, %v5621
        %v5804 = vadd.f32 %v5341, %v5626
        %v5805 = vadd.f32 %v5346, %v5631
        %v5806 = vadd.f32 %v5351, %v5636
        %v5807 = vadd.f32 %v5356, %v5641
        %v5808 = vadd.f32 %v5361, %v5646
        %v5809 = vadd.f32 %v5366, %v5651
        %v5810 = vadd.f32 %v5371, %v5656
        %v5811 = vadd.f32 %v5376, %v5661
        %v5812 = vadd.f32 %v5381, %v5666
        %v5813 = vadd.f32 %v5386, %v5671
        %v5814 = vadd.f32 %v5391, %v5676
        %v5815 = vadd.f32 %v5396, %v5681
        %v5816 = vadd.f32 %v5401, %v5686
        %v5817 = vadd.f32 %v5406, %v5691
        %v5818 = vadd.f32 %v5411, %v5696
        %v5819 = vadd.f32 %v5416, %v5701
        %v5820 = vadd.f32 %v5421, %v5706
        %v5821 = vadd.f32 %v5426, %v5711
        %v5822 = vadd.f32 %v5431, %v5716
        %v5823 = vadd.f32 %v5436, %v5721
        %v5824 = vadd.f32 %v5441, %v5726
        %v5825 = vadd.f32 %v5446, %v5731
        %v5826 = vadd.f32 %v5451, %v5736
        %v5827 = vadd.f32 %v5456, %v5741
        %v5828 = vadd.f32 %v5461, %v5746
        %v5829 = vadd.f32 %v5466, %v5751
        %v5830 = vadd.f32 %v5471, %v5756
        %v5831 = vadd.f32 %v5476, %v5761
        %v5832 = vadd.f32 %v5481, %v5766
        %v5833 = vadd.f32 %v5486, %v5771
        %v5834 = vadd.f32 %v5491, %v5776
        %v5835 = vadd.f32 %v5496, %v5781
        %v5836 = vadd.f32 %v5501, %v5786
        %v5837 = vadd.f32 %v5506, %v5791
        %v5838 = vadd.f32 %v5511, %v5796
        %v5839 = vld [vmem:[#allocation3 + $0x1] sm:$0xff]
        %v5840 = vld [vmem:[#allocation3 + $0x9] sm:$0xff]
        %v5841 = vld [vmem:[#allocation3 + $0x11] sm:$0xff]
        %v5842 = vld [vmem:[#allocation3 + $0x19] sm:$0xff]
        %v5843 = vld [vmem:[#allocation3 + $0x21] sm:$0xff]
        %v5844 = vld [vmem:[#allocation3 + $0x31] sm:$0xff]
        %v5845 = vld [vmem:[#allocation3 + $0x39] sm:$0xff]
        %v5846 = vld [vmem:[#allocation3 + $0x41] sm:$0xff]
        %v5847 = vld [vmem:[#allocation3 + $0x49] sm:$0xff]
        %v5848 = vld [vmem:[#allocation3 + $0x51] sm:$0xff]
        %v5849 = vld [vmem:[#allocation3 + $0x61] sm:$0xff]
        %v5850 = vld [vmem:[#allocation3 + $0x69] sm:$0xff]
        %v5851 = vld [vmem:[#allocation3 + $0x71] sm:$0xff]
        %v5852 = vld [vmem:[#allocation3 + $0x79] sm:$0xff]
        %v5853 = vld [vmem:[#allocation3 + $0x81] sm:$0xff]
        %v5854 = vld [vmem:[#allocation3 + $0x91] sm:$0xff]
        %v5855 = vld [vmem:[#allocation3 + $0x99] sm:$0xff]
        %v5856 = vld [vmem:[#allocation3 + $0xa1] sm:$0xff]
        %v5857 = vld [vmem:[#allocation3 + $0xa9] sm:$0xff]
        %v5858 = vld [vmem:[#allocation3 + $0xb1] sm:$0xff]
        %v5859 = vld [vmem:[#allocation3 + $0xc1] sm:$0xff]
        %v5860 = vld [vmem:[#allocation3 + $0xc9] sm:$0xff]
        %v5861 = vld [vmem:[#allocation3 + $0xd1] sm:$0xff]
        %v5862 = vld [vmem:[#allocation3 + $0xd9] sm:$0xff]
        %v5863 = vld [vmem:[#allocation3 + $0xe1] sm:$0xff]
        %v5864 = vld [vmem:[#allocation3 + $0xf1] sm:$0xff]
        %v5865 = vld [vmem:[#allocation3 + $0xf9] sm:$0xff]
        %v5866 = vld [vmem:[#allocation3 + $0x101] sm:$0xff]
        %v5867 = vld [vmem:[#allocation3 + $0x109] sm:$0xff]
        %v5868 = vld [vmem:[#allocation3 + $0x111] sm:$0xff]
        %v5869 = vld [vmem:[#allocation3 + $0x121] sm:$0xff]
        %v5870 = vld [vmem:[#allocation3 + $0x129] sm:$0xff]
        %v5871 = vld [vmem:[#allocation3 + $0x131] sm:$0xff]
        %v5872 = vld [vmem:[#allocation3 + $0x139] sm:$0xff]
        %v5873 = vld [vmem:[#allocation3 + $0x141] sm:$0xff]
        %v5874 = vld [vmem:[#allocation3 + $0x151] sm:$0xff]
        %v5875 = vld [vmem:[#allocation3 + $0x159] sm:$0xff]
        %v5876 = vld [vmem:[#allocation3 + $0x161] sm:$0xff]
        %v5877 = vld [vmem:[#allocation3 + $0x169] sm:$0xff]
        %v5878 = vld [vmem:[#allocation3 + $0x171] sm:$0xff]
        %v5879 = vld [vmem:[#allocation3 + $0x181] sm:$0xff]
        %v5880 = vld [vmem:[#allocation3 + $0x189] sm:$0xff]
        %v5881 = vld [vmem:[#allocation3 + $0x191] sm:$0xff]
        %v5882 = vld [vmem:[#allocation3 + $0x199] sm:$0xff]
        %v5883 = vld [vmem:[#allocation3 + $0x1a1] sm:$0xff]
        %v5884 = vld [vmem:[#allocation3 + $0x1b1] sm:$0xff]
        %v5885 = vld [vmem:[#allocation3 + $0x1b9] sm:$0xff]
        %v5886 = vld [vmem:[#allocation3 + $0x1c1] sm:$0xff]
        %v5887 = vld [vmem:[#allocation3 + $0x1c9] sm:$0xff]
        %v5888 = vld [vmem:[#allocation3 + $0x1d1] sm:$0xff]
        %s5889 = scalar_lea.vmem %s5, 4
        %v5890 = vld [vmem:[%s5889] sm:$0xf]
        %v5892 = vsel %vm543, %v5839, 0
        %v5895 = vsel %vm543, %v5840, 0
        %v5898 = vsel %vm543, %v5841, 0
        %v5901 = vsel %vm543, %v5842, 0
        %v5904 = vsel %vm543, %v5843, 0
        %v5907 = vsel %vm543, %v5844, 0
        %v5910 = vsel %vm543, %v5845, 0
        %v5913 = vsel %vm543, %v5846, 0
        %v5916 = vsel %vm543, %v5847, 0
        %v5919 = vsel %vm543, %v5848, 0
        %v5922 = vsel %vm543, %v5849, 0
        %v5925 = vsel %vm543, %v5850, 0
        %v5928 = vsel %vm543, %v5851, 0
        %v5931 = vsel %vm543, %v5852, 0
        %v5934 = vsel %vm543, %v5853, 0
        %v5937 = vsel %vm543, %v5854, 0
        %v5940 = vsel %vm543, %v5855, 0
        %v5943 = vsel %vm543, %v5856, 0
        %v5946 = vsel %vm543, %v5857, 0
        %v5949 = vsel %vm543, %v5858, 0
        %v5952 = vsel %vm543, %v5859, 0
        %v5955 = vsel %vm543, %v5860, 0
        %v5958 = vsel %vm543, %v5861, 0
        %v5961 = vsel %vm543, %v5862, 0
        %v5964 = vsel %vm543, %v5863, 0
        %v5967 = vsel %vm543, %v5864, 0
        %v5970 = vsel %vm543, %v5865, 0
        %v5973 = vsel %vm543, %v5866, 0
        %v5976 = vsel %vm543, %v5867, 0
        %v5979 = vsel %vm543, %v5868, 0
        %v5982 = vsel %vm543, %v5869, 0
        %v5985 = vsel %vm543, %v5870, 0
        %v5988 = vsel %vm543, %v5871, 0
        %v5991 = vsel %vm543, %v5872, 0
        %v5994 = vsel %vm543, %v5873, 0
        %v5997 = vsel %vm543, %v5874, 0
        %v6000 = vsel %vm543, %v5875, 0
        %v6003 = vsel %vm543, %v5876, 0
        %v6006 = vsel %vm543, %v5877, 0
        %v6009 = vsel %vm543, %v5878, 0
        %v6012 = vsel %vm543, %v5890, 0
        %6014 = vmatprep.subr.mxu0 0.0
        %6015 = vmatpush1.xpose.msra.mxu0 %v6012
        %6016 = vmatprep.subr.mxu0 0.0
        %6017 = vmatpush1.xpose.msra.mxu0 0.0
        %6018 = vmatprep.subr.mxu0 0.0
        %6019 = vmatpush1.xpose.msra.mxu0 0.0
        %6020 = vmatprep.subr.mxu0 0.0
        %6021 = vmatpush1.xpose.msra.mxu0 0.0
        %6022 = vmatprep.subr.mxu0 0.0
        %6023 = vmatpush1.xpose.msra.mxu0 0.0
        %6024 = vmatprep.subr.mxu0 0.0
        %6025 = vmatpush1.xpose.msra.mxu0 0.0
        %6026 = vmatprep.subr.mxu0 0.0
        %6027 = vmatpush1.xpose.msra.mxu0 0.0
        %6028 = vmatprep.subr.mxu0 0.0
        %6029 = vmatpush1.xpose.msra.mxu0 0.0
        %6030 = vmatprep.subr.mxu0 0.0
        %6031 = vmatpush1.xpose.msra.mxu0 0.0
        %6032 = vmatprep.subr.mxu0 0.0
        %6033 = vmatpush1.xpose.msra.mxu0 0.0
        %6034 = vmatprep.subr.mxu0 0.0
        %6035 = vmatpush1.xpose.msra.mxu0 0.0
        %6036 = vmatprep.subr.mxu0 0.0
        %6037 = vmatpush1.xpose.msra.mxu0 0.0
        %6038 = vmatprep.subr.mxu0 0.0
        %6039 = vmatpush1.xpose.msra.mxu0 0.0
        %6040 = vmatprep.subr.mxu0 0.0
        %6041 = vmatpush1.xpose.msra.mxu0 0.0
        %6042 = vmatprep.subr.mxu0 0.0
        %6043 = vmatpush1.xpose.msra.mxu0 0.0
        %6044 = vmatprep.subr.mxu0 0.0
        %6045 = vmatpush1.xpose.msra.mxu0 0.0
        %6046 = vmatprep.subr.mxu0 0.0
        %6047 = vmatpush1.xpose.msra.mxu0 0.0
        %6048 = vmatprep.subr.mxu0 0.0
        %6049 = vmatpush1.xpose.msra.mxu0 0.0
        %6050 = vmatprep.subr.mxu0 0.0
        %6051 = vmatpush1.xpose.msra.mxu0 0.0
        %6052 = vmatprep.subr.mxu0 0.0
        %6053 = vmatpush1.xpose.msra.mxu0 0.0
        %6054 = vmatprep.subr.mxu0 0.0
        %6055 = vmatpush1.xpose.msra.mxu0 0.0
        %6056 = vmatprep.subr.mxu0 0.0
        %6057 = vmatpush1.xpose.msra.mxu0 0.0
        %6058 = vmatprep.subr.mxu0 0.0
        %6059 = vmatpush1.xpose.msra.mxu0 0.0
        %6060 = vmatprep.subr.mxu0 0.0
        %6061 = vmatpush1.xpose.msra.mxu0 0.0
        %6062 = vmatprep.subr.mxu0 0.0
        %6063 = vmatpush1.xpose.msra.mxu0 0.0
        %6064 = vmatprep.subr.mxu0 0.0
        %6065 = vmatpush1.xpose.msra.mxu0 0.0
        %6066 = vmatprep.subr.mxu0 0.0
        %6067 = vmatpush1.xpose.msra.mxu0 0.0
        %6068 = vmatprep.subr.mxu0 0.0
        %6069 = vmatpush1.xpose.msra.mxu0 0.0
        %6070 = vmatprep.subr.mxu0 0.0
        %6071 = vmatpush1.xpose.msra.mxu0 0.0
        %6072 = vmatprep.subr.mxu0 0.0
        %6073 = vmatpush1.xpose.msra.mxu0 0.0
        %6074 = vmatprep.subr.mxu0 0.0
        %6075 = vmatpush1.xpose.msra.mxu0 0.0
        %6076 = vmatprep.subr.mxu0 0.0
        %6077 = vmatpush1.xpose.msra.mxu0 0.0
        %6078 = vmatprep.mubr.f32.mxu0 0.0
        %6079 = vmatmul.mubr.f32.gmra.mrb[0].mxu0 %v5892
        %v6080 = vpop.f32.mrb[0].mxu0
        %v6081 = vadd.f32 0.0, %v6080
        %v6082 = vpop.f32.mrb[0].mxu0
        %6083 = vmatprep.mubr.f32.mxu0 0.0
        %6084 = vmatmul.mubr.f32.gmra.mrb[0].mxu0 %v5895
        %v6085 = vpop.f32.mrb[0].mxu0
        %v6086 = vadd.f32 0.0, %v6085
        %v6087 = vpop.f32.mrb[0].mxu0
        %6088 = vmatprep.mubr.f32.mxu0 0.0
        %6089 = vmatmul.mubr.f32.gmra.mrb[0].mxu0 %v5898
        %v6090 = vpop.f32.mrb[0].mxu0
        %v6091 = vadd.f32 0.0, %v6090
        %v6092 = vpop.f32.mrb[0].mxu0
        %6093 = vmatprep.mubr.f32.mxu0 0.0
        %6094 = vmatmul.mubr.f32.gmra.mrb[0].mxu0 %v5901
        %v6095 = vpop.f32.mrb[0].mxu0
        %v6096 = vadd.f32 0.0, %v6095
        %v6097 = vpop.f32.mrb[0].mxu0
        %6098 = vmatprep.mubr.f32.mxu0 0.0
        %6099 = vmatmul.mubr.f32.gmra.mrb[0].mxu0 %v5904
        %v6100 = vpop.f32.mrb[0].mxu0
        %v6101 = vadd.f32 0.0, %v6100
        %v6102 = vpop.f32.mrb[0].mxu0
        %6103 = vmatprep.mubr.f32.mxu0 0.0
        %6104 = vmatmul.mubr.f32.gmra.mrb[0].mxu0 %v5907
        %v6105 = vpop.f32.mrb[0].mxu0
        %v6106 = vadd.f32 0.0, %v6105
        %v6107 = vpop.f32.mrb[0].mxu0
        %6108 = vmatprep.mubr.f32.mxu0 0.0
        %6109 = vmatmul.mubr.f32.gmra.mrb[0].mxu0 %v5910
        %v6110 = vpop.f32.mrb[0].mxu0
        %v6111 = vadd.f32 0.0, %v6110
        %v6112 = vpop.f32.mrb[0].mxu0
        %6113 = vmatprep.mubr.f32.mxu0 0.0
        %6114 = vmatmul.mubr.f32.gmra.mrb[0].mxu0 %v5913
        %v6115 = vpop.f32.mrb[0].mxu0
        %v6116 = vadd.f32 0.0, %v6115
        %v6117 = vpop.f32.mrb[0].mxu0
        %6118 = vmatprep.mubr.f32.mxu0 0.0
        %6119 = vmatmul.mubr.f32.gmra.mrb[0].mxu0 %v5916
        %v6120 = vpop.f32.mrb[0].mxu0
        %v6121 = vadd.f32 0.0, %v6120
        %v6122 = vpop.f32.mrb[0].mxu0
        %6123 = vmatprep.mubr.f32.mxu0 0.0
        %6124 = vmatmul.mubr.f32.gmra.mrb[0].mxu0 %v5919
        %v6125 = vpop.f32.mrb[0].mxu0
        %v6126 = vadd.f32 0.0, %v6125
        %v6127 = vpop.f32.mrb[0].mxu0
        %6128 = vmatprep.mubr.f32.mxu0 0.0
        %6129 = vmatmul.mubr.f32.gmra.mrb[0].mxu0 %v5922
        %v6130 = vpop.f32.mrb[0].mxu0
        %v6131 = vadd.f32 0.0, %v6130
        %v6132 = vpop.f32.mrb[0].mxu0
        %6133 = vmatprep.mubr.f32.mxu0 0.0
        %6134 = vmatmul.mubr.f32.gmra.mrb[0].mxu0 %v5925
        %v6135 = vpop.f32.mrb[0].mxu0
        %v6136 = vadd.f32 0.0, %v6135
        %v6137 = vpop.f32.mrb[0].mxu0
        %6138 = vmatprep.mubr.f32.mxu0 0.0
        %6139 = vmatmul.mubr.f32.gmra.mrb[0].mxu0 %v5928
        %v6140 = vpop.f32.mrb[0].mxu0
        %v6141 = vadd.f32 0.0, %v6140
        %v6142 = vpop.f32.mrb[0].mxu0
        %6143 = vmatprep.mubr.f32.mxu0 0.0
        %6144 = vmatmul.mubr.f32.gmra.mrb[0].mxu0 %v5931
        %v6145 = vpop.f32.mrb[0].mxu0
        %v6146 = vadd.f32 0.0, %v6145
        %v6147 = vpop.f32.mrb[0].mxu0
        %6148 = vmatprep.mubr.f32.mxu0 0.0
        %6149 = vmatmul.mubr.f32.gmra.mrb[0].mxu0 %v5934
        %v6150 = vpop.f32.mrb[0].mxu0
        %v6151 = vadd.f32 0.0, %v6150
        %v6152 = vpop.f32.mrb[0].mxu0
        %6153 = vmatprep.mubr.f32.mxu0 0.0
        %6154 = vmatmul.mubr.f32.gmra.mrb[0].mxu0 %v5937
        %v6155 = vpop.f32.mrb[0].mxu0
        %v6156 = vadd.f32 0.0, %v6155
        %v6157 = vpop.f32.mrb[0].mxu0
        %6158 = vmatprep.mubr.f32.mxu0 0.0
        %6159 = vmatmul.mubr.f32.gmra.mrb[0].mxu0 %v5940
        %v6160 = vpop.f32.mrb[0].mxu0
        %v6161 = vadd.f32 0.0, %v6160
        %v6162 = vpop.f32.mrb[0].mxu0
        %6163 = vmatprep.mubr.f32.mxu0 0.0
        %6164 = vmatmul.mubr.f32.gmra.mrb[0].mxu0 %v5943
        %v6165 = vpop.f32.mrb[0].mxu0
        %v6166 = vadd.f32 0.0, %v6165
        %v6167 = vpop.f32.mrb[0].mxu0
        %6168 = vmatprep.mubr.f32.mxu0 0.0
        %6169 = vmatmul.mubr.f32.gmra.mrb[0].mxu0 %v5946
        %v6170 = vpop.f32.mrb[0].mxu0
        %v6171 = vadd.f32 0.0, %v6170
        %v6172 = vpop.f32.mrb[0].mxu0
        %6173 = vmatprep.mubr.f32.mxu0 0.0
        %6174 = vmatmul.mubr.f32.gmra.mrb[0].mxu0 %v5949
        %v6175 = vpop.f32.mrb[0].mxu0
        %v6176 = vadd.f32 0.0, %v6175
        %v6177 = vpop.f32.mrb[0].mxu0
        %6178 = vmatprep.mubr.f32.mxu0 0.0
        %6179 = vmatmul.mubr.f32.gmra.mrb[0].mxu0 %v5952
        %v6180 = vpop.f32.mrb[0].mxu0
        %v6181 = vadd.f32 0.0, %v6180
        %v6182 = vpop.f32.mrb[0].mxu0
        %6183 = vmatprep.mubr.f32.mxu0 0.0
        %6184 = vmatmul.mubr.f32.gmra.mrb[0].mxu0 %v5955
        %v6185 = vpop.f32.mrb[0].mxu0
        %v6186 = vadd.f32 0.0, %v6185
        %v6187 = vpop.f32.mrb[0].mxu0
        %6188 = vmatprep.mubr.f32.mxu0 0.0
        %6189 = vmatmul.mubr.f32.gmra.mrb[0].mxu0 %v5958
        %v6190 = vpop.f32.mrb[0].mxu0
        %v6191 = vadd.f32 0.0, %v6190
        %v6192 = vpop.f32.mrb[0].mxu0
        %6193 = vmatprep.mubr.f32.mxu0 0.0
        %6194 = vmatmul.mubr.f32.gmra.mrb[0].mxu0 %v5961
        %v6195 = vpop.f32.mrb[0].mxu0
        %v6196 = vadd.f32 0.0, %v6195
        %v6197 = vpop.f32.mrb[0].mxu0
        %6198 = vmatprep.mubr.f32.mxu0 0.0
        %6199 = vmatmul.mubr.f32.gmra.mrb[0].mxu0 %v5964
        %v6200 = vpop.f32.mrb[0].mxu0
        %v6201 = vadd.f32 0.0, %v6200
        %v6202 = vpop.f32.mrb[0].mxu0
        %6203 = vmatprep.mubr.f32.mxu0 0.0
        %6204 = vmatmul.mubr.f32.gmra.mrb[0].mxu0 %v5967
        %v6205 = vpop.f32.mrb[0].mxu0
        %v6206 = vadd.f32 0.0, %v6205
        %v6207 = vpop.f32.mrb[0].mxu0
        %6208 = vmatprep.mubr.f32.mxu0 0.0
        %6209 = vmatmul.mubr.f32.gmra.mrb[0].mxu0 %v5970
        %v6210 = vpop.f32.mrb[0].mxu0
        %v6211 = vadd.f32 0.0, %v6210
        %v6212 = vpop.f32.mrb[0].mxu0
        %6213 = vmatprep.mubr.f32.mxu0 0.0
        %6214 = vmatmul.mubr.f32.gmra.mrb[0].mxu0 %v5973
        %v6215 = vpop.f32.mrb[0].mxu0
        %v6216 = vadd.f32 0.0, %v6215
        %v6217 = vpop.f32.mrb[0].mxu0
        %6218 = vmatprep.mubr.f32.mxu0 0.0
        %6219 = vmatmul.mubr.f32.gmra.mrb[0].mxu0 %v5976
        %v6220 = vpop.f32.mrb[0].mxu0
        %v6221 = vadd.f32 0.0, %v6220
        %v6222 = vpop.f32.mrb[0].mxu0
        %6223 = vmatprep.mubr.f32.mxu0 0.0
        %6224 = vmatmul.mubr.f32.gmra.mrb[0].mxu0 %v5979
        %v6225 = vpop.f32.mrb[0].mxu0
        %v6226 = vadd.f32 0.0, %v6225
        %v6227 = vpop.f32.mrb[0].mxu0
        %6228 = vmatprep.mubr.f32.mxu0 0.0
        %6229 = vmatmul.mubr.f32.gmra.mrb[0].mxu0 %v5982
        %v6230 = vpop.f32.mrb[0].mxu0
        %v6231 = vadd.f32 0.0, %v6230
        %v6232 = vpop.f32.mrb[0].mxu0
        %6233 = vmatprep.mubr.f32.mxu0 0.0
        %6234 = vmatmul.mubr.f32.gmra.mrb[0].mxu0 %v5985
        %v6235 = vpop.f32.mrb[0].mxu0
        %v6236 = vadd.f32 0.0, %v6235
        %v6237 = vpop.f32.mrb[0].mxu0
        %6238 = vmatprep.mubr.f32.mxu0 0.0
        %6239 = vmatmul.mubr.f32.gmra.mrb[0].mxu0 %v5988
        %v6240 = vpop.f32.mrb[0].mxu0
        %v6241 = vadd.f32 0.0, %v6240
        %v6242 = vpop.f32.mrb[0].mxu0
        %6243 = vmatprep.mubr.f32.mxu0 0.0
        %6244 = vmatmul.mubr.f32.gmra.mrb[0].mxu0 %v5991
        %v6245 = vpop.f32.mrb[0].mxu0
        %v6246 = vadd.f32 0.0, %v6245
        %v6247 = vpop.f32.mrb[0].mxu0
        %6248 = vmatprep.mubr.f32.mxu0 0.0
        %6249 = vmatmul.mubr.f32.gmra.mrb[0].mxu0 %v5994
        %v6250 = vpop.f32.mrb[0].mxu0
        %v6251 = vadd.f32 0.0, %v6250
        %v6252 = vpop.f32.mrb[0].mxu0
        %6253 = vmatprep.mubr.f32.mxu0 0.0
        %6254 = vmatmul.mubr.f32.gmra.mrb[0].mxu0 %v5997
        %v6255 = vpop.f32.mrb[0].mxu0
        %v6256 = vadd.f32 0.0, %v6255
        %v6257 = vpop.f32.mrb[0].mxu0
        %6258 = vmatprep.mubr.f32.mxu0 0.0
        %6259 = vmatmul.mubr.f32.gmra.mrb[0].mxu0 %v6000
        %v6260 = vpop.f32.mrb[0].mxu0
        %v6261 = vadd.f32 0.0, %v6260
        %v6262 = vpop.f32.mrb[0].mxu0
        %6263 = vmatprep.mubr.f32.mxu0 0.0
        %6264 = vmatmul.mubr.f32.gmra.mrb[0].mxu0 %v6003
        %v6265 = vpop.f32.mrb[0].mxu0
        %v6266 = vadd.f32 0.0, %v6265
        %v6267 = vpop.f32.mrb[0].mxu0
        %6268 = vmatprep.mubr.f32.mxu0 0.0
        %6269 = vmatmul.mubr.f32.gmra.mrb[0].mxu0 %v6006
        %v6270 = vpop.f32.mrb[0].mxu0
        %v6271 = vadd.f32 0.0, %v6270
        %v6272 = vpop.f32.mrb[0].mxu0
        %6273 = vmatprep.mubr.f32.mxu0 0.0
        %6274 = vmatmul.mubr.f32.gmra.mrb[0].mxu0 %v6009
        %v6275 = vpop.f32.mrb[0].mxu0
        %v6276 = vadd.f32 0.0, %v6275
        %v6277 = vpop.f32.mrb[0].mxu0
        %6278 = vdwg.mxu0
        %v6279 = vadd.f32 %v5799, %v6081
        %v6280 = vadd.f32 %v5800, %v6086
        %v6281 = vadd.f32 %v5801, %v6091
        %v6282 = vadd.f32 %v5802, %v6096
        %v6283 = vadd.f32 %v5803, %v6101
        %v6284 = vadd.f32 %v5804, %v6106
        %v6285 = vadd.f32 %v5805, %v6111
        %v6286 = vadd.f32 %v5806, %v6116
        %v6287 = vadd.f32 %v5807, %v6121
        %v6288 = vadd.f32 %v5808, %v6126
        %v6289 = vadd.f32 %v5809, %v6131
        %v6290 = vadd.f32 %v5810, %v6136
        %v6291 = vadd.f32 %v5811, %v6141
        %v6292 = vadd.f32 %v5812, %v6146
        %v6293 = vadd.f32 %v5813, %v6151
        %v6294 = vadd.f32 %v5814, %v6156
        %v6295 = vadd.f32 %v5815, %v6161
        %v6296 = vadd.f32 %v5816, %v6166
        %v6297 = vadd.f32 %v5817, %v6171
        %v6298 = vadd.f32 %v5818, %v6176
        %v6299 = vadd.f32 %v5819, %v6181
        %v6300 = vadd.f32 %v5820, %v6186
        %v6301 = vadd.f32 %v5821, %v6191
        %v6302 = vadd.f32 %v5822, %v6196
        %v6303 = vadd.f32 %v5823, %v6201
        %v6304 = vadd.f32 %v5824, %v6206
        %v6305 = vadd.f32 %v5825, %v6211
        %v6306 = vadd.f32 %v5826, %v6216
        %v6307 = vadd.f32 %v5827, %v6221
        %v6308 = vadd.f32 %v5828, %v6226
        %v6309 = vadd.f32 %v5829, %v6231
        %v6310 = vadd.f32 %v5830, %v6236
        %v6311 = vadd.f32 %v5831, %v6241
        %v6312 = vadd.f32 %v5832, %v6246
        %v6313 = vadd.f32 %v5833, %v6251
        %v6314 = vadd.f32 %v5834, %v6256
        %v6315 = vadd.f32 %v5835, %v6261
        %v6316 = vadd.f32 %v5836, %v6266
        %v6317 = vadd.f32 %v5837, %v6271
        %v6318 = vadd.f32 %v5838, %v6276
        %s6319 = scalar_lea.vmem %s5, 16
        %v6320 = vld [vmem:[%s6319] sm:$0xf]
        %v6322 = vsel %vm543, %v5879, 0
        %v6325 = vsel %vm543, %v5880, 0
        %v6328 = vsel %vm543, %v5881, 0
        %v6331 = vsel %vm543, %v5882, 0
        %v6334 = vsel %vm543, %v5883, 0
        %v6337 = vsel %vm543, %v6320, 0
        %6339 = vmatprep.subr.mxu0 0.0
        %6340 = vmatpush1.xpose.msra.mxu0 %v6337
        %6341 = vmatprep.subr.mxu0 0.0
        %6342 = vmatpush1.xpose.msra.mxu0 0.0
        %6343 = vmatprep.subr.mxu0 0.0
        %6344 = vmatpush1.xpose.msra.mxu0 0.0
        %6345 = vmatprep.subr.mxu0 0.0
        %6346 = vmatpush1.xpose.msra.mxu0 0.0
        %6347 = vmatprep.subr.mxu0 0.0
        %6348 = vmatpush1.xpose.msra.mxu0 0.0
        %6349 = vmatprep.subr.mxu0 0.0
        %6350 = vmatpush1.xpose.msra.mxu0 0.0
        %6351 = vmatprep.subr.mxu0 0.0
        %6352 = vmatpush1.xpose.msra.mxu0 0.0
        %6353 = vmatprep.subr.mxu0 0.0
        %6354 = vmatpush1.xpose.msra.mxu0 0.0
        %6355 = vmatprep.subr.mxu0 0.0
        %6356 = vmatpush1.xpose.msra.mxu0 0.0
        %6357 = vmatprep.subr.mxu0 0.0
        %6358 = vmatpush1.xpose.msra.mxu0 0.0
        %6359 = vmatprep.subr.mxu0 0.0
        %6360 = vmatpush1.xpose.msra.mxu0 0.0
        %6361 = vmatprep.subr.mxu0 0.0
        %6362 = vmatpush1.xpose.msra.mxu0 0.0
        %6363 = vmatprep.subr.mxu0 0.0
        %6364 = vmatpush1.xpose.msra.mxu0 0.0
        %6365 = vmatprep.subr.mxu0 0.0
        %6366 = vmatpush1.xpose.msra.mxu0 0.0
        %6367 = vmatprep.subr.mxu0 0.0
        %6368 = vmatpush1.xpose.msra.mxu0 0.0
        %6369 = vmatprep.subr.mxu0 0.0
        %6370 = vmatpush1.xpose.msra.mxu0 0.0
        %6371 = vmatprep.subr.mxu0 0.0
        %6372 = vmatpush1.xpose.msra.mxu0 0.0
        %6373 = vmatprep.subr.mxu0 0.0
        %6374 = vmatpush1.xpose.msra.mxu0 0.0
        %6375 = vmatprep.subr.mxu0 0.0
        %6376 = vmatpush1.xpose.msra.mxu0 0.0
        %6377 = vmatprep.subr.mxu0 0.0
        %6378 = vmatpush1.xpose.msra.mxu0 0.0
        %6379 = vmatprep.subr.mxu0 0.0
        %6380 = vmatpush1.xpose.msra.mxu0 0.0
        %6381 = vmatprep.subr.mxu0 0.0
        %6382 = vmatpush1.xpose.msra.mxu0 0.0
        %6383 = vmatprep.subr.mxu0 0.0
        %6384 = vmatpush1.xpose.msra.mxu0 0.0
        %6385 = vmatprep.subr.mxu0 0.0
        %6386 = vmatpush1.xpose.msra.mxu0 0.0
        %6387 = vmatprep.subr.mxu0 0.0
        %6388 = vmatpush1.xpose.msra.mxu0 0.0
        %6389 = vmatprep.subr.mxu0 0.0
        %6390 = vmatpush1.xpose.msra.mxu0 0.0
        %6391 = vmatprep.subr.mxu0 0.0
        %6392 = vmatpush1.xpose.msra.mxu0 0.0
        %6393 = vmatprep.subr.mxu0 0.0
        %6394 = vmatpush1.xpose.msra.mxu0 0.0
        %6395 = vmatprep.subr.mxu0 0.0
        %6396 = vmatpush1.xpose.msra.mxu0 0.0
        %6397 = vmatprep.subr.mxu0 0.0
        %6398 = vmatpush1.xpose.msra.mxu0 0.0
        %6399 = vmatprep.subr.mxu0 0.0
        %6400 = vmatpush1.xpose.msra.mxu0 0.0
        %6401 = vmatprep.subr.mxu0 0.0
        %6402 = vmatpush1.xpose.msra.mxu0 0.0
        %6403 = vmatprep.mubr.f32.mxu0 0.0
        %6404 = vmatmul.mubr.f32.gmra.mrb[0].mxu0 %v5907
        %v6405 = vpop.f32.mrb[0].mxu0
        %v6406 = vadd.f32 0.0, %v6405
        %v6407 = vpop.f32.mrb[0].mxu0
        %6408 = vmatprep.mubr.f32.mxu0 0.0
        %6409 = vmatmul.mubr.f32.gmra.mrb[0].mxu0 %v5910
        %v6410 = vpop.f32.mrb[0].mxu0
        %v6411 = vadd.f32 0.0, %v6410
        %v6412 = vpop.f32.mrb[0].mxu0
        %6413 = vmatprep.mubr.f32.mxu0 0.0
        %6414 = vmatmul.mubr.f32.gmra.mrb[0].mxu0 %v5913
        %v6415 = vpop.f32.mrb[0].mxu0
        %v6416 = vadd.f32 0.0, %v6415
        %v6417 = vpop.f32.mrb[0].mxu0
        %6418 = vmatprep.mubr.f32.mxu0 0.0
        %6419 = vmatmul.mubr.f32.gmra.mrb[0].mxu0 %v5916
        %v6420 = vpop.f32.mrb[0].mxu0
        %v6421 = vadd.f32 0.0, %v6420
        %v6422 = vpop.f32.mrb[0].mxu0
        %6423 = vmatprep.mubr.f32.mxu0 0.0
        %6424 = vmatmul.mubr.f32.gmra.mrb[0].mxu0 %v5919
        %v6425 = vpop.f32.mrb[0].mxu0
        %v6426 = vadd.f32 0.0, %v6425
        %v6427 = vpop.f32.mrb[0].mxu0
        %6428 = vmatprep.mubr.f32.mxu0 0.0
        %6429 = vmatmul.mubr.f32.gmra.mrb[0].mxu0 %v5922
        %v6430 = vpop.f32.mrb[0].mxu0
        %v6431 = vadd.f32 0.0, %v6430
        %v6432 = vpop.f32.mrb[0].mxu0
        %6433 = vmatprep.mubr.f32.mxu0 0.0
        %6434 = vmatmul.mubr.f32.gmra.mrb[0].mxu0 %v5925
        %v6435 = vpop.f32.mrb[0].mxu0
        %v6436 = vadd.f32 0.0, %v6435
        %v6437 = vpop.f32.mrb[0].mxu0
        %6438 = vmatprep.mubr.f32.mxu0 0.0
        %6439 = vmatmul.mubr.f32.gmra.mrb[0].mxu0 %v5928
        %v6440 = vpop.f32.mrb[0].mxu0
        %v6441 = vadd.f32 0.0, %v6440
        %v6442 = vpop.f32.mrb[0].mxu0
        %6443 = vmatprep.mubr.f32.mxu0 0.0
        %6444 = vmatmul.mubr.f32.gmra.mrb[0].mxu0 %v5931
        %v6445 = vpop.f32.mrb[0].mxu0
        %v6446 = vadd.f32 0.0, %v6445
        %v6447 = vpop.f32.mrb[0].mxu0
        %6448 = vmatprep.mubr.f32.mxu0 0.0
        %6449 = vmatmul.mubr.f32.gmra.mrb[0].mxu0 %v5934
        %v6450 = vpop.f32.mrb[0].mxu0
        %v6451 = vadd.f32 0.0, %v6450
        %v6452 = vpop.f32.mrb[0].mxu0
        %6453 = vmatprep.mubr.f32.mxu0 0.0
        %6454 = vmatmul.mubr.f32.gmra.mrb[0].mxu0 %v5937
        %v6455 = vpop.f32.mrb[0].mxu0
        %v6456 = vadd.f32 0.0, %v6455
        %v6457 = vpop.f32.mrb[0].mxu0
        %6458 = vmatprep.mubr.f32.mxu0 0.0
        %6459 = vmatmul.mubr.f32.gmra.mrb[0].mxu0 %v5940
        %v6460 = vpop.f32.mrb[0].mxu0
        %v6461 = vadd.f32 0.0, %v6460
        %v6462 = vpop.f32.mrb[0].mxu0
        %6463 = vmatprep.mubr.f32.mxu0 0.0
        %6464 = vmatmul.mubr.f32.gmra.mrb[0].mxu0 %v5943
        %v6465 = vpop.f32.mrb[0].mxu0
        %v6466 = vadd.f32 0.0, %v6465
        %v6467 = vpop.f32.mrb[0].mxu0
        %6468 = vmatprep.mubr.f32.mxu0 0.0
        %6469 = vmatmul.mubr.f32.gmra.mrb[0].mxu0 %v5946
        %v6470 = vpop.f32.mrb[0].mxu0
        %v6471 = vadd.f32 0.0, %v6470
        %v6472 = vpop.f32.mrb[0].mxu0
        %6473 = vmatprep.mubr.f32.mxu0 0.0
        %6474 = vmatmul.mubr.f32.gmra.mrb[0].mxu0 %v5949
        %v6475 = vpop.f32.mrb[0].mxu0
        %v6476 = vadd.f32 0.0, %v6475
        %v6477 = vpop.f32.mrb[0].mxu0
        %6478 = vmatprep.mubr.f32.mxu0 0.0
        %6479 = vmatmul.mubr.f32.gmra.mrb[0].mxu0 %v5952
        %v6480 = vpop.f32.mrb[0].mxu0
        %v6481 = vadd.f32 0.0, %v6480
        %v6482 = vpop.f32.mrb[0].mxu0
        %6483 = vmatprep.mubr.f32.mxu0 0.0
        %6484 = vmatmul.mubr.f32.gmra.mrb[0].mxu0 %v5955
        %v6485 = vpop.f32.mrb[0].mxu0
        %v6486 = vadd.f32 0.0, %v6485
        %v6487 = vpop.f32.mrb[0].mxu0
        %6488 = vmatprep.mubr.f32.mxu0 0.0
        %6489 = vmatmul.mubr.f32.gmra.mrb[0].mxu0 %v5958
        %v6490 = vpop.f32.mrb[0].mxu0
        %v6491 = vadd.f32 0.0, %v6490
        %v6492 = vpop.f32.mrb[0].mxu0
        %6493 = vmatprep.mubr.f32.mxu0 0.0
        %6494 = vmatmul.mubr.f32.gmra.mrb[0].mxu0 %v5961
        %v6495 = vpop.f32.mrb[0].mxu0
        %v6496 = vadd.f32 0.0, %v6495
        %v6497 = vpop.f32.mrb[0].mxu0
        %6498 = vmatprep.mubr.f32.mxu0 0.0
        %6499 = vmatmul.mubr.f32.gmra.mrb[0].mxu0 %v5964
        %v6500 = vpop.f32.mrb[0].mxu0
        %v6501 = vadd.f32 0.0, %v6500
        %v6502 = vpop.f32.mrb[0].mxu0
        %6503 = vmatprep.mubr.f32.mxu0 0.0
        %6504 = vmatmul.mubr.f32.gmra.mrb[0].mxu0 %v5967
        %v6505 = vpop.f32.mrb[0].mxu0
        %v6506 = vadd.f32 0.0, %v6505
        %v6507 = vpop.f32.mrb[0].mxu0
        %6508 = vmatprep.mubr.f32.mxu0 0.0
        %6509 = vmatmul.mubr.f32.gmra.mrb[0].mxu0 %v5970
        %v6510 = vpop.f32.mrb[0].mxu0
        %v6511 = vadd.f32 0.0, %v6510
        %v6512 = vpop.f32.mrb[0].mxu0
        %6513 = vmatprep.mubr.f32.mxu0 0.0
        %6514 = vmatmul.mubr.f32.gmra.mrb[0].mxu0 %v5973
        %v6515 = vpop.f32.mrb[0].mxu0
        %v6516 = vadd.f32 0.0, %v6515
        %v6517 = vpop.f32.mrb[0].mxu0
        %6518 = vmatprep.mubr.f32.mxu0 0.0
        %6519 = vmatmul.mubr.f32.gmra.mrb[0].mxu0 %v5976
        %v6520 = vpop.f32.mrb[0].mxu0
        %v6521 = vadd.f32 0.0, %v6520
        %v6522 = vpop.f32.mrb[0].mxu0
        %6523 = vmatprep.mubr.f32.mxu0 0.0
        %6524 = vmatmul.mubr.f32.gmra.mrb[0].mxu0 %v5979
        %v6525 = vpop.f32.mrb[0].mxu0
        %v6526 = vadd.f32 0.0, %v6525
        %v6527 = vpop.f32.mrb[0].mxu0
        %6528 = vmatprep.mubr.f32.mxu0 0.0
        %6529 = vmatmul.mubr.f32.gmra.mrb[0].mxu0 %v5982
        %v6530 = vpop.f32.mrb[0].mxu0
        %v6531 = vadd.f32 0.0, %v6530
        %v6532 = vpop.f32.mrb[0].mxu0
        %6533 = vmatprep.mubr.f32.mxu0 0.0
        %6534 = vmatmul.mubr.f32.gmra.mrb[0].mxu0 %v5985
        %v6535 = vpop.f32.mrb[0].mxu0
        %v6536 = vadd.f32 0.0, %v6535
        %v6537 = vpop.f32.mrb[0].mxu0
        %6538 = vmatprep.mubr.f32.mxu0 0.0
        %6539 = vmatmul.mubr.f32.gmra.mrb[0].mxu0 %v5988
        %v6540 = vpop.f32.mrb[0].mxu0
        %v6541 = vadd.f32 0.0, %v6540
        %v6542 = vpop.f32.mrb[0].mxu0
        %6543 = vmatprep.mubr.f32.mxu0 0.0
        %6544 = vmatmul.mubr.f32.gmra.mrb[0].mxu0 %v5991
        %v6545 = vpop.f32.mrb[0].mxu0
        %v6546 = vadd.f32 0.0, %v6545
        %v6547 = vpop.f32.mrb[0].mxu0
        %6548 = vmatprep.mubr.f32.mxu0 0.0
        %6549 = vmatmul.mubr.f32.gmra.mrb[0].mxu0 %v5994
        %v6550 = vpop.f32.mrb[0].mxu0
        %v6551 = vadd.f32 0.0, %v6550
        %v6552 = vpop.f32.mrb[0].mxu0
        %6553 = vmatprep.mubr.f32.mxu0 0.0
        %6554 = vmatmul.mubr.f32.gmra.mrb[0].mxu0 %v5997
        %v6555 = vpop.f32.mrb[0].mxu0
        %v6556 = vadd.f32 0.0, %v6555
        %v6557 = vpop.f32.mrb[0].mxu0
        %6558 = vmatprep.mubr.f32.mxu0 0.0
        %6559 = vmatmul.mubr.f32.gmra.mrb[0].mxu0 %v6000
        %v6560 = vpop.f32.mrb[0].mxu0
        %v6561 = vadd.f32 0.0, %v6560
        %v6562 = vpop.f32.mrb[0].mxu0
        %6563 = vmatprep.mubr.f32.mxu0 0.0
        %6564 = vmatmul.mubr.f32.gmra.mrb[0].mxu0 %v6003
        %v6565 = vpop.f32.mrb[0].mxu0
        %v6566 = vadd.f32 0.0, %v6565
        %v6567 = vpop.f32.mrb[0].mxu0
        %6568 = vmatprep.mubr.f32.mxu0 0.0
        %6569 = vmatmul.mubr.f32.gmra.mrb[0].mxu0 %v6006
        %v6570 = vpop.f32.mrb[0].mxu0
        %v6571 = vadd.f32 0.0, %v6570
        %v6572 = vpop.f32.mrb[0].mxu0
        %6573 = vmatprep.mubr.f32.mxu0 0.0
        %6574 = vmatmul.mubr.f32.gmra.mrb[0].mxu0 %v6009
        %v6575 = vpop.f32.mrb[0].mxu0
        %v6576 = vadd.f32 0.0, %v6575
        %v6577 = vpop.f32.mrb[0].mxu0
        %6578 = vmatprep.mubr.f32.mxu0 0.0
        %6579 = vmatmul.mubr.f32.gmra.mrb[0].mxu0 %v6322
        %v6580 = vpop.f32.mrb[0].mxu0
        %v6581 = vadd.f32 0.0, %v6580
        %v6582 = vpop.f32.mrb[0].mxu0
        %6583 = vmatprep.mubr.f32.mxu0 0.0
        %6584 = vmatmul.mubr.f32.gmra.mrb[0].mxu0 %v6325
        %v6585 = vpop.f32.mrb[0].mxu0
        %v6586 = vadd.f32 0.0, %v6585
        %v6587 = vpop.f32.mrb[0].mxu0
        %6588 = vmatprep.mubr.f32.mxu0 0.0
        %6589 = vmatmul.mubr.f32.gmra.mrb[0].mxu0 %v6328
        %v6590 = vpop.f32.mrb[0].mxu0
        %v6591 = vadd.f32 0.0, %v6590
        %v6592 = vpop.f32.mrb[0].mxu0
        %6593 = vmatprep.mubr.f32.mxu0 0.0
        %6594 = vmatmul.mubr.f32.gmra.mrb[0].mxu0 %v6331
        %v6595 = vpop.f32.mrb[0].mxu0
        %v6596 = vadd.f32 0.0, %v6595
        %v6597 = vpop.f32.mrb[0].mxu0
        %6598 = vmatprep.mubr.f32.mxu0 0.0
        %6599 = vmatmul.mubr.f32.gmra.mrb[0].mxu0 %v6334
        %v6600 = vpop.f32.mrb[0].mxu0
        %v6601 = vadd.f32 0.0, %v6600
        %v6602 = vpop.f32.mrb[0].mxu0
        %6603 = vdwg.mxu0
        %v6604 = vadd.f32 %v6279, %v6406
        %v6605 = vadd.f32 %v6280, %v6411
        %v6606 = vadd.f32 %v6281, %v6416
        %v6607 = vadd.f32 %v6282, %v6421
        %v6608 = vadd.f32 %v6283, %v6426
        %v6609 = vadd.f32 %v6284, %v6431
        %v6610 = vadd.f32 %v6285, %v6436
        %v6611 = vadd.f32 %v6286, %v6441
        %v6612 = vadd.f32 %v6287, %v6446
        %v6613 = vadd.f32 %v6288, %v6451
        %v6614 = vadd.f32 %v6289, %v6456
        %v6615 = vadd.f32 %v6290, %v6461
        %v6616 = vadd.f32 %v6291, %v6466
        %v6617 = vadd.f32 %v6292, %v6471
        %v6618 = vadd.f32 %v6293, %v6476
        %v6619 = vadd.f32 %v6294, %v6481
        %v6620 = vadd.f32 %v6295, %v6486
        %v6621 = vadd.f32 %v6296, %v6491
        %v6622 = vadd.f32 %v6297, %v6496
        %v6623 = vadd.f32 %v6298, %v6501
        %v6624 = vadd.f32 %v6299, %v6506
        %v6625 = vadd.f32 %v6300, %v6511
        %v6626 = vadd.f32 %v6301, %v6516
        %v6627 = vadd.f32 %v6302, %v6521
        %v6628 = vadd.f32 %v6303, %v6526
        %v6629 = vadd.f32 %v6304, %v6531
        %v6630 = vadd.f32 %v6305, %v6536
        %v6631 = vadd.f32 %v6306, %v6541
        %v6632 = vadd.f32 %v6307, %v6546
        %v6633 = vadd.f32 %v6308, %v6551
        %v6634 = vadd.f32 %v6309, %v6556
        %v6635 = vadd.f32 %v6310, %v6561
        %v6636 = vadd.f32 %v6311, %v6566
        %v6637 = vadd.f32 %v6312, %v6571
        %v6638 = vadd.f32 %v6313, %v6576
        %v6639 = vadd.f32 %v6314, %v6581
        %v6640 = vadd.f32 %v6315, %v6586
        %v6641 = vadd.f32 %v6316, %v6591
        %v6642 = vadd.f32 %v6317, %v6596
        %v6643 = vadd.f32 %v6318, %v6601
        %s6644 = scalar_lea.vmem %s5, 28
        %v6645 = vld [vmem:[%s6644] sm:$0xf]
        %v6647 = vsel %vm543, %v5884, 0
        %v6650 = vsel %vm543, %v5885, 0
        %v6653 = vsel %vm543, %v5886, 0
        %v6656 = vsel %vm543, %v5887, 0
        %v6659 = vsel %vm543, %v5888, 0
        %v6662 = vsel %vm543, %v6645, 0
        %6664 = vmatprep.subr.mxu0 0.0
        %6665 = vmatpush1.xpose.msra.mxu0 %v6662
        %6666 = vmatprep.subr.mxu0 0.0
        %6667 = vmatpush1.xpose.msra.mxu0 0.0
        %6668 = vmatprep.subr.mxu0 0.0
        %6669 = vmatpush1.xpose.msra.mxu0 0.0
        %6670 = vmatprep.subr.mxu0 0.0
        %6671 = vmatpush1.xpose.msra.mxu0 0.0
        %6672 = vmatprep.subr.mxu0 0.0
        %6673 = vmatpush1.xpose.msra.mxu0 0.0
        %6674 = vmatprep.subr.mxu0 0.0
        %6675 = vmatpush1.xpose.msra.mxu0 0.0
        %6676 = vmatprep.subr.mxu0 0.0
        %6677 = vmatpush1.xpose.msra.mxu0 0.0
        %6678 = vmatprep.subr.mxu0 0.0
        %6679 = vmatpush1.xpose.msra.mxu0 0.0
        %6680 = vmatprep.subr.mxu0 0.0
        %6681 = vmatpush1.xpose.msra.mxu0 0.0
        %6682 = vmatprep.subr.mxu0 0.0
        %6683 = vmatpush1.xpose.msra.mxu0 0.0
        %6684 = vmatprep.subr.mxu0 0.0
        %6685 = vmatpush1.xpose.msra.mxu0 0.0
        %6686 = vmatprep.subr.mxu0 0.0
        %6687 = vmatpush1.xpose.msra.mxu0 0.0
        %6688 = vmatprep.subr.mxu0 0.0
        %6689 = vmatpush1.xpose.msra.mxu0 0.0
        %6690 = vmatprep.subr.mxu0 0.0
        %6691 = vmatpush1.xpose.msra.mxu0 0.0
        %6692 = vmatprep.subr.mxu0 0.0
        %6693 = vmatpush1.xpose.msra.mxu0 0.0
        %6694 = vmatprep.subr.mxu0 0.0
        %6695 = vmatpush1.xpose.msra.mxu0 0.0
        %6696 = vmatprep.subr.mxu0 0.0
        %6697 = vmatpush1.xpose.msra.mxu0 0.0
        %6698 = vmatprep.subr.mxu0 0.0
        %6699 = vmatpush1.xpose.msra.mxu0 0.0
        %6700 = vmatprep.subr.mxu0 0.0
        %6701 = vmatpush1.xpose.msra.mxu0 0.0
        %6702 = vmatprep.subr.mxu0 0.0
        %6703 = vmatpush1.xpose.msra.mxu0 0.0
        %6704 = vmatprep.subr.mxu0 0.0
        %6705 = vmatpush1.xpose.msra.mxu0 0.0
        %6706 = vmatprep.subr.mxu0 0.0
        %6707 = vmatpush1.xpose.msra.mxu0 0.0
        %6708 = vmatprep.subr.mxu0 0.0
        %6709 = vmatpush1.xpose.msra.mxu0 0.0
        %6710 = vmatprep.subr.mxu0 0.0
        %6711 = vmatpush1.xpose.msra.mxu0 0.0
        %6712 = vmatprep.subr.mxu0 0.0
        %6713 = vmatpush1.xpose.msra.mxu0 0.0
        %6714 = vmatprep.subr.mxu0 0.0
        %6715 = vmatpush1.xpose.msra.mxu0 0.0
        %6716 = vmatprep.subr.mxu0 0.0
        %6717 = vmatpush1.xpose.msra.mxu0 0.0
        %6718 = vmatprep.subr.mxu0 0.0
        %6719 = vmatpush1.xpose.msra.mxu0 0.0
        %6720 = vmatprep.subr.mxu0 0.0
        %6721 = vmatpush1.xpose.msra.mxu0 0.0
        %6722 = vmatprep.subr.mxu0 0.0
        %6723 = vmatpush1.xpose.msra.mxu0 0.0
        %6724 = vmatprep.subr.mxu0 0.0
        %6725 = vmatpush1.xpose.msra.mxu0 0.0
        %6726 = vmatprep.subr.mxu0 0.0
        %6727 = vmatpush1.xpose.msra.mxu0 0.0
        %6728 = vmatprep.mubr.f32.mxu0 0.0
        %6729 = vmatmul.mubr.f32.gmra.mrb[0].mxu0 %v5922
        %v6730 = vpop.f32.mrb[0].mxu0
        %v6731 = vadd.f32 0.0, %v6730
        %v6732 = vpop.f32.mrb[0].mxu0
        %6733 = vmatprep.mubr.f32.mxu0 0.0
        %6734 = vmatmul.mubr.f32.gmra.mrb[0].mxu0 %v5925
        %v6735 = vpop.f32.mrb[0].mxu0
        %v6736 = vadd.f32 0.0, %v6735
        %v6737 = vpop.f32.mrb[0].mxu0
        %6738 = vmatprep.mubr.f32.mxu0 0.0
        %6739 = vmatmul.mubr.f32.gmra.mrb[0].mxu0 %v5928
        %v6740 = vpop.f32.mrb[0].mxu0
        %v6741 = vadd.f32 0.0, %v6740
        %v6742 = vpop.f32.mrb[0].mxu0
        %6743 = vmatprep.mubr.f32.mxu0 0.0
        %6744 = vmatmul.mubr.f32.gmra.mrb[0].mxu0 %v5931
        %v6745 = vpop.f32.mrb[0].mxu0
        %v6746 = vadd.f32 0.0, %v6745
        %v6747 = vpop.f32.mrb[0].mxu0
        %6748 = vmatprep.mubr.f32.mxu0 0.0
        %6749 = vmatmul.mubr.f32.gmra.mrb[0].mxu0 %v5934
        %v6750 = vpop.f32.mrb[0].mxu0
        %v6751 = vadd.f32 0.0, %v6750
        %v6752 = vpop.f32.mrb[0].mxu0
        %6753 = vmatprep.mubr.f32.mxu0 0.0
        %6754 = vmatmul.mubr.f32.gmra.mrb[0].mxu0 %v5937
        %v6755 = vpop.f32.mrb[0].mxu0
        %v6756 = vadd.f32 0.0, %v6755
        %v6757 = vpop.f32.mrb[0].mxu0
        %6758 = vmatprep.mubr.f32.mxu0 0.0
        %6759 = vmatmul.mubr.f32.gmra.mrb[0].mxu0 %v5940
        %v6760 = vpop.f32.mrb[0].mxu0
        %v6761 = vadd.f32 0.0, %v6760
        %v6762 = vpop.f32.mrb[0].mxu0
        %6763 = vmatprep.mubr.f32.mxu0 0.0
        %6764 = vmatmul.mubr.f32.gmra.mrb[0].mxu0 %v5943
        %v6765 = vpop.f32.mrb[0].mxu0
        %v6766 = vadd.f32 0.0, %v6765
        %v6767 = vpop.f32.mrb[0].mxu0
        %6768 = vmatprep.mubr.f32.mxu0 0.0
        %6769 = vmatmul.mubr.f32.gmra.mrb[0].mxu0 %v5946
        %v6770 = vpop.f32.mrb[0].mxu0
        %v6771 = vadd.f32 0.0, %v6770
        %v6772 = vpop.f32.mrb[0].mxu0
        %6773 = vmatprep.mubr.f32.mxu0 0.0
        %6774 = vmatmul.mubr.f32.gmra.mrb[0].mxu0 %v5949
        %v6775 = vpop.f32.mrb[0].mxu0
        %v6776 = vadd.f32 0.0, %v6775
        %v6777 = vpop.f32.mrb[0].mxu0
        %6778 = vmatprep.mubr.f32.mxu0 0.0
        %6779 = vmatmul.mubr.f32.gmra.mrb[0].mxu0 %v5952
        %v6780 = vpop.f32.mrb[0].mxu0
        %v6781 = vadd.f32 0.0, %v6780
        %v6782 = vpop.f32.mrb[0].mxu0
        %6783 = vmatprep.mubr.f32.mxu0 0.0
        %6784 = vmatmul.mubr.f32.gmra.mrb[0].mxu0 %v5955
        %v6785 = vpop.f32.mrb[0].mxu0
        %v6786 = vadd.f32 0.0, %v6785
        %v6787 = vpop.f32.mrb[0].mxu0
        %6788 = vmatprep.mubr.f32.mxu0 0.0
        %6789 = vmatmul.mubr.f32.gmra.mrb[0].mxu0 %v5958
        %v6790 = vpop.f32.mrb[0].mxu0
        %v6791 = vadd.f32 0.0, %v6790
        %v6792 = vpop.f32.mrb[0].mxu0
        %6793 = vmatprep.mubr.f32.mxu0 0.0
        %6794 = vmatmul.mubr.f32.gmra.mrb[0].mxu0 %v5961
        %v6795 = vpop.f32.mrb[0].mxu0
        %v6796 = vadd.f32 0.0, %v6795
        %v6797 = vpop.f32.mrb[0].mxu0
        %6798 = vmatprep.mubr.f32.mxu0 0.0
        %6799 = vmatmul.mubr.f32.gmra.mrb[0].mxu0 %v5964
        %v6800 = vpop.f32.mrb[0].mxu0
        %v6801 = vadd.f32 0.0, %v6800
        %v6802 = vpop.f32.mrb[0].mxu0
        %6803 = vmatprep.mubr.f32.mxu0 0.0
        %6804 = vmatmul.mubr.f32.gmra.mrb[0].mxu0 %v5967
        %v6805 = vpop.f32.mrb[0].mxu0
        %v6806 = vadd.f32 0.0, %v6805
        %v6807 = vpop.f32.mrb[0].mxu0
        %6808 = vmatprep.mubr.f32.mxu0 0.0
        %6809 = vmatmul.mubr.f32.gmra.mrb[0].mxu0 %v5970
        %v6810 = vpop.f32.mrb[0].mxu0
        %v6811 = vadd.f32 0.0, %v6810
        %v6812 = vpop.f32.mrb[0].mxu0
        %6813 = vmatprep.mubr.f32.mxu0 0.0
        %6814 = vmatmul.mubr.f32.gmra.mrb[0].mxu0 %v5973
        %v6815 = vpop.f32.mrb[0].mxu0
        %v6816 = vadd.f32 0.0, %v6815
        %v6817 = vpop.f32.mrb[0].mxu0
        %6818 = vmatprep.mubr.f32.mxu0 0.0
        %6819 = vmatmul.mubr.f32.gmra.mrb[0].mxu0 %v5976
        %v6820 = vpop.f32.mrb[0].mxu0
        %v6821 = vadd.f32 0.0, %v6820
        %v6822 = vpop.f32.mrb[0].mxu0
        %6823 = vmatprep.mubr.f32.mxu0 0.0
        %6824 = vmatmul.mubr.f32.gmra.mrb[0].mxu0 %v5979
        %v6825 = vpop.f32.mrb[0].mxu0
        %v6826 = vadd.f32 0.0, %v6825
        %v6827 = vpop.f32.mrb[0].mxu0
        %6828 = vmatprep.mubr.f32.mxu0 0.0
        %6829 = vmatmul.mubr.f32.gmra.mrb[0].mxu0 %v5982
        %v6830 = vpop.f32.mrb[0].mxu0
        %v6831 = vadd.f32 0.0, %v6830
        %v6832 = vpop.f32.mrb[0].mxu0
        %6833 = vmatprep.mubr.f32.mxu0 0.0
        %6834 = vmatmul.mubr.f32.gmra.mrb[0].mxu0 %v5985
        %v6835 = vpop.f32.mrb[0].mxu0
        %v6836 = vadd.f32 0.0, %v6835
        %v6837 = vpop.f32.mrb[0].mxu0
        %6838 = vmatprep.mubr.f32.mxu0 0.0
        %6839 = vmatmul.mubr.f32.gmra.mrb[0].mxu0 %v5988
        %v6840 = vpop.f32.mrb[0].mxu0
        %v6841 = vadd.f32 0.0, %v6840
        %v6842 = vpop.f32.mrb[0].mxu0
        %6843 = vmatprep.mubr.f32.mxu0 0.0
        %6844 = vmatmul.mubr.f32.gmra.mrb[0].mxu0 %v5991
        %v6845 = vpop.f32.mrb[0].mxu0
        %v6846 = vadd.f32 0.0, %v6845
        %v6847 = vpop.f32.mrb[0].mxu0
        %6848 = vmatprep.mubr.f32.mxu0 0.0
        %6849 = vmatmul.mubr.f32.gmra.mrb[0].mxu0 %v5994
        %v6850 = vpop.f32.mrb[0].mxu0
        %v6851 = vadd.f32 0.0, %v6850
        %v6852 = vpop.f32.mrb[0].mxu0
        %6853 = vmatprep.mubr.f32.mxu0 0.0
        %6854 = vmatmul.mubr.f32.gmra.mrb[0].mxu0 %v5997
        %v6855 = vpop.f32.mrb[0].mxu0
        %v6856 = vadd.f32 0.0, %v6855
        %v6857 = vpop.f32.mrb[0].mxu0
        %6858 = vmatprep.mubr.f32.mxu0 0.0
        %6859 = vmatmul.mubr.f32.gmra.mrb[0].mxu0 %v6000
        %v6860 = vpop.f32.mrb[0].mxu0
        %v6861 = vadd.f32 0.0, %v6860
        %v6862 = vpop.f32.mrb[0].mxu0
        %6863 = vmatprep.mubr.f32.mxu0 0.0
        %6864 = vmatmul.mubr.f32.gmra.mrb[0].mxu0 %v6003
        %v6865 = vpop.f32.mrb[0].mxu0
        %v6866 = vadd.f32 0.0, %v6865
        %v6867 = vpop.f32.mrb[0].mxu0
        %6868 = vmatprep.mubr.f32.mxu0 0.0
        %6869 = vmatmul.mubr.f32.gmra.mrb[0].mxu0 %v6006
        %v6870 = vpop.f32.mrb[0].mxu0
        %v6871 = vadd.f32 0.0, %v6870
        %v6872 = vpop.f32.mrb[0].mxu0
        %6873 = vmatprep.mubr.f32.mxu0 0.0
        %6874 = vmatmul.mubr.f32.gmra.mrb[0].mxu0 %v6009
        %v6875 = vpop.f32.mrb[0].mxu0
        %v6876 = vadd.f32 0.0, %v6875
        %v6877 = vpop.f32.mrb[0].mxu0
        %6878 = vmatprep.mubr.f32.mxu0 0.0
        %6879 = vmatmul.mubr.f32.gmra.mrb[0].mxu0 %v6322
        %v6880 = vpop.f32.mrb[0].mxu0
        %v6881 = vadd.f32 0.0, %v6880
        %v6882 = vpop.f32.mrb[0].mxu0
        %6883 = vmatprep.mubr.f32.mxu0 0.0
        %6884 = vmatmul.mubr.f32.gmra.mrb[0].mxu0 %v6325
        %v6885 = vpop.f32.mrb[0].mxu0
        %v6886 = vadd.f32 0.0, %v6885
        %v6887 = vpop.f32.mrb[0].mxu0
        %6888 = vmatprep.mubr.f32.mxu0 0.0
        %6889 = vmatmul.mubr.f32.gmra.mrb[0].mxu0 %v6328
        %v6890 = vpop.f32.mrb[0].mxu0
        %v6891 = vadd.f32 0.0, %v6890
        %v6892 = vpop.f32.mrb[0].mxu0
        %6893 = vmatprep.mubr.f32.mxu0 0.0
        %6894 = vmatmul.mubr.f32.gmra.mrb[0].mxu0 %v6331
        %v6895 = vpop.f32.mrb[0].mxu0
        %v6896 = vadd.f32 0.0, %v6895
        %v6897 = vpop.f32.mrb[0].mxu0
        %6898 = vmatprep.mubr.f32.mxu0 0.0
        %6899 = vmatmul.mubr.f32.gmra.mrb[0].mxu0 %v6334
        %v6900 = vpop.f32.mrb[0].mxu0
        %v6901 = vadd.f32 0.0, %v6900
        %v6902 = vpop.f32.mrb[0].mxu0
        %6903 = vmatprep.mubr.f32.mxu0 0.0
        %6904 = vmatmul.mubr.f32.gmra.mrb[0].mxu0 %v6647
        %v6905 = vpop.f32.mrb[0].mxu0
        %v6906 = vadd.f32 0.0, %v6905
        %v6907 = vpop.f32.mrb[0].mxu0
        %6908 = vmatprep.mubr.f32.mxu0 0.0
        %6909 = vmatmul.mubr.f32.gmra.mrb[0].mxu0 %v6650
        %v6910 = vpop.f32.mrb[0].mxu0
        %v6911 = vadd.f32 0.0, %v6910
        %v6912 = vpop.f32.mrb[0].mxu0
        %6913 = vmatprep.mubr.f32.mxu0 0.0
        %6914 = vmatmul.mubr.f32.gmra.mrb[0].mxu0 %v6653
        %v6915 = vpop.f32.mrb[0].mxu0
        %v6916 = vadd.f32 0.0, %v6915
        %v6917 = vpop.f32.mrb[0].mxu0
        %6918 = vmatprep.mubr.f32.mxu0 0.0
        %6919 = vmatmul.mubr.f32.gmra.mrb[0].mxu0 %v6656
        %v6920 = vpop.f32.mrb[0].mxu0
        %v6921 = vadd.f32 0.0, %v6920
        %v6922 = vpop.f32.mrb[0].mxu0
        %6923 = vmatprep.mubr.f32.mxu0 0.0
        %6924 = vmatmul.mubr.f32.gmra.mrb[0].mxu0 %v6659
        %v6925 = vpop.f32.mrb[0].mxu0
        %v6926 = vadd.f32 0.0, %v6925
        %v6927 = vpop.f32.mrb[0].mxu0
        %6928 = vdwg.mxu0
        %v6929 = vadd.f32 %v6604, %v6731
        %v6930 = vadd.f32 %v6605, %v6736
        %v6931 = vadd.f32 %v6606, %v6741
        %v6932 = vadd.f32 %v6607, %v6746
        %v6933 = vadd.f32 %v6608, %v6751
        %v6934 = vadd.f32 %v6609, %v6756
        %v6935 = vadd.f32 %v6610, %v6761
        %v6936 = vadd.f32 %v6611, %v6766
        %v6937 = vadd.f32 %v6612, %v6771
        %v6938 = vadd.f32 %v6613, %v6776
        %v6939 = vadd.f32 %v6614, %v6781
        %v6940 = vadd.f32 %v6615, %v6786
        %v6941 = vadd.f32 %v6616, %v6791
        %v6942 = vadd.f32 %v6617, %v6796
        %v6943 = vadd.f32 %v6618, %v6801
        %v6944 = vadd.f32 %v6619, %v6806
        %v6945 = vadd.f32 %v6620, %v6811
        %v6946 = vadd.f32 %v6621, %v6816
        %v6947 = vadd.f32 %v6622, %v6821
        %v6948 = vadd.f32 %v6623, %v6826
        %v6949 = vadd.f32 %v6624, %v6831
        %v6950 = vadd.f32 %v6625, %v6836
        %v6951 = vadd.f32 %v6626, %v6841
        %v6952 = vadd.f32 %v6627, %v6846
        %v6953 = vadd.f32 %v6628, %v6851
        %v6954 = vadd.f32 %v6629, %v6856
        %v6955 = vadd.f32 %v6630, %v6861
        %v6956 = vadd.f32 %v6631, %v6866
        %v6957 = vadd.f32 %v6632, %v6871
        %v6958 = vadd.f32 %v6633, %v6876
        %v6959 = vadd.f32 %v6634, %v6881
        %v6960 = vadd.f32 %v6635, %v6886
        %v6961 = vadd.f32 %v6636, %v6891
        %v6962 = vadd.f32 %v6637, %v6896
        %v6963 = vadd.f32 %v6638, %v6901
        %v6964 = vadd.f32 %v6639, %v6906
        %v6965 = vadd.f32 %v6640, %v6911
        %v6966 = vadd.f32 %v6641, %v6916
        %v6967 = vadd.f32 %v6642, %v6921
        %v6968 = vadd.f32 %v6643, %v6926
        %v6969 = vld [vmem:[#allocation3 + $0x2] sm:$0xff]
        %v6970 = vld [vmem:[#allocation3 + $0xa] sm:$0xff]
        %v6971 = vld [vmem:[#allocation3 + $0x12] sm:$0xff]
        %v6972 = vld [vmem:[#allocation3 + $0x1a] sm:$0xff]
        %v6973 = vld [vmem:[#allocation3 + $0x22] sm:$0xff]
        %v6974 = vld [vmem:[#allocation3 + $0x32] sm:$0xff]
        %v6975 = vld [vmem:[#allocation3 + $0x3a] sm:$0xff]
        %v6976 = vld [vmem:[#allocation3 + $0x42] sm:$0xff]
        %v6977 = vld [vmem:[#allocation3 + $0x4a] sm:$0xff]
        %v6978 = vld [vmem:[#allocation3 + $0x52] sm:$0xff]
        %v6979 = vld [vmem:[#allocation3 + $0x62] sm:$0xff]
        %v6980 = vld [vmem:[#allocation3 + $0x6a] sm:$0xff]
        %v6981 = vld [vmem:[#allocation3 + $0x72] sm:$0xff]
        %v6982 = vld [vmem:[#allocation3 + $0x7a] sm:$0xff]
        %v6983 = vld [vmem:[#allocation3 + $0x82] sm:$0xff]
        %v6984 = vld [vmem:[#allocation3 + $0x92] sm:$0xff]
        %v6985 = vld [vmem:[#allocation3 + $0x9a] sm:$0xff]
        %v6986 = vld [vmem:[#allocation3 + $0xa2] sm:$0xff]
        %v6987 = vld [vmem:[#allocation3 + $0xaa] sm:$0xff]
        %v6988 = vld [vmem:[#allocation3 + $0xb2] sm:$0xff]
        %v6989 = vld [vmem:[#allocation3 + $0xc2] sm:$0xff]
        %v6990 = vld [vmem:[#allocation3 + $0xca] sm:$0xff]
        %v6991 = vld [vmem:[#allocation3 + $0xd2] sm:$0xff]
        %v6992 = vld [vmem:[#allocation3 + $0xda] sm:$0xff]
        %v6993 = vld [vmem:[#allocation3 + $0xe2] sm:$0xff]
        %v6994 = vld [vmem:[#allocation3 + $0xf2] sm:$0xff]
        %v6995 = vld [vmem:[#allocation3 + $0xfa] sm:$0xff]
        %v6996 = vld [vmem:[#allocation3 + $0x102] sm:$0xff]
        %v6997 = vld [vmem:[#allocation3 + $0x10a] sm:$0xff]
        %v6998 = vld [vmem:[#allocation3 + $0x112] sm:$0xff]
        %v6999 = vld [vmem:[#allocation3 + $0x122] sm:$0xff]
        %v7000 = vld [vmem:[#allocation3 + $0x12a] sm:$0xff]
        %v7001 = vld [vmem:[#allocation3 + $0x132] sm:$0xff]
        %v7002 = vld [vmem:[#allocation3 + $0x13a] sm:$0xff]
        %v7003 = vld [vmem:[#allocation3 + $0x142] sm:$0xff]
        %v7004 = vld [vmem:[#allocation3 + $0x152] sm:$0xff]
        %v7005 = vld [vmem:[#allocation3 + $0x15a] sm:$0xff]
        %v7006 = vld [vmem:[#allocation3 + $0x162] sm:$0xff]
        %v7007 = vld [vmem:[#allocation3 + $0x16a] sm:$0xff]
        %v7008 = vld [vmem:[#allocation3 + $0x172] sm:$0xff]
        %v7009 = vld [vmem:[#allocation3 + $0x182] sm:$0xff]
        %v7010 = vld [vmem:[#allocation3 + $0x18a] sm:$0xff]
        %v7011 = vld [vmem:[#allocation3 + $0x192] sm:$0xff]
        %v7012 = vld [vmem:[#allocation3 + $0x19a] sm:$0xff]
        %v7013 = vld [vmem:[#allocation3 + $0x1a2] sm:$0xff]
        %v7014 = vld [vmem:[#allocation3 + $0x1b2] sm:$0xff]
        %v7015 = vld [vmem:[#allocation3 + $0x1ba] sm:$0xff]
        %v7016 = vld [vmem:[#allocation3 + $0x1c2] sm:$0xff]
        %v7017 = vld [vmem:[#allocation3 + $0x1ca] sm:$0xff]
        %v7018 = vld [vmem:[#allocation3 + $0x1d2] sm:$0xff]
        %s7019 = scalar_lea.vmem %s5, 8
        %v7020 = vld [vmem:[%s7019] sm:$0xf]
        %v7022 = vsel %vm543, %v6969, 0
        %v7025 = vsel %vm543, %v6970, 0
        %v7028 = vsel %vm543, %v6971, 0
        %v7031 = vsel %vm543, %v6972, 0
        %v7034 = vsel %vm543, %v6973, 0
        %v7037 = vsel %vm543, %v6974, 0
        %v7040 = vsel %vm543, %v6975, 0
        %v7043 = vsel %vm543, %v6976, 0
        %v7046 = vsel %vm543, %v6977, 0
        %v7049 = vsel %vm543, %v6978, 0
        %v7052 = vsel %vm543, %v6979, 0
        %v7055 = vsel %vm543, %v6980, 0
        %v7058 = vsel %vm543, %v6981, 0
        %v7061 = vsel %vm543, %v6982, 0
        %v7064 = vsel %vm543, %v6983, 0
        %v7067 = vsel %vm543, %v6984, 0
        %v7070 = vsel %vm543, %v6985, 0
        %v7073 = vsel %vm543, %v6986, 0
        %v7076 = vsel %vm543, %v6987, 0
        %v7079 = vsel %vm543, %v6988, 0
        %v7082 = vsel %vm543, %v6989, 0
        %v7085 = vsel %vm543, %v6990, 0
        %v7088 = vsel %vm543, %v6991, 0
        %v7091 = vsel %vm543, %v6992, 0
        %v7094 = vsel %vm543, %v6993, 0
        %v7097 = vsel %vm543, %v6994, 0
        %v7100 = vsel %vm543, %v6995, 0
        %v7103 = vsel %vm543, %v6996, 0
        %v7106 = vsel %vm543, %v6997, 0
        %v7109 = vsel %vm543, %v6998, 0
        %v7112 = vsel %vm543, %v6999, 0
        %v7115 = vsel %vm543, %v7000, 0
        %v7118 = vsel %vm543, %v7001, 0
        %v7121 = vsel %vm543, %v7002, 0
        %v7124 = vsel %vm543, %v7003, 0
        %v7127 = vsel %vm543, %v7004, 0
        %v7130 = vsel %vm543, %v7005, 0
        %v7133 = vsel %vm543, %v7006, 0
        %v7136 = vsel %vm543, %v7007, 0
        %v7139 = vsel %vm543, %v7008, 0
        %v7142 = vsel %vm543, %v7020, 0
        %7144 = vmatprep.subr.mxu0 0.0
        %7145 = vmatpush1.xpose.msra.mxu0 %v7142
        %7146 = vmatprep.subr.mxu0 0.0
        %7147 = vmatpush1.xpose.msra.mxu0 0.0
        %7148 = vmatprep.subr.mxu0 0.0
        %7149 = vmatpush1.xpose.msra.mxu0 0.0
        %7150 = vmatprep.subr.mxu0 0.0
        %7151 = vmatpush1.xpose.msra.mxu0 0.0
        %7152 = vmatprep.subr.mxu0 0.0
        %7153 = vmatpush1.xpose.msra.mxu0 0.0
        %7154 = vmatprep.subr.mxu0 0.0
        %7155 = vmatpush1.xpose.msra.mxu0 0.0
        %7156 = vmatprep.subr.mxu0 0.0
        %7157 = vmatpush1.xpose.msra.mxu0 0.0
        %7158 = vmatprep.subr.mxu0 0.0
        %7159 = vmatpush1.xpose.msra.mxu0 0.0
        %7160 = vmatprep.subr.mxu0 0.0
        %7161 = vmatpush1.xpose.msra.mxu0 0.0
        %7162 = vmatprep.subr.mxu0 0.0
        %7163 = vmatpush1.xpose.msra.mxu0 0.0
        %7164 = vmatprep.subr.mxu0 0.0
        %7165 = vmatpush1.xpose.msra.mxu0 0.0
        %7166 = vmatprep.subr.mxu0 0.0
        %7167 = vmatpush1.xpose.msra.mxu0 0.0
        %7168 = vmatprep.subr.mxu0 0.0
        %7169 = vmatpush1.xpose.msra.mxu0 0.0
        %7170 = vmatprep.subr.mxu0 0.0
        %7171 = vmatpush1.xpose.msra.mxu0 0.0
        %7172 = vmatprep.subr.mxu0 0.0
        %7173 = vmatpush1.xpose.msra.mxu0 0.0
        %7174 = vmatprep.subr.mxu0 0.0
        %7175 = vmatpush1.xpose.msra.mxu0 0.0
        %7176 = vmatprep.subr.mxu0 0.0
        %7177 = vmatpush1.xpose.msra.mxu0 0.0
        %7178 = vmatprep.subr.mxu0 0.0
        %7179 = vmatpush1.xpose.msra.mxu0 0.0
        %7180 = vmatprep.subr.mxu0 0.0
        %7181 = vmatpush1.xpose.msra.mxu0 0.0
        %7182 = vmatprep.subr.mxu0 0.0
        %7183 = vmatpush1.xpose.msra.mxu0 0.0
        %7184 = vmatprep.subr.mxu0 0.0
        %7185 = vmatpush1.xpose.msra.mxu0 0.0
        %7186 = vmatprep.subr.mxu0 0.0
        %7187 = vmatpush1.xpose.msra.mxu0 0.0
        %7188 = vmatprep.subr.mxu0 0.0
        %7189 = vmatpush1.xpose.msra.mxu0 0.0
        %7190 = vmatprep.subr.mxu0 0.0
        %7191 = vmatpush1.xpose.msra.mxu0 0.0
        %7192 = vmatprep.subr.mxu0 0.0
        %7193 = vmatpush1.xpose.msra.mxu0 0.0
        %7194 = vmatprep.subr.mxu0 0.0
        %7195 = vmatpush1.xpose.msra.mxu0 0.0
        %7196 = vmatprep.subr.mxu0 0.0
        %7197 = vmatpush1.xpose.msra.mxu0 0.0
        %7198 = vmatprep.subr.mxu0 0.0
        %7199 = vmatpush1.xpose.msra.mxu0 0.0
        %7200 = vmatprep.subr.mxu0 0.0
        %7201 = vmatpush1.xpose.msra.mxu0 0.0
        %7202 = vmatprep.subr.mxu0 0.0
        %7203 = vmatpush1.xpose.msra.mxu0 0.0
        %7204 = vmatprep.subr.mxu0 0.0
        %7205 = vmatpush1.xpose.msra.mxu0 0.0
        %7206 = vmatprep.subr.mxu0 0.0
        %7207 = vmatpush1.xpose.msra.mxu0 0.0
        %7208 = vmatprep.mubr.f32.mxu0 0.0
        %7209 = vmatmul.mubr.f32.gmra.mrb[0].mxu0 %v7022
        %v7210 = vpop.f32.mrb[0].mxu0
        %v7211 = vadd.f32 0.0, %v7210
        %v7212 = vpop.f32.mrb[0].mxu0
        %7213 = vmatprep.mubr.f32.mxu0 0.0
        %7214 = vmatmul.mubr.f32.gmra.mrb[0].mxu0 %v7025
        %v7215 = vpop.f32.mrb[0].mxu0
        %v7216 = vadd.f32 0.0, %v7215
        %v7217 = vpop.f32.mrb[0].mxu0
        %7218 = vmatprep.mubr.f32.mxu0 0.0
        %7219 = vmatmul.mubr.f32.gmra.mrb[0].mxu0 %v7028
        %v7220 = vpop.f32.mrb[0].mxu0
        %v7221 = vadd.f32 0.0, %v7220
        %v7222 = vpop.f32.mrb[0].mxu0
        %7223 = vmatprep.mubr.f32.mxu0 0.0
        %7224 = vmatmul.mubr.f32.gmra.mrb[0].mxu0 %v7031
        %v7225 = vpop.f32.mrb[0].mxu0
        %v7226 = vadd.f32 0.0, %v7225
        %v7227 = vpop.f32.mrb[0].mxu0
        %7228 = vmatprep.mubr.f32.mxu0 0.0
        %7229 = vmatmul.mubr.f32.gmra.mrb[0].mxu0 %v7034
        %v7230 = vpop.f32.mrb[0].mxu0
        %v7231 = vadd.f32 0.0, %v7230
        %v7232 = vpop.f32.mrb[0].mxu0
        %7233 = vmatprep.mubr.f32.mxu0 0.0
        %7234 = vmatmul.mubr.f32.gmra.mrb[0].mxu0 %v7037
        %v7235 = vpop.f32.mrb[0].mxu0
        %v7236 = vadd.f32 0.0, %v7235
        %v7237 = vpop.f32.mrb[0].mxu0
        %7238 = vmatprep.mubr.f32.mxu0 0.0
        %7239 = vmatmul.mubr.f32.gmra.mrb[0].mxu0 %v7040
        %v7240 = vpop.f32.mrb[0].mxu0
        %v7241 = vadd.f32 0.0, %v7240
        %v7242 = vpop.f32.mrb[0].mxu0
        %7243 = vmatprep.mubr.f32.mxu0 0.0
        %7244 = vmatmul.mubr.f32.gmra.mrb[0].mxu0 %v7043
        %v7245 = vpop.f32.mrb[0].mxu0
        %v7246 = vadd.f32 0.0, %v7245
        %v7247 = vpop.f32.mrb[0].mxu0
        %7248 = vmatprep.mubr.f32.mxu0 0.0
        %7249 = vmatmul.mubr.f32.gmra.mrb[0].mxu0 %v7046
        %v7250 = vpop.f32.mrb[0].mxu0
        %v7251 = vadd.f32 0.0, %v7250
        %v7252 = vpop.f32.mrb[0].mxu0
        %7253 = vmatprep.mubr.f32.mxu0 0.0
        %7254 = vmatmul.mubr.f32.gmra.mrb[0].mxu0 %v7049
        %v7255 = vpop.f32.mrb[0].mxu0
        %v7256 = vadd.f32 0.0, %v7255
        %v7257 = vpop.f32.mrb[0].mxu0
        %7258 = vmatprep.mubr.f32.mxu0 0.0
        %7259 = vmatmul.mubr.f32.gmra.mrb[0].mxu0 %v7052
        %v7260 = vpop.f32.mrb[0].mxu0
        %v7261 = vadd.f32 0.0, %v7260
        %v7262 = vpop.f32.mrb[0].mxu0
        %7263 = vmatprep.mubr.f32.mxu0 0.0
        %7264 = vmatmul.mubr.f32.gmra.mrb[0].mxu0 %v7055
        %v7265 = vpop.f32.mrb[0].mxu0
        %v7266 = vadd.f32 0.0, %v7265
        %v7267 = vpop.f32.mrb[0].mxu0
        %7268 = vmatprep.mubr.f32.mxu0 0.0
        %7269 = vmatmul.mubr.f32.gmra.mrb[0].mxu0 %v7058
        %v7270 = vpop.f32.mrb[0].mxu0
        %v7271 = vadd.f32 0.0, %v7270
        %v7272 = vpop.f32.mrb[0].mxu0
        %7273 = vmatprep.mubr.f32.mxu0 0.0
        %7274 = vmatmul.mubr.f32.gmra.mrb[0].mxu0 %v7061
        %v7275 = vpop.f32.mrb[0].mxu0
        %v7276 = vadd.f32 0.0, %v7275
        %v7277 = vpop.f32.mrb[0].mxu0
        %7278 = vmatprep.mubr.f32.mxu0 0.0
        %7279 = vmatmul.mubr.f32.gmra.mrb[0].mxu0 %v7064
        %v7280 = vpop.f32.mrb[0].mxu0
        %v7281 = vadd.f32 0.0, %v7280
        %v7282 = vpop.f32.mrb[0].mxu0
        %7283 = vmatprep.mubr.f32.mxu0 0.0
        %7284 = vmatmul.mubr.f32.gmra.mrb[0].mxu0 %v7067
        %v7285 = vpop.f32.mrb[0].mxu0
        %v7286 = vadd.f32 0.0, %v7285
        %v7287 = vpop.f32.mrb[0].mxu0
        %7288 = vmatprep.mubr.f32.mxu0 0.0
        %7289 = vmatmul.mubr.f32.gmra.mrb[0].mxu0 %v7070
        %v7290 = vpop.f32.mrb[0].mxu0
        %v7291 = vadd.f32 0.0, %v7290
        %v7292 = vpop.f32.mrb[0].mxu0
        %7293 = vmatprep.mubr.f32.mxu0 0.0
        %7294 = vmatmul.mubr.f32.gmra.mrb[0].mxu0 %v7073
        %v7295 = vpop.f32.mrb[0].mxu0
        %v7296 = vadd.f32 0.0, %v7295
        %v7297 = vpop.f32.mrb[0].mxu0
        %7298 = vmatprep.mubr.f32.mxu0 0.0
        %7299 = vmatmul.mubr.f32.gmra.mrb[0].mxu0 %v7076
        %v7300 = vpop.f32.mrb[0].mxu0
        %v7301 = vadd.f32 0.0, %v7300
        %v7302 = vpop.f32.mrb[0].mxu0
        %7303 = vmatprep.mubr.f32.mxu0 0.0
        %7304 = vmatmul.mubr.f32.gmra.mrb[0].mxu0 %v7079
        %v7305 = vpop.f32.mrb[0].mxu0
        %v7306 = vadd.f32 0.0, %v7305
        %v7307 = vpop.f32.mrb[0].mxu0
        %7308 = vmatprep.mubr.f32.mxu0 0.0
        %7309 = vmatmul.mubr.f32.gmra.mrb[0].mxu0 %v7082
        %v7310 = vpop.f32.mrb[0].mxu0
        %v7311 = vadd.f32 0.0, %v7310
        %v7312 = vpop.f32.mrb[0].mxu0
        %7313 = vmatprep.mubr.f32.mxu0 0.0
        %7314 = vmatmul.mubr.f32.gmra.mrb[0].mxu0 %v7085
        %v7315 = vpop.f32.mrb[0].mxu0
        %v7316 = vadd.f32 0.0, %v7315
        %v7317 = vpop.f32.mrb[0].mxu0
        %7318 = vmatprep.mubr.f32.mxu0 0.0
        %7319 = vmatmul.mubr.f32.gmra.mrb[0].mxu0 %v7088
        %v7320 = vpop.f32.mrb[0].mxu0
        %v7321 = vadd.f32 0.0, %v7320
        %v7322 = vpop.f32.mrb[0].mxu0
        %7323 = vmatprep.mubr.f32.mxu0 0.0
        %7324 = vmatmul.mubr.f32.gmra.mrb[0].mxu0 %v7091
        %v7325 = vpop.f32.mrb[0].mxu0
        %v7326 = vadd.f32 0.0, %v7325
        %v7327 = vpop.f32.mrb[0].mxu0
        %7328 = vmatprep.mubr.f32.mxu0 0.0
        %7329 = vmatmul.mubr.f32.gmra.mrb[0].mxu0 %v7094
        %v7330 = vpop.f32.mrb[0].mxu0
        %v7331 = vadd.f32 0.0, %v7330
        %v7332 = vpop.f32.mrb[0].mxu0
        %7333 = vmatprep.mubr.f32.mxu0 0.0
        %7334 = vmatmul.mubr.f32.gmra.mrb[0].mxu0 %v7097
        %v7335 = vpop.f32.mrb[0].mxu0
        %v7336 = vadd.f32 0.0, %v7335
        %v7337 = vpop.f32.mrb[0].mxu0
        %7338 = vmatprep.mubr.f32.mxu0 0.0
        %7339 = vmatmul.mubr.f32.gmra.mrb[0].mxu0 %v7100
        %v7340 = vpop.f32.mrb[0].mxu0
        %v7341 = vadd.f32 0.0, %v7340
        %v7342 = vpop.f32.mrb[0].mxu0
        %7343 = vmatprep.mubr.f32.mxu0 0.0
        %7344 = vmatmul.mubr.f32.gmra.mrb[0].mxu0 %v7103
        %v7345 = vpop.f32.mrb[0].mxu0
        %v7346 = vadd.f32 0.0, %v7345
        %v7347 = vpop.f32.mrb[0].mxu0
        %7348 = vmatprep.mubr.f32.mxu0 0.0
        %7349 = vmatmul.mubr.f32.gmra.mrb[0].mxu0 %v7106
        %v7350 = vpop.f32.mrb[0].mxu0
        %v7351 = vadd.f32 0.0, %v7350
        %v7352 = vpop.f32.mrb[0].mxu0
        %7353 = vmatprep.mubr.f32.mxu0 0.0
        %7354 = vmatmul.mubr.f32.gmra.mrb[0].mxu0 %v7109
        %v7355 = vpop.f32.mrb[0].mxu0
        %v7356 = vadd.f32 0.0, %v7355
        %v7357 = vpop.f32.mrb[0].mxu0
        %7358 = vmatprep.mubr.f32.mxu0 0.0
        %7359 = vmatmul.mubr.f32.gmra.mrb[0].mxu0 %v7112
        %v7360 = vpop.f32.mrb[0].mxu0
        %v7361 = vadd.f32 0.0, %v7360
        %v7362 = vpop.f32.mrb[0].mxu0
        %7363 = vmatprep.mubr.f32.mxu0 0.0
        %7364 = vmatmul.mubr.f32.gmra.mrb[0].mxu0 %v7115
        %v7365 = vpop.f32.mrb[0].mxu0
        %v7366 = vadd.f32 0.0, %v7365
        %v7367 = vpop.f32.mrb[0].mxu0
        %7368 = vmatprep.mubr.f32.mxu0 0.0
        %7369 = vmatmul.mubr.f32.gmra.mrb[0].mxu0 %v7118
        %v7370 = vpop.f32.mrb[0].mxu0
        %v7371 = vadd.f32 0.0, %v7370
        %v7372 = vpop.f32.mrb[0].mxu0
        %7373 = vmatprep.mubr.f32.mxu0 0.0
        %7374 = vmatmul.mubr.f32.gmra.mrb[0].mxu0 %v7121
        %v7375 = vpop.f32.mrb[0].mxu0
        %v7376 = vadd.f32 0.0, %v7375
        %v7377 = vpop.f32.mrb[0].mxu0
        %7378 = vmatprep.mubr.f32.mxu0 0.0
        %7379 = vmatmul.mubr.f32.gmra.mrb[0].mxu0 %v7124
        %v7380 = vpop.f32.mrb[0].mxu0
        %v7381 = vadd.f32 0.0, %v7380
        %v7382 = vpop.f32.mrb[0].mxu0
        %7383 = vmatprep.mubr.f32.mxu0 0.0
        %7384 = vmatmul.mubr.f32.gmra.mrb[0].mxu0 %v7127
        %v7385 = vpop.f32.mrb[0].mxu0
        %v7386 = vadd.f32 0.0, %v7385
        %v7387 = vpop.f32.mrb[0].mxu0
        %7388 = vmatprep.mubr.f32.mxu0 0.0
        %7389 = vmatmul.mubr.f32.gmra.mrb[0].mxu0 %v7130
        %v7390 = vpop.f32.mrb[0].mxu0
        %v7391 = vadd.f32 0.0, %v7390
        %v7392 = vpop.f32.mrb[0].mxu0
        %7393 = vmatprep.mubr.f32.mxu0 0.0
        %7394 = vmatmul.mubr.f32.gmra.mrb[0].mxu0 %v7133
        %v7395 = vpop.f32.mrb[0].mxu0
        %v7396 = vadd.f32 0.0, %v7395
        %v7397 = vpop.f32.mrb[0].mxu0
        %7398 = vmatprep.mubr.f32.mxu0 0.0
        %7399 = vmatmul.mubr.f32.gmra.mrb[0].mxu0 %v7136
        %v7400 = vpop.f32.mrb[0].mxu0
        %v7401 = vadd.f32 0.0, %v7400
        %v7402 = vpop.f32.mrb[0].mxu0
        %7403 = vmatprep.mubr.f32.mxu0 0.0
        %7404 = vmatmul.mubr.f32.gmra.mrb[0].mxu0 %v7139
        %v7405 = vpop.f32.mrb[0].mxu0
        %v7406 = vadd.f32 0.0, %v7405
        %v7407 = vpop.f32.mrb[0].mxu0
        %7408 = vdwg.mxu0
        %v7409 = vadd.f32 %v6929, %v7211
        %v7410 = vadd.f32 %v6930, %v7216
        %v7411 = vadd.f32 %v6931, %v7221
        %v7412 = vadd.f32 %v6932, %v7226
        %v7413 = vadd.f32 %v6933, %v7231
        %v7414 = vadd.f32 %v6934, %v7236
        %v7415 = vadd.f32 %v6935, %v7241
        %v7416 = vadd.f32 %v6936, %v7246
        %v7417 = vadd.f32 %v6937, %v7251
        %v7418 = vadd.f32 %v6938, %v7256
        %v7419 = vadd.f32 %v6939, %v7261
        %v7420 = vadd.f32 %v6940, %v7266
        %v7421 = vadd.f32 %v6941, %v7271
        %v7422 = vadd.f32 %v6942, %v7276
        %v7423 = vadd.f32 %v6943, %v7281
        %v7424 = vadd.f32 %v6944, %v7286
        %v7425 = vadd.f32 %v6945, %v7291
        %v7426 = vadd.f32 %v6946, %v7296
        %v7427 = vadd.f32 %v6947, %v7301
        %v7428 = vadd.f32 %v6948, %v7306
        %v7429 = vadd.f32 %v6949, %v7311
        %v7430 = vadd.f32 %v6950, %v7316
        %v7431 = vadd.f32 %v6951, %v7321
        %v7432 = vadd.f32 %v6952, %v7326
        %v7433 = vadd.f32 %v6953, %v7331
        %v7434 = vadd.f32 %v6954, %v7336
        %v7435 = vadd.f32 %v6955, %v7341
        %v7436 = vadd.f32 %v6956, %v7346
        %v7437 = vadd.f32 %v6957, %v7351
        %v7438 = vadd.f32 %v6958, %v7356
        %v7439 = vadd.f32 %v6959, %v7361
        %v7440 = vadd.f32 %v6960, %v7366
        %v7441 = vadd.f32 %v6961, %v7371
        %v7442 = vadd.f32 %v6962, %v7376
        %v7443 = vadd.f32 %v6963, %v7381
        %v7444 = vadd.f32 %v6964, %v7386
        %v7445 = vadd.f32 %v6965, %v7391
        %v7446 = vadd.f32 %v6966, %v7396
        %v7447 = vadd.f32 %v6967, %v7401
        %v7448 = vadd.f32 %v6968, %v7406
        %s7449 = scalar_lea.vmem %s5, 20
        %v7450 = vld [vmem:[%s7449] sm:$0xf]
        %v7452 = vsel %vm543, %v7009, 0
        %v7455 = vsel %vm543, %v7010, 0
        %v7458 = vsel %vm543, %v7011, 0
        %v7461 = vsel %vm543, %v7012, 0
        %v7464 = vsel %vm543, %v7013, 0
        %v7467 = vsel %vm543, %v7450, 0
        %7469 = vmatprep.subr.mxu0 0.0
        %7470 = vmatpush1.xpose.msra.mxu0 %v7467
        %7471 = vmatprep.subr.mxu0 0.0
        %7472 = vmatpush1.xpose.msra.mxu0 0.0
        %7473 = vmatprep.subr.mxu0 0.0
        %7474 = vmatpush1.xpose.msra.mxu0 0.0
        %7475 = vmatprep.subr.mxu0 0.0
        %7476 = vmatpush1.xpose.msra.mxu0 0.0
        %7477 = vmatprep.subr.mxu0 0.0
        %7478 = vmatpush1.xpose.msra.mxu0 0.0
        %7479 = vmatprep.subr.mxu0 0.0
        %7480 = vmatpush1.xpose.msra.mxu0 0.0
        %7481 = vmatprep.subr.mxu0 0.0
        %7482 = vmatpush1.xpose.msra.mxu0 0.0
        %7483 = vmatprep.subr.mxu0 0.0
        %7484 = vmatpush1.xpose.msra.mxu0 0.0
        %7485 = vmatprep.subr.mxu0 0.0
        %7486 = vmatpush1.xpose.msra.mxu0 0.0
        %7487 = vmatprep.subr.mxu0 0.0
        %7488 = vmatpush1.xpose.msra.mxu0 0.0
        %7489 = vmatprep.subr.mxu0 0.0
        %7490 = vmatpush1.xpose.msra.mxu0 0.0
        %7491 = vmatprep.subr.mxu0 0.0
        %7492 = vmatpush1.xpose.msra.mxu0 0.0
        %7493 = vmatprep.subr.mxu0 0.0
        %7494 = vmatpush1.xpose.msra.mxu0 0.0
        %7495 = vmatprep.subr.mxu0 0.0
        %7496 = vmatpush1.xpose.msra.mxu0 0.0
        %7497 = vmatprep.subr.mxu0 0.0
        %7498 = vmatpush1.xpose.msra.mxu0 0.0
        %7499 = vmatprep.subr.mxu0 0.0
        %7500 = vmatpush1.xpose.msra.mxu0 0.0
        %7501 = vmatprep.subr.mxu0 0.0
        %7502 = vmatpush1.xpose.msra.mxu0 0.0
        %7503 = vmatprep.subr.mxu0 0.0
        %7504 = vmatpush1.xpose.msra.mxu0 0.0
        %7505 = vmatprep.subr.mxu0 0.0
        %7506 = vmatpush1.xpose.msra.mxu0 0.0
        %7507 = vmatprep.subr.mxu0 0.0
        %7508 = vmatpush1.xpose.msra.mxu0 0.0
        %7509 = vmatprep.subr.mxu0 0.0
        %7510 = vmatpush1.xpose.msra.mxu0 0.0
        %7511 = vmatprep.subr.mxu0 0.0
        %7512 = vmatpush1.xpose.msra.mxu0 0.0
        %7513 = vmatprep.subr.mxu0 0.0
        %7514 = vmatpush1.xpose.msra.mxu0 0.0
        %7515 = vmatprep.subr.mxu0 0.0
        %7516 = vmatpush1.xpose.msra.mxu0 0.0
        %7517 = vmatprep.subr.mxu0 0.0
        %7518 = vmatpush1.xpose.msra.mxu0 0.0
        %7519 = vmatprep.subr.mxu0 0.0
        %7520 = vmatpush1.xpose.msra.mxu0 0.0
        %7521 = vmatprep.subr.mxu0 0.0
        %7522 = vmatpush1.xpose.msra.mxu0 0.0
        %7523 = vmatprep.subr.mxu0 0.0
        %7524 = vmatpush1.xpose.msra.mxu0 0.0
        %7525 = vmatprep.subr.mxu0 0.0
        %7526 = vmatpush1.xpose.msra.mxu0 0.0
        %7527 = vmatprep.subr.mxu0 0.0
        %7528 = vmatpush1.xpose.msra.mxu0 0.0
        %7529 = vmatprep.subr.mxu0 0.0
        %7530 = vmatpush1.xpose.msra.mxu0 0.0
        %7531 = vmatprep.subr.mxu0 0.0
        %7532 = vmatpush1.xpose.msra.mxu0 0.0
        %7533 = vmatprep.mubr.f32.mxu0 0.0
        %7534 = vmatmul.mubr.f32.gmra.mrb[0].mxu0 %v7037
        %v7535 = vpop.f32.mrb[0].mxu0
        %v7536 = vadd.f32 0.0, %v7535
        %v7537 = vpop.f32.mrb[0].mxu0
        %7538 = vmatprep.mubr.f32.mxu0 0.0
        %7539 = vmatmul.mubr.f32.gmra.mrb[0].mxu0 %v7040
        %v7540 = vpop.f32.mrb[0].mxu0
        %v7541 = vadd.f32 0.0, %v7540
        %v7542 = vpop.f32.mrb[0].mxu0
        %7543 = vmatprep.mubr.f32.mxu0 0.0
        %7544 = vmatmul.mubr.f32.gmra.mrb[0].mxu0 %v7043
        %v7545 = vpop.f32.mrb[0].mxu0
        %v7546 = vadd.f32 0.0, %v7545
        %v7547 = vpop.f32.mrb[0].mxu0
        %7548 = vmatprep.mubr.f32.mxu0 0.0
        %7549 = vmatmul.mubr.f32.gmra.mrb[0].mxu0 %v7046
        %v7550 = vpop.f32.mrb[0].mxu0
        %v7551 = vadd.f32 0.0, %v7550
        %v7552 = vpop.f32.mrb[0].mxu0
        %7553 = vmatprep.mubr.f32.mxu0 0.0
        %7554 = vmatmul.mubr.f32.gmra.mrb[0].mxu0 %v7049
        %v7555 = vpop.f32.mrb[0].mxu0
        %v7556 = vadd.f32 0.0, %v7555
        %v7557 = vpop.f32.mrb[0].mxu0
        %7558 = vmatprep.mubr.f32.mxu0 0.0
        %7559 = vmatmul.mubr.f32.gmra.mrb[0].mxu0 %v7052
        %v7560 = vpop.f32.mrb[0].mxu0
        %v7561 = vadd.f32 0.0, %v7560
        %v7562 = vpop.f32.mrb[0].mxu0
        %7563 = vmatprep.mubr.f32.mxu0 0.0
        %7564 = vmatmul.mubr.f32.gmra.mrb[0].mxu0 %v7055
        %v7565 = vpop.f32.mrb[0].mxu0
        %v7566 = vadd.f32 0.0, %v7565
        %v7567 = vpop.f32.mrb[0].mxu0
        %7568 = vmatprep.mubr.f32.mxu0 0.0
        %7569 = vmatmul.mubr.f32.gmra.mrb[0].mxu0 %v7058
        %v7570 = vpop.f32.mrb[0].mxu0
        %v7571 = vadd.f32 0.0, %v7570
        %v7572 = vpop.f32.mrb[0].mxu0
        %7573 = vmatprep.mubr.f32.mxu0 0.0
        %7574 = vmatmul.mubr.f32.gmra.mrb[0].mxu0 %v7061
        %v7575 = vpop.f32.mrb[0].mxu0
        %v7576 = vadd.f32 0.0, %v7575
        %v7577 = vpop.f32.mrb[0].mxu0
        %7578 = vmatprep.mubr.f32.mxu0 0.0
        %7579 = vmatmul.mubr.f32.gmra.mrb[0].mxu0 %v7064
        %v7580 = vpop.f32.mrb[0].mxu0
        %v7581 = vadd.f32 0.0, %v7580
        %v7582 = vpop.f32.mrb[0].mxu0
        %7583 = vmatprep.mubr.f32.mxu0 0.0
        %7584 = vmatmul.mubr.f32.gmra.mrb[0].mxu0 %v7067
        %v7585 = vpop.f32.mrb[0].mxu0
        %v7586 = vadd.f32 0.0, %v7585
        %v7587 = vpop.f32.mrb[0].mxu0
        %7588 = vmatprep.mubr.f32.mxu0 0.0
        %7589 = vmatmul.mubr.f32.gmra.mrb[0].mxu0 %v7070
        %v7590 = vpop.f32.mrb[0].mxu0
        %v7591 = vadd.f32 0.0, %v7590
        %v7592 = vpop.f32.mrb[0].mxu0
        %7593 = vmatprep.mubr.f32.mxu0 0.0
        %7594 = vmatmul.mubr.f32.gmra.mrb[0].mxu0 %v7073
        %v7595 = vpop.f32.mrb[0].mxu0
        %v7596 = vadd.f32 0.0, %v7595
        %v7597 = vpop.f32.mrb[0].mxu0
        %7598 = vmatprep.mubr.f32.mxu0 0.0
        %7599 = vmatmul.mubr.f32.gmra.mrb[0].mxu0 %v7076
        %v7600 = vpop.f32.mrb[0].mxu0
        %v7601 = vadd.f32 0.0, %v7600
        %v7602 = vpop.f32.mrb[0].mxu0
        %7603 = vmatprep.mubr.f32.mxu0 0.0
        %7604 = vmatmul.mubr.f32.gmra.mrb[0].mxu0 %v7079
        %v7605 = vpop.f32.mrb[0].mxu0
        %v7606 = vadd.f32 0.0, %v7605
        %v7607 = vpop.f32.mrb[0].mxu0
        %7608 = vmatprep.mubr.f32.mxu0 0.0
        %7609 = vmatmul.mubr.f32.gmra.mrb[0].mxu0 %v7082
        %v7610 = vpop.f32.mrb[0].mxu0
        %v7611 = vadd.f32 0.0, %v7610
        %v7612 = vpop.f32.mrb[0].mxu0
        %7613 = vmatprep.mubr.f32.mxu0 0.0
        %7614 = vmatmul.mubr.f32.gmra.mrb[0].mxu0 %v7085
        %v7615 = vpop.f32.mrb[0].mxu0
        %v7616 = vadd.f32 0.0, %v7615
        %v7617 = vpop.f32.mrb[0].mxu0
        %7618 = vmatprep.mubr.f32.mxu0 0.0
        %7619 = vmatmul.mubr.f32.gmra.mrb[0].mxu0 %v7088
        %v7620 = vpop.f32.mrb[0].mxu0
        %v7621 = vadd.f32 0.0, %v7620
        %v7622 = vpop.f32.mrb[0].mxu0
        %7623 = vmatprep.mubr.f32.mxu0 0.0
        %7624 = vmatmul.mubr.f32.gmra.mrb[0].mxu0 %v7091
        %v7625 = vpop.f32.mrb[0].mxu0
        %v7626 = vadd.f32 0.0, %v7625
        %v7627 = vpop.f32.mrb[0].mxu0
        %7628 = vmatprep.mubr.f32.mxu0 0.0
        %7629 = vmatmul.mubr.f32.gmra.mrb[0].mxu0 %v7094
        %v7630 = vpop.f32.mrb[0].mxu0
        %v7631 = vadd.f32 0.0, %v7630
        %v7632 = vpop.f32.mrb[0].mxu0
        %7633 = vmatprep.mubr.f32.mxu0 0.0
        %7634 = vmatmul.mubr.f32.gmra.mrb[0].mxu0 %v7097
        %v7635 = vpop.f32.mrb[0].mxu0
        %v7636 = vadd.f32 0.0, %v7635
        %v7637 = vpop.f32.mrb[0].mxu0
        %7638 = vmatprep.mubr.f32.mxu0 0.0
        %7639 = vmatmul.mubr.f32.gmra.mrb[0].mxu0 %v7100
        %v7640 = vpop.f32.mrb[0].mxu0
        %v7641 = vadd.f32 0.0, %v7640
        %v7642 = vpop.f32.mrb[0].mxu0
        %7643 = vmatprep.mubr.f32.mxu0 0.0
        %7644 = vmatmul.mubr.f32.gmra.mrb[0].mxu0 %v7103
        %v7645 = vpop.f32.mrb[0].mxu0
        %v7646 = vadd.f32 0.0, %v7645
        %v7647 = vpop.f32.mrb[0].mxu0
        %7648 = vmatprep.mubr.f32.mxu0 0.0
        %7649 = vmatmul.mubr.f32.gmra.mrb[0].mxu0 %v7106
        %v7650 = vpop.f32.mrb[0].mxu0
        %v7651 = vadd.f32 0.0, %v7650
        %v7652 = vpop.f32.mrb[0].mxu0
        %7653 = vmatprep.mubr.f32.mxu0 0.0
        %7654 = vmatmul.mubr.f32.gmra.mrb[0].mxu0 %v7109
        %v7655 = vpop.f32.mrb[0].mxu0
        %v7656 = vadd.f32 0.0, %v7655
        %v7657 = vpop.f32.mrb[0].mxu0
        %7658 = vmatprep.mubr.f32.mxu0 0.0
        %7659 = vmatmul.mubr.f32.gmra.mrb[0].mxu0 %v7112
        %v7660 = vpop.f32.mrb[0].mxu0
        %v7661 = vadd.f32 0.0, %v7660
        %v7662 = vpop.f32.mrb[0].mxu0
        %7663 = vmatprep.mubr.f32.mxu0 0.0
        %7664 = vmatmul.mubr.f32.gmra.mrb[0].mxu0 %v7115
        %v7665 = vpop.f32.mrb[0].mxu0
        %v7666 = vadd.f32 0.0, %v7665
        %v7667 = vpop.f32.mrb[0].mxu0
        %7668 = vmatprep.mubr.f32.mxu0 0.0
        %7669 = vmatmul.mubr.f32.gmra.mrb[0].mxu0 %v7118
        %v7670 = vpop.f32.mrb[0].mxu0
        %v7671 = vadd.f32 0.0, %v7670
        %v7672 = vpop.f32.mrb[0].mxu0
        %7673 = vmatprep.mubr.f32.mxu0 0.0
        %7674 = vmatmul.mubr.f32.gmra.mrb[0].mxu0 %v7121
        %v7675 = vpop.f32.mrb[0].mxu0
        %v7676 = vadd.f32 0.0, %v7675
        %v7677 = vpop.f32.mrb[0].mxu0
        %7678 = vmatprep.mubr.f32.mxu0 0.0
        %7679 = vmatmul.mubr.f32.gmra.mrb[0].mxu0 %v7124
        %v7680 = vpop.f32.mrb[0].mxu0
        %v7681 = vadd.f32 0.0, %v7680
        %v7682 = vpop.f32.mrb[0].mxu0
        %7683 = vmatprep.mubr.f32.mxu0 0.0
        %7684 = vmatmul.mubr.f32.gmra.mrb[0].mxu0 %v7127
        %v7685 = vpop.f32.mrb[0].mxu0
        %v7686 = vadd.f32 0.0, %v7685
        %v7687 = vpop.f32.mrb[0].mxu0
        %7688 = vmatprep.mubr.f32.mxu0 0.0
        %7689 = vmatmul.mubr.f32.gmra.mrb[0].mxu0 %v7130
        %v7690 = vpop.f32.mrb[0].mxu0
        %v7691 = vadd.f32 0.0, %v7690
        %v7692 = vpop.f32.mrb[0].mxu0
        %7693 = vmatprep.mubr.f32.mxu0 0.0
        %7694 = vmatmul.mubr.f32.gmra.mrb[0].mxu0 %v7133
        %v7695 = vpop.f32.mrb[0].mxu0
        %v7696 = vadd.f32 0.0, %v7695
        %v7697 = vpop.f32.mrb[0].mxu0
        %7698 = vmatprep.mubr.f32.mxu0 0.0
        %7699 = vmatmul.mubr.f32.gmra.mrb[0].mxu0 %v7136
        %v7700 = vpop.f32.mrb[0].mxu0
        %v7701 = vadd.f32 0.0, %v7700
        %v7702 = vpop.f32.mrb[0].mxu0
        %7703 = vmatprep.mubr.f32.mxu0 0.0
        %7704 = vmatmul.mubr.f32.gmra.mrb[0].mxu0 %v7139
        %v7705 = vpop.f32.mrb[0].mxu0
        %v7706 = vadd.f32 0.0, %v7705
        %v7707 = vpop.f32.mrb[0].mxu0
        %7708 = vmatprep.mubr.f32.mxu0 0.0
        %7709 = vmatmul.mubr.f32.gmra.mrb[0].mxu0 %v7452
        %v7710 = vpop.f32.mrb[0].mxu0
        %v7711 = vadd.f32 0.0, %v7710
        %v7712 = vpop.f32.mrb[0].mxu0
        %7713 = vmatprep.mubr.f32.mxu0 0.0
        %7714 = vmatmul.mubr.f32.gmra.mrb[0].mxu0 %v7455
        %v7715 = vpop.f32.mrb[0].mxu0
        %v7716 = vadd.f32 0.0, %v7715
        %v7717 = vpop.f32.mrb[0].mxu0
        %7718 = vmatprep.mubr.f32.mxu0 0.0
        %7719 = vmatmul.mubr.f32.gmra.mrb[0].mxu0 %v7458
        %v7720 = vpop.f32.mrb[0].mxu0
        %v7721 = vadd.f32 0.0, %v7720
        %v7722 = vpop.f32.mrb[0].mxu0
        %7723 = vmatprep.mubr.f32.mxu0 0.0
        %7724 = vmatmul.mubr.f32.gmra.mrb[0].mxu0 %v7461
        %v7725 = vpop.f32.mrb[0].mxu0
        %v7726 = vadd.f32 0.0, %v7725
        %v7727 = vpop.f32.mrb[0].mxu0
        %7728 = vmatprep.mubr.f32.mxu0 0.0
        %7729 = vmatmul.mubr.f32.gmra.mrb[0].mxu0 %v7464
        %v7730 = vpop.f32.mrb[0].mxu0
        %v7731 = vadd.f32 0.0, %v7730
        %v7732 = vpop.f32.mrb[0].mxu0
        %7733 = vdwg.mxu0
        %v7734 = vadd.f32 %v7409, %v7536
        %v7735 = vadd.f32 %v7410, %v7541
        %v7736 = vadd.f32 %v7411, %v7546
        %v7737 = vadd.f32 %v7412, %v7551
        %v7738 = vadd.f32 %v7413, %v7556
        %v7739 = vadd.f32 %v7414, %v7561
        %v7740 = vadd.f32 %v7415, %v7566
        %v7741 = vadd.f32 %v7416, %v7571
        %v7742 = vadd.f32 %v7417, %v7576
        %v7743 = vadd.f32 %v7418, %v7581
        %v7744 = vadd.f32 %v7419, %v7586
        %v7745 = vadd.f32 %v7420, %v7591
        %v7746 = vadd.f32 %v7421, %v7596
        %v7747 = vadd.f32 %v7422, %v7601
        %v7748 = vadd.f32 %v7423, %v7606
        %v7749 = vadd.f32 %v7424, %v7611
        %v7750 = vadd.f32 %v7425, %v7616
        %v7751 = vadd.f32 %v7426, %v7621
        %v7752 = vadd.f32 %v7427, %v7626
        %v7753 = vadd.f32 %v7428, %v7631
        %v7754 = vadd.f32 %v7429, %v7636
        %v7755 = vadd.f32 %v7430, %v7641
        %v7756 = vadd.f32 %v7431, %v7646
        %v7757 = vadd.f32 %v7432, %v7651
        %v7758 = vadd.f32 %v7433, %v7656
        %v7759 = vadd.f32 %v7434, %v7661
        %v7760 = vadd.f32 %v7435, %v7666
        %v7761 = vadd.f32 %v7436, %v7671
        %v7762 = vadd.f32 %v7437, %v7676
        %v7763 = vadd.f32 %v7438, %v7681
        %v7764 = vadd.f32 %v7439, %v7686
        %v7765 = vadd.f32 %v7440, %v7691
        %v7766 = vadd.f32 %v7441, %v7696
        %v7767 = vadd.f32 %v7442, %v7701
        %v7768 = vadd.f32 %v7443, %v7706
        %v7769 = vadd.f32 %v7444, %v7711
        %v7770 = vadd.f32 %v7445, %v7716
        %v7771 = vadd.f32 %v7446, %v7721
        %v7772 = vadd.f32 %v7447, %v7726
        %v7773 = vadd.f32 %v7448, %v7731
        %s7774 = scalar_lea.vmem %s5, 32
        %v7775 = vld [vmem:[%s7774] sm:$0xf]
        %v7777 = vsel %vm543, %v7014, 0
        %v7780 = vsel %vm543, %v7015, 0
        %v7783 = vsel %vm543, %v7016, 0
        %v7786 = vsel %vm543, %v7017, 0
        %v7789 = vsel %vm543, %v7018, 0
        %v7792 = vsel %vm543, %v7775, 0
        %7794 = vmatprep.subr.mxu0 0.0
        %7795 = vmatpush1.xpose.msra.mxu0 %v7792
        %7796 = vmatprep.subr.mxu0 0.0
        %7797 = vmatpush1.xpose.msra.mxu0 0.0
        %7798 = vmatprep.subr.mxu0 0.0
        %7799 = vmatpush1.xpose.msra.mxu0 0.0
        %7800 = vmatprep.subr.mxu0 0.0
        %7801 = vmatpush1.xpose.msra.mxu0 0.0
        %7802 = vmatprep.subr.mxu0 0.0
        %7803 = vmatpush1.xpose.msra.mxu0 0.0
        %7804 = vmatprep.subr.mxu0 0.0
        %7805 = vmatpush1.xpose.msra.mxu0 0.0
        %7806 = vmatprep.subr.mxu0 0.0
        %7807 = vmatpush1.xpose.msra.mxu0 0.0
        %7808 = vmatprep.subr.mxu0 0.0
        %7809 = vmatpush1.xpose.msra.mxu0 0.0
        %7810 = vmatprep.subr.mxu0 0.0
        %7811 = vmatpush1.xpose.msra.mxu0 0.0
        %7812 = vmatprep.subr.mxu0 0.0
        %7813 = vmatpush1.xpose.msra.mxu0 0.0
        %7814 = vmatprep.subr.mxu0 0.0
        %7815 = vmatpush1.xpose.msra.mxu0 0.0
        %7816 = vmatprep.subr.mxu0 0.0
        %7817 = vmatpush1.xpose.msra.mxu0 0.0
        %7818 = vmatprep.subr.mxu0 0.0
        %7819 = vmatpush1.xpose.msra.mxu0 0.0
        %7820 = vmatprep.subr.mxu0 0.0
        %7821 = vmatpush1.xpose.msra.mxu0 0.0
        %7822 = vmatprep.subr.mxu0 0.0
        %7823 = vmatpush1.xpose.msra.mxu0 0.0
        %7824 = vmatprep.subr.mxu0 0.0
        %7825 = vmatpush1.xpose.msra.mxu0 0.0
        %7826 = vmatprep.subr.mxu0 0.0
        %7827 = vmatpush1.xpose.msra.mxu0 0.0
        %7828 = vmatprep.subr.mxu0 0.0
        %7829 = vmatpush1.xpose.msra.mxu0 0.0
        %7830 = vmatprep.subr.mxu0 0.0
        %7831 = vmatpush1.xpose.msra.mxu0 0.0
        %7832 = vmatprep.subr.mxu0 0.0
        %7833 = vmatpush1.xpose.msra.mxu0 0.0
        %7834 = vmatprep.subr.mxu0 0.0
        %7835 = vmatpush1.xpose.msra.mxu0 0.0
        %7836 = vmatprep.subr.mxu0 0.0
        %7837 = vmatpush1.xpose.msra.mxu0 0.0
        %7838 = vmatprep.subr.mxu0 0.0
        %7839 = vmatpush1.xpose.msra.mxu0 0.0
        %7840 = vmatprep.subr.mxu0 0.0
        %7841 = vmatpush1.xpose.msra.mxu0 0.0
        %7842 = vmatprep.subr.mxu0 0.0
        %7843 = vmatpush1.xpose.msra.mxu0 0.0
        %7844 = vmatprep.subr.mxu0 0.0
        %7845 = vmatpush1.xpose.msra.mxu0 0.0
        %7846 = vmatprep.subr.mxu0 0.0
        %7847 = vmatpush1.xpose.msra.mxu0 0.0
        %7848 = vmatprep.subr.mxu0 0.0
        %7849 = vmatpush1.xpose.msra.mxu0 0.0
        %7850 = vmatprep.subr.mxu0 0.0
        %7851 = vmatpush1.xpose.msra.mxu0 0.0
        %7852 = vmatprep.subr.mxu0 0.0
        %7853 = vmatpush1.xpose.msra.mxu0 0.0
        %7854 = vmatprep.subr.mxu0 0.0
        %7855 = vmatpush1.xpose.msra.mxu0 0.0
        %7856 = vmatprep.subr.mxu0 0.0
        %7857 = vmatpush1.xpose.msra.mxu0 0.0
        %7858 = vmatprep.mubr.f32.mxu0 0.0
        %7859 = vmatmul.mubr.f32.gmra.mrb[0].mxu0 %v7052
        %v7860 = vpop.f32.mrb[0].mxu0
        %v7861 = vadd.f32 0.0, %v7860
        %v7862 = vpop.f32.mrb[0].mxu0
        %7863 = vmatprep.mubr.f32.mxu0 0.0
        %7864 = vmatmul.mubr.f32.gmra.mrb[0].mxu0 %v7055
        %v7865 = vpop.f32.mrb[0].mxu0
        %v7866 = vadd.f32 0.0, %v7865
        %v7867 = vpop.f32.mrb[0].mxu0
        %7868 = vmatprep.mubr.f32.mxu0 0.0
        %7869 = vmatmul.mubr.f32.gmra.mrb[0].mxu0 %v7058
        %v7870 = vpop.f32.mrb[0].mxu0
        %v7871 = vadd.f32 0.0, %v7870
        %v7872 = vpop.f32.mrb[0].mxu0
        %7873 = vmatprep.mubr.f32.mxu0 0.0
        %7874 = vmatmul.mubr.f32.gmra.mrb[0].mxu0 %v7061
        %v7875 = vpop.f32.mrb[0].mxu0
        %v7876 = vadd.f32 0.0, %v7875
        %v7877 = vpop.f32.mrb[0].mxu0
        %7878 = vmatprep.mubr.f32.mxu0 0.0
        %7879 = vmatmul.mubr.f32.gmra.mrb[0].mxu0 %v7064
        %v7880 = vpop.f32.mrb[0].mxu0
        %v7881 = vadd.f32 0.0, %v7880
        %v7882 = vpop.f32.mrb[0].mxu0
        %7883 = vmatprep.mubr.f32.mxu0 0.0
        %7884 = vmatmul.mubr.f32.gmra.mrb[0].mxu0 %v7067
        %v7885 = vpop.f32.mrb[0].mxu0
        %v7886 = vadd.f32 0.0, %v7885
        %v7887 = vpop.f32.mrb[0].mxu0
        %7888 = vmatprep.mubr.f32.mxu0 0.0
        %7889 = vmatmul.mubr.f32.gmra.mrb[0].mxu0 %v7070
        %v7890 = vpop.f32.mrb[0].mxu0
        %v7891 = vadd.f32 0.0, %v7890
        %v7892 = vpop.f32.mrb[0].mxu0
        %7893 = vmatprep.mubr.f32.mxu0 0.0
        %7894 = vmatmul.mubr.f32.gmra.mrb[0].mxu0 %v7073
        %v7895 = vpop.f32.mrb[0].mxu0
        %v7896 = vadd.f32 0.0, %v7895
        %v7897 = vpop.f32.mrb[0].mxu0
        %7898 = vmatprep.mubr.f32.mxu0 0.0
        %7899 = vmatmul.mubr.f32.gmra.mrb[0].mxu0 %v7076
        %v7900 = vpop.f32.mrb[0].mxu0
        %v7901 = vadd.f32 0.0, %v7900
        %v7902 = vpop.f32.mrb[0].mxu0
        %7903 = vmatprep.mubr.f32.mxu0 0.0
        %7904 = vmatmul.mubr.f32.gmra.mrb[0].mxu0 %v7079
        %v7905 = vpop.f32.mrb[0].mxu0
        %v7906 = vadd.f32 0.0, %v7905
        %v7907 = vpop.f32.mrb[0].mxu0
        %7908 = vmatprep.mubr.f32.mxu0 0.0
        %7909 = vmatmul.mubr.f32.gmra.mrb[0].mxu0 %v7082
        %v7910 = vpop.f32.mrb[0].mxu0
        %v7911 = vadd.f32 0.0, %v7910
        %v7912 = vpop.f32.mrb[0].mxu0
        %7913 = vmatprep.mubr.f32.mxu0 0.0
        %7914 = vmatmul.mubr.f32.gmra.mrb[0].mxu0 %v7085
        %v7915 = vpop.f32.mrb[0].mxu0
        %v7916 = vadd.f32 0.0, %v7915
        %v7917 = vpop.f32.mrb[0].mxu0
        %7918 = vmatprep.mubr.f32.mxu0 0.0
        %7919 = vmatmul.mubr.f32.gmra.mrb[0].mxu0 %v7088
        %v7920 = vpop.f32.mrb[0].mxu0
        %v7921 = vadd.f32 0.0, %v7920
        %v7922 = vpop.f32.mrb[0].mxu0
        %7923 = vmatprep.mubr.f32.mxu0 0.0
        %7924 = vmatmul.mubr.f32.gmra.mrb[0].mxu0 %v7091
        %v7925 = vpop.f32.mrb[0].mxu0
        %v7926 = vadd.f32 0.0, %v7925
        %v7927 = vpop.f32.mrb[0].mxu0
        %7928 = vmatprep.mubr.f32.mxu0 0.0
        %7929 = vmatmul.mubr.f32.gmra.mrb[0].mxu0 %v7094
        %v7930 = vpop.f32.mrb[0].mxu0
        %v7931 = vadd.f32 0.0, %v7930
        %v7932 = vpop.f32.mrb[0].mxu0
        %7933 = vmatprep.mubr.f32.mxu0 0.0
        %7934 = vmatmul.mubr.f32.gmra.mrb[0].mxu0 %v7097
        %v7935 = vpop.f32.mrb[0].mxu0
        %v7936 = vadd.f32 0.0, %v7935
        %v7937 = vpop.f32.mrb[0].mxu0
        %7938 = vmatprep.mubr.f32.mxu0 0.0
        %7939 = vmatmul.mubr.f32.gmra.mrb[0].mxu0 %v7100
        %v7940 = vpop.f32.mrb[0].mxu0
        %v7941 = vadd.f32 0.0, %v7940
        %v7942 = vpop.f32.mrb[0].mxu0
        %7943 = vmatprep.mubr.f32.mxu0 0.0
        %7944 = vmatmul.mubr.f32.gmra.mrb[0].mxu0 %v7103
        %v7945 = vpop.f32.mrb[0].mxu0
        %v7946 = vadd.f32 0.0, %v7945
        %v7947 = vpop.f32.mrb[0].mxu0
        %7948 = vmatprep.mubr.f32.mxu0 0.0
        %7949 = vmatmul.mubr.f32.gmra.mrb[0].mxu0 %v7106
        %v7950 = vpop.f32.mrb[0].mxu0
        %v7951 = vadd.f32 0.0, %v7950
        %v7952 = vpop.f32.mrb[0].mxu0
        %7953 = vmatprep.mubr.f32.mxu0 0.0
        %7954 = vmatmul.mubr.f32.gmra.mrb[0].mxu0 %v7109
        %v7955 = vpop.f32.mrb[0].mxu0
        %v7956 = vadd.f32 0.0, %v7955
        %v7957 = vpop.f32.mrb[0].mxu0
        %7958 = vmatprep.mubr.f32.mxu0 0.0
        %7959 = vmatmul.mubr.f32.gmra.mrb[0].mxu0 %v7112
        %v7960 = vpop.f32.mrb[0].mxu0
        %v7961 = vadd.f32 0.0, %v7960
        %v7962 = vpop.f32.mrb[0].mxu0
        %7963 = vmatprep.mubr.f32.mxu0 0.0
        %7964 = vmatmul.mubr.f32.gmra.mrb[0].mxu0 %v7115
        %v7965 = vpop.f32.mrb[0].mxu0
        %v7966 = vadd.f32 0.0, %v7965
        %v7967 = vpop.f32.mrb[0].mxu0
        %7968 = vmatprep.mubr.f32.mxu0 0.0
        %7969 = vmatmul.mubr.f32.gmra.mrb[0].mxu0 %v7118
        %v7970 = vpop.f32.mrb[0].mxu0
        %v7971 = vadd.f32 0.0, %v7970
        %v7972 = vpop.f32.mrb[0].mxu0
        %7973 = vmatprep.mubr.f32.mxu0 0.0
        %7974 = vmatmul.mubr.f32.gmra.mrb[0].mxu0 %v7121
        %v7975 = vpop.f32.mrb[0].mxu0
        %v7976 = vadd.f32 0.0, %v7975
        %v7977 = vpop.f32.mrb[0].mxu0
        %7978 = vmatprep.mubr.f32.mxu0 0.0
        %7979 = vmatmul.mubr.f32.gmra.mrb[0].mxu0 %v7124
        %v7980 = vpop.f32.mrb[0].mxu0
        %v7981 = vadd.f32 0.0, %v7980
        %v7982 = vpop.f32.mrb[0].mxu0
        %7983 = vmatprep.mubr.f32.mxu0 0.0
        %7984 = vmatmul.mubr.f32.gmra.mrb[0].mxu0 %v7127
        %v7985 = vpop.f32.mrb[0].mxu0
        %v7986 = vadd.f32 0.0, %v7985
        %v7987 = vpop.f32.mrb[0].mxu0
        %7988 = vmatprep.mubr.f32.mxu0 0.0
        %7989 = vmatmul.mubr.f32.gmra.mrb[0].mxu0 %v7130
        %v7990 = vpop.f32.mrb[0].mxu0
        %v7991 = vadd.f32 0.0, %v7990
        %v7992 = vpop.f32.mrb[0].mxu0
        %7993 = vmatprep.mubr.f32.mxu0 0.0
        %7994 = vmatmul.mubr.f32.gmra.mrb[0].mxu0 %v7133
        %v7995 = vpop.f32.mrb[0].mxu0
        %v7996 = vadd.f32 0.0, %v7995
        %v7997 = vpop.f32.mrb[0].mxu0
        %7998 = vmatprep.mubr.f32.mxu0 0.0
        %7999 = vmatmul.mubr.f32.gmra.mrb[0].mxu0 %v7136
        %v8000 = vpop.f32.mrb[0].mxu0
        %v8001 = vadd.f32 0.0, %v8000
        %v8002 = vpop.f32.mrb[0].mxu0
        %8003 = vmatprep.mubr.f32.mxu0 0.0
        %8004 = vmatmul.mubr.f32.gmra.mrb[0].mxu0 %v7139
        %v8005 = vpop.f32.mrb[0].mxu0
        %v8006 = vadd.f32 0.0, %v8005
        %v8007 = vpop.f32.mrb[0].mxu0
        %8008 = vmatprep.mubr.f32.mxu0 0.0
        %8009 = vmatmul.mubr.f32.gmra.mrb[0].mxu0 %v7452
        %v8010 = vpop.f32.mrb[0].mxu0
        %v8011 = vadd.f32 0.0, %v8010
        %v8012 = vpop.f32.mrb[0].mxu0
        %8013 = vmatprep.mubr.f32.mxu0 0.0
        %8014 = vmatmul.mubr.f32.gmra.mrb[0].mxu0 %v7455
        %v8015 = vpop.f32.mrb[0].mxu0
        %v8016 = vadd.f32 0.0, %v8015
        %v8017 = vpop.f32.mrb[0].mxu0
        %8018 = vmatprep.mubr.f32.mxu0 0.0
        %8019 = vmatmul.mubr.f32.gmra.mrb[0].mxu0 %v7458
        %v8020 = vpop.f32.mrb[0].mxu0
        %v8021 = vadd.f32 0.0, %v8020
        %v8022 = vpop.f32.mrb[0].mxu0
        %8023 = vmatprep.mubr.f32.mxu0 0.0
        %8024 = vmatmul.mubr.f32.gmra.mrb[0].mxu0 %v7461
        %v8025 = vpop.f32.mrb[0].mxu0
        %v8026 = vadd.f32 0.0, %v8025
        %v8027 = vpop.f32.mrb[0].mxu0
        %8028 = vmatprep.mubr.f32.mxu0 0.0
        %8029 = vmatmul.mubr.f32.gmra.mrb[0].mxu0 %v7464
        %v8030 = vpop.f32.mrb[0].mxu0
        %v8031 = vadd.f32 0.0, %v8030
        %v8032 = vpop.f32.mrb[0].mxu0
        %8033 = vmatprep.mubr.f32.mxu0 0.0
        %8034 = vmatmul.mubr.f32.gmra.mrb[0].mxu0 %v7777
        %v8035 = vpop.f32.mrb[0].mxu0
        %v8036 = vadd.f32 0.0, %v8035
        %v8037 = vpop.f32.mrb[0].mxu0
        %8038 = vmatprep.mubr.f32.mxu0 0.0
        %8039 = vmatmul.mubr.f32.gmra.mrb[0].mxu0 %v7780
        %v8040 = vpop.f32.mrb[0].mxu0
        %v8041 = vadd.f32 0.0, %v8040
        %v8042 = vpop.f32.mrb[0].mxu0
        %8043 = vmatprep.mubr.f32.mxu0 0.0
        %8044 = vmatmul.mubr.f32.gmra.mrb[0].mxu0 %v7783
        %v8045 = vpop.f32.mrb[0].mxu0
        %v8046 = vadd.f32 0.0, %v8045
        %v8047 = vpop.f32.mrb[0].mxu0
        %8048 = vmatprep.mubr.f32.mxu0 0.0
        %8049 = vmatmul.mubr.f32.gmra.mrb[0].mxu0 %v7786
        %v8050 = vpop.f32.mrb[0].mxu0
        %v8051 = vadd.f32 0.0, %v8050
        %v8052 = vpop.f32.mrb[0].mxu0
        %8053 = vmatprep.mubr.f32.mxu0 0.0
        %8054 = vmatmul.mubr.f32.gmra.mrb[0].mxu0 %v7789
        %v8055 = vpop.f32.mrb[0].mxu0
        %v8056 = vadd.f32 0.0, %v8055
        %v8057 = vpop.f32.mrb[0].mxu0
        %8058 = vdwg.mxu0
        %v8059 = vadd.f32 %v7734, %v7861
        %v8060 = vadd.f32 %v7735, %v7866
        %v8061 = vadd.f32 %v7736, %v7871
        %v8062 = vadd.f32 %v7737, %v7876
        %v8063 = vadd.f32 %v7738, %v7881
        %v8064 = vadd.f32 %v7739, %v7886
        %v8065 = vadd.f32 %v7740, %v7891
        %v8066 = vadd.f32 %v7741, %v7896
        %v8067 = vadd.f32 %v7742, %v7901
        %v8068 = vadd.f32 %v7743, %v7906
        %v8069 = vadd.f32 %v7744, %v7911
        %v8070 = vadd.f32 %v7745, %v7916
        %v8071 = vadd.f32 %v7746, %v7921
        %v8072 = vadd.f32 %v7747, %v7926
        %v8073 = vadd.f32 %v7748, %v7931
        %v8074 = vadd.f32 %v7749, %v7936
        %v8075 = vadd.f32 %v7750, %v7941
        %v8076 = vadd.f32 %v7751, %v7946
        %v8077 = vadd.f32 %v7752, %v7951
        %v8078 = vadd.f32 %v7753, %v7956
        %v8079 = vadd.f32 %v7754, %v7961
        %v8080 = vadd.f32 %v7755, %v7966
        %v8081 = vadd.f32 %v7756, %v7971
        %v8082 = vadd.f32 %v7757, %v7976
        %v8083 = vadd.f32 %v7758, %v7981
        %v8084 = vadd.f32 %v7759, %v7986
        %v8085 = vadd.f32 %v7760, %v7991
        %v8086 = vadd.f32 %v7761, %v7996
        %v8087 = vadd.f32 %v7762, %v8001
        %v8088 = vadd.f32 %v7763, %v8006
        %v8089 = vadd.f32 %v7764, %v8011
        %v8090 = vadd.f32 %v7765, %v8016
        %v8091 = vadd.f32 %v7766, %v8021
        %v8092 = vadd.f32 %v7767, %v8026
        %v8093 = vadd.f32 %v7768, %v8031
        %v8094 = vadd.f32 %v7769, %v8036
        %v8095 = vadd.f32 %v7770, %v8041
        %v8096 = vadd.f32 %v7771, %v8046
        %v8097 = vadd.f32 %v7772, %v8051
        %v8098 = vadd.f32 %v7773, %v8056
        %v8099 = vld [vmem:[%s6] sm:$0x1]
        %v8101 = vlaneseq
        %v8102 = vshrl.u32 %v8101, 7
        %v8103 = vsub.s32 0, %v8102
        %v8104 = vrot.slane %v8099, %v8103
        %v8106 = vadd.f32 %v8059, %v8104
        %v8107 = vadd.f32 %v8060, %v8104
        %v8108 = vadd.f32 %v8061, %v8104
        %v8109 = vadd.f32 %v8062, %v8104
        %v8110 = vadd.f32 %v8063, %v8104
        %v8111 = vadd.f32 %v8064, %v8104
        %v8112 = vadd.f32 %v8065, %v8104
        %v8113 = vadd.f32 %v8066, %v8104
        %v8114 = vadd.f32 %v8067, %v8104
        %v8115 = vadd.f32 %v8068, %v8104
        %v8116 = vadd.f32 %v8069, %v8104
        %v8117 = vadd.f32 %v8070, %v8104
        %v8118 = vadd.f32 %v8071, %v8104
        %v8119 = vadd.f32 %v8072, %v8104
        %v8120 = vadd.f32 %v8073, %v8104
        %v8121 = vadd.f32 %v8074, %v8104
        %v8122 = vadd.f32 %v8075, %v8104
        %v8123 = vadd.f32 %v8076, %v8104
        %v8124 = vadd.f32 %v8077, %v8104
        %v8125 = vadd.f32 %v8078, %v8104
        %v8126 = vadd.f32 %v8079, %v8104
        %v8127 = vadd.f32 %v8080, %v8104
        %v8128 = vadd.f32 %v8081, %v8104
        %v8129 = vadd.f32 %v8082, %v8104
        %v8130 = vadd.f32 %v8083, %v8104
        %v8131 = vadd.f32 %v8084, %v8104
        %v8132 = vadd.f32 %v8085, %v8104
        %v8133 = vadd.f32 %v8086, %v8104
        %v8134 = vadd.f32 %v8087, %v8104
        %v8135 = vadd.f32 %v8088, %v8104
        %v8136 = vadd.f32 %v8089, %v8104
        %v8137 = vadd.f32 %v8090, %v8104
        %v8138 = vadd.f32 %v8091, %v8104
        %v8139 = vadd.f32 %v8092, %v8104
        %v8140 = vadd.f32 %v8093, %v8104
        %v8141 = vadd.f32 %v8094, %v8104
        %v8142 = vadd.f32 %v8095, %v8104
        %v8143 = vadd.f32 %v8096, %v8104
        %v8144 = vadd.f32 %v8097, %v8104
        %v8145 = vadd.f32 %v8098, %v8104
        %v8146 = vmax.f32 %v8106, 0.0
        %v8147 = vmax.f32 %v8107, 0.0
        %v8148 = vmax.f32 %v8108, 0.0
        %v8149 = vmax.f32 %v8109, 0.0
        %v8150 = vmax.f32 %v8110, 0.0
        %v8151 = vmax.f32 %v8111, 0.0
        %v8152 = vmax.f32 %v8112, 0.0
        %v8153 = vmax.f32 %v8113, 0.0
        %v8154 = vmax.f32 %v8114, 0.0
        %v8155 = vmax.f32 %v8115, 0.0
        %v8156 = vmax.f32 %v8116, 0.0
        %v8157 = vmax.f32 %v8117, 0.0
        %v8158 = vmax.f32 %v8118, 0.0
        %v8159 = vmax.f32 %v8119, 0.0
        %v8160 = vmax.f32 %v8120, 0.0
        %v8161 = vmax.f32 %v8121, 0.0
        %v8162 = vmax.f32 %v8122, 0.0
        %v8163 = vmax.f32 %v8123, 0.0
        %v8164 = vmax.f32 %v8124, 0.0
        %v8165 = vmax.f32 %v8125, 0.0
        %v8166 = vmax.f32 %v8126, 0.0
        %v8167 = vmax.f32 %v8127, 0.0
        %v8168 = vmax.f32 %v8128, 0.0
        %v8169 = vmax.f32 %v8129, 0.0
        %v8170 = vmax.f32 %v8130, 0.0
        %v8171 = vmax.f32 %v8131, 0.0
        %v8172 = vmax.f32 %v8132, 0.0
        %v8173 = vmax.f32 %v8133, 0.0
        %v8174 = vmax.f32 %v8134, 0.0
        %v8175 = vmax.f32 %v8135, 0.0
        %v8176 = vmax.f32 %v8136, 0.0
        %v8177 = vmax.f32 %v8137, 0.0
        %v8178 = vmax.f32 %v8138, 0.0
        %v8179 = vmax.f32 %v8139, 0.0
        %v8180 = vmax.f32 %v8140, 0.0
        %v8181 = vmax.f32 %v8141, 0.0
        %v8182 = vmax.f32 %v8142, 0.0
        %v8183 = vmax.f32 %v8143, 0.0
        %v8184 = vmax.f32 %v8144, 0.0
        %v8185 = vmax.f32 %v8145, 0.0
        %v8186 = vld [vmem:[%s7] sm:$0x3f]
        %v8187 = vld [vmem:[%s8] sm:$0x3f]
        %8189 = vset.pattern.permute.xlu0 0
        %8190 = vperm.xlu0 %8189, %v8187
        %v8191 = vpop.permute.xlu0 %8190
        %v8194 = vsel %vm543, %v8186, 0
        %v8197 = vsel %vm543, %v8146, 0
        %v8200 = vsel %vm543, %v8147, 0
        %v8203 = vsel %vm543, %v8148, 0
        %v8206 = vsel %vm543, %v8149, 0
        %v8209 = vsel %vm543, %v8150, 0
        %v8212 = vsel %vm543, %v8151, 0
        %v8215 = vsel %vm543, %v8152, 0
        %v8218 = vsel %vm543, %v8153, 0
        %v8221 = vsel %vm543, %v8154, 0
        %v8224 = vsel %vm543, %v8155, 0
        %v8227 = vsel %vm543, %v8156, 0
        %v8230 = vsel %vm543, %v8157, 0
        %v8233 = vsel %vm543, %v8158, 0
        %v8236 = vsel %vm543, %v8159, 0
        %v8239 = vsel %vm543, %v8160, 0
        %v8242 = vsel %vm543, %v8161, 0
        %v8245 = vsel %vm543, %v8162, 0
        %v8248 = vsel %vm543, %v8163, 0
        %v8251 = vsel %vm543, %v8164, 0
        %v8254 = vsel %vm543, %v8165, 0
        %v8257 = vsel %vm543, %v8166, 0
        %v8260 = vsel %vm543, %v8167, 0
        %v8263 = vsel %vm543, %v8168, 0
        %v8266 = vsel %vm543, %v8169, 0
        %v8269 = vsel %vm543, %v8170, 0
        %v8272 = vsel %vm543, %v8171, 0
        %v8275 = vsel %vm543, %v8172, 0
        %v8278 = vsel %vm543, %v8173, 0
        %v8281 = vsel %vm543, %v8174, 0
        %v8284 = vsel %vm543, %v8175, 0
        %v8287 = vsel %vm543, %v8176, 0
        %v8290 = vsel %vm543, %v8177, 0
        %v8293 = vsel %vm543, %v8178, 0
        %v8296 = vsel %vm543, %v8179, 0
        %v8299 = vsel %vm543, %v8180, 0
        %v8302 = vsel %vm543, %v8181, 0
        %v8305 = vsel %vm543, %v8182, 0
        %v8308 = vsel %vm543, %v8183, 0
        %v8311 = vsel %vm543, %v8184, 0
        %v8314 = vsel %vm543, %v8185, 0
        %8316 = vmatprep.subr.mxu0 0.0
        %8317 = vmatpush1.xpose.msra.mxu0 %v8197
        %8318 = vmatprep.subr.mxu0 0.0
        %8319 = vmatpush1.xpose.msra.mxu0 %v8200
        %8320 = vmatprep.subr.mxu0 0.0
        %8321 = vmatpush1.xpose.msra.mxu0 %v8203
        %8322 = vmatprep.subr.mxu0 0.0
        %8323 = vmatpush1.xpose.msra.mxu0 %v8206
        %8324 = vmatprep.subr.mxu0 0.0
        %8325 = vmatpush1.xpose.msra.mxu0 %v8209
        %8326 = vmatprep.subr.mxu0 0.0
        %8327 = vmatpush1.xpose.msra.mxu0 %v8212
        %8328 = vmatprep.subr.mxu0 0.0
        %8329 = vmatpush1.xpose.msra.mxu0 %v8215
        %8330 = vmatprep.subr.mxu0 0.0
        %8331 = vmatpush1.xpose.msra.mxu0 %v8218
        %8332 = vmatprep.subr.mxu0 0.0
        %8333 = vmatpush1.xpose.msra.mxu0 %v8221
        %8334 = vmatprep.subr.mxu0 0.0
        %8335 = vmatpush1.xpose.msra.mxu0 %v8224
        %8336 = vmatprep.subr.mxu0 0.0
        %8337 = vmatpush1.xpose.msra.mxu0 %v8227
        %8338 = vmatprep.subr.mxu0 0.0
        %8339 = vmatpush1.xpose.msra.mxu0 %v8230
        %8340 = vmatprep.subr.mxu0 0.0
        %8341 = vmatpush1.xpose.msra.mxu0 %v8233
        %8342 = vmatprep.subr.mxu0 0.0
        %8343 = vmatpush1.xpose.msra.mxu0 %v8236
        %8344 = vmatprep.subr.mxu0 0.0
        %8345 = vmatpush1.xpose.msra.mxu0 %v8239
        %8346 = vmatprep.subr.mxu0 0.0
        %8347 = vmatpush1.xpose.msra.mxu0 %v8242
        %8348 = vmatprep.subr.mxu0 0.0
        %8349 = vmatpush1.xpose.msra.mxu0 %v8245
        %8350 = vmatprep.subr.mxu0 0.0
        %8351 = vmatpush1.xpose.msra.mxu0 %v8248
        %8352 = vmatprep.subr.mxu0 0.0
        %8353 = vmatpush1.xpose.msra.mxu0 %v8251
        %8354 = vmatprep.subr.mxu0 0.0
        %8355 = vmatpush1.xpose.msra.mxu0 %v8254
        %8356 = vmatprep.subr.mxu0 0.0
        %8357 = vmatpush1.xpose.msra.mxu0 %v8257
        %8358 = vmatprep.subr.mxu0 0.0
        %8359 = vmatpush1.xpose.msra.mxu0 %v8260
        %8360 = vmatprep.subr.mxu0 0.0
        %8361 = vmatpush1.xpose.msra.mxu0 %v8263
        %8362 = vmatprep.subr.mxu0 0.0
        %8363 = vmatpush1.xpose.msra.mxu0 %v8266
        %8364 = vmatprep.subr.mxu0 0.0
        %8365 = vmatpush1.xpose.msra.mxu0 %v8269
        %8366 = vmatprep.subr.mxu0 0.0
        %8367 = vmatpush1.xpose.msra.mxu0 %v8272
        %8368 = vmatprep.subr.mxu0 0.0
        %8369 = vmatpush1.xpose.msra.mxu0 %v8275
        %8370 = vmatprep.subr.mxu0 0.0
        %8371 = vmatpush1.xpose.msra.mxu0 %v8278
        %8372 = vmatprep.subr.mxu0 0.0
        %8373 = vmatpush1.xpose.msra.mxu0 %v8281
        %8374 = vmatprep.subr.mxu0 0.0
        %8375 = vmatpush1.xpose.msra.mxu0 %v8284
        %8376 = vmatprep.subr.mxu0 0.0
        %8377 = vmatpush1.xpose.msra.mxu0 %v8287
        %8378 = vmatprep.subr.mxu0 0.0
        %8379 = vmatpush1.xpose.msra.mxu0 %v8290
        %8380 = vmatprep.mubr.f32.mxu0 0.0
        %8381 = vmatmul.mubr.f32.gmra.mrb[0].mxu0 %v8194
        %v8382 = vpop.f32.mrb[0].mxu0
        %v8383 = vadd.f32 %v8191, %v8382
        %v8384 = vpop.f32.mrb[0].mxu0
        %v8385 = vadd.f32 %v8191, %v8384
        %8386 = vdwg.mxu0
        %8387 = vmatprep.subr.mxu0 0.0
        %8388 = vmatpush1.xpose.msra.mxu0 %v8293
        %8389 = vmatprep.subr.mxu0 0.0
        %8390 = vmatpush1.xpose.msra.mxu0 %v8296
        %8391 = vmatprep.subr.mxu0 0.0
        %8392 = vmatpush1.xpose.msra.mxu0 %v8299
        %8393 = vmatprep.subr.mxu0 0.0
        %8394 = vmatpush1.xpose.msra.mxu0 %v8302
        %8395 = vmatprep.subr.mxu0 0.0
        %8396 = vmatpush1.xpose.msra.mxu0 %v8305
        %8397 = vmatprep.subr.mxu0 0.0
        %8398 = vmatpush1.xpose.msra.mxu0 %v8308
        %8399 = vmatprep.subr.mxu0 0.0
        %8400 = vmatpush1.xpose.msra.mxu0 %v8311
        %8401 = vmatprep.subr.mxu0 0.0
        %8402 = vmatpush1.xpose.msra.mxu0 %v8314
        %8403 = vmatprep.subr.mxu0 0.0
        %8404 = vmatpush1.xpose.msra.mxu0 0.0
        %8405 = vmatprep.subr.mxu0 0.0
        %8406 = vmatpush1.xpose.msra.mxu0 0.0
        %8407 = vmatprep.subr.mxu0 0.0
        %8408 = vmatpush1.xpose.msra.mxu0 0.0
        %8409 = vmatprep.subr.mxu0 0.0
        %8410 = vmatpush1.xpose.msra.mxu0 0.0
        %8411 = vmatprep.subr.mxu0 0.0
        %8412 = vmatpush1.xpose.msra.mxu0 0.0
        %8413 = vmatprep.subr.mxu0 0.0
        %8414 = vmatpush1.xpose.msra.mxu0 0.0
        %8415 = vmatprep.subr.mxu0 0.0
        %8416 = vmatpush1.xpose.msra.mxu0 0.0
        %8417 = vmatprep.subr.mxu0 0.0
        %8418 = vmatpush1.xpose.msra.mxu0 0.0
        %8419 = vmatprep.subr.mxu0 0.0
        %8420 = vmatpush1.xpose.msra.mxu0 0.0
        %8421 = vmatprep.subr.mxu0 0.0
        %8422 = vmatpush1.xpose.msra.mxu0 0.0
        %8423 = vmatprep.subr.mxu0 0.0
        %8424 = vmatpush1.xpose.msra.mxu0 0.0
        %8425 = vmatprep.subr.mxu0 0.0
        %8426 = vmatpush1.xpose.msra.mxu0 0.0
        %8427 = vmatprep.subr.mxu0 0.0
        %8428 = vmatpush1.xpose.msra.mxu0 0.0
        %8429 = vmatprep.subr.mxu0 0.0
        %8430 = vmatpush1.xpose.msra.mxu0 0.0
        %8431 = vmatprep.subr.mxu0 0.0
        %8432 = vmatpush1.xpose.msra.mxu0 0.0
        %8433 = vmatprep.subr.mxu0 0.0
        %8434 = vmatpush1.xpose.msra.mxu0 0.0
        %8435 = vmatprep.subr.mxu0 0.0
        %8436 = vmatpush1.xpose.msra.mxu0 0.0
        %8437 = vmatprep.subr.mxu0 0.0
        %8438 = vmatpush1.xpose.msra.mxu0 0.0
        %8439 = vmatprep.subr.mxu0 0.0
        %8440 = vmatpush1.xpose.msra.mxu0 0.0
        %8441 = vmatprep.subr.mxu0 0.0
        %8442 = vmatpush1.xpose.msra.mxu0 0.0
        %8443 = vmatprep.subr.mxu0 0.0
        %8444 = vmatpush1.xpose.msra.mxu0 0.0
        %8445 = vmatprep.subr.mxu0 0.0
        %8446 = vmatpush1.xpose.msra.mxu0 0.0
        %8447 = vmatprep.subr.mxu0 0.0
        %8448 = vmatpush1.xpose.msra.mxu0 0.0
        %8449 = vmatprep.subr.mxu0 0.0
        %8450 = vmatpush1.xpose.msra.mxu0 0.0
        %8451 = vmatprep.mubr.f32.mxu0 0.0
        %8452 = vmatmul.mubr.f32.gmra.mrb[0].mxu0 %v8194
        %v8453 = vpop.f32.mrb[0].mxu0
        %v8454 = vadd.f32 %v8191, %v8453
        %v8455 = vpop.f32.mrb[0].mxu0
        %8456 = vdwg.mxu0
        %v8457 = vsub.f32 0.0, %v8383
        %v8458 = vsub.f32 0.0, %v8385
        %v8459 = vsub.f32 0.0, %v8454
        %v8460 = vmul.f32 %v8457, 1.442695
        %v8461 = vpow.pop %v8460
        %v8462 = vmul.f32 %v8458, 1.442695
        %v8463 = vpow.pop %v8462
        %v8464 = vmul.f32 %v8459, 1.442695
        %v8465 = vpow.pop %v8464
        %v8466 = vadd.f32 %v8461, 1.0
        %v8467 = vadd.f32 %v8463, 1.0
        %v8468 = vadd.f32 %v8465, 1.0
        %v8469 = vrcp.pop %v8466
        %v8470 = vrcp.pop %v8467
        %v8471 = vrcp.pop %v8468
        %v8473 = vcombine.high %v8469, %v8469
        %v8475 = vunpack.c.l.s4 1966171168
        %v8476 = vunpack.c.0.s8 %v8475
        %v8477 = vlaneseq
        %v8478 = vshrl.u32 %v8477, 7
        %v8479 = vsub.s32 %v8476, %v8478
        %v8480 = vrot.slane %v8469, %v8479
        %v8482 = vunpack.c.l.s4 1966171168
        %v8483 = vunpack.c.0.s8 %v8482
        %v8484 = vlaneseq
        %v8485 = vshrl.u32 %v8484, 7
        %v8486 = vsub.s32 %v8483, %v8485
        %v8487 = vrot.slane %v8473, %v8486
        %v8488 = vcombine.high %v8480, %v8480
        %v8489 = vcombine.high %v8487, %v8487
        %v8491 = vunpack.c.l.s4 1966171168
        %v8492 = vunpack.c.0.s8 %v8491
        %v8493 = vlaneseq
        %v8494 = vshrl.u32 %v8493, 7
        %v8495 = vsub.s32 %v8492, %v8494
        %v8496 = vrot.slane %v8480, %v8495
        %v8498 = vunpack.c.l.s4 1966171168
        %v8499 = vunpack.c.0.s8 %v8498
        %v8500 = vlaneseq
        %v8501 = vshrl.u32 %v8500, 7
        %v8502 = vsub.s32 %v8499, %v8501
        %v8503 = vrot.slane %v8487, %v8502
        %v8505 = vunpack.c.l.s4 1966171168
        %v8506 = vunpack.c.0.s8 %v8505
        %v8507 = vlaneseq
        %v8508 = vshrl.u32 %v8507, 7
        %v8509 = vsub.s32 %v8506, %v8508
        %v8510 = vrot.slane %v8488, %v8509
        %v8512 = vunpack.c.l.s4 1966171168
        %v8513 = vunpack.c.0.s8 %v8512
        %v8514 = vlaneseq
        %v8515 = vshrl.u32 %v8514, 7
        %v8516 = vsub.s32 %v8513, %v8515
        %v8517 = vrot.slane %v8489, %v8516
        %v8518 = vcombine.high %v8496, %v8496
        %v8519 = vcombine.high %v8510, %v8510
        %vm8526 = vcmask 319488
        %8527 = vst.msk [vmem:[%s319] sm:$0x1] %vm8526, %v8496
        %8528 = vst.msk [vmem:[%s319 + $0x8] sm:$0x1] %vm8526, %v8510
        %8529 = vst.msk [vmem:[%s319 + $0x10] sm:$0x1] %vm8526, %v8518
        %8530 = vst.msk [vmem:[%s319 + $0x18] sm:$0x1] %vm8526, %v8519
        %8531 = vst.msk [vmem:[%s319 + $0x20] sm:$0x1] %vm8526, %v8503
        %8532 = vst.msk [vmem:[%s319 + $0x28] sm:$0x1] %vm8526, %v8517
        %v8533 = vlaneseq
        %v8534 = vshrl.u32 %v8533, 7
        %v8535 = vsub.s32 0, %v8534
        %v8536 = vrot.slane %v8496, %v8535
        %v8537 = vlaneseq
        %v8538 = vshrl.u32 %v8537, 7
        %v8539 = vsub.s32 0, %v8538
        %v8540 = vrot.slane %v8510, %v8539
        %v8541 = vlaneseq
        %v8542 = vshrl.u32 %v8541, 7
        %v8543 = vsub.s32 0, %v8542
        %v8544 = vrot.slane %v8518, %v8543
        %v8545 = vlaneseq
        %v8546 = vshrl.u32 %v8545, 7
        %v8547 = vsub.s32 0, %v8546
        %v8548 = vrot.slane %v8519, %v8547
        %v8549 = vlaneseq
        %v8550 = vshrl.u32 %v8549, 7
        %v8551 = vsub.s32 0, %v8550
        %v8552 = vrot.slane %v8503, %v8551
        %v8553 = vlaneseq
        %v8554 = vshrl.u32 %v8553, 7
        %v8555 = vsub.s32 0, %v8554
        %v8556 = vrot.slane %v8517, %v8555
        %8557 = vrot.lane.b32.xlu0 %v8536, 88
        %v8558 = vpop.permute.xlu0 %8557
        %8559 = vrot.lane.b32.xlu0 %v8540, 88
        %v8560 = vpop.permute.xlu0 %8559
        %8561 = vrot.lane.b32.xlu0 %v8544, 88
        %v8562 = vpop.permute.xlu0 %8561
        %8563 = vrot.lane.b32.xlu0 %v8548, 88
        %v8564 = vpop.permute.xlu0 %8563
        %8565 = vrot.lane.b32.xlu0 %v8552, 88
        %v8566 = vpop.permute.xlu0 %8565
        %8567 = vrot.lane.b32.xlu0 %v8556, 88
        %v8568 = vpop.permute.xlu0 %8567
        %8575 = vst.msk [vmem:[%s319 + $0x1] sm:$0x1] %vm8526, %v8558
        %8576 = vst.msk [vmem:[%s319 + $0x9] sm:$0x1] %vm8526, %v8560
        %8577 = vst.msk [vmem:[%s319 + $0x11] sm:$0x1] %vm8526, %v8562
        %8578 = vst.msk [vmem:[%s319 + $0x19] sm:$0x1] %vm8526, %v8564
        %8579 = vst.msk [vmem:[%s319 + $0x21] sm:$0x1] %vm8526, %v8566
        %8580 = vst.msk [vmem:[%s319 + $0x29] sm:$0x1] %vm8526, %v8568
        %8581 = vrot.lane.b32.xlu0 %v8536, 48
        %v8582 = vpop.permute.xlu0 %8581
        %8583 = vrot.lane.b32.xlu0 %v8540, 48
        %v8584 = vpop.permute.xlu0 %8583
        %8585 = vrot.lane.b32.xlu0 %v8544, 48
        %v8586 = vpop.permute.xlu0 %8585
        %8587 = vrot.lane.b32.xlu0 %v8548, 48
        %v8588 = vpop.permute.xlu0 %8587
        %8589 = vrot.lane.b32.xlu0 %v8552, 48
        %v8590 = vpop.permute.xlu0 %8589
        %8591 = vrot.lane.b32.xlu0 %v8556, 48
        %v8592 = vpop.permute.xlu0 %8591
        %8599 = vst.msk [vmem:[%s319 + $0x2] sm:$0x1] %vm8526, %v8582
        %8600 = vst.msk [vmem:[%s319 + $0xa] sm:$0x1] %vm8526, %v8584
        %8601 = vst.msk [vmem:[%s319 + $0x12] sm:$0x1] %vm8526, %v8586
        %8602 = vst.msk [vmem:[%s319 + $0x1a] sm:$0x1] %vm8526, %v8588
        %8603 = vst.msk [vmem:[%s319 + $0x22] sm:$0x1] %vm8526, %v8590
        %8604 = vst.msk [vmem:[%s319 + $0x2a] sm:$0x1] %vm8526, %v8592
        %v8606 = vcombine.low %v8469, %v8470
        %v8607 = vcombine.high %v8469, %v8470
        %v8609 = vunpack.c.l.s4 1966171168
        %v8610 = vunpack.c.0.s8 %v8609
        %v8611 = vlaneseq
        %v8612 = vshrl.u32 %v8611, 7
        %v8613 = vsub.s32 %v8610, %v8612
        %v8614 = vrot.slane %v8606, %v8613
        %v8616 = vunpack.c.l.s4 1966171168
        %v8617 = vunpack.c.0.s8 %v8616
        %v8618 = vlaneseq
        %v8619 = vshrl.u32 %v8618, 7
        %v8620 = vsub.s32 %v8617, %v8619
        %v8621 = vrot.slane %v8607, %v8620
        %v8622 = vcombine.high %v8614, %v8614
        %v8623 = vcombine.high %v8621, %v8621
        %v8625 = vunpack.c.l.s4 1966171168
        %v8626 = vunpack.c.0.s8 %v8625
        %v8627 = vlaneseq
        %v8628 = vshrl.u32 %v8627, 7
        %v8629 = vsub.s32 %v8626, %v8628
        %v8630 = vrot.slane %v8614, %v8629
        %v8632 = vunpack.c.l.s4 1966171168
        %v8633 = vunpack.c.0.s8 %v8632
        %v8634 = vlaneseq
        %v8635 = vshrl.u32 %v8634, 7
        %v8636 = vsub.s32 %v8633, %v8635
        %v8637 = vrot.slane %v8621, %v8636
        %v8639 = vunpack.c.l.s4 1966171168
        %v8640 = vunpack.c.0.s8 %v8639
        %v8641 = vlaneseq
        %v8642 = vshrl.u32 %v8641, 7
        %v8643 = vsub.s32 %v8640, %v8642
        %v8644 = vrot.slane %v8622, %v8643
        %v8646 = vunpack.c.l.s4 1966171168
        %v8647 = vunpack.c.0.s8 %v8646
        %v8648 = vlaneseq
        %v8649 = vshrl.u32 %v8648, 7
        %v8650 = vsub.s32 %v8647, %v8649
        %v8651 = vrot.slane %v8623, %v8650
        %v8652 = vcombine.high %v8630, %v8630
        %v8653 = vcombine.high %v8644, %v8644
        %v8654 = vlaneseq
        %v8655 = vshrl.u32 %v8654, 7
        %v8656 = vsub.s32 0, %v8655
        %v8657 = vrot.slane %v8630, %v8656
        %v8658 = vlaneseq
        %v8659 = vshrl.u32 %v8658, 7
        %v8660 = vsub.s32 1, %v8659
        %v8661 = vrot.slane %v8630, %v8660
        %v8662 = vlaneseq
        %v8663 = vshrl.u32 %v8662, 7
        %v8664 = vsub.s32 0, %v8663
        %v8665 = vrot.slane %v8644, %v8664
        %v8666 = vlaneseq
        %v8667 = vshrl.u32 %v8666, 7
        %v8668 = vsub.s32 1, %v8667
        %v8669 = vrot.slane %v8644, %v8668
        %v8670 = vlaneseq
        %v8671 = vshrl.u32 %v8670, 7
        %v8672 = vsub.s32 0, %v8671
        %v8673 = vrot.slane %v8652, %v8672
        %v8674 = vlaneseq
        %v8675 = vshrl.u32 %v8674, 7
        %v8676 = vsub.s32 1, %v8675
        %v8677 = vrot.slane %v8652, %v8676
        %v8678 = vlaneseq
        %v8679 = vshrl.u32 %v8678, 7
        %v8680 = vsub.s32 0, %v8679
        %v8681 = vrot.slane %v8653, %v8680
        %v8682 = vlaneseq
        %v8683 = vshrl.u32 %v8682, 7
        %v8684 = vsub.s32 1, %v8683
        %v8685 = vrot.slane %v8653, %v8684
        %v8686 = vlaneseq
        %v8687 = vshrl.u32 %v8686, 7
        %v8688 = vsub.s32 0, %v8687
        %v8689 = vrot.slane %v8637, %v8688
        %v8690 = vlaneseq
        %v8691 = vshrl.u32 %v8690, 7
        %v8692 = vsub.s32 1, %v8691
        %v8693 = vrot.slane %v8637, %v8692
        %v8694 = vlaneseq
        %v8695 = vshrl.u32 %v8694, 7
        %v8696 = vsub.s32 0, %v8695
        %v8697 = vrot.slane %v8651, %v8696
        %v8698 = vlaneseq
        %v8699 = vshrl.u32 %v8698, 7
        %v8700 = vsub.s32 1, %v8699
        %v8701 = vrot.slane %v8651, %v8700
        %8702 = vrot.lane.b32.xlu0 %v8657, 8
        %v8703 = vpop.permute.xlu0 %8702
        %8704 = vrot.lane.b32.xlu0 %v8661, 8
        %v8705 = vpop.permute.xlu0 %8704
        %8706 = vrot.lane.b32.xlu0 %v8665, 8
        %v8707 = vpop.permute.xlu0 %8706
        %8708 = vrot.lane.b32.xlu0 %v8669, 8
        %v8709 = vpop.permute.xlu0 %8708
        %8710 = vrot.lane.b32.xlu0 %v8673, 8
        %v8711 = vpop.permute.xlu0 %8710
        %8712 = vrot.lane.b32.xlu0 %v8677, 8
        %v8713 = vpop.permute.xlu0 %8712
        %8714 = vrot.lane.b32.xlu0 %v8681, 8
        %v8715 = vpop.permute.xlu0 %8714
        %8716 = vrot.lane.b32.xlu0 %v8685, 8
        %v8717 = vpop.permute.xlu0 %8716
        %8718 = vrot.lane.b32.xlu0 %v8689, 8
        %v8719 = vpop.permute.xlu0 %8718
        %8720 = vrot.lane.b32.xlu0 %v8693, 8
        %v8721 = vpop.permute.xlu0 %8720
        %8722 = vrot.lane.b32.xlu0 %v8697, 8
        %v8723 = vpop.permute.xlu0 %8722
        %8724 = vrot.lane.b32.xlu0 %v8701, 8
        %v8725 = vpop.permute.xlu0 %8724
        %vm8726 = vcmask 64512
        %v8727 = vsel %vm8726, %v8703, %v8705
        %v8728 = vsel %vm8726, %v8707, %v8709
        %v8729 = vsel %vm8726, %v8711, %v8713
        %v8730 = vsel %vm8726, %v8715, %v8717
        %v8731 = vsel %vm8726, %v8719, %v8721
        %v8732 = vsel %vm8726, %v8723, %v8725
        %8739 = vst.msk [vmem:[%s319 + $0x3] sm:$0x1] %vm8526, %v8727
        %8740 = vst.msk [vmem:[%s319 + $0xb] sm:$0x1] %vm8526, %v8728
        %8741 = vst.msk [vmem:[%s319 + $0x13] sm:$0x1] %vm8526, %v8729
        %8742 = vst.msk [vmem:[%s319 + $0x1b] sm:$0x1] %vm8526, %v8730
        %8743 = vst.msk [vmem:[%s319 + $0x23] sm:$0x1] %vm8526, %v8731
        %8744 = vst.msk [vmem:[%s319 + $0x2b] sm:$0x1] %vm8526, %v8732
        %v8745 = vcombine.high %v8470, %v8470
        %v8747 = vunpack.c.l.s4 1966171168
        %v8748 = vunpack.c.0.s8 %v8747
        %v8749 = vlaneseq
        %v8750 = vshrl.u32 %v8749, 7
        %v8751 = vsub.s32 %v8748, %v8750
        %v8752 = vrot.slane %v8470, %v8751
        %v8754 = vunpack.c.l.s4 1966171168
        %v8755 = vunpack.c.0.s8 %v8754
        %v8756 = vlaneseq
        %v8757 = vshrl.u32 %v8756, 7
        %v8758 = vsub.s32 %v8755, %v8757
        %v8759 = vrot.slane %v8745, %v8758
        %v8760 = vcombine.high %v8752, %v8752
        %v8761 = vcombine.high %v8759, %v8759
        %v8763 = vunpack.c.l.s4 1966171168
        %v8764 = vunpack.c.0.s8 %v8763
        %v8765 = vlaneseq
        %v8766 = vshrl.u32 %v8765, 7
        %v8767 = vsub.s32 %v8764, %v8766
        %v8768 = vrot.slane %v8752, %v8767
        %v8770 = vunpack.c.l.s4 1966171168
        %v8771 = vunpack.c.0.s8 %v8770
        %v8772 = vlaneseq
        %v8773 = vshrl.u32 %v8772, 7
        %v8774 = vsub.s32 %v8771, %v8773
        %v8775 = vrot.slane %v8759, %v8774
        %v8777 = vunpack.c.l.s4 1966171168
        %v8778 = vunpack.c.0.s8 %v8777
        %v8779 = vlaneseq
        %v8780 = vshrl.u32 %v8779, 7
        %v8781 = vsub.s32 %v8778, %v8780
        %v8782 = vrot.slane %v8760, %v8781
        %v8784 = vunpack.c.l.s4 1966171168
        %v8785 = vunpack.c.0.s8 %v8784
        %v8786 = vlaneseq
        %v8787 = vshrl.u32 %v8786, 7
        %v8788 = vsub.s32 %v8785, %v8787
        %v8789 = vrot.slane %v8761, %v8788
        %v8790 = vcombine.high %v8768, %v8768
        %v8791 = vcombine.high %v8782, %v8782
        %v8792 = vlaneseq
        %v8793 = vshrl.u32 %v8792, 7
        %v8794 = vsub.s32 0, %v8793
        %v8795 = vrot.slane %v8768, %v8794
        %v8796 = vlaneseq
        %v8797 = vshrl.u32 %v8796, 7
        %v8798 = vsub.s32 0, %v8797
        %v8799 = vrot.slane %v8782, %v8798
        %v8800 = vlaneseq
        %v8801 = vshrl.u32 %v8800, 7
        %v8802 = vsub.s32 0, %v8801
        %v8803 = vrot.slane %v8790, %v8802
        %v8804 = vlaneseq
        %v8805 = vshrl.u32 %v8804, 7
        %v8806 = vsub.s32 0, %v8805
        %v8807 = vrot.slane %v8791, %v8806
        %v8808 = vlaneseq
        %v8809 = vshrl.u32 %v8808, 7
        %v8810 = vsub.s32 0, %v8809
        %v8811 = vrot.slane %v8775, %v8810
        %v8812 = vlaneseq
        %v8813 = vshrl.u32 %v8812, 7
        %v8814 = vsub.s32 0, %v8813
        %v8815 = vrot.slane %v8789, %v8814
        %8816 = vrot.lane.b32.xlu0 %v8795, 96
        %v8817 = vpop.permute.xlu0 %8816
        %8818 = vrot.lane.b32.xlu0 %v8799, 96
        %v8819 = vpop.permute.xlu0 %8818
        %8820 = vrot.lane.b32.xlu0 %v8803, 96
        %v8821 = vpop.permute.xlu0 %8820
        %8822 = vrot.lane.b32.xlu0 %v8807, 96
        %v8823 = vpop.permute.xlu0 %8822
        %8824 = vrot.lane.b32.xlu0 %v8811, 96
        %v8825 = vpop.permute.xlu0 %8824
        %8826 = vrot.lane.b32.xlu0 %v8815, 96
        %v8827 = vpop.permute.xlu0 %8826
        %8834 = vst.msk [vmem:[%s319 + $0x4] sm:$0x1] %vm8526, %v8817
        %8835 = vst.msk [vmem:[%s319 + $0xc] sm:$0x1] %vm8526, %v8819
        %8836 = vst.msk [vmem:[%s319 + $0x14] sm:$0x1] %vm8526, %v8821
        %8837 = vst.msk [vmem:[%s319 + $0x1c] sm:$0x1] %vm8526, %v8823
        %8838 = vst.msk [vmem:[%s319 + $0x24] sm:$0x1] %vm8526, %v8825
        %8839 = vst.msk [vmem:[%s319 + $0x2c] sm:$0x1] %vm8526, %v8827
        %8840 = vrot.lane.b32.xlu0 %v8795, 56
        %v8841 = vpop.permute.xlu0 %8840
        %8842 = vrot.lane.b32.xlu0 %v8799, 56
        %v8843 = vpop.permute.xlu0 %8842
        %8844 = vrot.lane.b32.xlu0 %v8803, 56
        %v8845 = vpop.permute.xlu0 %8844
        %8846 = vrot.lane.b32.xlu0 %v8807, 56
        %v8847 = vpop.permute.xlu0 %8846
        %8848 = vrot.lane.b32.xlu0 %v8811, 56
        %v8849 = vpop.permute.xlu0 %8848
        %8850 = vrot.lane.b32.xlu0 %v8815, 56
        %v8851 = vpop.permute.xlu0 %8850
        %8858 = vst.msk [vmem:[%s319 + $0x5] sm:$0x1] %vm8526, %v8841
        %8859 = vst.msk [vmem:[%s319 + $0xd] sm:$0x1] %vm8526, %v8843
        %8860 = vst.msk [vmem:[%s319 + $0x15] sm:$0x1] %vm8526, %v8845
        %8861 = vst.msk [vmem:[%s319 + $0x1d] sm:$0x1] %vm8526, %v8847
        %8862 = vst.msk [vmem:[%s319 + $0x25] sm:$0x1] %vm8526, %v8849
        %8863 = vst.msk [vmem:[%s319 + $0x2d] sm:$0x1] %vm8526, %v8851
        %v8865 = vcombine.low %v8470, %v8471
        %v8866 = vcombine.high %v8470, %v8471
        %v8868 = vunpack.c.l.s4 1966171168
        %v8869 = vunpack.c.0.s8 %v8868
        %v8870 = vlaneseq
        %v8871 = vshrl.u32 %v8870, 7
        %v8872 = vsub.s32 %v8869, %v8871
        %v8873 = vrot.slane %v8865, %v8872
        %v8875 = vunpack.c.l.s4 1966171168
        %v8876 = vunpack.c.0.s8 %v8875
        %v8877 = vlaneseq
        %v8878 = vshrl.u32 %v8877, 7
        %v8879 = vsub.s32 %v8876, %v8878
        %v8880 = vrot.slane %v8866, %v8879
        %v8881 = vcombine.high %v8873, %v8873
        %v8882 = vcombine.high %v8880, %v8880
        %v8884 = vunpack.c.l.s4 1966171168
        %v8885 = vunpack.c.0.s8 %v8884
        %v8886 = vlaneseq
        %v8887 = vshrl.u32 %v8886, 7
        %v8888 = vsub.s32 %v8885, %v8887
        %v8889 = vrot.slane %v8873, %v8888
        %v8891 = vunpack.c.l.s4 1966171168
        %v8892 = vunpack.c.0.s8 %v8891
        %v8893 = vlaneseq
        %v8894 = vshrl.u32 %v8893, 7
        %v8895 = vsub.s32 %v8892, %v8894
        %v8896 = vrot.slane %v8880, %v8895
        %v8898 = vunpack.c.l.s4 1966171168
        %v8899 = vunpack.c.0.s8 %v8898
        %v8900 = vlaneseq
        %v8901 = vshrl.u32 %v8900, 7
        %v8902 = vsub.s32 %v8899, %v8901
        %v8903 = vrot.slane %v8881, %v8902
        %v8905 = vunpack.c.l.s4 1966171168
        %v8906 = vunpack.c.0.s8 %v8905
        %v8907 = vlaneseq
        %v8908 = vshrl.u32 %v8907, 7
        %v8909 = vsub.s32 %v8906, %v8908
        %v8910 = vrot.slane %v8882, %v8909
        %v8911 = vcombine.high %v8889, %v8889
        %v8912 = vcombine.high %v8903, %v8903
        %v8913 = vlaneseq
        %v8914 = vshrl.u32 %v8913, 7
        %v8915 = vsub.s32 0, %v8914
        %v8916 = vrot.slane %v8889, %v8915
        %v8917 = vlaneseq
        %v8918 = vshrl.u32 %v8917, 7
        %v8919 = vsub.s32 1, %v8918
        %v8920 = vrot.slane %v8889, %v8919
        %v8921 = vlaneseq
        %v8922 = vshrl.u32 %v8921, 7
        %v8923 = vsub.s32 0, %v8922
        %v8924 = vrot.slane %v8903, %v8923
        %v8925 = vlaneseq
        %v8926 = vshrl.u32 %v8925, 7
        %v8927 = vsub.s32 1, %v8926
        %v8928 = vrot.slane %v8903, %v8927
        %v8929 = vlaneseq
        %v8930 = vshrl.u32 %v8929, 7
        %v8931 = vsub.s32 0, %v8930
        %v8932 = vrot.slane %v8911, %v8931
        %v8933 = vlaneseq
        %v8934 = vshrl.u32 %v8933, 7
        %v8935 = vsub.s32 1, %v8934
        %v8936 = vrot.slane %v8911, %v8935
        %v8937 = vlaneseq
        %v8938 = vshrl.u32 %v8937, 7
        %v8939 = vsub.s32 0, %v8938
        %v8940 = vrot.slane %v8912, %v8939
        %v8941 = vlaneseq
        %v8942 = vshrl.u32 %v8941, 7
        %v8943 = vsub.s32 1, %v8942
        %v8944 = vrot.slane %v8912, %v8943
        %v8945 = vlaneseq
        %v8946 = vshrl.u32 %v8945, 7
        %v8947 = vsub.s32 0, %v8946
        %v8948 = vrot.slane %v8896, %v8947
        %v8949 = vlaneseq
        %v8950 = vshrl.u32 %v8949, 7
        %v8951 = vsub.s32 1, %v8950
        %v8952 = vrot.slane %v8896, %v8951
        %v8953 = vlaneseq
        %v8954 = vshrl.u32 %v8953, 7
        %v8955 = vsub.s32 0, %v8954
        %v8956 = vrot.slane %v8910, %v8955
        %v8957 = vlaneseq
        %v8958 = vshrl.u32 %v8957, 7
        %v8959 = vsub.s32 1, %v8958
        %v8960 = vrot.slane %v8910, %v8959
        %8961 = vrot.lane.b32.xlu0 %v8916, 16
        %v8962 = vpop.permute.xlu0 %8961
        %8963 = vrot.lane.b32.xlu0 %v8920, 16
        %v8964 = vpop.permute.xlu0 %8963
        %8965 = vrot.lane.b32.xlu0 %v8924, 16
        %v8966 = vpop.permute.xlu0 %8965
        %8967 = vrot.lane.b32.xlu0 %v8928, 16
        %v8968 = vpop.permute.xlu0 %8967
        %8969 = vrot.lane.b32.xlu0 %v8932, 16
        %v8970 = vpop.permute.xlu0 %8969
        %8971 = vrot.lane.b32.xlu0 %v8936, 16
        %v8972 = vpop.permute.xlu0 %8971
        %8973 = vrot.lane.b32.xlu0 %v8940, 16
        %v8974 = vpop.permute.xlu0 %8973
        %8975 = vrot.lane.b32.xlu0 %v8944, 16
        %v8976 = vpop.permute.xlu0 %8975
        %8977 = vrot.lane.b32.xlu0 %v8948, 16
        %v8978 = vpop.permute.xlu0 %8977
        %8979 = vrot.lane.b32.xlu0 %v8952, 16
        %v8980 = vpop.permute.xlu0 %8979
        %8981 = vrot.lane.b32.xlu0 %v8956, 16
        %v8982 = vpop.permute.xlu0 %8981
        %8983 = vrot.lane.b32.xlu0 %v8960, 16
        %v8984 = vpop.permute.xlu0 %8983
        %vm8985 = vcmask 130048
        %v8986 = vsel %vm8985, %v8962, %v8964
        %v8987 = vsel %vm8985, %v8966, %v8968
        %v8988 = vsel %vm8985, %v8970, %v8972
        %v8989 = vsel %vm8985, %v8974, %v8976
        %v8990 = vsel %vm8985, %v8978, %v8980
        %v8991 = vsel %vm8985, %v8982, %v8984
        %8998 = vst.msk [vmem:[%s319 + $0x6] sm:$0x1] %vm8526, %v8986
        %8999 = vst.msk [vmem:[%s319 + $0xe] sm:$0x1] %vm8526, %v8987
        %9000 = vst.msk [vmem:[%s319 + $0x16] sm:$0x1] %vm8526, %v8988
        %9001 = vst.msk [vmem:[%s319 + $0x1e] sm:$0x1] %vm8526, %v8989
        %9002 = vst.msk [vmem:[%s319 + $0x26] sm:$0x1] %vm8526, %v8990
        %9003 = vst.msk [vmem:[%s319 + $0x2e] sm:$0x1] %vm8526, %v8991
        %v9004 = vcombine.high %v8471, %v8471
        %v9006 = vunpack.c.l.s4 1966171168
        %v9007 = vunpack.c.0.s8 %v9006
        %v9008 = vlaneseq
        %v9009 = vshrl.u32 %v9008, 7
        %v9010 = vsub.s32 %v9007, %v9009
        %v9011 = vrot.slane %v8471, %v9010
        %v9013 = vunpack.c.l.s4 1966171168
        %v9014 = vunpack.c.0.s8 %v9013
        %v9015 = vlaneseq
        %v9016 = vshrl.u32 %v9015, 7
        %v9017 = vsub.s32 %v9014, %v9016
        %v9018 = vrot.slane %v9004, %v9017
        %v9019 = vcombine.high %v9011, %v9011
        %v9020 = vcombine.high %v9018, %v9018
        %v9022 = vunpack.c.l.s4 1966171168
        %v9023 = vunpack.c.0.s8 %v9022
        %v9024 = vlaneseq
        %v9025 = vshrl.u32 %v9024, 7
        %v9026 = vsub.s32 %v9023, %v9025
        %v9027 = vrot.slane %v9011, %v9026
        %v9029 = vunpack.c.l.s4 1966171168
        %v9030 = vunpack.c.0.s8 %v9029
        %v9031 = vlaneseq
        %v9032 = vshrl.u32 %v9031, 7
        %v9033 = vsub.s32 %v9030, %v9032
        %v9034 = vrot.slane %v9018, %v9033
        %v9036 = vunpack.c.l.s4 1966171168
        %v9037 = vunpack.c.0.s8 %v9036
        %v9038 = vlaneseq
        %v9039 = vshrl.u32 %v9038, 7
        %v9040 = vsub.s32 %v9037, %v9039
        %v9041 = vrot.slane %v9019, %v9040
        %v9043 = vunpack.c.l.s4 1966171168
        %v9044 = vunpack.c.0.s8 %v9043
        %v9045 = vlaneseq
        %v9046 = vshrl.u32 %v9045, 7
        %v9047 = vsub.s32 %v9044, %v9046
        %v9048 = vrot.slane %v9020, %v9047
        %v9049 = vcombine.high %v9027, %v9027
        %v9050 = vcombine.high %v9041, %v9041
        %v9051 = vlaneseq
        %v9052 = vshrl.u32 %v9051, 7
        %v9053 = vsub.s32 0, %v9052
        %v9054 = vrot.slane %v9027, %v9053
        %v9055 = vlaneseq
        %v9056 = vshrl.u32 %v9055, 7
        %v9057 = vsub.s32 0, %v9056
        %v9058 = vrot.slane %v9041, %v9057
        %v9059 = vlaneseq
        %v9060 = vshrl.u32 %v9059, 7
        %v9061 = vsub.s32 0, %v9060
        %v9062 = vrot.slane %v9049, %v9061
        %v9063 = vlaneseq
        %v9064 = vshrl.u32 %v9063, 7
        %v9065 = vsub.s32 0, %v9064
        %v9066 = vrot.slane %v9050, %v9065
        %v9067 = vlaneseq
        %v9068 = vshrl.u32 %v9067, 7
        %v9069 = vsub.s32 0, %v9068
        %v9070 = vrot.slane %v9034, %v9069
        %v9071 = vlaneseq
        %v9072 = vshrl.u32 %v9071, 7
        %v9073 = vsub.s32 0, %v9072
        %v9074 = vrot.slane %v9048, %v9073
        %9075 = vrot.lane.b32.xlu0 %v9054, 104
        %v9076 = vpop.permute.xlu0 %9075
        %9077 = vrot.lane.b32.xlu0 %v9058, 104
        %v9078 = vpop.permute.xlu0 %9077
        %9079 = vrot.lane.b32.xlu0 %v9062, 104
        %v9080 = vpop.permute.xlu0 %9079
        %9081 = vrot.lane.b32.xlu0 %v9066, 104
        %v9082 = vpop.permute.xlu0 %9081
        %9083 = vrot.lane.b32.xlu0 %v9070, 104
        %v9084 = vpop.permute.xlu0 %9083
        %9085 = vrot.lane.b32.xlu0 %v9074, 104
        %v9086 = vpop.permute.xlu0 %9085
        %9093 = vst.msk [vmem:[%s319 + $0x7] sm:$0x1] %vm8526, %v9076
        %9094 = vst.msk [vmem:[%s319 + $0xf] sm:$0x1] %vm8526, %v9078
        %9095 = vst.msk [vmem:[%s319 + $0x17] sm:$0x1] %vm8526, %v9080
        %9096 = vst.msk [vmem:[%s319 + $0x1f] sm:$0x1] %vm8526, %v9082
        %9097 = vst.msk [vmem:[%s319 + $0x27] sm:$0x1] %vm8526, %v9084
        %9098 = vst.msk [vmem:[%s319 + $0x2f] sm:$0x1] %vm8526, %v9086
        %s9099 = sand.u32 %s224, 1
        %s9100 = scalar_lea.sflag [#allocation7], %s9099
        %s9101 = sand.u32 %s224, 1
        %s9102 = smul.addr %s9101, 48
        %s9103 = scalar_lea.vmem [#allocation6], %s9102
        // Predicated region
        $region60: #{tpu_custom_call.1} parent=51 // pred_check
          %p9104 = pneg %p234
        $region61: #{tpu_custom_call.1} parent=51 // pred_check_branch
          %9106 = sbr.rel (%p9104) target = $region63
        $region62: #{tpu_custom_call.1} parent=51 // pred_region
          %s9108 = ssub.s32 768, 768
          %9109 = vsyncadd %s9100, %s9108
          %s9110 = smul.addr %s33, 30
          %s9111 = sadd.s32 %s34, %s9110
          %s9112 = smul.addr %s9111, 128
          %s9113 = scalar_lea.hbm %s9, %s9112
          %s9114 = sshll.u32 %s9103, 4
          %s9115 = int_to_ptr.vmem [resolvable:$true] %s9114
          %9120 = dma.vmem_to_hbm [thread:$0]  %s9115, 768, %s9113, %s9100, 128, 640, 8
        $region63: #{tpu_custom_call.1} parent=51 // pred_fallthru
          _
      $region52: #{tpu_custom_call.1} parent=5 // pred_fallthru
        _
      %p9121 = scmp.le.s32.totalorder 2, %s24
      // Predicated region
      $region64: #{tpu_custom_call.1} parent=5 // pred_check
        %p9122 = pneg %p9121
      $region65: #{tpu_custom_call.1} parent=5 // pred_check_branch
        %9124 = sbr.rel (%p9122) target = $region67
      $region66: #{tpu_custom_call.1} parent=5 // pred_region
        %s9125 = ssub.s32 %s24, 2
        // Predicated region
        $region68: #{tpu_custom_call.1} parent=66 // pred_check
          %p9126 = pneg %p240
        $region69: #{tpu_custom_call.1} parent=66 // pred_check_branch
          %9128 = sbr.rel (%p9126) target = $region71
        $region70: #{tpu_custom_call.1} parent=66 // pred_region
          %s9129 = sand.u32 %s225, 1
          %s9130 = scalar_lea.sflag [#allocation7], %s9129
          %s9131 = sand.u32 %s225, 1
          %s9132 = smul.addr %s9131, 48
          %s9133 = scalar_lea.vmem [#allocation6], %s9132
          %9134 = dma.done %s9130, 768
        $region71: #{tpu_custom_call.1} parent=66 // pred_fallthru
          _
      $region67: #{tpu_custom_call.1} parent=5 // pred_fallthru
        _
    $region6: #{tpu_custom_call.1} parent=1 // loop_footer
      %s28 = sadd.s32 1, %s24
    $region7: #{tpu_custom_call.1} parent=1 // loop_footer_branch
      %23 = sbr.rel target = $region3
    $region8: #{tpu_custom_call.1} parent=1 // loop_exit
      _
    %9135 = vsyncpa [#allocation7], 1
    %s9136 = scalar_lea.sflag [#allocation7], 1
    %9137 = vsyncpa %s9136, 1

</llo_original>
